<compile_context>
chip_gen: v7x
topology: tpu7x:2x2x1
jax: 0.10.0
libtpu: 0.0.40
codegen_flags: <defaults>
</compile_context>

<pallas_src>
import functools

import numpy as np

import jax
import jax.numpy as jnp
from jax import lax
from jax.experimental import pallas as pl
from jax.experimental.pallas import tpu as pltpu

_K = 5          # both convs are 5x5, stride 1, VALID
_LANE = 128     # lane width / padding granularity
_OUT_PAD = 128  # lane-dense padding of the final logits (sliced to 10 outside)


def _round_up(n, m):
    return ((n + m - 1) // m) * m


# --------------------- one-time host-side weight prep -----------------------

def _conv_pool_toeplitz(w_oihw, h_in, w_in, *, chw_rows, rows_pad_to=None):
    """Dense matrix computing conv(5x5, VALID) with 2x2 max-pool quadrant layout.

    Returns T of shape (rows, 4*P):
      rows : flattened input features, (c, h, w) order if chw_rows else (h, w, c),
             zero-padded to rows_pad_to.
      cols : quadrant q = 2*dh + dw occupies [q*P, (q+1)*P); within a quadrant the
             conv output at (h=2*ph+dh, w=2*pw+dw, o) sits at (ph*Wp + pw)*O + o;
             each quadrant is zero-padded to P = round_up(Hp*Wp*O, 128) lanes.
    The elementwise max over the four quadrant slices of (x_flat @ T) equals the
    2x2/2 max-pool of the (bias-free) conv output, flattened in (h, w, c) order.
    """
    o_ch, c_in, k, _ = w_oihw.shape
    h_out, w_out = h_in - k + 1, w_in - k + 1
    assert h_out % 2 == 0 and w_out % 2 == 0, "max_pool2d(2,2) needs even conv output"
    h_p, w_p = h_out // 2, w_out // 2
    chunk = h_p * w_p * o_ch
    p = _round_up(chunk, _LANE)

    w = np.asarray(w_oihw, np.float32)
    t = np.zeros((c_in, h_in, w_in, h_out, w_out, o_ch), np.float32)
    oh = np.arange(h_out)[:, None]
    ow = np.arange(w_out)[None, :]
    for ki in range(k):
        for kj in range(k):
            # T[c, h+ki, w+kj, h, w, o] = W[o, c, ki, kj]
            t[:, oh + ki, ow + kj, oh, ow, :] = w[:, :, ki, kj].T[:, None, None, :]

    # (c, hi, wi, h, w, o) -> (c, hi, wi, dh, dw, ph, pw, o), with h = 2*ph + dh.
    t = t.reshape(c_in, h_in, w_in, h_p, 2, w_p, 2, o_ch)
    t = t.transpose(0, 1, 2, 4, 6, 3, 5, 7)
    t = t.reshape(c_in, h_in, w_in, 4, chunk)
    if p != chunk:
        t = np.concatenate([t, np.zeros(t.shape[:4] + (p - chunk,), np.float32)], -1)
    if chw_rows:
        t = t.reshape(c_in * h_in * w_in, 4 * p)
    else:
        t = t.transpose(1, 2, 0, 3, 4).reshape(h_in * w_in * c_in, 4 * p)
    if rows_pad_to is not None and rows_pad_to > t.shape[0]:
        t = np.concatenate(
            [t, np.zeros((rows_pad_to - t.shape[0], 4 * p), np.float32)], 0)
    return t, (h_p, w_p, p)


def preprocess_params(params, channel, size, compute_dtype=jnp.bfloat16):
    """One-time layout transforms; the traced forward does zero weight reshuffling."""
    del channel  # implied by conv1_w
    o1 = params["conv1_w"].shape[0]
    o2 = params["conv2_w"].shape[0]
    fch, fc_in = params["fc1_w"].shape
    ncls = params["fc2_w"].shape[0]

    # conv1 + pool: rows in NCHW-flatten (c, h, w) order so the wrapper only reshapes x.
    t1, (hp1, wp1, p1) = _conv_pool_toeplitz(
        np.asarray(params["conv1_w"]), size, size, chw_rows=True)
    # conv2 + pool: rows are the pooled conv1 activation, (h, w, c) order, P1 wide.
    t2, (hs, ws, p2) = _conv_pool_toeplitz(
        np.asarray(params["conv2_w"]), hp1, wp1, chw_rows=False, rows_pad_to=p1)
    assert fc_in == hs * ws * o2

    # Biases, pre-tiled over spatial positions to match the (ph, pw, o) column order.
    b1 = np.zeros((1, p1), np.float32)
    b1[0, :hp1 * wp1 * o1] = np.tile(np.asarray(params["conv1_b"], np.float32), hp1 * wp1)
    b2 = np.zeros((1, p2), np.float32)
    b2[0, :hs * ws * o2] = np.tile(np.asarray(params["conv2_b"], np.float32), hs * ws)

    # fc1: permute input features from torch's (c, h, w) flatten to our (h, w, c),
    # transpose to (in, out), zero-pad the in dim to the P2 lane pad.
    f1 = np.asarray(params["fc1_w"], np.float32).reshape(fch, o2, hs, ws)
    f1 = f1.transpose(0, 2, 3, 1).reshape(fch, fc_in)
    f1w = np.zeros((p2, fch), np.float32)
    f1w[:fc_in, :] = f1.T
    f1b = np.asarray(params["fc1_b"], np.float32).reshape(1, fch)

    # fc2: (in, out), out zero-padded to a lane-dense 128.
    f2w = np.zeros((fch, _OUT_PAD), np.float32)
    f2w[:, :ncls] = np.asarray(params["fc2_w"], np.float32).T
    f2b = np.zeros((1, _OUT_PAD), np.float32)
    f2b[0, :ncls] = np.asarray(params["fc2_b"], np.float32)

    cdt = compute_dtype
    return {
        "t1": jnp.asarray(t1, cdt), "b1": jnp.asarray(b1),
        "t2": jnp.asarray(t2, cdt), "b2": jnp.asarray(b2),
        "f1w": jnp.asarray(f1w, cdt), "f1b": jnp.asarray(f1b),
        "f2w": jnp.asarray(f2w, cdt), "f2b": jnp.asarray(f2b),
    }


# ------------------------------ fused kernel -------------------------------

def _fused_math(x_flat, t1, b1, t2, b2, f1w, f1b, f2w, f2b, precision=None):
    """conv1+pool+relu -> conv2+pool+relu -> fc1 -> fc2, all as dense matmuls.

    Shared between the Pallas kernel body and the pure-JAX preprocessing check.
    Matmul operands use the weights' dtype; accumulation / epilogue are f32.
    """
    cdt = t1.dtype
    p1 = t1.shape[1] // 4
    p2 = t2.shape[1] // 4
    dot = functools.partial(jnp.dot, preferred_element_type=jnp.float32,
                            precision=precision)

    def quad_max(y, p):  # 2x2 max-pool == max over the 4 quadrant lane-slices
        return jnp.maximum(jnp.maximum(y[:, 0 * p:1 * p], y[:, 1 * p:2 * p]),
                           jnp.maximum(y[:, 2 * p:3 * p], y[:, 3 * p:4 * p]))

    c1 = dot(x_flat.astype(cdt), t1)                      # (B, 4*P1) f32
    a1 = jnp.maximum(quad_max(c1, p1) + b1, 0.0)          # (B, P1)   f32

    c2 = dot(a1.astype(cdt), t2)                          # (B, 4*P2) f32
    a2 = jnp.maximum(quad_max(c2, p2) + b2, 0.0)          # (B, P2)   f32

    h1 = dot(a2.astype(cdt), f1w) + f1b                   # (B, 500)  f32
    return dot(h1.astype(cdt), f2w) + f2b                 # (B, 128)  f32


def _fused_kernel(x_ref, t1_ref, b1_ref, t2_ref, b2_ref,
                  f1w_ref, f1b_ref, f2w_ref, f2b_ref, o_ref):
    o_ref[...] = _fused_math(
        x_ref[...], t1_ref[...], b1_ref[...], t2_ref[...], b2_ref[...],
        f1w_ref[...], f1b_ref[...], f2w_ref[...], f2b_ref[...],
    ).astype(o_ref.dtype)


# --------------------------------- forward ----------------------------------

def _batch_tile(n):
    return 32 if n >= 32 else max(8, _round_up(n, 8))


def lenet_split_forward(x_nchw, pp, n_classes=10):
    """Fused Pallas implementation of LeNet_Split.forward. Input: NCHW float32."""
    n = x_nchw.shape[0]
    feat = pp["t1"].shape[0]                       # C*H*W
    x_flat = x_nchw.reshape(n, feat).astype(jnp.float32)   # NCHW flatten (free)

    bt = _batch_tile(n)
    n_pad = _round_up(n, bt)
    if n_pad != n:
        x_flat = jnp.pad(x_flat, ((0, n_pad - n), (0, 0)))

    weights = (pp["t1"], pp["b1"], pp["t2"], pp["b2"],
               pp["f1w"], pp["f1b"], pp["f2w"], pp["f2b"])
    # double-buffered weight DMA buffers + generous slack for values/temporaries
    vmem_limit = int(sum(2 * w.size * w.dtype.itemsize for w in weights)) + (16 << 20)

    out = pl.pallas_call(
        _fused_kernel,
        out_shape=jax.ShapeDtypeStruct((n_pad, _OUT_PAD), jnp.float32),
        grid=(n_pad // bt,),
        in_specs=[pl.BlockSpec((bt, feat), lambda i: (i, 0))] +
                 [pl.BlockSpec(w.shape, lambda i: (0, 0)) for w in weights],
        out_specs=pl.BlockSpec((bt, _OUT_PAD), lambda i: (i, 0)),
        compiler_params=pltpu.CompilerParams(
            dimension_semantics=("parallel",),     # v7x: shard batch tiles over 2 TCs
            vmem_limit_bytes=vmem_limit,
        ),
    )(x_flat, *weights)
    return out[:n, :n_classes]


# --------------------------- pure-JAX reference -----------------------------

def lenet_split_reference(x_nchw, params):
    hp = lax.Precision.HIGHEST
    x = jnp.transpose(x_nchw, (0, 2, 3, 1))
    dn = ("NHWC", "HWIO", "NHWC")

    def conv(inp, w_oihw, b):
        w = jnp.transpose(w_oihw, (2, 3, 1, 0))
        return lax.conv_general_dilated(inp, w, (1, 1), "VALID",
                                        dimension_numbers=dn, precision=hp) + b

    def pool(inp):
        return lax.reduce_window(inp, -jnp.inf, lax.max,
                                 (1, 2, 2, 1), (1, 2, 2, 1), "VALID")

    y = jnp.maximum(pool(conv(x, params["conv1_w"], params["conv1_b"])), 0.0)
    y = jnp.maximum(pool(conv(y, params["conv2_w"], params["conv2_b"])), 0.0)
    flat = jnp.transpose(y, (0, 3, 1, 2)).reshape(x.shape[0], -1)
    h = jnp.dot(flat, params["fc1_w"].T, precision=hp) + params["fc1_b"]
    return jnp.dot(h, params["fc2_w"].T, precision=hp) + params["fc2_b"]


# ---------------------------------- main ------------------------------------

def make_params(key, channel, size):
    size_before_fc = int(((size - 4) / 2 - 4) / 2)
    fc_in = size_before_fc * size_before_fc * 50
    ks = jax.random.split(key, 8)
    s = 0.05
    return {
        "conv1_w": s * jax.random.normal(ks[0], (20, channel, 5, 5), jnp.float32),
        "conv1_b": s * jax.random.normal(ks[1], (20,), jnp.float32),
        "conv2_w": s * jax.random.normal(ks[2], (50, 20, 5, 5), jnp.float32),
        "conv2_b": s * jax.random.normal(ks[3], (50,), jnp.float32),
        "fc1_w":   s * jax.random.normal(ks[4], (500, fc_in), jnp.float32),
        "fc1_b":   s * jax.random.normal(ks[5], (500,), jnp.float32),
        "fc2_w":   s * jax.random.normal(ks[6], (10, 500), jnp.float32),
        "fc2_b":   s * jax.random.normal(ks[7], (10,), jnp.float32),
    }


if __name__ == "__main__":
    key = jax.random.PRNGKey(0)
    k_x, k_p = jax.random.split(key)

    batch, channel, size = 2, 4, 16          # -> size_before_fc = 1, fc_in = 50
    x = jax.random.normal(k_x, (batch, channel, size, size), jnp.float32)
    params = make_params(k_p, channel, size)

    ref = jax.block_until_ready(lenet_split_reference(x, params))

    # (1) Validate the Toeplitz / layout preprocessing exactly (f32, pure JAX, no Pallas).
    pp32 = preprocess_params(params, channel, size, compute_dtype=jnp.float32)
    chk = _fused_math(x.reshape(batch, -1), pp32["t1"], pp32["b1"], pp32["t2"],
                      pp32["b2"], pp32["f1w"], pp32["f1b"], pp32["f2w"], pp32["f2b"],
                      precision=lax.Precision.HIGHEST)[:, :10]
    err32 = float(jnp.max(jnp.abs(chk - ref)))
    assert err32 < 1e-3, f"f32 preprocessing mismatch: max abs err = {err32}"

    # (2) Fused Pallas kernel on TPU: bf16 MXU operands, f32 accumulation/epilogue.
    pp = preprocess_params(params, channel, size)           # bf16 default
    fwd = jax.jit(lenet_split_forward)
    out = jax.block_until_ready(fwd(x, pp))

    assert out.shape == (batch, 10), out.shape
    max_err = float(jnp.max(jnp.abs(out - ref)))
    assert jnp.allclose(out, ref, atol=2e-2, rtol=2e-2), (
        f"kernel mismatch vs reference: max abs err = {max_err}")
    print("KERNEL_OK")
</pallas_src>

<mosaic_0001>
module attributes {stable_mosaic.version = 11 : i64} {
  func.func @_fused_kernel(%arg0: i32, %arg1: memref<8x1024xf32, #tpu.memory_space<vmem>>, %arg2: memref<1024x3072xbf16, #tpu.memory_space<vmem>>, %arg3: memref<1x768xf32, #tpu.memory_space<vmem>>, %arg4: memref<768x512xbf16, #tpu.memory_space<vmem>>, %arg5: memref<1x128xf32, #tpu.memory_space<vmem>>, %arg6: memref<128x500xbf16, #tpu.memory_space<vmem>>, %arg7: memref<1x500xf32, #tpu.memory_space<vmem>>, %arg8: memref<500x128xbf16, #tpu.memory_space<vmem>>, %arg9: memref<1x128xf32, #tpu.memory_space<vmem>>, %arg10: memref<8x128xf32, #tpu.memory_space<vmem>>) attributes {dimension_semantics = [#tpu.dimension_semantics<parallel>], iteration_bounds = array<i64: 1>, scalar_prefetch = 0 : i64, scratch_operands = 0 : i64, tpu.core_type = #tpu.core_type<tc>, window_params = [{transform_indices = @transform_0, window_bounds = array<i64: 8, 1024>}, {pipeline_mode = #tpu.pipeline_mode<synchronous>, transform_indices = @transform_1, window_bounds = array<i64: 1024, 3072>}, {pipeline_mode = #tpu.pipeline_mode<synchronous>, transform_indices = @transform_2, window_bounds = array<i64: 1, 768>}, {pipeline_mode = #tpu.pipeline_mode<synchronous>, transform_indices = @transform_3, window_bounds = array<i64: 768, 512>}, {pipeline_mode = #tpu.pipeline_mode<synchronous>, transform_indices = @transform_4, window_bounds = array<i64: 1, 128>}, {pipeline_mode = #tpu.pipeline_mode<synchronous>, transform_indices = @transform_5, window_bounds = array<i64: 128, 500>}, {pipeline_mode = #tpu.pipeline_mode<synchronous>, transform_indices = @transform_6, window_bounds = array<i64: 1, 500>}, {pipeline_mode = #tpu.pipeline_mode<synchronous>, transform_indices = @transform_7, window_bounds = array<i64: 500, 128>}, {pipeline_mode = #tpu.pipeline_mode<synchronous>, transform_indices = @transform_8, window_bounds = array<i64: 1, 128>}, {transform_indices = @transform_9, window_bounds = array<i64: 8, 128>}]} {
    %c0 = arith.constant 0 : index
    %c0_0 = arith.constant 0 : index
    %0 = vector.load %arg1[%c0, %c0_0] : memref<8x1024xf32, #tpu.memory_space<vmem>>, vector<8x1024xf32>
    %c0_1 = arith.constant 0 : index
    %c0_2 = arith.constant 0 : index
    %1 = vector.load %arg2[%c0_1, %c0_2] : memref<1024x3072xbf16, #tpu.memory_space<vmem>>, vector<1024x3072xbf16>
    %c0_3 = arith.constant 0 : index
    %c0_4 = arith.constant 0 : index
    %2 = vector.load %arg3[%c0_3, %c0_4] : memref<1x768xf32, #tpu.memory_space<vmem>>, vector<1x768xf32>
    %c0_5 = arith.constant 0 : index
    %c0_6 = arith.constant 0 : index
    %3 = vector.load %arg4[%c0_5, %c0_6] : memref<768x512xbf16, #tpu.memory_space<vmem>>, vector<768x512xbf16>
    %c0_7 = arith.constant 0 : index
    %c0_8 = arith.constant 0 : index
    %4 = vector.load %arg5[%c0_7, %c0_8] : memref<1x128xf32, #tpu.memory_space<vmem>>, vector<1x128xf32>
    %c0_9 = arith.constant 0 : index
    %c0_10 = arith.constant 0 : index
    %5 = vector.load %arg6[%c0_9, %c0_10] : memref<128x500xbf16, #tpu.memory_space<vmem>>, vector<128x500xbf16>
    %c0_11 = arith.constant 0 : index
    %c0_12 = arith.constant 0 : index
    %6 = vector.load %arg7[%c0_11, %c0_12] : memref<1x500xf32, #tpu.memory_space<vmem>>, vector<1x500xf32>
    %c0_13 = arith.constant 0 : index
    %c0_14 = arith.constant 0 : index
    %7 = vector.load %arg8[%c0_13, %c0_14] : memref<500x128xbf16, #tpu.memory_space<vmem>>, vector<500x128xbf16>
    %c0_15 = arith.constant 0 : index
    %c0_16 = arith.constant 0 : index
    %8 = vector.load %arg9[%c0_15, %c0_16] : memref<1x128xf32, #tpu.memory_space<vmem>>, vector<1x128xf32>
    %9 = arith.truncf %0 : vector<8x1024xf32> to vector<8x1024xbf16>
    %cst = arith.constant dense<0.000000e+00> : vector<8x3072xf32>
    %10 = tpu.matmul %9, %1, %cst {dimension_numbers = #tpu.dot_dimension_numbers<[1], [0], [0], [1], [0, 0, 1, 1], [], []>} : vector<8x1024xbf16>, vector<1024x3072xbf16>, vector<8x3072xf32> -> vector<8x3072xf32>
    %11 = vector.extract_strided_slice %10 {offsets = [0, 0], sizes = [8, 768], strides = [1, 1]} : vector<8x3072xf32> to vector<8x768xf32>
    %12 = vector.extract_strided_slice %10 {offsets = [0, 768], sizes = [8, 768], strides = [1, 1]} : vector<8x3072xf32> to vector<8x768xf32>
    %13 = arith.maximumf %11, %12 : vector<8x768xf32>
    %14 = vector.extract_strided_slice %10 {offsets = [0, 1536], sizes = [8, 768], strides = [1, 1]} : vector<8x3072xf32> to vector<8x768xf32>
    %15 = vector.extract_strided_slice %10 {offsets = [0, 2304], sizes = [8, 768], strides = [1, 1]} : vector<8x3072xf32> to vector<8x768xf32>
    %16 = arith.maximumf %14, %15 : vector<8x768xf32>
    %17 = arith.maximumf %13, %16 : vector<8x768xf32>
    %18 = vector.broadcast %2 : vector<1x768xf32> to vector<8x768xf32>
    %19 = arith.addf %17, %18 : vector<8x768xf32>
    %cst_17 = arith.constant 0.000000e+00 : f32
    %20 = vector.broadcast %cst_17 : f32 to vector<8x768xf32>
    %21 = arith.maximumf %19, %20 : vector<8x768xf32>
    %22 = arith.truncf %21 : vector<8x768xf32> to vector<8x768xbf16>
    %cst_18 = arith.constant dense<0.000000e+00> : vector<8x512xf32>
    %23 = tpu.matmul %22, %3, %cst_18 {dimension_numbers = #tpu.dot_dimension_numbers<[1], [0], [0], [1], [0, 0, 1, 1], [], []>} : vector<8x768xbf16>, vector<768x512xbf16>, vector<8x512xf32> -> vector<8x512xf32>
    %24 = vector.extract_strided_slice %23 {offsets = [0, 0], sizes = [8, 128], strides = [1, 1]} : vector<8x512xf32> to vector<8x128xf32>
    %25 = vector.extract_strided_slice %23 {offsets = [0, 128], sizes = [8, 128], strides = [1, 1]} : vector<8x512xf32> to vector<8x128xf32>
    %26 = arith.maximumf %24, %25 : vector<8x128xf32>
    %27 = vector.extract_strided_slice %23 {offsets = [0, 256], sizes = [8, 128], strides = [1, 1]} : vector<8x512xf32> to vector<8x128xf32>
    %28 = vector.extract_strided_slice %23 {offsets = [0, 384], sizes = [8, 128], strides = [1, 1]} : vector<8x512xf32> to vector<8x128xf32>
    %29 = arith.maximumf %27, %28 : vector<8x128xf32>
    %30 = arith.maximumf %26, %29 : vector<8x128xf32>
    %31 = vector.broadcast %4 : vector<1x128xf32> to vector<8x128xf32>
    %32 = arith.addf %30, %31 : vector<8x128xf32>
    %cst_19 = arith.constant 0.000000e+00 : f32
    %33 = vector.broadcast %cst_19 : f32 to vector<8x128xf32>
    %34 = arith.maximumf %32, %33 : vector<8x128xf32>
    %35 = arith.truncf %34 : vector<8x128xf32> to vector<8x128xbf16>
    %cst_20 = arith.constant dense<0.000000e+00> : vector<8x500xf32>
    %36 = tpu.matmul %35, %5, %cst_20 {dimension_numbers = #tpu.dot_dimension_numbers<[1], [0], [0], [1], [0, 0, 1, 1], [], []>} : vector<8x128xbf16>, vector<128x500xbf16>, vector<8x500xf32> -> vector<8x500xf32>
    %37 = vector.broadcast %6 : vector<1x500xf32> to vector<8x500xf32>
    %38 = arith.addf %36, %37 : vector<8x500xf32>
    %39 = arith.truncf %38 : vector<8x500xf32> to vector<8x500xbf16>
    %cst_21 = arith.constant dense<0.000000e+00> : vector<8x128xf32>
    %40 = tpu.matmul %39, %7, %cst_21 {dimension_numbers = #tpu.dot_dimension_numbers<[1], [0], [0], [1], [0, 0, 1, 1], [], []>} : vector<8x500xbf16>, vector<500x128xbf16>, vector<8x128xf32> -> vector<8x128xf32>
    %41 = vector.broadcast %8 : vector<1x128xf32> to vector<8x128xf32>
    %42 = arith.addf %40, %41 : vector<8x128xf32>
    %c0_22 = arith.constant 0 : index
    %c0_23 = arith.constant 0 : index
    %43 = vector.load %arg10[%c0_22, %c0_23] : memref<8x128xf32, #tpu.memory_space<vmem>>, vector<8x128xf32>
    tpu.vector_store %arg10[%c0_22, %c0_23], %42 {strides = array<i32>} : memref<8x128xf32, #tpu.memory_space<vmem>>, vector<8x128xf32>,
    return
  }
  func.func @transform_0(%arg0: i32) -> (i32, i32) {
    %c0_i32 = arith.constant 0 : i32
    %c0_i32_0 = arith.constant 0 : i32
    return %arg0, %c0_i32 : i32, i32
  }
  func.func @transform_1(%arg0: i32) -> (i32, i32) {
    %c0_i32 = arith.constant 0 : i32
    %c0_i32_0 = arith.constant 0 : i32
    %c0_i32_1 = arith.constant 0 : i32
    return %c0_i32, %c0_i32_0 : i32, i32
  }
  func.func @transform_2(%arg0: i32) -> (i32, i32) {
    %c0_i32 = arith.constant 0 : i32
    %c0_i32_0 = arith.constant 0 : i32
    %c0_i32_1 = arith.constant 0 : i32
    return %c0_i32, %c0_i32_0 : i32, i32
  }
  func.func @transform_3(%arg0: i32) -> (i32, i32) {
    %c0_i32 = arith.constant 0 : i32
    %c0_i32_0 = arith.constant 0 : i32
    %c0_i32_1 = arith.constant 0 : i32
    return %c0_i32, %c0_i32_0 : i32, i32
  }
  func.func @transform_4(%arg0: i32) -> (i32, i32) {
    %c0_i32 = arith.constant 0 : i32
    %c0_i32_0 = arith.constant 0 : i32
    %c0_i32_1 = arith.constant 0 : i32
    return %c0_i32, %c0_i32_0 : i32, i32
  }
  func.func @transform_5(%arg0: i32) -> (i32, i32) {
    %c0_i32 = arith.constant 0 : i32
    %c0_i32_0 = arith.constant 0 : i32
    %c0_i32_1 = arith.constant 0 : i32
    return %c0_i32, %c0_i32_0 : i32, i32
  }
  func.func @transform_6(%arg0: i32) -> (i32, i32) {
    %c0_i32 = arith.constant 0 : i32
    %c0_i32_0 = arith.constant 0 : i32
    %c0_i32_1 = arith.constant 0 : i32
    return %c0_i32, %c0_i32_0 : i32, i32
  }
  func.func @transform_7(%arg0: i32) -> (i32, i32) {
    %c0_i32 = arith.constant 0 : i32
    %c0_i32_0 = arith.constant 0 : i32
    %c0_i32_1 = arith.constant 0 : i32
    return %c0_i32, %c0_i32_0 : i32, i32
  }
  func.func @transform_8(%arg0: i32) -> (i32, i32) {
    %c0_i32 = arith.constant 0 : i32
    %c0_i32_0 = arith.constant 0 : i32
    %c0_i32_1 = arith.constant 0 : i32
    return %c0_i32, %c0_i32_0 : i32, i32
  }
  func.func @transform_9(%arg0: i32) -> (i32, i32) {
    %c0_i32 = arith.constant 0 : i32
    %c0_i32_0 = arith.constant 0 : i32
    return %arg0, %c0_i32 : i32, i32
  }
}

</mosaic_0001>

<llo_original>
// kernel: lenet_split_forward.1
$region0: #{lenet_split_forward.1}
  #allocation0 [shape = 'u32[]', space=smem, size = 0x4, offset = 0x4, fixed_abs, tag = 'smem constant byte address 0x4 - core index']
  #allocation1 [shape = 'u32[144,128]{1,0:T(1,128)}', space=vmem, size = 0x12000, scoped, tag = 'internal scratch']
  %s0 = inlined_call_operand.vmem [shape: f32[8,1024], index: 0, kind: input, shape index: {}]
  %s1 = inlined_call_operand.hbm [shape: bf16[1024,3072], index: 1, kind: input, shape index: {}]
  %s2 = inlined_call_operand.hbm [shape: f32[1,768], index: 2, kind: input, shape index: {}]
  %s3 = inlined_call_operand.hbm [shape: bf16[768,512], index: 3, kind: input, shape index: {}]
  %s4 = inlined_call_operand.hbm [shape: f32[1,128], index: 4, kind: input, shape index: {}]
  %s5 = inlined_call_operand.vmem [shape: bf16[128,500], index: 5, kind: input, shape index: {}]
  %s6 = inlined_call_operand.hbm [shape: f32[1,500], index: 6, kind: input, shape index: {}]
  %s7 = inlined_call_operand.hbm [shape: bf16[500,128], index: 7, kind: input, shape index: {}]
  %s8 = inlined_call_operand.hbm [shape: f32[1,128], index: 8, kind: input, shape index: {}]
  %s9 = inlined_call_operand.vmem [shape: f32[8,128], index: 9, kind: output, shape index: {}]
  %s10 = sld [smem:[#allocation0]]
  $region74: #{lenet_split_forward.1} parent=0
    _
  %s12 = ssub.s32 1, %s10
  %s13 = scalar_select 0, %s12, %s10
  $region1: #{lenet_split_forward.1} parent=0
    #allocation2 [shape = 'u8[6291456]{0}', space=vmem, size = 0x600000, scoped, tag = 'input window, operand 1, single buffered']
    #allocation3 [shape = 's32[1]{0}', space=sflag, size = 0x4, scoped, tag = 'scoped memory for lenet_split_forward.1']
    #allocation4 [shape = 'u8[3072]{0}', space=vmem, size = 0xc00, scoped, tag = 'input window, operand 2, single buffered']
    #allocation5 [shape = 's32[1]{0}', space=sflag, size = 0x4, scoped, tag = 'scoped memory for lenet_split_forward.1']
    #allocation6 [shape = 'u8[786432]{0}', space=vmem, size = 0xc0000, scoped, tag = 'input window, operand 3, single buffered']
    #allocation7 [shape = 'u8[512]{0}', space=vmem, size = 0x400, scoped, tag = 'input window, operand 4, single buffered']
    #allocation8 [shape = 's32[1]{0}', space=sflag, size = 0x4, scoped, tag = 'scoped memory for lenet_split_forward.1']
    #allocation9 [shape = 'u8[2048]{0}', space=vmem, size = 0x800, scoped, tag = 'input window, operand 6, single buffered']
    #allocation10 [shape = 'u8[129024]{0}', space=vmem, size = 0x1f800, scoped, tag = 'input window, operand 7, single buffered']
    #allocation11 [shape = 's32[1]{0}', space=sflag, size = 0x4, scoped, tag = 'scoped memory for lenet_split_forward.1']
    #allocation12 [shape = 'u8[512]{0}', space=vmem, size = 0x400, scoped, tag = 'input window, operand 8, single buffered']
    %14 = vsyncpa [#allocation3], 0
    %15 = vsyncpa [#allocation5], 0
    %16 = vsyncpa [#allocation8], 0
    %17 = vsyncpa [#allocation11], 0
    // Predicated region
    $region2: #{lenet_split_forward.1} parent=1 // pred_check
      _
    $region3: #{lenet_split_forward.1} parent=1 // pred_check_branch
      %19 = sbr.rel (0) target = $region5
    $region4: #{lenet_split_forward.1} parent=1 // pred_region
      _
    $region5: #{lenet_split_forward.1} parent=1 // pred_fallthru
      _
    // Predicated region
    $region6: #{lenet_split_forward.1} parent=1 // pred_check
      _
    $region7: #{lenet_split_forward.1} parent=1 // pred_check_branch
      %21 = sbr.rel (0) target = $region9
    $region8: #{lenet_split_forward.1} parent=1 // pred_region
      %s23 = ssub.s32 196608, 196608
      %24 = vsyncadd [#allocation3], %s23
      %s25 = sshll.u32 [#allocation2], 4
      %s26 = int_to_ptr.vmem [resolvable:$true] %s25
      %31 = dma.hbm_to_vmem [thread:$0]  %s1, 196608, %s26, [#allocation3], 1536, 1536, 96
    $region9: #{lenet_split_forward.1} parent=1 // pred_fallthru
      _
    // Predicated region
    $region10: #{lenet_split_forward.1} parent=1 // pred_check
      _
    $region11: #{lenet_split_forward.1} parent=1 // pred_check_branch
      %33 = sbr.rel (0) target = $region13
    $region12: #{lenet_split_forward.1} parent=1 // pred_region
      %s35 = ssub.s32 96, 96
      %36 = vsyncadd [#allocation5], %s35
      %s38 = sshll.u32 [#allocation4], 4
      %s39 = int_to_ptr.vmem [resolvable:$true] %s38
      %41 = dma.hbm_to_vmem [thread:$0]  %s2, 96, %s39, [#allocation5]
    $region13: #{lenet_split_forward.1} parent=1 // pred_fallthru
      _
    // Predicated region
    $region14: #{lenet_split_forward.1} parent=1 // pred_check
      _
    $region15: #{lenet_split_forward.1} parent=1 // pred_check_branch
      %43 = sbr.rel (0) target = $region17
    $region16: #{lenet_split_forward.1} parent=1 // pred_region
      %s45 = ssub.s32 24576, 24576
      %46 = vsyncadd [#allocation5], %s45
      %s47 = sshll.u32 [#allocation6], 4
      %s48 = int_to_ptr.vmem [resolvable:$true] %s47
      %53 = dma.hbm_to_vmem [thread:$0]  %s3, 24576, %s48, [#allocation5], 256, 256, 16
    $region17: #{lenet_split_forward.1} parent=1 // pred_fallthru
      _
    // Predicated region
    $region18: #{lenet_split_forward.1} parent=1 // pred_check
      _
    $region19: #{lenet_split_forward.1} parent=1 // pred_check_branch
      %55 = sbr.rel (0) target = $region21
    $region20: #{lenet_split_forward.1} parent=1 // pred_region
      %s57 = ssub.s32 16, 16
      %58 = vsyncadd [#allocation8], %s57
      %s60 = sshll.u32 [#allocation7], 4
      %s61 = int_to_ptr.vmem [resolvable:$true] %s60
      %63 = dma.hbm_to_vmem [thread:$0]  %s4, 16, %s61, [#allocation8]
    $region21: #{lenet_split_forward.1} parent=1 // pred_fallthru
      _
    // Predicated region
    $region22: #{lenet_split_forward.1} parent=1 // pred_check
      _
    $region23: #{lenet_split_forward.1} parent=1 // pred_check_branch
      %65 = sbr.rel (0) target = $region25
    $region24: #{lenet_split_forward.1} parent=1 // pred_region
      _
    $region25: #{lenet_split_forward.1} parent=1 // pred_fallthru
      _
    // Predicated region
    $region26: #{lenet_split_forward.1} parent=1 // pred_check
      _
    $region27: #{lenet_split_forward.1} parent=1 // pred_check_branch
      %67 = sbr.rel (0) target = $region29
    $region28: #{lenet_split_forward.1} parent=1 // pred_region
      %s69 = ssub.s32 64, 64
      %70 = vsyncadd [#allocation8], %s69
      %s72 = sshll.u32 [#allocation9], 4
      %s73 = int_to_ptr.vmem [resolvable:$true] %s72
      %75 = dma.hbm_to_vmem [thread:$0]  %s6, 64, %s73, [#allocation8]
    $region29: #{lenet_split_forward.1} parent=1 // pred_fallthru
      _
    // Predicated region
    $region30: #{lenet_split_forward.1} parent=1 // pred_check
      _
    $region31: #{lenet_split_forward.1} parent=1 // pred_check_branch
      %77 = sbr.rel (0) target = $region33
    $region32: #{lenet_split_forward.1} parent=1 // pred_region
      %s79 = ssub.s32 4032, 4032
      %80 = vsyncadd [#allocation11], %s79
      %s81 = sshll.u32 [#allocation10], 4
      %s82 = int_to_ptr.vmem [resolvable:$true] %s81
      %87 = dma.hbm_to_vmem [thread:$0]  %s7, 4032, %s82, [#allocation11], 64, 64, 4
    $region33: #{lenet_split_forward.1} parent=1 // pred_fallthru
      _
    // Predicated region
    $region34: #{lenet_split_forward.1} parent=1 // pred_check
      _
    $region35: #{lenet_split_forward.1} parent=1 // pred_check_branch
      %89 = sbr.rel (0) target = $region37
    $region36: #{lenet_split_forward.1} parent=1 // pred_region
      %s91 = ssub.s32 16, 16
      %92 = vsyncadd [#allocation11], %s91
      %s94 = sshll.u32 [#allocation12], 4
      %s95 = int_to_ptr.vmem [resolvable:$true] %s94
      %97 = dma.hbm_to_vmem [thread:$0]  %s8, 16, %s95, [#allocation11]
    $region37: #{lenet_split_forward.1} parent=1 // pred_fallthru
      _
    // Predicated region
    $region38: #{lenet_split_forward.1} parent=1 // pred_check
      _
    $region39: #{lenet_split_forward.1} parent=1 // pred_check_branch
      %99 = sbr.rel (0) target = $region41
    $region40: #{lenet_split_forward.1} parent=1 // pred_region
      %100 = dma.done [#allocation3], 196608
    $region41: #{lenet_split_forward.1} parent=1 // pred_fallthru
      _
    // Predicated region
    $region42: #{lenet_split_forward.1} parent=1 // pred_check
      _
    $region43: #{lenet_split_forward.1} parent=1 // pred_check_branch
      %102 = sbr.rel (0) target = $region45
    $region44: #{lenet_split_forward.1} parent=1 // pred_region
      %103 = dma.done [#allocation5], 96
    $region45: #{lenet_split_forward.1} parent=1 // pred_fallthru
      _
    // Predicated region
    $region46: #{lenet_split_forward.1} parent=1 // pred_check
      _
    $region47: #{lenet_split_forward.1} parent=1 // pred_check_branch
      %105 = sbr.rel (0) target = $region49
    $region48: #{lenet_split_forward.1} parent=1 // pred_region
      %106 = dma.done [#allocation5], 24576
    $region49: #{lenet_split_forward.1} parent=1 // pred_fallthru
      _
    // Predicated region
    $region50: #{lenet_split_forward.1} parent=1 // pred_check
      _
    $region51: #{lenet_split_forward.1} parent=1 // pred_check_branch
      %108 = sbr.rel (0) target = $region53
    $region52: #{lenet_split_forward.1} parent=1 // pred_region
      %109 = dma.done [#allocation8], 16
    $region53: #{lenet_split_forward.1} parent=1 // pred_fallthru
      _
    // Predicated region
    $region54: #{lenet_split_forward.1} parent=1 // pred_check
      _
    $region55: #{lenet_split_forward.1} parent=1 // pred_check_branch
      %111 = sbr.rel (0) target = $region57
    $region56: #{lenet_split_forward.1} parent=1 // pred_region
      %112 = dma.done [#allocation8], 64
    $region57: #{lenet_split_forward.1} parent=1 // pred_fallthru
      _
    // Predicated region
    $region58: #{lenet_split_forward.1} parent=1 // pred_check
      _
    $region59: #{lenet_split_forward.1} parent=1 // pred_check_branch
      %114 = sbr.rel (0) target = $region61
    $region60: #{lenet_split_forward.1} parent=1 // pred_region
      %115 = dma.done [#allocation11], 4032
    $region61: #{lenet_split_forward.1} parent=1 // pred_fallthru
      _
    // Predicated region
    $region62: #{lenet_split_forward.1} parent=1 // pred_check
      _
    $region63: #{lenet_split_forward.1} parent=1 // pred_check_branch
      %117 = sbr.rel (0) target = $region65
    $region64: #{lenet_split_forward.1} parent=1 // pred_region
      %118 = dma.done [#allocation11], 16
    $region65: #{lenet_split_forward.1} parent=1 // pred_fallthru
      _
    %v120 = vld [vmem:[%s0] sm:$0xff]
    %v121 = vld [vmem:[%s0 + $0x8] sm:$0xff]
    %v122 = vld [vmem:[%s0 + $0x10] sm:$0xff]
    %v123 = vld [vmem:[%s0 + $0x18] sm:$0xff]
    %v124 = vld [vmem:[%s0 + $0x20] sm:$0xff]
    %v125 = vld [vmem:[%s0 + $0x28] sm:$0xff]
    %v126 = vld [vmem:[%s0 + $0x30] sm:$0xff]
    %v127 = vld [vmem:[%s0 + $0x38] sm:$0xff]
    %v128 = vld [vmem:[#allocation2] sm:$0xff]
    %v129 = vld [vmem:[#allocation2 + $0x8] sm:$0xff]
    %v130 = vld [vmem:[#allocation2 + $0x10] sm:$0xff]
    %v131 = vld [vmem:[#allocation2 + $0x18] sm:$0xff]
    %v132 = vld [vmem:[#allocation2 + $0x20] sm:$0xff]
    %v133 = vld [vmem:[#allocation2 + $0x28] sm:$0xff]
    %v134 = vld [vmem:[#allocation2 + $0x30] sm:$0xff]
    %v135 = vld [vmem:[#allocation2 + $0x38] sm:$0xff]
    %v136 = vld [vmem:[#allocation2 + $0x40] sm:$0xff]
    %v137 = vld [vmem:[#allocation2 + $0x48] sm:$0xff]
    %v138 = vld [vmem:[#allocation2 + $0x50] sm:$0xff]
    %v139 = vld [vmem:[#allocation2 + $0x58] sm:$0xff]
    %v140 = vld [vmem:[#allocation2 + $0x60] sm:$0xff]
    %v141 = vld [vmem:[#allocation2 + $0x68] sm:$0xff]
    %v142 = vld [vmem:[#allocation2 + $0x70] sm:$0xff]
    %v143 = vld [vmem:[#allocation2 + $0x78] sm:$0xff]
    %v144 = vld [vmem:[#allocation2 + $0x80] sm:$0xff]
    %v145 = vld [vmem:[#allocation2 + $0x88] sm:$0xff]
    %v146 = vld [vmem:[#allocation2 + $0x90] sm:$0xff]
    %v147 = vld [vmem:[#allocation2 + $0x98] sm:$0xff]
    %v148 = vld [vmem:[#allocation2 + $0xa0] sm:$0xff]
    %v149 = vld [vmem:[#allocation2 + $0xa8] sm:$0xff]
    %v150 = vld [vmem:[#allocation2 + $0xb0] sm:$0xff]
    %v151 = vld [vmem:[#allocation2 + $0xb8] sm:$0xff]
    %v152 = vld [vmem:[#allocation2 + $0xc0] sm:$0xff]
    %v153 = vld [vmem:[#allocation2 + $0xc8] sm:$0xff]
    %v154 = vld [vmem:[#allocation2 + $0xd0] sm:$0xff]
    %v155 = vld [vmem:[#allocation2 + $0xd8] sm:$0xff]
    %v156 = vld [vmem:[#allocation2 + $0xe0] sm:$0xff]
    %v157 = vld [vmem:[#allocation2 + $0xe8] sm:$0xff]
    %v158 = vld [vmem:[#allocation2 + $0xf0] sm:$0xff]
    %v159 = vld [vmem:[#allocation2 + $0xf8] sm:$0xff]
    %v160 = vld [vmem:[#allocation2 + $0x100] sm:$0xff]
    %v161 = vld [vmem:[#allocation2 + $0x108] sm:$0xff]
    %v162 = vld [vmem:[#allocation2 + $0x110] sm:$0xff]
    %v163 = vld [vmem:[#allocation2 + $0x118] sm:$0xff]
    %v164 = vld [vmem:[#allocation2 + $0x120] sm:$0xff]
    %v165 = vld [vmem:[#allocation2 + $0x128] sm:$0xff]
    %v166 = vld [vmem:[#allocation2 + $0x130] sm:$0xff]
    %v167 = vld [vmem:[#allocation2 + $0x138] sm:$0xff]
    %v168 = vld [vmem:[#allocation2 + $0x140] sm:$0xff]
    %v169 = vld [vmem:[#allocation2 + $0x148] sm:$0xff]
    %v170 = vld [vmem:[#allocation2 + $0x150] sm:$0xff]
    %v171 = vld [vmem:[#allocation2 + $0x158] sm:$0xff]
    %v172 = vld [vmem:[#allocation2 + $0x160] sm:$0xff]
    %v173 = vld [vmem:[#allocation2 + $0x168] sm:$0xff]
    %v174 = vld [vmem:[#allocation2 + $0x170] sm:$0xff]
    %v175 = vld [vmem:[#allocation2 + $0x178] sm:$0xff]
    %v176 = vld [vmem:[#allocation2 + $0x180] sm:$0xff]
    %v177 = vld [vmem:[#allocation2 + $0x188] sm:$0xff]
    %v178 = vld [vmem:[#allocation2 + $0x190] sm:$0xff]
    %v179 = vld [vmem:[#allocation2 + $0x198] sm:$0xff]
    %v180 = vld [vmem:[#allocation2 + $0x1a0] sm:$0xff]
    %v181 = vld [vmem:[#allocation2 + $0x1a8] sm:$0xff]
    %v182 = vld [vmem:[#allocation2 + $0x1b0] sm:$0xff]
    %v183 = vld [vmem:[#allocation2 + $0x1b8] sm:$0xff]
    %v184 = vld [vmem:[#allocation2 + $0x1c0] sm:$0xff]
    %v185 = vld [vmem:[#allocation2 + $0x1c8] sm:$0xff]
    %v186 = vld [vmem:[#allocation2 + $0x1d0] sm:$0xff]
    %v187 = vld [vmem:[#allocation2 + $0x1d8] sm:$0xff]
    %v188 = vld [vmem:[#allocation2 + $0x1e0] sm:$0xff]
    %v189 = vld [vmem:[#allocation2 + $0x1e8] sm:$0xff]
    %v190 = vld [vmem:[#allocation2 + $0x1f0] sm:$0xff]
    %v191 = vld [vmem:[#allocation2 + $0x1f8] sm:$0xff]
    %v192 = vld [vmem:[#allocation2 + $0x200] sm:$0xff]
    %v193 = vld [vmem:[#allocation2 + $0x208] sm:$0xff]
    %v194 = vld [vmem:[#allocation2 + $0x210] sm:$0xff]
    %v195 = vld [vmem:[#allocation2 + $0x218] sm:$0xff]
    %v196 = vld [vmem:[#allocation2 + $0x220] sm:$0xff]
    %v197 = vld [vmem:[#allocation2 + $0x228] sm:$0xff]
    %v198 = vld [vmem:[#allocation2 + $0x230] sm:$0xff]
    %v199 = vld [vmem:[#allocation2 + $0x238] sm:$0xff]
    %v200 = vld [vmem:[#allocation2 + $0x240] sm:$0xff]
    %v201 = vld [vmem:[#allocation2 + $0x248] sm:$0xff]
    %v202 = vld [vmem:[#allocation2 + $0x250] sm:$0xff]
    %v203 = vld [vmem:[#allocation2 + $0x258] sm:$0xff]
    %v204 = vld [vmem:[#allocation2 + $0x260] sm:$0xff]
    %v205 = vld [vmem:[#allocation2 + $0x268] sm:$0xff]
    %v206 = vld [vmem:[#allocation2 + $0x270] sm:$0xff]
    %v207 = vld [vmem:[#allocation2 + $0x278] sm:$0xff]
    %v208 = vld [vmem:[#allocation2 + $0x280] sm:$0xff]
    %v209 = vld [vmem:[#allocation2 + $0x288] sm:$0xff]
    %v210 = vld [vmem:[#allocation2 + $0x290] sm:$0xff]
    %v211 = vld [vmem:[#allocation2 + $0x298] sm:$0xff]
    %v212 = vld [vmem:[#allocation2 + $0x2a0] sm:$0xff]
    %v213 = vld [vmem:[#allocation2 + $0x2a8] sm:$0xff]
    %v214 = vld [vmem:[#allocation2 + $0x2b0] sm:$0xff]
    %v215 = vld [vmem:[#allocation2 + $0x2b8] sm:$0xff]
    %v216 = vld [vmem:[#allocation2 + $0x2c0] sm:$0xff]
    %v217 = vld [vmem:[#allocation2 + $0x2c8] sm:$0xff]
    %v218 = vld [vmem:[#allocation2 + $0x2d0] sm:$0xff]
    %v219 = vld [vmem:[#allocation2 + $0x2d8] sm:$0xff]
    %v220 = vld [vmem:[#allocation2 + $0x2e0] sm:$0xff]
    %v221 = vld [vmem:[#allocation2 + $0x2e8] sm:$0xff]
    %v222 = vld [vmem:[#allocation2 + $0x2f0] sm:$0xff]
    %v223 = vld [vmem:[#allocation2 + $0x2f8] sm:$0xff]
    %v224 = vld [vmem:[#allocation2 + $0x300] sm:$0xff]
    %v225 = vld [vmem:[#allocation2 + $0x308] sm:$0xff]
    %v226 = vld [vmem:[#allocation2 + $0x310] sm:$0xff]
    %v227 = vld [vmem:[#allocation2 + $0x318] sm:$0xff]
    %v228 = vld [vmem:[#allocation2 + $0x320] sm:$0xff]
    %v229 = vld [vmem:[#allocation2 + $0x328] sm:$0xff]
    %v230 = vld [vmem:[#allocation2 + $0x330] sm:$0xff]
    %v231 = vld [vmem:[#allocation2 + $0x338] sm:$0xff]
    %v232 = vld [vmem:[#allocation2 + $0x340] sm:$0xff]
    %v233 = vld [vmem:[#allocation2 + $0x348] sm:$0xff]
    %v234 = vld [vmem:[#allocation2 + $0x350] sm:$0xff]
    %v235 = vld [vmem:[#allocation2 + $0x358] sm:$0xff]
    %v236 = vld [vmem:[#allocation2 + $0x360] sm:$0xff]
    %v237 = vld [vmem:[#allocation2 + $0x368] sm:$0xff]
    %v238 = vld [vmem:[#allocation2 + $0x370] sm:$0xff]
    %v239 = vld [vmem:[#allocation2 + $0x378] sm:$0xff]
    %v240 = vld [vmem:[#allocation2 + $0x380] sm:$0xff]
    %v241 = vld [vmem:[#allocation2 + $0x388] sm:$0xff]
    %v242 = vld [vmem:[#allocation2 + $0x390] sm:$0xff]
    %v243 = vld [vmem:[#allocation2 + $0x398] sm:$0xff]
    %v244 = vld [vmem:[#allocation2 + $0x3a0] sm:$0xff]
    %v245 = vld [vmem:[#allocation2 + $0x3a8] sm:$0xff]
    %v246 = vld [vmem:[#allocation2 + $0x3b0] sm:$0xff]
    %v247 = vld [vmem:[#allocation2 + $0x3b8] sm:$0xff]
    %v248 = vld [vmem:[#allocation2 + $0x3c0] sm:$0xff]
    %v249 = vld [vmem:[#allocation2 + $0x3c8] sm:$0xff]
    %v250 = vld [vmem:[#allocation2 + $0x3d0] sm:$0xff]
    %v251 = vld [vmem:[#allocation2 + $0x3d8] sm:$0xff]
    %v252 = vld [vmem:[#allocation2 + $0x3e0] sm:$0xff]
    %v253 = vld [vmem:[#allocation2 + $0x3e8] sm:$0xff]
    %v254 = vld [vmem:[#allocation2 + $0x3f0] sm:$0xff]
    %v255 = vld [vmem:[#allocation2 + $0x3f8] sm:$0xff]
    %v256 = vld [vmem:[#allocation2 + $0x400] sm:$0xff]
    %v257 = vld [vmem:[#allocation2 + $0x408] sm:$0xff]
    %v258 = vld [vmem:[#allocation2 + $0x410] sm:$0xff]
    %v259 = vld [vmem:[#allocation2 + $0x418] sm:$0xff]
    %v260 = vld [vmem:[#allocation2 + $0x420] sm:$0xff]
    %v261 = vld [vmem:[#allocation2 + $0x428] sm:$0xff]
    %v262 = vld [vmem:[#allocation2 + $0x430] sm:$0xff]
    %v263 = vld [vmem:[#allocation2 + $0x438] sm:$0xff]
    %v264 = vld [vmem:[#allocation2 + $0x440] sm:$0xff]
    %v265 = vld [vmem:[#allocation2 + $0x448] sm:$0xff]
    %v266 = vld [vmem:[#allocation2 + $0x450] sm:$0xff]
    %v267 = vld [vmem:[#allocation2 + $0x458] sm:$0xff]
    %v268 = vld [vmem:[#allocation2 + $0x460] sm:$0xff]
    %v269 = vld [vmem:[#allocation2 + $0x468] sm:$0xff]
    %v270 = vld [vmem:[#allocation2 + $0x470] sm:$0xff]
    %v271 = vld [vmem:[#allocation2 + $0x478] sm:$0xff]
    %v272 = vld [vmem:[#allocation2 + $0x480] sm:$0xff]
    %v273 = vld [vmem:[#allocation2 + $0x488] sm:$0xff]
    %v274 = vld [vmem:[#allocation2 + $0x490] sm:$0xff]
    %v275 = vld [vmem:[#allocation2 + $0x498] sm:$0xff]
    %v276 = vld [vmem:[#allocation2 + $0x4a0] sm:$0xff]
    %v277 = vld [vmem:[#allocation2 + $0x4a8] sm:$0xff]
    %v278 = vld [vmem:[#allocation2 + $0x4b0] sm:$0xff]
    %v279 = vld [vmem:[#allocation2 + $0x4b8] sm:$0xff]
    %v280 = vld [vmem:[#allocation2 + $0x4c0] sm:$0xff]
    %v281 = vld [vmem:[#allocation2 + $0x4c8] sm:$0xff]
    %v282 = vld [vmem:[#allocation2 + $0x4d0] sm:$0xff]
    %v283 = vld [vmem:[#allocation2 + $0x4d8] sm:$0xff]
    %v284 = vld [vmem:[#allocation2 + $0x4e0] sm:$0xff]
    %v285 = vld [vmem:[#allocation2 + $0x4e8] sm:$0xff]
    %v286 = vld [vmem:[#allocation2 + $0x4f0] sm:$0xff]
    %v287 = vld [vmem:[#allocation2 + $0x4f8] sm:$0xff]
    %v288 = vld [vmem:[#allocation2 + $0x500] sm:$0xff]
    %v289 = vld [vmem:[#allocation2 + $0x508] sm:$0xff]
    %v290 = vld [vmem:[#allocation2 + $0x510] sm:$0xff]
    %v291 = vld [vmem:[#allocation2 + $0x518] sm:$0xff]
    %v292 = vld [vmem:[#allocation2 + $0x520] sm:$0xff]
    %v293 = vld [vmem:[#allocation2 + $0x528] sm:$0xff]
    %v294 = vld [vmem:[#allocation2 + $0x530] sm:$0xff]
    %v295 = vld [vmem:[#allocation2 + $0x538] sm:$0xff]
    %v296 = vld [vmem:[#allocation2 + $0x540] sm:$0xff]
    %v297 = vld [vmem:[#allocation2 + $0x548] sm:$0xff]
    %v298 = vld [vmem:[#allocation2 + $0x550] sm:$0xff]
    %v299 = vld [vmem:[#allocation2 + $0x558] sm:$0xff]
    %v300 = vld [vmem:[#allocation2 + $0x560] sm:$0xff]
    %v301 = vld [vmem:[#allocation2 + $0x568] sm:$0xff]
    %v302 = vld [vmem:[#allocation2 + $0x570] sm:$0xff]
    %v303 = vld [vmem:[#allocation2 + $0x578] sm:$0xff]
    %v304 = vld [vmem:[#allocation2 + $0x580] sm:$0xff]
    %v305 = vld [vmem:[#allocation2 + $0x588] sm:$0xff]
    %v306 = vld [vmem:[#allocation2 + $0x590] sm:$0xff]
    %v307 = vld [vmem:[#allocation2 + $0x598] sm:$0xff]
    %v308 = vld [vmem:[#allocation2 + $0x5a0] sm:$0xff]
    %v309 = vld [vmem:[#allocation2 + $0x5a8] sm:$0xff]
    %v310 = vld [vmem:[#allocation2 + $0x5b0] sm:$0xff]
    %v311 = vld [vmem:[#allocation2 + $0x5b8] sm:$0xff]
    %v312 = vld [vmem:[#allocation2 + $0x5c0] sm:$0xff]
    %v313 = vld [vmem:[#allocation2 + $0x5c8] sm:$0xff]
    %v314 = vld [vmem:[#allocation2 + $0x5d0] sm:$0xff]
    %v315 = vld [vmem:[#allocation2 + $0x5d8] sm:$0xff]
    %v316 = vld [vmem:[#allocation2 + $0x5e0] sm:$0xff]
    %v317 = vld [vmem:[#allocation2 + $0x5e8] sm:$0xff]
    %v318 = vld [vmem:[#allocation2 + $0x5f0] sm:$0xff]
    %v319 = vld [vmem:[#allocation2 + $0x5f8] sm:$0xff]
    %v320 = vld [vmem:[#allocation2 + $0x600] sm:$0xff]
    %v321 = vld [vmem:[#allocation2 + $0x608] sm:$0xff]
    %v322 = vld [vmem:[#allocation2 + $0x610] sm:$0xff]
    %v323 = vld [vmem:[#allocation2 + $0x618] sm:$0xff]
    %v324 = vld [vmem:[#allocation2 + $0x620] sm:$0xff]
    %v325 = vld [vmem:[#allocation2 + $0x628] sm:$0xff]
    %v326 = vld [vmem:[#allocation2 + $0x630] sm:$0xff]
    %v327 = vld [vmem:[#allocation2 + $0x638] sm:$0xff]
    %v328 = vld [vmem:[#allocation2 + $0x640] sm:$0xff]
    %v329 = vld [vmem:[#allocation2 + $0x648] sm:$0xff]
    %v330 = vld [vmem:[#allocation2 + $0x650] sm:$0xff]
    %v331 = vld [vmem:[#allocation2 + $0x658] sm:$0xff]
    %v332 = vld [vmem:[#allocation2 + $0x660] sm:$0xff]
    %v333 = vld [vmem:[#allocation2 + $0x668] sm:$0xff]
    %v334 = vld [vmem:[#allocation2 + $0x670] sm:$0xff]
    %v335 = vld [vmem:[#allocation2 + $0x678] sm:$0xff]
    %v336 = vld [vmem:[#allocation2 + $0x680] sm:$0xff]
    %v337 = vld [vmem:[#allocation2 + $0x688] sm:$0xff]
    %v338 = vld [vmem:[#allocation2 + $0x690] sm:$0xff]
    %v339 = vld [vmem:[#allocation2 + $0x698] sm:$0xff]
    %v340 = vld [vmem:[#allocation2 + $0x6a0] sm:$0xff]
    %v341 = vld [vmem:[#allocation2 + $0x6a8] sm:$0xff]
    %v342 = vld [vmem:[#allocation2 + $0x6b0] sm:$0xff]
    %v343 = vld [vmem:[#allocation2 + $0x6b8] sm:$0xff]
    %v344 = vld [vmem:[#allocation2 + $0x6c0] sm:$0xff]
    %v345 = vld [vmem:[#allocation2 + $0x6c8] sm:$0xff]
    %v346 = vld [vmem:[#allocation2 + $0x6d0] sm:$0xff]
    %v347 = vld [vmem:[#allocation2 + $0x6d8] sm:$0xff]
    %v348 = vld [vmem:[#allocation2 + $0x6e0] sm:$0xff]
    %v349 = vld [vmem:[#allocation2 + $0x6e8] sm:$0xff]
    %v350 = vld [vmem:[#allocation2 + $0x6f0] sm:$0xff]
    %v351 = vld [vmem:[#allocation2 + $0x6f8] sm:$0xff]
    %v352 = vld [vmem:[#allocation2 + $0x700] sm:$0xff]
    %v353 = vld [vmem:[#allocation2 + $0x708] sm:$0xff]
    %v354 = vld [vmem:[#allocation2 + $0x710] sm:$0xff]
    %v355 = vld [vmem:[#allocation2 + $0x718] sm:$0xff]
    %v356 = vld [vmem:[#allocation2 + $0x720] sm:$0xff]
    %v357 = vld [vmem:[#allocation2 + $0x728] sm:$0xff]
    %v358 = vld [vmem:[#allocation2 + $0x730] sm:$0xff]
    %v359 = vld [vmem:[#allocation2 + $0x738] sm:$0xff]
    %v360 = vld [vmem:[#allocation2 + $0x740] sm:$0xff]
    %v361 = vld [vmem:[#allocation2 + $0x748] sm:$0xff]
    %v362 = vld [vmem:[#allocation2 + $0x750] sm:$0xff]
    %v363 = vld [vmem:[#allocation2 + $0x758] sm:$0xff]
    %v364 = vld [vmem:[#allocation2 + $0x760] sm:$0xff]
    %v365 = vld [vmem:[#allocation2 + $0x768] sm:$0xff]
    %v366 = vld [vmem:[#allocation2 + $0x770] sm:$0xff]
    %v367 = vld [vmem:[#allocation2 + $0x778] sm:$0xff]
    %v368 = vld [vmem:[#allocation2 + $0x780] sm:$0xff]
    %v369 = vld [vmem:[#allocation2 + $0x788] sm:$0xff]
    %v370 = vld [vmem:[#allocation2 + $0x790] sm:$0xff]
    %v371 = vld [vmem:[#allocation2 + $0x798] sm:$0xff]
    %v372 = vld [vmem:[#allocation2 + $0x7a0] sm:$0xff]
    %v373 = vld [vmem:[#allocation2 + $0x7a8] sm:$0xff]
    %v374 = vld [vmem:[#allocation2 + $0x7b0] sm:$0xff]
    %v375 = vld [vmem:[#allocation2 + $0x7b8] sm:$0xff]
    %v376 = vld [vmem:[#allocation2 + $0x7c0] sm:$0xff]
    %v377 = vld [vmem:[#allocation2 + $0x7c8] sm:$0xff]
    %v378 = vld [vmem:[#allocation2 + $0x7d0] sm:$0xff]
    %v379 = vld [vmem:[#allocation2 + $0x7d8] sm:$0xff]
    %v380 = vld [vmem:[#allocation2 + $0x7e0] sm:$0xff]
    %v381 = vld [vmem:[#allocation2 + $0x7e8] sm:$0xff]
    %v382 = vld [vmem:[#allocation2 + $0x7f0] sm:$0xff]
    %v383 = vld [vmem:[#allocation2 + $0x7f8] sm:$0xff]
    %v384 = vld [vmem:[#allocation2 + $0x800] sm:$0xff]
    %v385 = vld [vmem:[#allocation2 + $0x808] sm:$0xff]
    %v386 = vld [vmem:[#allocation2 + $0x810] sm:$0xff]
    %v387 = vld [vmem:[#allocation2 + $0x818] sm:$0xff]
    %v388 = vld [vmem:[#allocation2 + $0x820] sm:$0xff]
    %v389 = vld [vmem:[#allocation2 + $0x828] sm:$0xff]
    %v390 = vld [vmem:[#allocation2 + $0x830] sm:$0xff]
    %v391 = vld [vmem:[#allocation2 + $0x838] sm:$0xff]
    %v392 = vld [vmem:[#allocation2 + $0x840] sm:$0xff]
    %v393 = vld [vmem:[#allocation2 + $0x848] sm:$0xff]
    %v394 = vld [vmem:[#allocation2 + $0x850] sm:$0xff]
    %v395 = vld [vmem:[#allocation2 + $0x858] sm:$0xff]
    %v396 = vld [vmem:[#allocation2 + $0x860] sm:$0xff]
    %v397 = vld [vmem:[#allocation2 + $0x868] sm:$0xff]
    %v398 = vld [vmem:[#allocation2 + $0x870] sm:$0xff]
    %v399 = vld [vmem:[#allocation2 + $0x878] sm:$0xff]
    %v400 = vld [vmem:[#allocation2 + $0x880] sm:$0xff]
    %v401 = vld [vmem:[#allocation2 + $0x888] sm:$0xff]
    %v402 = vld [vmem:[#allocation2 + $0x890] sm:$0xff]
    %v403 = vld [vmem:[#allocation2 + $0x898] sm:$0xff]
    %v404 = vld [vmem:[#allocation2 + $0x8a0] sm:$0xff]
    %v405 = vld [vmem:[#allocation2 + $0x8a8] sm:$0xff]
    %v406 = vld [vmem:[#allocation2 + $0x8b0] sm:$0xff]
    %v407 = vld [vmem:[#allocation2 + $0x8b8] sm:$0xff]
    %v408 = vld [vmem:[#allocation2 + $0x8c0] sm:$0xff]
    %v409 = vld [vmem:[#allocation2 + $0x8c8] sm:$0xff]
    %v410 = vld [vmem:[#allocation2 + $0x8d0] sm:$0xff]
    %v411 = vld [vmem:[#allocation2 + $0x8d8] sm:$0xff]
    %v412 = vld [vmem:[#allocation2 + $0x8e0] sm:$0xff]
    %v413 = vld [vmem:[#allocation2 + $0x8e8] sm:$0xff]
    %v414 = vld [vmem:[#allocation2 + $0x8f0] sm:$0xff]
    %v415 = vld [vmem:[#allocation2 + $0x8f8] sm:$0xff]
    %v416 = vld [vmem:[#allocation2 + $0x900] sm:$0xff]
    %v417 = vld [vmem:[#allocation2 + $0x908] sm:$0xff]
    %v418 = vld [vmem:[#allocation2 + $0x910] sm:$0xff]
    %v419 = vld [vmem:[#allocation2 + $0x918] sm:$0xff]
    %v420 = vld [vmem:[#allocation2 + $0x920] sm:$0xff]
    %v421 = vld [vmem:[#allocation2 + $0x928] sm:$0xff]
    %v422 = vld [vmem:[#allocation2 + $0x930] sm:$0xff]
    %v423 = vld [vmem:[#allocation2 + $0x938] sm:$0xff]
    %v424 = vld [vmem:[#allocation2 + $0x940] sm:$0xff]
    %v425 = vld [vmem:[#allocation2 + $0x948] sm:$0xff]
    %v426 = vld [vmem:[#allocation2 + $0x950] sm:$0xff]
    %v427 = vld [vmem:[#allocation2 + $0x958] sm:$0xff]
    %v428 = vld [vmem:[#allocation2 + $0x960] sm:$0xff]
    %v429 = vld [vmem:[#allocation2 + $0x968] sm:$0xff]
    %v430 = vld [vmem:[#allocation2 + $0x970] sm:$0xff]
    %v431 = vld [vmem:[#allocation2 + $0x978] sm:$0xff]
    %v432 = vld [vmem:[#allocation2 + $0x980] sm:$0xff]
    %v433 = vld [vmem:[#allocation2 + $0x988] sm:$0xff]
    %v434 = vld [vmem:[#allocation2 + $0x990] sm:$0xff]
    %v435 = vld [vmem:[#allocation2 + $0x998] sm:$0xff]
    %v436 = vld [vmem:[#allocation2 + $0x9a0] sm:$0xff]
    %v437 = vld [vmem:[#allocation2 + $0x9a8] sm:$0xff]
    %v438 = vld [vmem:[#allocation2 + $0x9b0] sm:$0xff]
    %v439 = vld [vmem:[#allocation2 + $0x9b8] sm:$0xff]
    %v440 = vld [vmem:[#allocation2 + $0x9c0] sm:$0xff]
    %v441 = vld [vmem:[#allocation2 + $0x9c8] sm:$0xff]
    %v442 = vld [vmem:[#allocation2 + $0x9d0] sm:$0xff]
    %v443 = vld [vmem:[#allocation2 + $0x9d8] sm:$0xff]
    %v444 = vld [vmem:[#allocation2 + $0x9e0] sm:$0xff]
    %v445 = vld [vmem:[#allocation2 + $0x9e8] sm:$0xff]
    %v446 = vld [vmem:[#allocation2 + $0x9f0] sm:$0xff]
    %v447 = vld [vmem:[#allocation2 + $0x9f8] sm:$0xff]
    %v448 = vld [vmem:[#allocation2 + $0xa00] sm:$0xff]
    %v449 = vld [vmem:[#allocation2 + $0xa08] sm:$0xff]
    %v450 = vld [vmem:[#allocation2 + $0xa10] sm:$0xff]
    %v451 = vld [vmem:[#allocation2 + $0xa18] sm:$0xff]
    %v452 = vld [vmem:[#allocation2 + $0xa20] sm:$0xff]
    %v453 = vld [vmem:[#allocation2 + $0xa28] sm:$0xff]
    %v454 = vld [vmem:[#allocation2 + $0xa30] sm:$0xff]
    %v455 = vld [vmem:[#allocation2 + $0xa38] sm:$0xff]
    %v456 = vld [vmem:[#allocation2 + $0xa40] sm:$0xff]
    %v457 = vld [vmem:[#allocation2 + $0xa48] sm:$0xff]
    %v458 = vld [vmem:[#allocation2 + $0xa50] sm:$0xff]
    %v459 = vld [vmem:[#allocation2 + $0xa58] sm:$0xff]
    %v460 = vld [vmem:[#allocation2 + $0xa60] sm:$0xff]
    %v461 = vld [vmem:[#allocation2 + $0xa68] sm:$0xff]
    %v462 = vld [vmem:[#allocation2 + $0xa70] sm:$0xff]
    %v463 = vld [vmem:[#allocation2 + $0xa78] sm:$0xff]
    %v464 = vld [vmem:[#allocation2 + $0xa80] sm:$0xff]
    %v465 = vld [vmem:[#allocation2 + $0xa88] sm:$0xff]
    %v466 = vld [vmem:[#allocation2 + $0xa90] sm:$0xff]
    %v467 = vld [vmem:[#allocation2 + $0xa98] sm:$0xff]
    %v468 = vld [vmem:[#allocation2 + $0xaa0] sm:$0xff]
    %v469 = vld [vmem:[#allocation2 + $0xaa8] sm:$0xff]
    %v470 = vld [vmem:[#allocation2 + $0xab0] sm:$0xff]
    %v471 = vld [vmem:[#allocation2 + $0xab8] sm:$0xff]
    %v472 = vld [vmem:[#allocation2 + $0xac0] sm:$0xff]
    %v473 = vld [vmem:[#allocation2 + $0xac8] sm:$0xff]
    %v474 = vld [vmem:[#allocation2 + $0xad0] sm:$0xff]
    %v475 = vld [vmem:[#allocation2 + $0xad8] sm:$0xff]
    %v476 = vld [vmem:[#allocation2 + $0xae0] sm:$0xff]
    %v477 = vld [vmem:[#allocation2 + $0xae8] sm:$0xff]
    %v478 = vld [vmem:[#allocation2 + $0xaf0] sm:$0xff]
    %v479 = vld [vmem:[#allocation2 + $0xaf8] sm:$0xff]
    %v480 = vld [vmem:[#allocation2 + $0xb00] sm:$0xff]
    %v481 = vld [vmem:[#allocation2 + $0xb08] sm:$0xff]
    %v482 = vld [vmem:[#allocation2 + $0xb10] sm:$0xff]
    %v483 = vld [vmem:[#allocation2 + $0xb18] sm:$0xff]
    %v484 = vld [vmem:[#allocation2 + $0xb20] sm:$0xff]
    %v485 = vld [vmem:[#allocation2 + $0xb28] sm:$0xff]
    %v486 = vld [vmem:[#allocation2 + $0xb30] sm:$0xff]
    %v487 = vld [vmem:[#allocation2 + $0xb38] sm:$0xff]
    %v488 = vld [vmem:[#allocation2 + $0xb40] sm:$0xff]
    %v489 = vld [vmem:[#allocation2 + $0xb48] sm:$0xff]
    %v490 = vld [vmem:[#allocation2 + $0xb50] sm:$0xff]
    %v491 = vld [vmem:[#allocation2 + $0xb58] sm:$0xff]
    %v492 = vld [vmem:[#allocation2 + $0xb60] sm:$0xff]
    %v493 = vld [vmem:[#allocation2 + $0xb68] sm:$0xff]
    %v494 = vld [vmem:[#allocation2 + $0xb70] sm:$0xff]
    %v495 = vld [vmem:[#allocation2 + $0xb78] sm:$0xff]
    %v496 = vld [vmem:[#allocation2 + $0xb80] sm:$0xff]
    %v497 = vld [vmem:[#allocation2 + $0xb88] sm:$0xff]
    %v498 = vld [vmem:[#allocation2 + $0xb90] sm:$0xff]
    %v499 = vld [vmem:[#allocation2 + $0xb98] sm:$0xff]
    %v500 = vld [vmem:[#allocation2 + $0xba0] sm:$0xff]
    %v501 = vld [vmem:[#allocation2 + $0xba8] sm:$0xff]
    %v502 = vld [vmem:[#allocation2 + $0xbb0] sm:$0xff]
    %v503 = vld [vmem:[#allocation2 + $0xbb8] sm:$0xff]
    %v504 = vld [vmem:[#allocation2 + $0xbc0] sm:$0xff]
    %v505 = vld [vmem:[#allocation2 + $0xbc8] sm:$0xff]
    %v506 = vld [vmem:[#allocation2 + $0xbd0] sm:$0xff]
    %v507 = vld [vmem:[#allocation2 + $0xbd8] sm:$0xff]
    %v508 = vld [vmem:[#allocation2 + $0xbe0] sm:$0xff]
    %v509 = vld [vmem:[#allocation2 + $0xbe8] sm:$0xff]
    %v510 = vld [vmem:[#allocation2 + $0xbf0] sm:$0xff]
    %v511 = vld [vmem:[#allocation2 + $0xbf8] sm:$0xff]
    %v512 = vld [vmem:[#allocation2 + $0xc00] sm:$0xff]
    %v513 = vld [vmem:[#allocation2 + $0xc08] sm:$0xff]
    %v514 = vld [vmem:[#allocation2 + $0xc10] sm:$0xff]
    %v515 = vld [vmem:[#allocation2 + $0xc18] sm:$0xff]
    %v516 = vld [vmem:[#allocation2 + $0xc20] sm:$0xff]
    %v517 = vld [vmem:[#allocation2 + $0xc28] sm:$0xff]
    %v518 = vld [vmem:[#allocation2 + $0xc30] sm:$0xff]
    %v519 = vld [vmem:[#allocation2 + $0xc38] sm:$0xff]
    %v520 = vld [vmem:[#allocation2 + $0xc40] sm:$0xff]
    %v521 = vld [vmem:[#allocation2 + $0xc48] sm:$0xff]
    %v522 = vld [vmem:[#allocation2 + $0xc50] sm:$0xff]
    %v523 = vld [vmem:[#allocation2 + $0xc58] sm:$0xff]
    %v524 = vld [vmem:[#allocation2 + $0xc60] sm:$0xff]
    %v525 = vld [vmem:[#allocation2 + $0xc68] sm:$0xff]
    %v526 = vld [vmem:[#allocation2 + $0xc70] sm:$0xff]
    %v527 = vld [vmem:[#allocation2 + $0xc78] sm:$0xff]
    %v528 = vld [vmem:[#allocation2 + $0xc80] sm:$0xff]
    %v529 = vld [vmem:[#allocation2 + $0xc88] sm:$0xff]
    %v530 = vld [vmem:[#allocation2 + $0xc90] sm:$0xff]
    %v531 = vld [vmem:[#allocation2 + $0xc98] sm:$0xff]
    %v532 = vld [vmem:[#allocation2 + $0xca0] sm:$0xff]
    %v533 = vld [vmem:[#allocation2 + $0xca8] sm:$0xff]
    %v534 = vld [vmem:[#allocation2 + $0xcb0] sm:$0xff]
    %v535 = vld [vmem:[#allocation2 + $0xcb8] sm:$0xff]
    %v536 = vld [vmem:[#allocation2 + $0xcc0] sm:$0xff]
    %v537 = vld [vmem:[#allocation2 + $0xcc8] sm:$0xff]
    %v538 = vld [vmem:[#allocation2 + $0xcd0] sm:$0xff]
    %v539 = vld [vmem:[#allocation2 + $0xcd8] sm:$0xff]
    %v540 = vld [vmem:[#allocation2 + $0xce0] sm:$0xff]
    %v541 = vld [vmem:[#allocation2 + $0xce8] sm:$0xff]
    %v542 = vld [vmem:[#allocation2 + $0xcf0] sm:$0xff]
    %v543 = vld [vmem:[#allocation2 + $0xcf8] sm:$0xff]
    %v544 = vld [vmem:[#allocation2 + $0xd00] sm:$0xff]
    %v545 = vld [vmem:[#allocation2 + $0xd08] sm:$0xff]
    %v546 = vld [vmem:[#allocation2 + $0xd10] sm:$0xff]
    %v547 = vld [vmem:[#allocation2 + $0xd18] sm:$0xff]
    %v548 = vld [vmem:[#allocation2 + $0xd20] sm:$0xff]
    %v549 = vld [vmem:[#allocation2 + $0xd28] sm:$0xff]
    %v550 = vld [vmem:[#allocation2 + $0xd30] sm:$0xff]
    %v551 = vld [vmem:[#allocation2 + $0xd38] sm:$0xff]
    %v552 = vld [vmem:[#allocation2 + $0xd40] sm:$0xff]
    %v553 = vld [vmem:[#allocation2 + $0xd48] sm:$0xff]
    %v554 = vld [vmem:[#allocation2 + $0xd50] sm:$0xff]
    %v555 = vld [vmem:[#allocation2 + $0xd58] sm:$0xff]
    %v556 = vld [vmem:[#allocation2 + $0xd60] sm:$0xff]
    %v557 = vld [vmem:[#allocation2 + $0xd68] sm:$0xff]
    %v558 = vld [vmem:[#allocation2 + $0xd70] sm:$0xff]
    %v559 = vld [vmem:[#allocation2 + $0xd78] sm:$0xff]
    %v560 = vld [vmem:[#allocation2 + $0xd80] sm:$0xff]
    %v561 = vld [vmem:[#allocation2 + $0xd88] sm:$0xff]
    %v562 = vld [vmem:[#allocation2 + $0xd90] sm:$0xff]
    %v563 = vld [vmem:[#allocation2 + $0xd98] sm:$0xff]
    %v564 = vld [vmem:[#allocation2 + $0xda0] sm:$0xff]
    %v565 = vld [vmem:[#allocation2 + $0xda8] sm:$0xff]
    %v566 = vld [vmem:[#allocation2 + $0xdb0] sm:$0xff]
    %v567 = vld [vmem:[#allocation2 + $0xdb8] sm:$0xff]
    %v568 = vld [vmem:[#allocation2 + $0xdc0] sm:$0xff]
    %v569 = vld [vmem:[#allocation2 + $0xdc8] sm:$0xff]
    %v570 = vld [vmem:[#allocation2 + $0xdd0] sm:$0xff]
    %v571 = vld [vmem:[#allocation2 + $0xdd8] sm:$0xff]
    %v572 = vld [vmem:[#allocation2 + $0xde0] sm:$0xff]
    %v573 = vld [vmem:[#allocation2 + $0xde8] sm:$0xff]
    %v574 = vld [vmem:[#allocation2 + $0xdf0] sm:$0xff]
    %v575 = vld [vmem:[#allocation2 + $0xdf8] sm:$0xff]
    %v576 = vld [vmem:[#allocation2 + $0xe00] sm:$0xff]
    %v577 = vld [vmem:[#allocation2 + $0xe08] sm:$0xff]
    %v578 = vld [vmem:[#allocation2 + $0xe10] sm:$0xff]
    %v579 = vld [vmem:[#allocation2 + $0xe18] sm:$0xff]
    %v580 = vld [vmem:[#allocation2 + $0xe20] sm:$0xff]
    %v581 = vld [vmem:[#allocation2 + $0xe28] sm:$0xff]
    %v582 = vld [vmem:[#allocation2 + $0xe30] sm:$0xff]
    %v583 = vld [vmem:[#allocation2 + $0xe38] sm:$0xff]
    %v584 = vld [vmem:[#allocation2 + $0xe40] sm:$0xff]
    %v585 = vld [vmem:[#allocation2 + $0xe48] sm:$0xff]
    %v586 = vld [vmem:[#allocation2 + $0xe50] sm:$0xff]
    %v587 = vld [vmem:[#allocation2 + $0xe58] sm:$0xff]
    %v588 = vld [vmem:[#allocation2 + $0xe60] sm:$0xff]
    %v589 = vld [vmem:[#allocation2 + $0xe68] sm:$0xff]
    %v590 = vld [vmem:[#allocation2 + $0xe70] sm:$0xff]
    %v591 = vld [vmem:[#allocation2 + $0xe78] sm:$0xff]
    %v592 = vld [vmem:[#allocation2 + $0xe80] sm:$0xff]
    %v593 = vld [vmem:[#allocation2 + $0xe88] sm:$0xff]
    %v594 = vld [vmem:[#allocation2 + $0xe90] sm:$0xff]
    %v595 = vld [vmem:[#allocation2 + $0xe98] sm:$0xff]
    %v596 = vld [vmem:[#allocation2 + $0xea0] sm:$0xff]
    %v597 = vld [vmem:[#allocation2 + $0xea8] sm:$0xff]
    %v598 = vld [vmem:[#allocation2 + $0xeb0] sm:$0xff]
    %v599 = vld [vmem:[#allocation2 + $0xeb8] sm:$0xff]
    %v600 = vld [vmem:[#allocation2 + $0xec0] sm:$0xff]
    %v601 = vld [vmem:[#allocation2 + $0xec8] sm:$0xff]
    %v602 = vld [vmem:[#allocation2 + $0xed0] sm:$0xff]
    %v603 = vld [vmem:[#allocation2 + $0xed8] sm:$0xff]
    %v604 = vld [vmem:[#allocation2 + $0xee0] sm:$0xff]
    %v605 = vld [vmem:[#allocation2 + $0xee8] sm:$0xff]
    %v606 = vld [vmem:[#allocation2 + $0xef0] sm:$0xff]
    %v607 = vld [vmem:[#allocation2 + $0xef8] sm:$0xff]
    %v608 = vld [vmem:[#allocation2 + $0xf00] sm:$0xff]
    %v609 = vld [vmem:[#allocation2 + $0xf08] sm:$0xff]
    %v610 = vld [vmem:[#allocation2 + $0xf10] sm:$0xff]
    %v611 = vld [vmem:[#allocation2 + $0xf18] sm:$0xff]
    %v612 = vld [vmem:[#allocation2 + $0xf20] sm:$0xff]
    %v613 = vld [vmem:[#allocation2 + $0xf28] sm:$0xff]
    %v614 = vld [vmem:[#allocation2 + $0xf30] sm:$0xff]
    %v615 = vld [vmem:[#allocation2 + $0xf38] sm:$0xff]
    %v616 = vld [vmem:[#allocation2 + $0xf40] sm:$0xff]
    %v617 = vld [vmem:[#allocation2 + $0xf48] sm:$0xff]
    %v618 = vld [vmem:[#allocation2 + $0xf50] sm:$0xff]
    %v619 = vld [vmem:[#allocation2 + $0xf58] sm:$0xff]
    %v620 = vld [vmem:[#allocation2 + $0xf60] sm:$0xff]
    %v621 = vld [vmem:[#allocation2 + $0xf68] sm:$0xff]
    %v622 = vld [vmem:[#allocation2 + $0xf70] sm:$0xff]
    %v623 = vld [vmem:[#allocation2 + $0xf78] sm:$0xff]
    %v624 = vld [vmem:[#allocation2 + $0xf80] sm:$0xff]
    %v625 = vld [vmem:[#allocation2 + $0xf88] sm:$0xff]
    %v626 = vld [vmem:[#allocation2 + $0xf90] sm:$0xff]
    %v627 = vld [vmem:[#allocation2 + $0xf98] sm:$0xff]
    %v628 = vld [vmem:[#allocation2 + $0xfa0] sm:$0xff]
    %v629 = vld [vmem:[#allocation2 + $0xfa8] sm:$0xff]
    %v630 = vld [vmem:[#allocation2 + $0xfb0] sm:$0xff]
    %v631 = vld [vmem:[#allocation2 + $0xfb8] sm:$0xff]
    %v632 = vld [vmem:[#allocation2 + $0xfc0] sm:$0xff]
    %v633 = vld [vmem:[#allocation2 + $0xfc8] sm:$0xff]
    %v634 = vld [vmem:[#allocation2 + $0xfd0] sm:$0xff]
    %v635 = vld [vmem:[#allocation2 + $0xfd8] sm:$0xff]
    %v636 = vld [vmem:[#allocation2 + $0xfe0] sm:$0xff]
    %v637 = vld [vmem:[#allocation2 + $0xfe8] sm:$0xff]
    %v638 = vld [vmem:[#allocation2 + $0xff0] sm:$0xff]
    %v639 = vld [vmem:[#allocation2 + $0xff8] sm:$0xff]
    %v640 = vld [vmem:[#allocation2 + $0x1000] sm:$0xff]
    %v641 = vld [vmem:[#allocation2 + $0x1008] sm:$0xff]
    %v642 = vld [vmem:[#allocation2 + $0x1010] sm:$0xff]
    %v643 = vld [vmem:[#allocation2 + $0x1018] sm:$0xff]
    %v644 = vld [vmem:[#allocation2 + $0x1020] sm:$0xff]
    %v645 = vld [vmem:[#allocation2 + $0x1028] sm:$0xff]
    %v646 = vld [vmem:[#allocation2 + $0x1030] sm:$0xff]
    %v647 = vld [vmem:[#allocation2 + $0x1038] sm:$0xff]
    %v648 = vld [vmem:[#allocation2 + $0x1040] sm:$0xff]
    %v649 = vld [vmem:[#allocation2 + $0x1048] sm:$0xff]
    %v650 = vld [vmem:[#allocation2 + $0x1050] sm:$0xff]
    %v651 = vld [vmem:[#allocation2 + $0x1058] sm:$0xff]
    %v652 = vld [vmem:[#allocation2 + $0x1060] sm:$0xff]
    %v653 = vld [vmem:[#allocation2 + $0x1068] sm:$0xff]
    %v654 = vld [vmem:[#allocation2 + $0x1070] sm:$0xff]
    %v655 = vld [vmem:[#allocation2 + $0x1078] sm:$0xff]
    %v656 = vld [vmem:[#allocation2 + $0x1080] sm:$0xff]
    %v657 = vld [vmem:[#allocation2 + $0x1088] sm:$0xff]
    %v658 = vld [vmem:[#allocation2 + $0x1090] sm:$0xff]
    %v659 = vld [vmem:[#allocation2 + $0x1098] sm:$0xff]
    %v660 = vld [vmem:[#allocation2 + $0x10a0] sm:$0xff]
    %v661 = vld [vmem:[#allocation2 + $0x10a8] sm:$0xff]
    %v662 = vld [vmem:[#allocation2 + $0x10b0] sm:$0xff]
    %v663 = vld [vmem:[#allocation2 + $0x10b8] sm:$0xff]
    %v664 = vld [vmem:[#allocation2 + $0x10c0] sm:$0xff]
    %v665 = vld [vmem:[#allocation2 + $0x10c8] sm:$0xff]
    %v666 = vld [vmem:[#allocation2 + $0x10d0] sm:$0xff]
    %v667 = vld [vmem:[#allocation2 + $0x10d8] sm:$0xff]
    %v668 = vld [vmem:[#allocation2 + $0x10e0] sm:$0xff]
    %v669 = vld [vmem:[#allocation2 + $0x10e8] sm:$0xff]
    %v670 = vld [vmem:[#allocation2 + $0x10f0] sm:$0xff]
    %v671 = vld [vmem:[#allocation2 + $0x10f8] sm:$0xff]
    %v672 = vld [vmem:[#allocation2 + $0x1100] sm:$0xff]
    %v673 = vld [vmem:[#allocation2 + $0x1108] sm:$0xff]
    %v674 = vld [vmem:[#allocation2 + $0x1110] sm:$0xff]
    %v675 = vld [vmem:[#allocation2 + $0x1118] sm:$0xff]
    %v676 = vld [vmem:[#allocation2 + $0x1120] sm:$0xff]
    %v677 = vld [vmem:[#allocation2 + $0x1128] sm:$0xff]
    %v678 = vld [vmem:[#allocation2 + $0x1130] sm:$0xff]
    %v679 = vld [vmem:[#allocation2 + $0x1138] sm:$0xff]
    %v680 = vld [vmem:[#allocation2 + $0x1140] sm:$0xff]
    %v681 = vld [vmem:[#allocation2 + $0x1148] sm:$0xff]
    %v682 = vld [vmem:[#allocation2 + $0x1150] sm:$0xff]
    %v683 = vld [vmem:[#allocation2 + $0x1158] sm:$0xff]
    %v684 = vld [vmem:[#allocation2 + $0x1160] sm:$0xff]
    %v685 = vld [vmem:[#allocation2 + $0x1168] sm:$0xff]
    %v686 = vld [vmem:[#allocation2 + $0x1170] sm:$0xff]
    %v687 = vld [vmem:[#allocation2 + $0x1178] sm:$0xff]
    %v688 = vld [vmem:[#allocation2 + $0x1180] sm:$0xff]
    %v689 = vld [vmem:[#allocation2 + $0x1188] sm:$0xff]
    %v690 = vld [vmem:[#allocation2 + $0x1190] sm:$0xff]
    %v691 = vld [vmem:[#allocation2 + $0x1198] sm:$0xff]
    %v692 = vld [vmem:[#allocation2 + $0x11a0] sm:$0xff]
    %v693 = vld [vmem:[#allocation2 + $0x11a8] sm:$0xff]
    %v694 = vld [vmem:[#allocation2 + $0x11b0] sm:$0xff]
    %v695 = vld [vmem:[#allocation2 + $0x11b8] sm:$0xff]
    %v696 = vld [vmem:[#allocation2 + $0x11c0] sm:$0xff]
    %v697 = vld [vmem:[#allocation2 + $0x11c8] sm:$0xff]
    %v698 = vld [vmem:[#allocation2 + $0x11d0] sm:$0xff]
    %v699 = vld [vmem:[#allocation2 + $0x11d8] sm:$0xff]
    %v700 = vld [vmem:[#allocation2 + $0x11e0] sm:$0xff]
    %v701 = vld [vmem:[#allocation2 + $0x11e8] sm:$0xff]
    %v702 = vld [vmem:[#allocation2 + $0x11f0] sm:$0xff]
    %v703 = vld [vmem:[#allocation2 + $0x11f8] sm:$0xff]
    %v704 = vld [vmem:[#allocation2 + $0x1200] sm:$0xff]
    %v705 = vld [vmem:[#allocation2 + $0x1208] sm:$0xff]
    %v706 = vld [vmem:[#allocation2 + $0x1210] sm:$0xff]
    %v707 = vld [vmem:[#allocation2 + $0x1218] sm:$0xff]
    %v708 = vld [vmem:[#allocation2 + $0x1220] sm:$0xff]
    %v709 = vld [vmem:[#allocation2 + $0x1228] sm:$0xff]
    %v710 = vld [vmem:[#allocation2 + $0x1230] sm:$0xff]
    %v711 = vld [vmem:[#allocation2 + $0x1238] sm:$0xff]
    %v712 = vld [vmem:[#allocation2 + $0x1240] sm:$0xff]
    %v713 = vld [vmem:[#allocation2 + $0x1248] sm:$0xff]
    %v714 = vld [vmem:[#allocation2 + $0x1250] sm:$0xff]
    %v715 = vld [vmem:[#allocation2 + $0x1258] sm:$0xff]
    %v716 = vld [vmem:[#allocation2 + $0x1260] sm:$0xff]
    %v717 = vld [vmem:[#allocation2 + $0x1268] sm:$0xff]
    %v718 = vld [vmem:[#allocation2 + $0x1270] sm:$0xff]
    %v719 = vld [vmem:[#allocation2 + $0x1278] sm:$0xff]
    %v720 = vld [vmem:[#allocation2 + $0x1280] sm:$0xff]
    %v721 = vld [vmem:[#allocation2 + $0x1288] sm:$0xff]
    %v722 = vld [vmem:[#allocation2 + $0x1290] sm:$0xff]
    %v723 = vld [vmem:[#allocation2 + $0x1298] sm:$0xff]
    %v724 = vld [vmem:[#allocation2 + $0x12a0] sm:$0xff]
    %v725 = vld [vmem:[#allocation2 + $0x12a8] sm:$0xff]
    %v726 = vld [vmem:[#allocation2 + $0x12b0] sm:$0xff]
    %v727 = vld [vmem:[#allocation2 + $0x12b8] sm:$0xff]
    %v728 = vld [vmem:[#allocation2 + $0x12c0] sm:$0xff]
    %v729 = vld [vmem:[#allocation2 + $0x12c8] sm:$0xff]
    %v730 = vld [vmem:[#allocation2 + $0x12d0] sm:$0xff]
    %v731 = vld [vmem:[#allocation2 + $0x12d8] sm:$0xff]
    %v732 = vld [vmem:[#allocation2 + $0x12e0] sm:$0xff]
    %v733 = vld [vmem:[#allocation2 + $0x12e8] sm:$0xff]
    %v734 = vld [vmem:[#allocation2 + $0x12f0] sm:$0xff]
    %v735 = vld [vmem:[#allocation2 + $0x12f8] sm:$0xff]
    %v736 = vld [vmem:[#allocation2 + $0x1300] sm:$0xff]
    %v737 = vld [vmem:[#allocation2 + $0x1308] sm:$0xff]
    %v738 = vld [vmem:[#allocation2 + $0x1310] sm:$0xff]
    %v739 = vld [vmem:[#allocation2 + $0x1318] sm:$0xff]
    %v740 = vld [vmem:[#allocation2 + $0x1320] sm:$0xff]
    %v741 = vld [vmem:[#allocation2 + $0x1328] sm:$0xff]
    %v742 = vld [vmem:[#allocation2 + $0x1330] sm:$0xff]
    %v743 = vld [vmem:[#allocation2 + $0x1338] sm:$0xff]
    %v744 = vld [vmem:[#allocation2 + $0x1340] sm:$0xff]
    %v745 = vld [vmem:[#allocation2 + $0x1348] sm:$0xff]
    %v746 = vld [vmem:[#allocation2 + $0x1350] sm:$0xff]
    %v747 = vld [vmem:[#allocation2 + $0x1358] sm:$0xff]
    %v748 = vld [vmem:[#allocation2 + $0x1360] sm:$0xff]
    %v749 = vld [vmem:[#allocation2 + $0x1368] sm:$0xff]
    %v750 = vld [vmem:[#allocation2 + $0x1370] sm:$0xff]
    %v751 = vld [vmem:[#allocation2 + $0x1378] sm:$0xff]
    %v752 = vld [vmem:[#allocation2 + $0x1380] sm:$0xff]
    %v753 = vld [vmem:[#allocation2 + $0x1388] sm:$0xff]
    %v754 = vld [vmem:[#allocation2 + $0x1390] sm:$0xff]
    %v755 = vld [vmem:[#allocation2 + $0x1398] sm:$0xff]
    %v756 = vld [vmem:[#allocation2 + $0x13a0] sm:$0xff]
    %v757 = vld [vmem:[#allocation2 + $0x13a8] sm:$0xff]
    %v758 = vld [vmem:[#allocation2 + $0x13b0] sm:$0xff]
    %v759 = vld [vmem:[#allocation2 + $0x13b8] sm:$0xff]
    %v760 = vld [vmem:[#allocation2 + $0x13c0] sm:$0xff]
    %v761 = vld [vmem:[#allocation2 + $0x13c8] sm:$0xff]
    %v762 = vld [vmem:[#allocation2 + $0x13d0] sm:$0xff]
    %v763 = vld [vmem:[#allocation2 + $0x13d8] sm:$0xff]
    %v764 = vld [vmem:[#allocation2 + $0x13e0] sm:$0xff]
    %v765 = vld [vmem:[#allocation2 + $0x13e8] sm:$0xff]
    %v766 = vld [vmem:[#allocation2 + $0x13f0] sm:$0xff]
    %v767 = vld [vmem:[#allocation2 + $0x13f8] sm:$0xff]
    %v768 = vld [vmem:[#allocation2 + $0x1400] sm:$0xff]
    %v769 = vld [vmem:[#allocation2 + $0x1408] sm:$0xff]
    %v770 = vld [vmem:[#allocation2 + $0x1410] sm:$0xff]
    %v771 = vld [vmem:[#allocation2 + $0x1418] sm:$0xff]
    %v772 = vld [vmem:[#allocation2 + $0x1420] sm:$0xff]
    %v773 = vld [vmem:[#allocation2 + $0x1428] sm:$0xff]
    %v774 = vld [vmem:[#allocation2 + $0x1430] sm:$0xff]
    %v775 = vld [vmem:[#allocation2 + $0x1438] sm:$0xff]
    %v776 = vld [vmem:[#allocation2 + $0x1440] sm:$0xff]
    %v777 = vld [vmem:[#allocation2 + $0x1448] sm:$0xff]
    %v778 = vld [vmem:[#allocation2 + $0x1450] sm:$0xff]
    %v779 = vld [vmem:[#allocation2 + $0x1458] sm:$0xff]
    %v780 = vld [vmem:[#allocation2 + $0x1460] sm:$0xff]
    %v781 = vld [vmem:[#allocation2 + $0x1468] sm:$0xff]
    %v782 = vld [vmem:[#allocation2 + $0x1470] sm:$0xff]
    %v783 = vld [vmem:[#allocation2 + $0x1478] sm:$0xff]
    %v784 = vld [vmem:[#allocation2 + $0x1480] sm:$0xff]
    %v785 = vld [vmem:[#allocation2 + $0x1488] sm:$0xff]
    %v786 = vld [vmem:[#allocation2 + $0x1490] sm:$0xff]
    %v787 = vld [vmem:[#allocation2 + $0x1498] sm:$0xff]
    %v788 = vld [vmem:[#allocation2 + $0x14a0] sm:$0xff]
    %v789 = vld [vmem:[#allocation2 + $0x14a8] sm:$0xff]
    %v790 = vld [vmem:[#allocation2 + $0x14b0] sm:$0xff]
    %v791 = vld [vmem:[#allocation2 + $0x14b8] sm:$0xff]
    %v792 = vld [vmem:[#allocation2 + $0x14c0] sm:$0xff]
    %v793 = vld [vmem:[#allocation2 + $0x14c8] sm:$0xff]
    %v794 = vld [vmem:[#allocation2 + $0x14d0] sm:$0xff]
    %v795 = vld [vmem:[#allocation2 + $0x14d8] sm:$0xff]
    %v796 = vld [vmem:[#allocation2 + $0x14e0] sm:$0xff]
    %v797 = vld [vmem:[#allocation2 + $0x14e8] sm:$0xff]
    %v798 = vld [vmem:[#allocation2 + $0x14f0] sm:$0xff]
    %v799 = vld [vmem:[#allocation2 + $0x14f8] sm:$0xff]
    %v800 = vld [vmem:[#allocation2 + $0x1500] sm:$0xff]
    %v801 = vld [vmem:[#allocation2 + $0x1508] sm:$0xff]
    %v802 = vld [vmem:[#allocation2 + $0x1510] sm:$0xff]
    %v803 = vld [vmem:[#allocation2 + $0x1518] sm:$0xff]
    %v804 = vld [vmem:[#allocation2 + $0x1520] sm:$0xff]
    %v805 = vld [vmem:[#allocation2 + $0x1528] sm:$0xff]
    %v806 = vld [vmem:[#allocation2 + $0x1530] sm:$0xff]
    %v807 = vld [vmem:[#allocation2 + $0x1538] sm:$0xff]
    %v808 = vld [vmem:[#allocation2 + $0x1540] sm:$0xff]
    %v809 = vld [vmem:[#allocation2 + $0x1548] sm:$0xff]
    %v810 = vld [vmem:[#allocation2 + $0x1550] sm:$0xff]
    %v811 = vld [vmem:[#allocation2 + $0x1558] sm:$0xff]
    %v812 = vld [vmem:[#allocation2 + $0x1560] sm:$0xff]
    %v813 = vld [vmem:[#allocation2 + $0x1568] sm:$0xff]
    %v814 = vld [vmem:[#allocation2 + $0x1570] sm:$0xff]
    %v815 = vld [vmem:[#allocation2 + $0x1578] sm:$0xff]
    %v816 = vld [vmem:[#allocation2 + $0x1580] sm:$0xff]
    %v817 = vld [vmem:[#allocation2 + $0x1588] sm:$0xff]
    %v818 = vld [vmem:[#allocation2 + $0x1590] sm:$0xff]
    %v819 = vld [vmem:[#allocation2 + $0x1598] sm:$0xff]
    %v820 = vld [vmem:[#allocation2 + $0x15a0] sm:$0xff]
    %v821 = vld [vmem:[#allocation2 + $0x15a8] sm:$0xff]
    %v822 = vld [vmem:[#allocation2 + $0x15b0] sm:$0xff]
    %v823 = vld [vmem:[#allocation2 + $0x15b8] sm:$0xff]
    %v824 = vld [vmem:[#allocation2 + $0x15c0] sm:$0xff]
    %v825 = vld [vmem:[#allocation2 + $0x15c8] sm:$0xff]
    %v826 = vld [vmem:[#allocation2 + $0x15d0] sm:$0xff]
    %v827 = vld [vmem:[#allocation2 + $0x15d8] sm:$0xff]
    %v828 = vld [vmem:[#allocation2 + $0x15e0] sm:$0xff]
    %v829 = vld [vmem:[#allocation2 + $0x15e8] sm:$0xff]
    %v830 = vld [vmem:[#allocation2 + $0x15f0] sm:$0xff]
    %v831 = vld [vmem:[#allocation2 + $0x15f8] sm:$0xff]
    %v832 = vld [vmem:[#allocation2 + $0x1600] sm:$0xff]
    %v833 = vld [vmem:[#allocation2 + $0x1608] sm:$0xff]
    %v834 = vld [vmem:[#allocation2 + $0x1610] sm:$0xff]
    %v835 = vld [vmem:[#allocation2 + $0x1618] sm:$0xff]
    %v836 = vld [vmem:[#allocation2 + $0x1620] sm:$0xff]
    %v837 = vld [vmem:[#allocation2 + $0x1628] sm:$0xff]
    %v838 = vld [vmem:[#allocation2 + $0x1630] sm:$0xff]
    %v839 = vld [vmem:[#allocation2 + $0x1638] sm:$0xff]
    %v840 = vld [vmem:[#allocation2 + $0x1640] sm:$0xff]
    %v841 = vld [vmem:[#allocation2 + $0x1648] sm:$0xff]
    %v842 = vld [vmem:[#allocation2 + $0x1650] sm:$0xff]
    %v843 = vld [vmem:[#allocation2 + $0x1658] sm:$0xff]
    %v844 = vld [vmem:[#allocation2 + $0x1660] sm:$0xff]
    %v845 = vld [vmem:[#allocation2 + $0x1668] sm:$0xff]
    %v846 = vld [vmem:[#allocation2 + $0x1670] sm:$0xff]
    %v847 = vld [vmem:[#allocation2 + $0x1678] sm:$0xff]
    %v848 = vld [vmem:[#allocation2 + $0x1680] sm:$0xff]
    %v849 = vld [vmem:[#allocation2 + $0x1688] sm:$0xff]
    %v850 = vld [vmem:[#allocation2 + $0x1690] sm:$0xff]
    %v851 = vld [vmem:[#allocation2 + $0x1698] sm:$0xff]
    %v852 = vld [vmem:[#allocation2 + $0x16a0] sm:$0xff]
    %v853 = vld [vmem:[#allocation2 + $0x16a8] sm:$0xff]
    %v854 = vld [vmem:[#allocation2 + $0x16b0] sm:$0xff]
    %v855 = vld [vmem:[#allocation2 + $0x16b8] sm:$0xff]
    %v856 = vld [vmem:[#allocation2 + $0x16c0] sm:$0xff]
    %v857 = vld [vmem:[#allocation2 + $0x16c8] sm:$0xff]
    %v858 = vld [vmem:[#allocation2 + $0x16d0] sm:$0xff]
    %v859 = vld [vmem:[#allocation2 + $0x16d8] sm:$0xff]
    %v860 = vld [vmem:[#allocation2 + $0x16e0] sm:$0xff]
    %v861 = vld [vmem:[#allocation2 + $0x16e8] sm:$0xff]
    %v862 = vld [vmem:[#allocation2 + $0x16f0] sm:$0xff]
    %v863 = vld [vmem:[#allocation2 + $0x16f8] sm:$0xff]
    %v864 = vld [vmem:[#allocation2 + $0x1700] sm:$0xff]
    %v865 = vld [vmem:[#allocation2 + $0x1708] sm:$0xff]
    %v866 = vld [vmem:[#allocation2 + $0x1710] sm:$0xff]
    %v867 = vld [vmem:[#allocation2 + $0x1718] sm:$0xff]
    %v868 = vld [vmem:[#allocation2 + $0x1720] sm:$0xff]
    %v869 = vld [vmem:[#allocation2 + $0x1728] sm:$0xff]
    %v870 = vld [vmem:[#allocation2 + $0x1730] sm:$0xff]
    %v871 = vld [vmem:[#allocation2 + $0x1738] sm:$0xff]
    %v872 = vld [vmem:[#allocation2 + $0x1740] sm:$0xff]
    %v873 = vld [vmem:[#allocation2 + $0x1748] sm:$0xff]
    %v874 = vld [vmem:[#allocation2 + $0x1750] sm:$0xff]
    %v875 = vld [vmem:[#allocation2 + $0x1758] sm:$0xff]
    %v876 = vld [vmem:[#allocation2 + $0x1760] sm:$0xff]
    %v877 = vld [vmem:[#allocation2 + $0x1768] sm:$0xff]
    %v878 = vld [vmem:[#allocation2 + $0x1770] sm:$0xff]
    %v879 = vld [vmem:[#allocation2 + $0x1778] sm:$0xff]
    %v880 = vld [vmem:[#allocation2 + $0x1780] sm:$0xff]
    %v881 = vld [vmem:[#allocation2 + $0x1788] sm:$0xff]
    %v882 = vld [vmem:[#allocation2 + $0x1790] sm:$0xff]
    %v883 = vld [vmem:[#allocation2 + $0x1798] sm:$0xff]
    %v884 = vld [vmem:[#allocation2 + $0x17a0] sm:$0xff]
    %v885 = vld [vmem:[#allocation2 + $0x17a8] sm:$0xff]
    %v886 = vld [vmem:[#allocation2 + $0x17b0] sm:$0xff]
    %v887 = vld [vmem:[#allocation2 + $0x17b8] sm:$0xff]
    %v888 = vld [vmem:[#allocation2 + $0x17c0] sm:$0xff]
    %v889 = vld [vmem:[#allocation2 + $0x17c8] sm:$0xff]
    %v890 = vld [vmem:[#allocation2 + $0x17d0] sm:$0xff]
    %v891 = vld [vmem:[#allocation2 + $0x17d8] sm:$0xff]
    %v892 = vld [vmem:[#allocation2 + $0x17e0] sm:$0xff]
    %v893 = vld [vmem:[#allocation2 + $0x17e8] sm:$0xff]
    %v894 = vld [vmem:[#allocation2 + $0x17f0] sm:$0xff]
    %v895 = vld [vmem:[#allocation2 + $0x17f8] sm:$0xff]
    %v896 = vld [vmem:[#allocation2 + $0x1800] sm:$0xff]
    %v897 = vld [vmem:[#allocation2 + $0x1808] sm:$0xff]
    %v898 = vld [vmem:[#allocation2 + $0x1810] sm:$0xff]
    %v899 = vld [vmem:[#allocation2 + $0x1818] sm:$0xff]
    %v900 = vld [vmem:[#allocation2 + $0x1820] sm:$0xff]
    %v901 = vld [vmem:[#allocation2 + $0x1828] sm:$0xff]
    %v902 = vld [vmem:[#allocation2 + $0x1830] sm:$0xff]
    %v903 = vld [vmem:[#allocation2 + $0x1838] sm:$0xff]
    %v904 = vld [vmem:[#allocation2 + $0x1840] sm:$0xff]
    %v905 = vld [vmem:[#allocation2 + $0x1848] sm:$0xff]
    %v906 = vld [vmem:[#allocation2 + $0x1850] sm:$0xff]
    %v907 = vld [vmem:[#allocation2 + $0x1858] sm:$0xff]
    %v908 = vld [vmem:[#allocation2 + $0x1860] sm:$0xff]
    %v909 = vld [vmem:[#allocation2 + $0x1868] sm:$0xff]
    %v910 = vld [vmem:[#allocation2 + $0x1870] sm:$0xff]
    %v911 = vld [vmem:[#allocation2 + $0x1878] sm:$0xff]
    %v912 = vld [vmem:[#allocation2 + $0x1880] sm:$0xff]
    %v913 = vld [vmem:[#allocation2 + $0x1888] sm:$0xff]
    %v914 = vld [vmem:[#allocation2 + $0x1890] sm:$0xff]
    %v915 = vld [vmem:[#allocation2 + $0x1898] sm:$0xff]
    %v916 = vld [vmem:[#allocation2 + $0x18a0] sm:$0xff]
    %v917 = vld [vmem:[#allocation2 + $0x18a8] sm:$0xff]
    %v918 = vld [vmem:[#allocation2 + $0x18b0] sm:$0xff]
    %v919 = vld [vmem:[#allocation2 + $0x18b8] sm:$0xff]
    %v920 = vld [vmem:[#allocation2 + $0x18c0] sm:$0xff]
    %v921 = vld [vmem:[#allocation2 + $0x18c8] sm:$0xff]
    %v922 = vld [vmem:[#allocation2 + $0x18d0] sm:$0xff]
    %v923 = vld [vmem:[#allocation2 + $0x18d8] sm:$0xff]
    %v924 = vld [vmem:[#allocation2 + $0x18e0] sm:$0xff]
    %v925 = vld [vmem:[#allocation2 + $0x18e8] sm:$0xff]
    %v926 = vld [vmem:[#allocation2 + $0x18f0] sm:$0xff]
    %v927 = vld [vmem:[#allocation2 + $0x18f8] sm:$0xff]
    %v928 = vld [vmem:[#allocation2 + $0x1900] sm:$0xff]
    %v929 = vld [vmem:[#allocation2 + $0x1908] sm:$0xff]
    %v930 = vld [vmem:[#allocation2 + $0x1910] sm:$0xff]
    %v931 = vld [vmem:[#allocation2 + $0x1918] sm:$0xff]
    %v932 = vld [vmem:[#allocation2 + $0x1920] sm:$0xff]
    %v933 = vld [vmem:[#allocation2 + $0x1928] sm:$0xff]
    %v934 = vld [vmem:[#allocation2 + $0x1930] sm:$0xff]
    %v935 = vld [vmem:[#allocation2 + $0x1938] sm:$0xff]
    %v936 = vld [vmem:[#allocation2 + $0x1940] sm:$0xff]
    %v937 = vld [vmem:[#allocation2 + $0x1948] sm:$0xff]
    %v938 = vld [vmem:[#allocation2 + $0x1950] sm:$0xff]
    %v939 = vld [vmem:[#allocation2 + $0x1958] sm:$0xff]
    %v940 = vld [vmem:[#allocation2 + $0x1960] sm:$0xff]
    %v941 = vld [vmem:[#allocation2 + $0x1968] sm:$0xff]
    %v942 = vld [vmem:[#allocation2 + $0x1970] sm:$0xff]
    %v943 = vld [vmem:[#allocation2 + $0x1978] sm:$0xff]
    %v944 = vld [vmem:[#allocation2 + $0x1980] sm:$0xff]
    %v945 = vld [vmem:[#allocation2 + $0x1988] sm:$0xff]
    %v946 = vld [vmem:[#allocation2 + $0x1990] sm:$0xff]
    %v947 = vld [vmem:[#allocation2 + $0x1998] sm:$0xff]
    %v948 = vld [vmem:[#allocation2 + $0x19a0] sm:$0xff]
    %v949 = vld [vmem:[#allocation2 + $0x19a8] sm:$0xff]
    %v950 = vld [vmem:[#allocation2 + $0x19b0] sm:$0xff]
    %v951 = vld [vmem:[#allocation2 + $0x19b8] sm:$0xff]
    %v952 = vld [vmem:[#allocation2 + $0x19c0] sm:$0xff]
    %v953 = vld [vmem:[#allocation2 + $0x19c8] sm:$0xff]
    %v954 = vld [vmem:[#allocation2 + $0x19d0] sm:$0xff]
    %v955 = vld [vmem:[#allocation2 + $0x19d8] sm:$0xff]
    %v956 = vld [vmem:[#allocation2 + $0x19e0] sm:$0xff]
    %v957 = vld [vmem:[#allocation2 + $0x19e8] sm:$0xff]
    %v958 = vld [vmem:[#allocation2 + $0x19f0] sm:$0xff]
    %v959 = vld [vmem:[#allocation2 + $0x19f8] sm:$0xff]
    %v960 = vld [vmem:[#allocation2 + $0x1a00] sm:$0xff]
    %v961 = vld [vmem:[#allocation2 + $0x1a08] sm:$0xff]
    %v962 = vld [vmem:[#allocation2 + $0x1a10] sm:$0xff]
    %v963 = vld [vmem:[#allocation2 + $0x1a18] sm:$0xff]
    %v964 = vld [vmem:[#allocation2 + $0x1a20] sm:$0xff]
    %v965 = vld [vmem:[#allocation2 + $0x1a28] sm:$0xff]
    %v966 = vld [vmem:[#allocation2 + $0x1a30] sm:$0xff]
    %v967 = vld [vmem:[#allocation2 + $0x1a38] sm:$0xff]
    %v968 = vld [vmem:[#allocation2 + $0x1a40] sm:$0xff]
    %v969 = vld [vmem:[#allocation2 + $0x1a48] sm:$0xff]
    %v970 = vld [vmem:[#allocation2 + $0x1a50] sm:$0xff]
    %v971 = vld [vmem:[#allocation2 + $0x1a58] sm:$0xff]
    %v972 = vld [vmem:[#allocation2 + $0x1a60] sm:$0xff]
    %v973 = vld [vmem:[#allocation2 + $0x1a68] sm:$0xff]
    %v974 = vld [vmem:[#allocation2 + $0x1a70] sm:$0xff]
    %v975 = vld [vmem:[#allocation2 + $0x1a78] sm:$0xff]
    %v976 = vld [vmem:[#allocation2 + $0x1a80] sm:$0xff]
    %v977 = vld [vmem:[#allocation2 + $0x1a88] sm:$0xff]
    %v978 = vld [vmem:[#allocation2 + $0x1a90] sm:$0xff]
    %v979 = vld [vmem:[#allocation2 + $0x1a98] sm:$0xff]
    %v980 = vld [vmem:[#allocation2 + $0x1aa0] sm:$0xff]
    %v981 = vld [vmem:[#allocation2 + $0x1aa8] sm:$0xff]
    %v982 = vld [vmem:[#allocation2 + $0x1ab0] sm:$0xff]
    %v983 = vld [vmem:[#allocation2 + $0x1ab8] sm:$0xff]
    %v984 = vld [vmem:[#allocation2 + $0x1ac0] sm:$0xff]
    %v985 = vld [vmem:[#allocation2 + $0x1ac8] sm:$0xff]
    %v986 = vld [vmem:[#allocation2 + $0x1ad0] sm:$0xff]
    %v987 = vld [vmem:[#allocation2 + $0x1ad8] sm:$0xff]
    %v988 = vld [vmem:[#allocation2 + $0x1ae0] sm:$0xff]
    %v989 = vld [vmem:[#allocation2 + $0x1ae8] sm:$0xff]
    %v990 = vld [vmem:[#allocation2 + $0x1af0] sm:$0xff]
    %v991 = vld [vmem:[#allocation2 + $0x1af8] sm:$0xff]
    %v992 = vld [vmem:[#allocation2 + $0x1b00] sm:$0xff]
    %v993 = vld [vmem:[#allocation2 + $0x1b08] sm:$0xff]
    %v994 = vld [vmem:[#allocation2 + $0x1b10] sm:$0xff]
    %v995 = vld [vmem:[#allocation2 + $0x1b18] sm:$0xff]
    %v996 = vld [vmem:[#allocation2 + $0x1b20] sm:$0xff]
    %v997 = vld [vmem:[#allocation2 + $0x1b28] sm:$0xff]
    %v998 = vld [vmem:[#allocation2 + $0x1b30] sm:$0xff]
    %v999 = vld [vmem:[#allocation2 + $0x1b38] sm:$0xff]
    %v1000 = vld [vmem:[#allocation2 + $0x1b40] sm:$0xff]
    %v1001 = vld [vmem:[#allocation2 + $0x1b48] sm:$0xff]
    %v1002 = vld [vmem:[#allocation2 + $0x1b50] sm:$0xff]
    %v1003 = vld [vmem:[#allocation2 + $0x1b58] sm:$0xff]
    %v1004 = vld [vmem:[#allocation2 + $0x1b60] sm:$0xff]
    %v1005 = vld [vmem:[#allocation2 + $0x1b68] sm:$0xff]
    %v1006 = vld [vmem:[#allocation2 + $0x1b70] sm:$0xff]
    %v1007 = vld [vmem:[#allocation2 + $0x1b78] sm:$0xff]
    %v1008 = vld [vmem:[#allocation2 + $0x1b80] sm:$0xff]
    %v1009 = vld [vmem:[#allocation2 + $0x1b88] sm:$0xff]
    %v1010 = vld [vmem:[#allocation2 + $0x1b90] sm:$0xff]
    %v1011 = vld [vmem:[#allocation2 + $0x1b98] sm:$0xff]
    %v1012 = vld [vmem:[#allocation2 + $0x1ba0] sm:$0xff]
    %v1013 = vld [vmem:[#allocation2 + $0x1ba8] sm:$0xff]
    %v1014 = vld [vmem:[#allocation2 + $0x1bb0] sm:$0xff]
    %v1015 = vld [vmem:[#allocation2 + $0x1bb8] sm:$0xff]
    %v1016 = vld [vmem:[#allocation2 + $0x1bc0] sm:$0xff]
    %v1017 = vld [vmem:[#allocation2 + $0x1bc8] sm:$0xff]
    %v1018 = vld [vmem:[#allocation2 + $0x1bd0] sm:$0xff]
    %v1019 = vld [vmem:[#allocation2 + $0x1bd8] sm:$0xff]
    %v1020 = vld [vmem:[#allocation2 + $0x1be0] sm:$0xff]
    %v1021 = vld [vmem:[#allocation2 + $0x1be8] sm:$0xff]
    %v1022 = vld [vmem:[#allocation2 + $0x1bf0] sm:$0xff]
    %v1023 = vld [vmem:[#allocation2 + $0x1bf8] sm:$0xff]
    %v1024 = vld [vmem:[#allocation2 + $0x1c00] sm:$0xff]
    %v1025 = vld [vmem:[#allocation2 + $0x1c08] sm:$0xff]
    %v1026 = vld [vmem:[#allocation2 + $0x1c10] sm:$0xff]
    %v1027 = vld [vmem:[#allocation2 + $0x1c18] sm:$0xff]
    %v1028 = vld [vmem:[#allocation2 + $0x1c20] sm:$0xff]
    %v1029 = vld [vmem:[#allocation2 + $0x1c28] sm:$0xff]
    %v1030 = vld [vmem:[#allocation2 + $0x1c30] sm:$0xff]
    %v1031 = vld [vmem:[#allocation2 + $0x1c38] sm:$0xff]
    %v1032 = vld [vmem:[#allocation2 + $0x1c40] sm:$0xff]
    %v1033 = vld [vmem:[#allocation2 + $0x1c48] sm:$0xff]
    %v1034 = vld [vmem:[#allocation2 + $0x1c50] sm:$0xff]
    %v1035 = vld [vmem:[#allocation2 + $0x1c58] sm:$0xff]
    %v1036 = vld [vmem:[#allocation2 + $0x1c60] sm:$0xff]
    %v1037 = vld [vmem:[#allocation2 + $0x1c68] sm:$0xff]
    %v1038 = vld [vmem:[#allocation2 + $0x1c70] sm:$0xff]
    %v1039 = vld [vmem:[#allocation2 + $0x1c78] sm:$0xff]
    %v1040 = vld [vmem:[#allocation2 + $0x1c80] sm:$0xff]
    %v1041 = vld [vmem:[#allocation2 + $0x1c88] sm:$0xff]
    %v1042 = vld [vmem:[#allocation2 + $0x1c90] sm:$0xff]
    %v1043 = vld [vmem:[#allocation2 + $0x1c98] sm:$0xff]
    %v1044 = vld [vmem:[#allocation2 + $0x1ca0] sm:$0xff]
    %v1045 = vld [vmem:[#allocation2 + $0x1ca8] sm:$0xff]
    %v1046 = vld [vmem:[#allocation2 + $0x1cb0] sm:$0xff]
    %v1047 = vld [vmem:[#allocation2 + $0x1cb8] sm:$0xff]
    %v1048 = vld [vmem:[#allocation2 + $0x1cc0] sm:$0xff]
    %v1049 = vld [vmem:[#allocation2 + $0x1cc8] sm:$0xff]
    %v1050 = vld [vmem:[#allocation2 + $0x1cd0] sm:$0xff]
    %v1051 = vld [vmem:[#allocation2 + $0x1cd8] sm:$0xff]
    %v1052 = vld [vmem:[#allocation2 + $0x1ce0] sm:$0xff]
    %v1053 = vld [vmem:[#allocation2 + $0x1ce8] sm:$0xff]
    %v1054 = vld [vmem:[#allocation2 + $0x1cf0] sm:$0xff]
    %v1055 = vld [vmem:[#allocation2 + $0x1cf8] sm:$0xff]
    %v1056 = vld [vmem:[#allocation2 + $0x1d00] sm:$0xff]
    %v1057 = vld [vmem:[#allocation2 + $0x1d08] sm:$0xff]
    %v1058 = vld [vmem:[#allocation2 + $0x1d10] sm:$0xff]
    %v1059 = vld [vmem:[#allocation2 + $0x1d18] sm:$0xff]
    %v1060 = vld [vmem:[#allocation2 + $0x1d20] sm:$0xff]
    %v1061 = vld [vmem:[#allocation2 + $0x1d28] sm:$0xff]
    %v1062 = vld [vmem:[#allocation2 + $0x1d30] sm:$0xff]
    %v1063 = vld [vmem:[#allocation2 + $0x1d38] sm:$0xff]
    %v1064 = vld [vmem:[#allocation2 + $0x1d40] sm:$0xff]
    %v1065 = vld [vmem:[#allocation2 + $0x1d48] sm:$0xff]
    %v1066 = vld [vmem:[#allocation2 + $0x1d50] sm:$0xff]
    %v1067 = vld [vmem:[#allocation2 + $0x1d58] sm:$0xff]
    %v1068 = vld [vmem:[#allocation2 + $0x1d60] sm:$0xff]
    %v1069 = vld [vmem:[#allocation2 + $0x1d68] sm:$0xff]
    %v1070 = vld [vmem:[#allocation2 + $0x1d70] sm:$0xff]
    %v1071 = vld [vmem:[#allocation2 + $0x1d78] sm:$0xff]
    %v1072 = vld [vmem:[#allocation2 + $0x1d80] sm:$0xff]
    %v1073 = vld [vmem:[#allocation2 + $0x1d88] sm:$0xff]
    %v1074 = vld [vmem:[#allocation2 + $0x1d90] sm:$0xff]
    %v1075 = vld [vmem:[#allocation2 + $0x1d98] sm:$0xff]
    %v1076 = vld [vmem:[#allocation2 + $0x1da0] sm:$0xff]
    %v1077 = vld [vmem:[#allocation2 + $0x1da8] sm:$0xff]
    %v1078 = vld [vmem:[#allocation2 + $0x1db0] sm:$0xff]
    %v1079 = vld [vmem:[#allocation2 + $0x1db8] sm:$0xff]
    %v1080 = vld [vmem:[#allocation2 + $0x1dc0] sm:$0xff]
    %v1081 = vld [vmem:[#allocation2 + $0x1dc8] sm:$0xff]
    %v1082 = vld [vmem:[#allocation2 + $0x1dd0] sm:$0xff]
    %v1083 = vld [vmem:[#allocation2 + $0x1dd8] sm:$0xff]
    %v1084 = vld [vmem:[#allocation2 + $0x1de0] sm:$0xff]
    %v1085 = vld [vmem:[#allocation2 + $0x1de8] sm:$0xff]
    %v1086 = vld [vmem:[#allocation2 + $0x1df0] sm:$0xff]
    %v1087 = vld [vmem:[#allocation2 + $0x1df8] sm:$0xff]
    %v1088 = vld [vmem:[#allocation2 + $0x1e00] sm:$0xff]
    %v1089 = vld [vmem:[#allocation2 + $0x1e08] sm:$0xff]
    %v1090 = vld [vmem:[#allocation2 + $0x1e10] sm:$0xff]
    %v1091 = vld [vmem:[#allocation2 + $0x1e18] sm:$0xff]
    %v1092 = vld [vmem:[#allocation2 + $0x1e20] sm:$0xff]
    %v1093 = vld [vmem:[#allocation2 + $0x1e28] sm:$0xff]
    %v1094 = vld [vmem:[#allocation2 + $0x1e30] sm:$0xff]
    %v1095 = vld [vmem:[#allocation2 + $0x1e38] sm:$0xff]
    %v1096 = vld [vmem:[#allocation2 + $0x1e40] sm:$0xff]
    %v1097 = vld [vmem:[#allocation2 + $0x1e48] sm:$0xff]
    %v1098 = vld [vmem:[#allocation2 + $0x1e50] sm:$0xff]
    %v1099 = vld [vmem:[#allocation2 + $0x1e58] sm:$0xff]
    %v1100 = vld [vmem:[#allocation2 + $0x1e60] sm:$0xff]
    %v1101 = vld [vmem:[#allocation2 + $0x1e68] sm:$0xff]
    %v1102 = vld [vmem:[#allocation2 + $0x1e70] sm:$0xff]
    %v1103 = vld [vmem:[#allocation2 + $0x1e78] sm:$0xff]
    %v1104 = vld [vmem:[#allocation2 + $0x1e80] sm:$0xff]
    %v1105 = vld [vmem:[#allocation2 + $0x1e88] sm:$0xff]
    %v1106 = vld [vmem:[#allocation2 + $0x1e90] sm:$0xff]
    %v1107 = vld [vmem:[#allocation2 + $0x1e98] sm:$0xff]
    %v1108 = vld [vmem:[#allocation2 + $0x1ea0] sm:$0xff]
    %v1109 = vld [vmem:[#allocation2 + $0x1ea8] sm:$0xff]
    %v1110 = vld [vmem:[#allocation2 + $0x1eb0] sm:$0xff]
    %v1111 = vld [vmem:[#allocation2 + $0x1eb8] sm:$0xff]
    %v1112 = vld [vmem:[#allocation2 + $0x1ec0] sm:$0xff]
    %v1113 = vld [vmem:[#allocation2 + $0x1ec8] sm:$0xff]
    %v1114 = vld [vmem:[#allocation2 + $0x1ed0] sm:$0xff]
    %v1115 = vld [vmem:[#allocation2 + $0x1ed8] sm:$0xff]
    %v1116 = vld [vmem:[#allocation2 + $0x1ee0] sm:$0xff]
    %v1117 = vld [vmem:[#allocation2 + $0x1ee8] sm:$0xff]
    %v1118 = vld [vmem:[#allocation2 + $0x1ef0] sm:$0xff]
    %v1119 = vld [vmem:[#allocation2 + $0x1ef8] sm:$0xff]
    %v1120 = vld [vmem:[#allocation2 + $0x1f00] sm:$0xff]
    %v1121 = vld [vmem:[#allocation2 + $0x1f08] sm:$0xff]
    %v1122 = vld [vmem:[#allocation2 + $0x1f10] sm:$0xff]
    %v1123 = vld [vmem:[#allocation2 + $0x1f18] sm:$0xff]
    %v1124 = vld [vmem:[#allocation2 + $0x1f20] sm:$0xff]
    %v1125 = vld [vmem:[#allocation2 + $0x1f28] sm:$0xff]
    %v1126 = vld [vmem:[#allocation2 + $0x1f30] sm:$0xff]
    %v1127 = vld [vmem:[#allocation2 + $0x1f38] sm:$0xff]
    %v1128 = vld [vmem:[#allocation2 + $0x1f40] sm:$0xff]
    %v1129 = vld [vmem:[#allocation2 + $0x1f48] sm:$0xff]
    %v1130 = vld [vmem:[#allocation2 + $0x1f50] sm:$0xff]
    %v1131 = vld [vmem:[#allocation2 + $0x1f58] sm:$0xff]
    %v1132 = vld [vmem:[#allocation2 + $0x1f60] sm:$0xff]
    %v1133 = vld [vmem:[#allocation2 + $0x1f68] sm:$0xff]
    %v1134 = vld [vmem:[#allocation2 + $0x1f70] sm:$0xff]
    %v1135 = vld [vmem:[#allocation2 + $0x1f78] sm:$0xff]
    %v1136 = vld [vmem:[#allocation2 + $0x1f80] sm:$0xff]
    %v1137 = vld [vmem:[#allocation2 + $0x1f88] sm:$0xff]
    %v1138 = vld [vmem:[#allocation2 + $0x1f90] sm:$0xff]
    %v1139 = vld [vmem:[#allocation2 + $0x1f98] sm:$0xff]
    %v1140 = vld [vmem:[#allocation2 + $0x1fa0] sm:$0xff]
    %v1141 = vld [vmem:[#allocation2 + $0x1fa8] sm:$0xff]
    %v1142 = vld [vmem:[#allocation2 + $0x1fb0] sm:$0xff]
    %v1143 = vld [vmem:[#allocation2 + $0x1fb8] sm:$0xff]
    %v1144 = vld [vmem:[#allocation2 + $0x1fc0] sm:$0xff]
    %v1145 = vld [vmem:[#allocation2 + $0x1fc8] sm:$0xff]
    %v1146 = vld [vmem:[#allocation2 + $0x1fd0] sm:$0xff]
    %v1147 = vld [vmem:[#allocation2 + $0x1fd8] sm:$0xff]
    %v1148 = vld [vmem:[#allocation2 + $0x1fe0] sm:$0xff]
    %v1149 = vld [vmem:[#allocation2 + $0x1fe8] sm:$0xff]
    %v1150 = vld [vmem:[#allocation2 + $0x1ff0] sm:$0xff]
    %v1151 = vld [vmem:[#allocation2 + $0x1ff8] sm:$0xff]
    %v1152 = vld [vmem:[#allocation2 + $0x2000] sm:$0xff]
    %v1153 = vld [vmem:[#allocation2 + $0x2008] sm:$0xff]
    %v1154 = vld [vmem:[#allocation2 + $0x2010] sm:$0xff]
    %v1155 = vld [vmem:[#allocation2 + $0x2018] sm:$0xff]
    %v1156 = vld [vmem:[#allocation2 + $0x2020] sm:$0xff]
    %v1157 = vld [vmem:[#allocation2 + $0x2028] sm:$0xff]
    %v1158 = vld [vmem:[#allocation2 + $0x2030] sm:$0xff]
    %v1159 = vld [vmem:[#allocation2 + $0x2038] sm:$0xff]
    %v1160 = vld [vmem:[#allocation2 + $0x2040] sm:$0xff]
    %v1161 = vld [vmem:[#allocation2 + $0x2048] sm:$0xff]
    %v1162 = vld [vmem:[#allocation2 + $0x2050] sm:$0xff]
    %v1163 = vld [vmem:[#allocation2 + $0x2058] sm:$0xff]
    %v1164 = vld [vmem:[#allocation2 + $0x2060] sm:$0xff]
    %v1165 = vld [vmem:[#allocation2 + $0x2068] sm:$0xff]
    %v1166 = vld [vmem:[#allocation2 + $0x2070] sm:$0xff]
    %v1167 = vld [vmem:[#allocation2 + $0x2078] sm:$0xff]
    %v1168 = vld [vmem:[#allocation2 + $0x2080] sm:$0xff]
    %v1169 = vld [vmem:[#allocation2 + $0x2088] sm:$0xff]
    %v1170 = vld [vmem:[#allocation2 + $0x2090] sm:$0xff]
    %v1171 = vld [vmem:[#allocation2 + $0x2098] sm:$0xff]
    %v1172 = vld [vmem:[#allocation2 + $0x20a0] sm:$0xff]
    %v1173 = vld [vmem:[#allocation2 + $0x20a8] sm:$0xff]
    %v1174 = vld [vmem:[#allocation2 + $0x20b0] sm:$0xff]
    %v1175 = vld [vmem:[#allocation2 + $0x20b8] sm:$0xff]
    %v1176 = vld [vmem:[#allocation2 + $0x20c0] sm:$0xff]
    %v1177 = vld [vmem:[#allocation2 + $0x20c8] sm:$0xff]
    %v1178 = vld [vmem:[#allocation2 + $0x20d0] sm:$0xff]
    %v1179 = vld [vmem:[#allocation2 + $0x20d8] sm:$0xff]
    %v1180 = vld [vmem:[#allocation2 + $0x20e0] sm:$0xff]
    %v1181 = vld [vmem:[#allocation2 + $0x20e8] sm:$0xff]
    %v1182 = vld [vmem:[#allocation2 + $0x20f0] sm:$0xff]
    %v1183 = vld [vmem:[#allocation2 + $0x20f8] sm:$0xff]
    %v1184 = vld [vmem:[#allocation2 + $0x2100] sm:$0xff]
    %v1185 = vld [vmem:[#allocation2 + $0x2108] sm:$0xff]
    %v1186 = vld [vmem:[#allocation2 + $0x2110] sm:$0xff]
    %v1187 = vld [vmem:[#allocation2 + $0x2118] sm:$0xff]
    %v1188 = vld [vmem:[#allocation2 + $0x2120] sm:$0xff]
    %v1189 = vld [vmem:[#allocation2 + $0x2128] sm:$0xff]
    %v1190 = vld [vmem:[#allocation2 + $0x2130] sm:$0xff]
    %v1191 = vld [vmem:[#allocation2 + $0x2138] sm:$0xff]
    %v1192 = vld [vmem:[#allocation2 + $0x2140] sm:$0xff]
    %v1193 = vld [vmem:[#allocation2 + $0x2148] sm:$0xff]
    %v1194 = vld [vmem:[#allocation2 + $0x2150] sm:$0xff]
    %v1195 = vld [vmem:[#allocation2 + $0x2158] sm:$0xff]
    %v1196 = vld [vmem:[#allocation2 + $0x2160] sm:$0xff]
    %v1197 = vld [vmem:[#allocation2 + $0x2168] sm:$0xff]
    %v1198 = vld [vmem:[#allocation2 + $0x2170] sm:$0xff]
    %v1199 = vld [vmem:[#allocation2 + $0x2178] sm:$0xff]
    %v1200 = vld [vmem:[#allocation2 + $0x2180] sm:$0xff]
    %v1201 = vld [vmem:[#allocation2 + $0x2188] sm:$0xff]
    %v1202 = vld [vmem:[#allocation2 + $0x2190] sm:$0xff]
    %v1203 = vld [vmem:[#allocation2 + $0x2198] sm:$0xff]
    %v1204 = vld [vmem:[#allocation2 + $0x21a0] sm:$0xff]
    %v1205 = vld [vmem:[#allocation2 + $0x21a8] sm:$0xff]
    %v1206 = vld [vmem:[#allocation2 + $0x21b0] sm:$0xff]
    %v1207 = vld [vmem:[#allocation2 + $0x21b8] sm:$0xff]
    %v1208 = vld [vmem:[#allocation2 + $0x21c0] sm:$0xff]
    %v1209 = vld [vmem:[#allocation2 + $0x21c8] sm:$0xff]
    %v1210 = vld [vmem:[#allocation2 + $0x21d0] sm:$0xff]
    %v1211 = vld [vmem:[#allocation2 + $0x21d8] sm:$0xff]
    %v1212 = vld [vmem:[#allocation2 + $0x21e0] sm:$0xff]
    %v1213 = vld [vmem:[#allocation2 + $0x21e8] sm:$0xff]
    %v1214 = vld [vmem:[#allocation2 + $0x21f0] sm:$0xff]
    %v1215 = vld [vmem:[#allocation2 + $0x21f8] sm:$0xff]
    %v1216 = vld [vmem:[#allocation2 + $0x2200] sm:$0xff]
    %v1217 = vld [vmem:[#allocation2 + $0x2208] sm:$0xff]
    %v1218 = vld [vmem:[#allocation2 + $0x2210] sm:$0xff]
    %v1219 = vld [vmem:[#allocation2 + $0x2218] sm:$0xff]
    %v1220 = vld [vmem:[#allocation2 + $0x2220] sm:$0xff]
    %v1221 = vld [vmem:[#allocation2 + $0x2228] sm:$0xff]
    %v1222 = vld [vmem:[#allocation2 + $0x2230] sm:$0xff]
    %v1223 = vld [vmem:[#allocation2 + $0x2238] sm:$0xff]
    %v1224 = vld [vmem:[#allocation2 + $0x2240] sm:$0xff]
    %v1225 = vld [vmem:[#allocation2 + $0x2248] sm:$0xff]
    %v1226 = vld [vmem:[#allocation2 + $0x2250] sm:$0xff]
    %v1227 = vld [vmem:[#allocation2 + $0x2258] sm:$0xff]
    %v1228 = vld [vmem:[#allocation2 + $0x2260] sm:$0xff]
    %v1229 = vld [vmem:[#allocation2 + $0x2268] sm:$0xff]
    %v1230 = vld [vmem:[#allocation2 + $0x2270] sm:$0xff]
    %v1231 = vld [vmem:[#allocation2 + $0x2278] sm:$0xff]
    %v1232 = vld [vmem:[#allocation2 + $0x2280] sm:$0xff]
    %v1233 = vld [vmem:[#allocation2 + $0x2288] sm:$0xff]
    %v1234 = vld [vmem:[#allocation2 + $0x2290] sm:$0xff]
    %v1235 = vld [vmem:[#allocation2 + $0x2298] sm:$0xff]
    %v1236 = vld [vmem:[#allocation2 + $0x22a0] sm:$0xff]
    %v1237 = vld [vmem:[#allocation2 + $0x22a8] sm:$0xff]
    %v1238 = vld [vmem:[#allocation2 + $0x22b0] sm:$0xff]
    %v1239 = vld [vmem:[#allocation2 + $0x22b8] sm:$0xff]
    %v1240 = vld [vmem:[#allocation2 + $0x22c0] sm:$0xff]
    %v1241 = vld [vmem:[#allocation2 + $0x22c8] sm:$0xff]
    %v1242 = vld [vmem:[#allocation2 + $0x22d0] sm:$0xff]
    %v1243 = vld [vmem:[#allocation2 + $0x22d8] sm:$0xff]
    %v1244 = vld [vmem:[#allocation2 + $0x22e0] sm:$0xff]
    %v1245 = vld [vmem:[#allocation2 + $0x22e8] sm:$0xff]
    %v1246 = vld [vmem:[#allocation2 + $0x22f0] sm:$0xff]
    %v1247 = vld [vmem:[#allocation2 + $0x22f8] sm:$0xff]
    %v1248 = vld [vmem:[#allocation2 + $0x2300] sm:$0xff]
    %v1249 = vld [vmem:[#allocation2 + $0x2308] sm:$0xff]
    %v1250 = vld [vmem:[#allocation2 + $0x2310] sm:$0xff]
    %v1251 = vld [vmem:[#allocation2 + $0x2318] sm:$0xff]
    %v1252 = vld [vmem:[#allocation2 + $0x2320] sm:$0xff]
    %v1253 = vld [vmem:[#allocation2 + $0x2328] sm:$0xff]
    %v1254 = vld [vmem:[#allocation2 + $0x2330] sm:$0xff]
    %v1255 = vld [vmem:[#allocation2 + $0x2338] sm:$0xff]
    %v1256 = vld [vmem:[#allocation2 + $0x2340] sm:$0xff]
    %v1257 = vld [vmem:[#allocation2 + $0x2348] sm:$0xff]
    %v1258 = vld [vmem:[#allocation2 + $0x2350] sm:$0xff]
    %v1259 = vld [vmem:[#allocation2 + $0x2358] sm:$0xff]
    %v1260 = vld [vmem:[#allocation2 + $0x2360] sm:$0xff]
    %v1261 = vld [vmem:[#allocation2 + $0x2368] sm:$0xff]
    %v1262 = vld [vmem:[#allocation2 + $0x2370] sm:$0xff]
    %v1263 = vld [vmem:[#allocation2 + $0x2378] sm:$0xff]
    %v1264 = vld [vmem:[#allocation2 + $0x2380] sm:$0xff]
    %v1265 = vld [vmem:[#allocation2 + $0x2388] sm:$0xff]
    %v1266 = vld [vmem:[#allocation2 + $0x2390] sm:$0xff]
    %v1267 = vld [vmem:[#allocation2 + $0x2398] sm:$0xff]
    %v1268 = vld [vmem:[#allocation2 + $0x23a0] sm:$0xff]
    %v1269 = vld [vmem:[#allocation2 + $0x23a8] sm:$0xff]
    %v1270 = vld [vmem:[#allocation2 + $0x23b0] sm:$0xff]
    %v1271 = vld [vmem:[#allocation2 + $0x23b8] sm:$0xff]
    %v1272 = vld [vmem:[#allocation2 + $0x23c0] sm:$0xff]
    %v1273 = vld [vmem:[#allocation2 + $0x23c8] sm:$0xff]
    %v1274 = vld [vmem:[#allocation2 + $0x23d0] sm:$0xff]
    %v1275 = vld [vmem:[#allocation2 + $0x23d8] sm:$0xff]
    %v1276 = vld [vmem:[#allocation2 + $0x23e0] sm:$0xff]
    %v1277 = vld [vmem:[#allocation2 + $0x23e8] sm:$0xff]
    %v1278 = vld [vmem:[#allocation2 + $0x23f0] sm:$0xff]
    %v1279 = vld [vmem:[#allocation2 + $0x23f8] sm:$0xff]
    %v1280 = vld [vmem:[#allocation2 + $0x2400] sm:$0xff]
    %v1281 = vld [vmem:[#allocation2 + $0x2408] sm:$0xff]
    %v1282 = vld [vmem:[#allocation2 + $0x2410] sm:$0xff]
    %v1283 = vld [vmem:[#allocation2 + $0x2418] sm:$0xff]
    %v1284 = vld [vmem:[#allocation2 + $0x2420] sm:$0xff]
    %v1285 = vld [vmem:[#allocation2 + $0x2428] sm:$0xff]
    %v1286 = vld [vmem:[#allocation2 + $0x2430] sm:$0xff]
    %v1287 = vld [vmem:[#allocation2 + $0x2438] sm:$0xff]
    %v1288 = vld [vmem:[#allocation2 + $0x2440] sm:$0xff]
    %v1289 = vld [vmem:[#allocation2 + $0x2448] sm:$0xff]
    %v1290 = vld [vmem:[#allocation2 + $0x2450] sm:$0xff]
    %v1291 = vld [vmem:[#allocation2 + $0x2458] sm:$0xff]
    %v1292 = vld [vmem:[#allocation2 + $0x2460] sm:$0xff]
    %v1293 = vld [vmem:[#allocation2 + $0x2468] sm:$0xff]
    %v1294 = vld [vmem:[#allocation2 + $0x2470] sm:$0xff]
    %v1295 = vld [vmem:[#allocation2 + $0x2478] sm:$0xff]
    %v1296 = vld [vmem:[#allocation2 + $0x2480] sm:$0xff]
    %v1297 = vld [vmem:[#allocation2 + $0x2488] sm:$0xff]
    %v1298 = vld [vmem:[#allocation2 + $0x2490] sm:$0xff]
    %v1299 = vld [vmem:[#allocation2 + $0x2498] sm:$0xff]
    %v1300 = vld [vmem:[#allocation2 + $0x24a0] sm:$0xff]
    %v1301 = vld [vmem:[#allocation2 + $0x24a8] sm:$0xff]
    %v1302 = vld [vmem:[#allocation2 + $0x24b0] sm:$0xff]
    %v1303 = vld [vmem:[#allocation2 + $0x24b8] sm:$0xff]
    %v1304 = vld [vmem:[#allocation2 + $0x24c0] sm:$0xff]
    %v1305 = vld [vmem:[#allocation2 + $0x24c8] sm:$0xff]
    %v1306 = vld [vmem:[#allocation2 + $0x24d0] sm:$0xff]
    %v1307 = vld [vmem:[#allocation2 + $0x24d8] sm:$0xff]
    %v1308 = vld [vmem:[#allocation2 + $0x24e0] sm:$0xff]
    %v1309 = vld [vmem:[#allocation2 + $0x24e8] sm:$0xff]
    %v1310 = vld [vmem:[#allocation2 + $0x24f0] sm:$0xff]
    %v1311 = vld [vmem:[#allocation2 + $0x24f8] sm:$0xff]
    %v1312 = vld [vmem:[#allocation2 + $0x2500] sm:$0xff]
    %v1313 = vld [vmem:[#allocation2 + $0x2508] sm:$0xff]
    %v1314 = vld [vmem:[#allocation2 + $0x2510] sm:$0xff]
    %v1315 = vld [vmem:[#allocation2 + $0x2518] sm:$0xff]
    %v1316 = vld [vmem:[#allocation2 + $0x2520] sm:$0xff]
    %v1317 = vld [vmem:[#allocation2 + $0x2528] sm:$0xff]
    %v1318 = vld [vmem:[#allocation2 + $0x2530] sm:$0xff]
    %v1319 = vld [vmem:[#allocation2 + $0x2538] sm:$0xff]
    %v1320 = vld [vmem:[#allocation2 + $0x2540] sm:$0xff]
    %v1321 = vld [vmem:[#allocation2 + $0x2548] sm:$0xff]
    %v1322 = vld [vmem:[#allocation2 + $0x2550] sm:$0xff]
    %v1323 = vld [vmem:[#allocation2 + $0x2558] sm:$0xff]
    %v1324 = vld [vmem:[#allocation2 + $0x2560] sm:$0xff]
    %v1325 = vld [vmem:[#allocation2 + $0x2568] sm:$0xff]
    %v1326 = vld [vmem:[#allocation2 + $0x2570] sm:$0xff]
    %v1327 = vld [vmem:[#allocation2 + $0x2578] sm:$0xff]
    %v1328 = vld [vmem:[#allocation2 + $0x2580] sm:$0xff]
    %v1329 = vld [vmem:[#allocation2 + $0x2588] sm:$0xff]
    %v1330 = vld [vmem:[#allocation2 + $0x2590] sm:$0xff]
    %v1331 = vld [vmem:[#allocation2 + $0x2598] sm:$0xff]
    %v1332 = vld [vmem:[#allocation2 + $0x25a0] sm:$0xff]
    %v1333 = vld [vmem:[#allocation2 + $0x25a8] sm:$0xff]
    %v1334 = vld [vmem:[#allocation2 + $0x25b0] sm:$0xff]
    %v1335 = vld [vmem:[#allocation2 + $0x25b8] sm:$0xff]
    %v1336 = vld [vmem:[#allocation2 + $0x25c0] sm:$0xff]
    %v1337 = vld [vmem:[#allocation2 + $0x25c8] sm:$0xff]
    %v1338 = vld [vmem:[#allocation2 + $0x25d0] sm:$0xff]
    %v1339 = vld [vmem:[#allocation2 + $0x25d8] sm:$0xff]
    %v1340 = vld [vmem:[#allocation2 + $0x25e0] sm:$0xff]
    %v1341 = vld [vmem:[#allocation2 + $0x25e8] sm:$0xff]
    %v1342 = vld [vmem:[#allocation2 + $0x25f0] sm:$0xff]
    %v1343 = vld [vmem:[#allocation2 + $0x25f8] sm:$0xff]
    %v1344 = vld [vmem:[#allocation2 + $0x2600] sm:$0xff]
    %v1345 = vld [vmem:[#allocation2 + $0x2608] sm:$0xff]
    %v1346 = vld [vmem:[#allocation2 + $0x2610] sm:$0xff]
    %v1347 = vld [vmem:[#allocation2 + $0x2618] sm:$0xff]
    %v1348 = vld [vmem:[#allocation2 + $0x2620] sm:$0xff]
    %v1349 = vld [vmem:[#allocation2 + $0x2628] sm:$0xff]
    %v1350 = vld [vmem:[#allocation2 + $0x2630] sm:$0xff]
    %v1351 = vld [vmem:[#allocation2 + $0x2638] sm:$0xff]
    %v1352 = vld [vmem:[#allocation2 + $0x2640] sm:$0xff]
    %v1353 = vld [vmem:[#allocation2 + $0x2648] sm:$0xff]
    %v1354 = vld [vmem:[#allocation2 + $0x2650] sm:$0xff]
    %v1355 = vld [vmem:[#allocation2 + $0x2658] sm:$0xff]
    %v1356 = vld [vmem:[#allocation2 + $0x2660] sm:$0xff]
    %v1357 = vld [vmem:[#allocation2 + $0x2668] sm:$0xff]
    %v1358 = vld [vmem:[#allocation2 + $0x2670] sm:$0xff]
    %v1359 = vld [vmem:[#allocation2 + $0x2678] sm:$0xff]
    %v1360 = vld [vmem:[#allocation2 + $0x2680] sm:$0xff]
    %v1361 = vld [vmem:[#allocation2 + $0x2688] sm:$0xff]
    %v1362 = vld [vmem:[#allocation2 + $0x2690] sm:$0xff]
    %v1363 = vld [vmem:[#allocation2 + $0x2698] sm:$0xff]
    %v1364 = vld [vmem:[#allocation2 + $0x26a0] sm:$0xff]
    %v1365 = vld [vmem:[#allocation2 + $0x26a8] sm:$0xff]
    %v1366 = vld [vmem:[#allocation2 + $0x26b0] sm:$0xff]
    %v1367 = vld [vmem:[#allocation2 + $0x26b8] sm:$0xff]
    %v1368 = vld [vmem:[#allocation2 + $0x26c0] sm:$0xff]
    %v1369 = vld [vmem:[#allocation2 + $0x26c8] sm:$0xff]
    %v1370 = vld [vmem:[#allocation2 + $0x26d0] sm:$0xff]
    %v1371 = vld [vmem:[#allocation2 + $0x26d8] sm:$0xff]
    %v1372 = vld [vmem:[#allocation2 + $0x26e0] sm:$0xff]
    %v1373 = vld [vmem:[#allocation2 + $0x26e8] sm:$0xff]
    %v1374 = vld [vmem:[#allocation2 + $0x26f0] sm:$0xff]
    %v1375 = vld [vmem:[#allocation2 + $0x26f8] sm:$0xff]
    %v1376 = vld [vmem:[#allocation2 + $0x2700] sm:$0xff]
    %v1377 = vld [vmem:[#allocation2 + $0x2708] sm:$0xff]
    %v1378 = vld [vmem:[#allocation2 + $0x2710] sm:$0xff]
    %v1379 = vld [vmem:[#allocation2 + $0x2718] sm:$0xff]
    %v1380 = vld [vmem:[#allocation2 + $0x2720] sm:$0xff]
    %v1381 = vld [vmem:[#allocation2 + $0x2728] sm:$0xff]
    %v1382 = vld [vmem:[#allocation2 + $0x2730] sm:$0xff]
    %v1383 = vld [vmem:[#allocation2 + $0x2738] sm:$0xff]
    %v1384 = vld [vmem:[#allocation2 + $0x2740] sm:$0xff]
    %v1385 = vld [vmem:[#allocation2 + $0x2748] sm:$0xff]
    %v1386 = vld [vmem:[#allocation2 + $0x2750] sm:$0xff]
    %v1387 = vld [vmem:[#allocation2 + $0x2758] sm:$0xff]
    %v1388 = vld [vmem:[#allocation2 + $0x2760] sm:$0xff]
    %v1389 = vld [vmem:[#allocation2 + $0x2768] sm:$0xff]
    %v1390 = vld [vmem:[#allocation2 + $0x2770] sm:$0xff]
    %v1391 = vld [vmem:[#allocation2 + $0x2778] sm:$0xff]
    %v1392 = vld [vmem:[#allocation2 + $0x2780] sm:$0xff]
    %v1393 = vld [vmem:[#allocation2 + $0x2788] sm:$0xff]
    %v1394 = vld [vmem:[#allocation2 + $0x2790] sm:$0xff]
    %v1395 = vld [vmem:[#allocation2 + $0x2798] sm:$0xff]
    %v1396 = vld [vmem:[#allocation2 + $0x27a0] sm:$0xff]
    %v1397 = vld [vmem:[#allocation2 + $0x27a8] sm:$0xff]
    %v1398 = vld [vmem:[#allocation2 + $0x27b0] sm:$0xff]
    %v1399 = vld [vmem:[#allocation2 + $0x27b8] sm:$0xff]
    %v1400 = vld [vmem:[#allocation2 + $0x27c0] sm:$0xff]
    %v1401 = vld [vmem:[#allocation2 + $0x27c8] sm:$0xff]
    %v1402 = vld [vmem:[#allocation2 + $0x27d0] sm:$0xff]
    %v1403 = vld [vmem:[#allocation2 + $0x27d8] sm:$0xff]
    %v1404 = vld [vmem:[#allocation2 + $0x27e0] sm:$0xff]
    %v1405 = vld [vmem:[#allocation2 + $0x27e8] sm:$0xff]
    %v1406 = vld [vmem:[#allocation2 + $0x27f0] sm:$0xff]
    %v1407 = vld [vmem:[#allocation2 + $0x27f8] sm:$0xff]
    %v1408 = vld [vmem:[#allocation2 + $0x2800] sm:$0xff]
    %v1409 = vld [vmem:[#allocation2 + $0x2808] sm:$0xff]
    %v1410 = vld [vmem:[#allocation2 + $0x2810] sm:$0xff]
    %v1411 = vld [vmem:[#allocation2 + $0x2818] sm:$0xff]
    %v1412 = vld [vmem:[#allocation2 + $0x2820] sm:$0xff]
    %v1413 = vld [vmem:[#allocation2 + $0x2828] sm:$0xff]
    %v1414 = vld [vmem:[#allocation2 + $0x2830] sm:$0xff]
    %v1415 = vld [vmem:[#allocation2 + $0x2838] sm:$0xff]
    %v1416 = vld [vmem:[#allocation2 + $0x2840] sm:$0xff]
    %v1417 = vld [vmem:[#allocation2 + $0x2848] sm:$0xff]
    %v1418 = vld [vmem:[#allocation2 + $0x2850] sm:$0xff]
    %v1419 = vld [vmem:[#allocation2 + $0x2858] sm:$0xff]
    %v1420 = vld [vmem:[#allocation2 + $0x2860] sm:$0xff]
    %v1421 = vld [vmem:[#allocation2 + $0x2868] sm:$0xff]
    %v1422 = vld [vmem:[#allocation2 + $0x2870] sm:$0xff]
    %v1423 = vld [vmem:[#allocation2 + $0x2878] sm:$0xff]
    %v1424 = vld [vmem:[#allocation2 + $0x2880] sm:$0xff]
    %v1425 = vld [vmem:[#allocation2 + $0x2888] sm:$0xff]
    %v1426 = vld [vmem:[#allocation2 + $0x2890] sm:$0xff]
    %v1427 = vld [vmem:[#allocation2 + $0x2898] sm:$0xff]
    %v1428 = vld [vmem:[#allocation2 + $0x28a0] sm:$0xff]
    %v1429 = vld [vmem:[#allocation2 + $0x28a8] sm:$0xff]
    %v1430 = vld [vmem:[#allocation2 + $0x28b0] sm:$0xff]
    %v1431 = vld [vmem:[#allocation2 + $0x28b8] sm:$0xff]
    %v1432 = vld [vmem:[#allocation2 + $0x28c0] sm:$0xff]
    %v1433 = vld [vmem:[#allocation2 + $0x28c8] sm:$0xff]
    %v1434 = vld [vmem:[#allocation2 + $0x28d0] sm:$0xff]
    %v1435 = vld [vmem:[#allocation2 + $0x28d8] sm:$0xff]
    %v1436 = vld [vmem:[#allocation2 + $0x28e0] sm:$0xff]
    %v1437 = vld [vmem:[#allocation2 + $0x28e8] sm:$0xff]
    %v1438 = vld [vmem:[#allocation2 + $0x28f0] sm:$0xff]
    %v1439 = vld [vmem:[#allocation2 + $0x28f8] sm:$0xff]
    %v1440 = vld [vmem:[#allocation2 + $0x2900] sm:$0xff]
    %v1441 = vld [vmem:[#allocation2 + $0x2908] sm:$0xff]
    %v1442 = vld [vmem:[#allocation2 + $0x2910] sm:$0xff]
    %v1443 = vld [vmem:[#allocation2 + $0x2918] sm:$0xff]
    %v1444 = vld [vmem:[#allocation2 + $0x2920] sm:$0xff]
    %v1445 = vld [vmem:[#allocation2 + $0x2928] sm:$0xff]
    %v1446 = vld [vmem:[#allocation2 + $0x2930] sm:$0xff]
    %v1447 = vld [vmem:[#allocation2 + $0x2938] sm:$0xff]
    %v1448 = vld [vmem:[#allocation2 + $0x2940] sm:$0xff]
    %v1449 = vld [vmem:[#allocation2 + $0x2948] sm:$0xff]
    %v1450 = vld [vmem:[#allocation2 + $0x2950] sm:$0xff]
    %v1451 = vld [vmem:[#allocation2 + $0x2958] sm:$0xff]
    %v1452 = vld [vmem:[#allocation2 + $0x2960] sm:$0xff]
    %v1453 = vld [vmem:[#allocation2 + $0x2968] sm:$0xff]
    %v1454 = vld [vmem:[#allocation2 + $0x2970] sm:$0xff]
    %v1455 = vld [vmem:[#allocation2 + $0x2978] sm:$0xff]
    %v1456 = vld [vmem:[#allocation2 + $0x2980] sm:$0xff]
    %v1457 = vld [vmem:[#allocation2 + $0x2988] sm:$0xff]
    %v1458 = vld [vmem:[#allocation2 + $0x2990] sm:$0xff]
    %v1459 = vld [vmem:[#allocation2 + $0x2998] sm:$0xff]
    %v1460 = vld [vmem:[#allocation2 + $0x29a0] sm:$0xff]
    %v1461 = vld [vmem:[#allocation2 + $0x29a8] sm:$0xff]
    %v1462 = vld [vmem:[#allocation2 + $0x29b0] sm:$0xff]
    %v1463 = vld [vmem:[#allocation2 + $0x29b8] sm:$0xff]
    %v1464 = vld [vmem:[#allocation2 + $0x29c0] sm:$0xff]
    %v1465 = vld [vmem:[#allocation2 + $0x29c8] sm:$0xff]
    %v1466 = vld [vmem:[#allocation2 + $0x29d0] sm:$0xff]
    %v1467 = vld [vmem:[#allocation2 + $0x29d8] sm:$0xff]
    %v1468 = vld [vmem:[#allocation2 + $0x29e0] sm:$0xff]
    %v1469 = vld [vmem:[#allocation2 + $0x29e8] sm:$0xff]
    %v1470 = vld [vmem:[#allocation2 + $0x29f0] sm:$0xff]
    %v1471 = vld [vmem:[#allocation2 + $0x29f8] sm:$0xff]
    %v1472 = vld [vmem:[#allocation2 + $0x2a00] sm:$0xff]
    %v1473 = vld [vmem:[#allocation2 + $0x2a08] sm:$0xff]
    %v1474 = vld [vmem:[#allocation2 + $0x2a10] sm:$0xff]
    %v1475 = vld [vmem:[#allocation2 + $0x2a18] sm:$0xff]
    %v1476 = vld [vmem:[#allocation2 + $0x2a20] sm:$0xff]
    %v1477 = vld [vmem:[#allocation2 + $0x2a28] sm:$0xff]
    %v1478 = vld [vmem:[#allocation2 + $0x2a30] sm:$0xff]
    %v1479 = vld [vmem:[#allocation2 + $0x2a38] sm:$0xff]
    %v1480 = vld [vmem:[#allocation2 + $0x2a40] sm:$0xff]
    %v1481 = vld [vmem:[#allocation2 + $0x2a48] sm:$0xff]
    %v1482 = vld [vmem:[#allocation2 + $0x2a50] sm:$0xff]
    %v1483 = vld [vmem:[#allocation2 + $0x2a58] sm:$0xff]
    %v1484 = vld [vmem:[#allocation2 + $0x2a60] sm:$0xff]
    %v1485 = vld [vmem:[#allocation2 + $0x2a68] sm:$0xff]
    %v1486 = vld [vmem:[#allocation2 + $0x2a70] sm:$0xff]
    %v1487 = vld [vmem:[#allocation2 + $0x2a78] sm:$0xff]
    %v1488 = vld [vmem:[#allocation2 + $0x2a80] sm:$0xff]
    %v1489 = vld [vmem:[#allocation2 + $0x2a88] sm:$0xff]
    %v1490 = vld [vmem:[#allocation2 + $0x2a90] sm:$0xff]
    %v1491 = vld [vmem:[#allocation2 + $0x2a98] sm:$0xff]
    %v1492 = vld [vmem:[#allocation2 + $0x2aa0] sm:$0xff]
    %v1493 = vld [vmem:[#allocation2 + $0x2aa8] sm:$0xff]
    %v1494 = vld [vmem:[#allocation2 + $0x2ab0] sm:$0xff]
    %v1495 = vld [vmem:[#allocation2 + $0x2ab8] sm:$0xff]
    %v1496 = vld [vmem:[#allocation2 + $0x2ac0] sm:$0xff]
    %v1497 = vld [vmem:[#allocation2 + $0x2ac8] sm:$0xff]
    %v1498 = vld [vmem:[#allocation2 + $0x2ad0] sm:$0xff]
    %v1499 = vld [vmem:[#allocation2 + $0x2ad8] sm:$0xff]
    %v1500 = vld [vmem:[#allocation2 + $0x2ae0] sm:$0xff]
    %v1501 = vld [vmem:[#allocation2 + $0x2ae8] sm:$0xff]
    %v1502 = vld [vmem:[#allocation2 + $0x2af0] sm:$0xff]
    %v1503 = vld [vmem:[#allocation2 + $0x2af8] sm:$0xff]
    %v1504 = vld [vmem:[#allocation2 + $0x2b00] sm:$0xff]
    %v1505 = vld [vmem:[#allocation2 + $0x2b08] sm:$0xff]
    %v1506 = vld [vmem:[#allocation2 + $0x2b10] sm:$0xff]
    %v1507 = vld [vmem:[#allocation2 + $0x2b18] sm:$0xff]
    %v1508 = vld [vmem:[#allocation2 + $0x2b20] sm:$0xff]
    %v1509 = vld [vmem:[#allocation2 + $0x2b28] sm:$0xff]
    %v1510 = vld [vmem:[#allocation2 + $0x2b30] sm:$0xff]
    %v1511 = vld [vmem:[#allocation2 + $0x2b38] sm:$0xff]
    %v1512 = vld [vmem:[#allocation2 + $0x2b40] sm:$0xff]
    %v1513 = vld [vmem:[#allocation2 + $0x2b48] sm:$0xff]
    %v1514 = vld [vmem:[#allocation2 + $0x2b50] sm:$0xff]
    %v1515 = vld [vmem:[#allocation2 + $0x2b58] sm:$0xff]
    %v1516 = vld [vmem:[#allocation2 + $0x2b60] sm:$0xff]
    %v1517 = vld [vmem:[#allocation2 + $0x2b68] sm:$0xff]
    %v1518 = vld [vmem:[#allocation2 + $0x2b70] sm:$0xff]
    %v1519 = vld [vmem:[#allocation2 + $0x2b78] sm:$0xff]
    %v1520 = vld [vmem:[#allocation2 + $0x2b80] sm:$0xff]
    %v1521 = vld [vmem:[#allocation2 + $0x2b88] sm:$0xff]
    %v1522 = vld [vmem:[#allocation2 + $0x2b90] sm:$0xff]
    %v1523 = vld [vmem:[#allocation2 + $0x2b98] sm:$0xff]
    %v1524 = vld [vmem:[#allocation2 + $0x2ba0] sm:$0xff]
    %v1525 = vld [vmem:[#allocation2 + $0x2ba8] sm:$0xff]
    %v1526 = vld [vmem:[#allocation2 + $0x2bb0] sm:$0xff]
    %v1527 = vld [vmem:[#allocation2 + $0x2bb8] sm:$0xff]
    %v1528 = vld [vmem:[#allocation2 + $0x2bc0] sm:$0xff]
    %v1529 = vld [vmem:[#allocation2 + $0x2bc8] sm:$0xff]
    %v1530 = vld [vmem:[#allocation2 + $0x2bd0] sm:$0xff]
    %v1531 = vld [vmem:[#allocation2 + $0x2bd8] sm:$0xff]
    %v1532 = vld [vmem:[#allocation2 + $0x2be0] sm:$0xff]
    %v1533 = vld [vmem:[#allocation2 + $0x2be8] sm:$0xff]
    %v1534 = vld [vmem:[#allocation2 + $0x2bf0] sm:$0xff]
    %v1535 = vld [vmem:[#allocation2 + $0x2bf8] sm:$0xff]
    %v1536 = vld [vmem:[#allocation2 + $0x2c00] sm:$0xff]
    %v1537 = vld [vmem:[#allocation2 + $0x2c08] sm:$0xff]
    %v1538 = vld [vmem:[#allocation2 + $0x2c10] sm:$0xff]
    %v1539 = vld [vmem:[#allocation2 + $0x2c18] sm:$0xff]
    %v1540 = vld [vmem:[#allocation2 + $0x2c20] sm:$0xff]
    %v1541 = vld [vmem:[#allocation2 + $0x2c28] sm:$0xff]
    %v1542 = vld [vmem:[#allocation2 + $0x2c30] sm:$0xff]
    %v1543 = vld [vmem:[#allocation2 + $0x2c38] sm:$0xff]
    %v1544 = vld [vmem:[#allocation2 + $0x2c40] sm:$0xff]
    %v1545 = vld [vmem:[#allocation2 + $0x2c48] sm:$0xff]
    %v1546 = vld [vmem:[#allocation2 + $0x2c50] sm:$0xff]
    %v1547 = vld [vmem:[#allocation2 + $0x2c58] sm:$0xff]
    %v1548 = vld [vmem:[#allocation2 + $0x2c60] sm:$0xff]
    %v1549 = vld [vmem:[#allocation2 + $0x2c68] sm:$0xff]
    %v1550 = vld [vmem:[#allocation2 + $0x2c70] sm:$0xff]
    %v1551 = vld [vmem:[#allocation2 + $0x2c78] sm:$0xff]
    %v1552 = vld [vmem:[#allocation2 + $0x2c80] sm:$0xff]
    %v1553 = vld [vmem:[#allocation2 + $0x2c88] sm:$0xff]
    %v1554 = vld [vmem:[#allocation2 + $0x2c90] sm:$0xff]
    %v1555 = vld [vmem:[#allocation2 + $0x2c98] sm:$0xff]
    %v1556 = vld [vmem:[#allocation2 + $0x2ca0] sm:$0xff]
    %v1557 = vld [vmem:[#allocation2 + $0x2ca8] sm:$0xff]
    %v1558 = vld [vmem:[#allocation2 + $0x2cb0] sm:$0xff]
    %v1559 = vld [vmem:[#allocation2 + $0x2cb8] sm:$0xff]
    %v1560 = vld [vmem:[#allocation2 + $0x2cc0] sm:$0xff]
    %v1561 = vld [vmem:[#allocation2 + $0x2cc8] sm:$0xff]
    %v1562 = vld [vmem:[#allocation2 + $0x2cd0] sm:$0xff]
    %v1563 = vld [vmem:[#allocation2 + $0x2cd8] sm:$0xff]
    %v1564 = vld [vmem:[#allocation2 + $0x2ce0] sm:$0xff]
    %v1565 = vld [vmem:[#allocation2 + $0x2ce8] sm:$0xff]
    %v1566 = vld [vmem:[#allocation2 + $0x2cf0] sm:$0xff]
    %v1567 = vld [vmem:[#allocation2 + $0x2cf8] sm:$0xff]
    %v1568 = vld [vmem:[#allocation2 + $0x2d00] sm:$0xff]
    %v1569 = vld [vmem:[#allocation2 + $0x2d08] sm:$0xff]
    %v1570 = vld [vmem:[#allocation2 + $0x2d10] sm:$0xff]
    %v1571 = vld [vmem:[#allocation2 + $0x2d18] sm:$0xff]
    %v1572 = vld [vmem:[#allocation2 + $0x2d20] sm:$0xff]
    %v1573 = vld [vmem:[#allocation2 + $0x2d28] sm:$0xff]
    %v1574 = vld [vmem:[#allocation2 + $0x2d30] sm:$0xff]
    %v1575 = vld [vmem:[#allocation2 + $0x2d38] sm:$0xff]
    %v1576 = vld [vmem:[#allocation2 + $0x2d40] sm:$0xff]
    %v1577 = vld [vmem:[#allocation2 + $0x2d48] sm:$0xff]
    %v1578 = vld [vmem:[#allocation2 + $0x2d50] sm:$0xff]
    %v1579 = vld [vmem:[#allocation2 + $0x2d58] sm:$0xff]
    %v1580 = vld [vmem:[#allocation2 + $0x2d60] sm:$0xff]
    %v1581 = vld [vmem:[#allocation2 + $0x2d68] sm:$0xff]
    %v1582 = vld [vmem:[#allocation2 + $0x2d70] sm:$0xff]
    %v1583 = vld [vmem:[#allocation2 + $0x2d78] sm:$0xff]
    %v1584 = vld [vmem:[#allocation2 + $0x2d80] sm:$0xff]
    %v1585 = vld [vmem:[#allocation2 + $0x2d88] sm:$0xff]
    %v1586 = vld [vmem:[#allocation2 + $0x2d90] sm:$0xff]
    %v1587 = vld [vmem:[#allocation2 + $0x2d98] sm:$0xff]
    %v1588 = vld [vmem:[#allocation2 + $0x2da0] sm:$0xff]
    %v1589 = vld [vmem:[#allocation2 + $0x2da8] sm:$0xff]
    %v1590 = vld [vmem:[#allocation2 + $0x2db0] sm:$0xff]
    %v1591 = vld [vmem:[#allocation2 + $0x2db8] sm:$0xff]
    %v1592 = vld [vmem:[#allocation2 + $0x2dc0] sm:$0xff]
    %v1593 = vld [vmem:[#allocation2 + $0x2dc8] sm:$0xff]
    %v1594 = vld [vmem:[#allocation2 + $0x2dd0] sm:$0xff]
    %v1595 = vld [vmem:[#allocation2 + $0x2dd8] sm:$0xff]
    %v1596 = vld [vmem:[#allocation2 + $0x2de0] sm:$0xff]
    %v1597 = vld [vmem:[#allocation2 + $0x2de8] sm:$0xff]
    %v1598 = vld [vmem:[#allocation2 + $0x2df0] sm:$0xff]
    %v1599 = vld [vmem:[#allocation2 + $0x2df8] sm:$0xff]
    %v1600 = vld [vmem:[#allocation2 + $0x2e00] sm:$0xff]
    %v1601 = vld [vmem:[#allocation2 + $0x2e08] sm:$0xff]
    %v1602 = vld [vmem:[#allocation2 + $0x2e10] sm:$0xff]
    %v1603 = vld [vmem:[#allocation2 + $0x2e18] sm:$0xff]
    %v1604 = vld [vmem:[#allocation2 + $0x2e20] sm:$0xff]
    %v1605 = vld [vmem:[#allocation2 + $0x2e28] sm:$0xff]
    %v1606 = vld [vmem:[#allocation2 + $0x2e30] sm:$0xff]
    %v1607 = vld [vmem:[#allocation2 + $0x2e38] sm:$0xff]
    %v1608 = vld [vmem:[#allocation2 + $0x2e40] sm:$0xff]
    %v1609 = vld [vmem:[#allocation2 + $0x2e48] sm:$0xff]
    %v1610 = vld [vmem:[#allocation2 + $0x2e50] sm:$0xff]
    %v1611 = vld [vmem:[#allocation2 + $0x2e58] sm:$0xff]
    %v1612 = vld [vmem:[#allocation2 + $0x2e60] sm:$0xff]
    %v1613 = vld [vmem:[#allocation2 + $0x2e68] sm:$0xff]
    %v1614 = vld [vmem:[#allocation2 + $0x2e70] sm:$0xff]
    %v1615 = vld [vmem:[#allocation2 + $0x2e78] sm:$0xff]
    %v1616 = vld [vmem:[#allocation2 + $0x2e80] sm:$0xff]
    %v1617 = vld [vmem:[#allocation2 + $0x2e88] sm:$0xff]
    %v1618 = vld [vmem:[#allocation2 + $0x2e90] sm:$0xff]
    %v1619 = vld [vmem:[#allocation2 + $0x2e98] sm:$0xff]
    %v1620 = vld [vmem:[#allocation2 + $0x2ea0] sm:$0xff]
    %v1621 = vld [vmem:[#allocation2 + $0x2ea8] sm:$0xff]
    %v1622 = vld [vmem:[#allocation2 + $0x2eb0] sm:$0xff]
    %v1623 = vld [vmem:[#allocation2 + $0x2eb8] sm:$0xff]
    %v1624 = vld [vmem:[#allocation2 + $0x2ec0] sm:$0xff]
    %v1625 = vld [vmem:[#allocation2 + $0x2ec8] sm:$0xff]
    %v1626 = vld [vmem:[#allocation2 + $0x2ed0] sm:$0xff]
    %v1627 = vld [vmem:[#allocation2 + $0x2ed8] sm:$0xff]
    %v1628 = vld [vmem:[#allocation2 + $0x2ee0] sm:$0xff]
    %v1629 = vld [vmem:[#allocation2 + $0x2ee8] sm:$0xff]
    %v1630 = vld [vmem:[#allocation2 + $0x2ef0] sm:$0xff]
    %v1631 = vld [vmem:[#allocation2 + $0x2ef8] sm:$0xff]
    %v1632 = vld [vmem:[#allocation2 + $0x2f00] sm:$0xff]
    %v1633 = vld [vmem:[#allocation2 + $0x2f08] sm:$0xff]
    %v1634 = vld [vmem:[#allocation2 + $0x2f10] sm:$0xff]
    %v1635 = vld [vmem:[#allocation2 + $0x2f18] sm:$0xff]
    %v1636 = vld [vmem:[#allocation2 + $0x2f20] sm:$0xff]
    %v1637 = vld [vmem:[#allocation2 + $0x2f28] sm:$0xff]
    %v1638 = vld [vmem:[#allocation2 + $0x2f30] sm:$0xff]
    %v1639 = vld [vmem:[#allocation2 + $0x2f38] sm:$0xff]
    %v1640 = vld [vmem:[#allocation2 + $0x2f40] sm:$0xff]
    %v1641 = vld [vmem:[#allocation2 + $0x2f48] sm:$0xff]
    %v1642 = vld [vmem:[#allocation2 + $0x2f50] sm:$0xff]
    %v1643 = vld [vmem:[#allocation2 + $0x2f58] sm:$0xff]
    %v1644 = vld [vmem:[#allocation2 + $0x2f60] sm:$0xff]
    %v1645 = vld [vmem:[#allocation2 + $0x2f68] sm:$0xff]
    %v1646 = vld [vmem:[#allocation2 + $0x2f70] sm:$0xff]
    %v1647 = vld [vmem:[#allocation2 + $0x2f78] sm:$0xff]
    %v1648 = vld [vmem:[#allocation2 + $0x2f80] sm:$0xff]
    %v1649 = vld [vmem:[#allocation2 + $0x2f88] sm:$0xff]
    %v1650 = vld [vmem:[#allocation2 + $0x2f90] sm:$0xff]
    %v1651 = vld [vmem:[#allocation2 + $0x2f98] sm:$0xff]
    %v1652 = vld [vmem:[#allocation2 + $0x2fa0] sm:$0xff]
    %v1653 = vld [vmem:[#allocation2 + $0x2fa8] sm:$0xff]
    %v1654 = vld [vmem:[#allocation2 + $0x2fb0] sm:$0xff]
    %v1655 = vld [vmem:[#allocation2 + $0x2fb8] sm:$0xff]
    %v1656 = vld [vmem:[#allocation2 + $0x2fc0] sm:$0xff]
    %v1657 = vld [vmem:[#allocation2 + $0x2fc8] sm:$0xff]
    %v1658 = vld [vmem:[#allocation2 + $0x2fd0] sm:$0xff]
    %v1659 = vld [vmem:[#allocation2 + $0x2fd8] sm:$0xff]
    %v1660 = vld [vmem:[#allocation2 + $0x2fe0] sm:$0xff]
    %v1661 = vld [vmem:[#allocation2 + $0x2fe8] sm:$0xff]
    %v1662 = vld [vmem:[#allocation2 + $0x2ff0] sm:$0xff]
    %v1663 = vld [vmem:[#allocation2 + $0x2ff8] sm:$0xff]
    %v1664 = vld [vmem:[#allocation4] sm:$0x3f]
    %v1665 = vld [vmem:[#allocation6] sm:$0xff]
    %v1666 = vld [vmem:[#allocation6 + $0x8] sm:$0xff]
    %v1667 = vld [vmem:[#allocation6 + $0x10] sm:$0xff]
    %v1668 = vld [vmem:[#allocation6 + $0x18] sm:$0xff]
    %v1669 = vld [vmem:[#allocation6 + $0x20] sm:$0xff]
    %v1670 = vld [vmem:[#allocation6 + $0x28] sm:$0xff]
    %v1671 = vld [vmem:[#allocation6 + $0x30] sm:$0xff]
    %v1672 = vld [vmem:[#allocation6 + $0x38] sm:$0xff]
    %v1673 = vld [vmem:[#allocation6 + $0x40] sm:$0xff]
    %v1674 = vld [vmem:[#allocation6 + $0x48] sm:$0xff]
    %v1675 = vld [vmem:[#allocation6 + $0x50] sm:$0xff]
    %v1676 = vld [vmem:[#allocation6 + $0x58] sm:$0xff]
    %v1677 = vld [vmem:[#allocation6 + $0x60] sm:$0xff]
    %v1678 = vld [vmem:[#allocation6 + $0x68] sm:$0xff]
    %v1679 = vld [vmem:[#allocation6 + $0x70] sm:$0xff]
    %v1680 = vld [vmem:[#allocation6 + $0x78] sm:$0xff]
    %v1681 = vld [vmem:[#allocation6 + $0x80] sm:$0xff]
    %v1682 = vld [vmem:[#allocation6 + $0x88] sm:$0xff]
    %v1683 = vld [vmem:[#allocation6 + $0x90] sm:$0xff]
    %v1684 = vld [vmem:[#allocation6 + $0x98] sm:$0xff]
    %v1685 = vld [vmem:[#allocation6 + $0xa0] sm:$0xff]
    %v1686 = vld [vmem:[#allocation6 + $0xa8] sm:$0xff]
    %v1687 = vld [vmem:[#allocation6 + $0xb0] sm:$0xff]
    %v1688 = vld [vmem:[#allocation6 + $0xb8] sm:$0xff]
    %v1689 = vld [vmem:[#allocation6 + $0xc0] sm:$0xff]
    %v1690 = vld [vmem:[#allocation6 + $0xc8] sm:$0xff]
    %v1691 = vld [vmem:[#allocation6 + $0xd0] sm:$0xff]
    %v1692 = vld [vmem:[#allocation6 + $0xd8] sm:$0xff]
    %v1693 = vld [vmem:[#allocation6 + $0xe0] sm:$0xff]
    %v1694 = vld [vmem:[#allocation6 + $0xe8] sm:$0xff]
    %v1695 = vld [vmem:[#allocation6 + $0xf0] sm:$0xff]
    %v1696 = vld [vmem:[#allocation6 + $0xf8] sm:$0xff]
    %v1697 = vld [vmem:[#allocation6 + $0x100] sm:$0xff]
    %v1698 = vld [vmem:[#allocation6 + $0x108] sm:$0xff]
    %v1699 = vld [vmem:[#allocation6 + $0x110] sm:$0xff]
    %v1700 = vld [vmem:[#allocation6 + $0x118] sm:$0xff]
    %v1701 = vld [vmem:[#allocation6 + $0x120] sm:$0xff]
    %v1702 = vld [vmem:[#allocation6 + $0x128] sm:$0xff]
    %v1703 = vld [vmem:[#allocation6 + $0x130] sm:$0xff]
    %v1704 = vld [vmem:[#allocation6 + $0x138] sm:$0xff]
    %v1705 = vld [vmem:[#allocation6 + $0x140] sm:$0xff]
    %v1706 = vld [vmem:[#allocation6 + $0x148] sm:$0xff]
    %v1707 = vld [vmem:[#allocation6 + $0x150] sm:$0xff]
    %v1708 = vld [vmem:[#allocation6 + $0x158] sm:$0xff]
    %v1709 = vld [vmem:[#allocation6 + $0x160] sm:$0xff]
    %v1710 = vld [vmem:[#allocation6 + $0x168] sm:$0xff]
    %v1711 = vld [vmem:[#allocation6 + $0x170] sm:$0xff]
    %v1712 = vld [vmem:[#allocation6 + $0x178] sm:$0xff]
    %v1713 = vld [vmem:[#allocation6 + $0x180] sm:$0xff]
    %v1714 = vld [vmem:[#allocation6 + $0x188] sm:$0xff]
    %v1715 = vld [vmem:[#allocation6 + $0x190] sm:$0xff]
    %v1716 = vld [vmem:[#allocation6 + $0x198] sm:$0xff]
    %v1717 = vld [vmem:[#allocation6 + $0x1a0] sm:$0xff]
    %v1718 = vld [vmem:[#allocation6 + $0x1a8] sm:$0xff]
    %v1719 = vld [vmem:[#allocation6 + $0x1b0] sm:$0xff]
    %v1720 = vld [vmem:[#allocation6 + $0x1b8] sm:$0xff]
    %v1721 = vld [vmem:[#allocation6 + $0x1c0] sm:$0xff]
    %v1722 = vld [vmem:[#allocation6 + $0x1c8] sm:$0xff]
    %v1723 = vld [vmem:[#allocation6 + $0x1d0] sm:$0xff]
    %v1724 = vld [vmem:[#allocation6 + $0x1d8] sm:$0xff]
    %v1725 = vld [vmem:[#allocation6 + $0x1e0] sm:$0xff]
    %v1726 = vld [vmem:[#allocation6 + $0x1e8] sm:$0xff]
    %v1727 = vld [vmem:[#allocation6 + $0x1f0] sm:$0xff]
    %v1728 = vld [vmem:[#allocation6 + $0x1f8] sm:$0xff]
    %v1729 = vld [vmem:[#allocation6 + $0x200] sm:$0xff]
    %v1730 = vld [vmem:[#allocation6 + $0x208] sm:$0xff]
    %v1731 = vld [vmem:[#allocation6 + $0x210] sm:$0xff]
    %v1732 = vld [vmem:[#allocation6 + $0x218] sm:$0xff]
    %v1733 = vld [vmem:[#allocation6 + $0x220] sm:$0xff]
    %v1734 = vld [vmem:[#allocation6 + $0x228] sm:$0xff]
    %v1735 = vld [vmem:[#allocation6 + $0x230] sm:$0xff]
    %v1736 = vld [vmem:[#allocation6 + $0x238] sm:$0xff]
    %v1737 = vld [vmem:[#allocation6 + $0x240] sm:$0xff]
    %v1738 = vld [vmem:[#allocation6 + $0x248] sm:$0xff]
    %v1739 = vld [vmem:[#allocation6 + $0x250] sm:$0xff]
    %v1740 = vld [vmem:[#allocation6 + $0x258] sm:$0xff]
    %v1741 = vld [vmem:[#allocation6 + $0x260] sm:$0xff]
    %v1742 = vld [vmem:[#allocation6 + $0x268] sm:$0xff]
    %v1743 = vld [vmem:[#allocation6 + $0x270] sm:$0xff]
    %v1744 = vld [vmem:[#allocation6 + $0x278] sm:$0xff]
    %v1745 = vld [vmem:[#allocation6 + $0x280] sm:$0xff]
    %v1746 = vld [vmem:[#allocation6 + $0x288] sm:$0xff]
    %v1747 = vld [vmem:[#allocation6 + $0x290] sm:$0xff]
    %v1748 = vld [vmem:[#allocation6 + $0x298] sm:$0xff]
    %v1749 = vld [vmem:[#allocation6 + $0x2a0] sm:$0xff]
    %v1750 = vld [vmem:[#allocation6 + $0x2a8] sm:$0xff]
    %v1751 = vld [vmem:[#allocation6 + $0x2b0] sm:$0xff]
    %v1752 = vld [vmem:[#allocation6 + $0x2b8] sm:$0xff]
    %v1753 = vld [vmem:[#allocation6 + $0x2c0] sm:$0xff]
    %v1754 = vld [vmem:[#allocation6 + $0x2c8] sm:$0xff]
    %v1755 = vld [vmem:[#allocation6 + $0x2d0] sm:$0xff]
    %v1756 = vld [vmem:[#allocation6 + $0x2d8] sm:$0xff]
    %v1757 = vld [vmem:[#allocation6 + $0x2e0] sm:$0xff]
    %v1758 = vld [vmem:[#allocation6 + $0x2e8] sm:$0xff]
    %v1759 = vld [vmem:[#allocation6 + $0x2f0] sm:$0xff]
    %v1760 = vld [vmem:[#allocation6 + $0x2f8] sm:$0xff]
    %v1761 = vld [vmem:[#allocation6 + $0x300] sm:$0xff]
    %v1762 = vld [vmem:[#allocation6 + $0x308] sm:$0xff]
    %v1763 = vld [vmem:[#allocation6 + $0x310] sm:$0xff]
    %v1764 = vld [vmem:[#allocation6 + $0x318] sm:$0xff]
    %v1765 = vld [vmem:[#allocation6 + $0x320] sm:$0xff]
    %v1766 = vld [vmem:[#allocation6 + $0x328] sm:$0xff]
    %v1767 = vld [vmem:[#allocation6 + $0x330] sm:$0xff]
    %v1768 = vld [vmem:[#allocation6 + $0x338] sm:$0xff]
    %v1769 = vld [vmem:[#allocation6 + $0x340] sm:$0xff]
    %v1770 = vld [vmem:[#allocation6 + $0x348] sm:$0xff]
    %v1771 = vld [vmem:[#allocation6 + $0x350] sm:$0xff]
    %v1772 = vld [vmem:[#allocation6 + $0x358] sm:$0xff]
    %v1773 = vld [vmem:[#allocation6 + $0x360] sm:$0xff]
    %v1774 = vld [vmem:[#allocation6 + $0x368] sm:$0xff]
    %v1775 = vld [vmem:[#allocation6 + $0x370] sm:$0xff]
    %v1776 = vld [vmem:[#allocation6 + $0x378] sm:$0xff]
    %v1777 = vld [vmem:[#allocation6 + $0x380] sm:$0xff]
    %v1778 = vld [vmem:[#allocation6 + $0x388] sm:$0xff]
    %v1779 = vld [vmem:[#allocation6 + $0x390] sm:$0xff]
    %v1780 = vld [vmem:[#allocation6 + $0x398] sm:$0xff]
    %v1781 = vld [vmem:[#allocation6 + $0x3a0] sm:$0xff]
    %v1782 = vld [vmem:[#allocation6 + $0x3a8] sm:$0xff]
    %v1783 = vld [vmem:[#allocation6 + $0x3b0] sm:$0xff]
    %v1784 = vld [vmem:[#allocation6 + $0x3b8] sm:$0xff]
    %v1785 = vld [vmem:[#allocation6 + $0x3c0] sm:$0xff]
    %v1786 = vld [vmem:[#allocation6 + $0x3c8] sm:$0xff]
    %v1787 = vld [vmem:[#allocation6 + $0x3d0] sm:$0xff]
    %v1788 = vld [vmem:[#allocation6 + $0x3d8] sm:$0xff]
    %v1789 = vld [vmem:[#allocation6 + $0x3e0] sm:$0xff]
    %v1790 = vld [vmem:[#allocation6 + $0x3e8] sm:$0xff]
    %v1791 = vld [vmem:[#allocation6 + $0x3f0] sm:$0xff]
    %v1792 = vld [vmem:[#allocation6 + $0x3f8] sm:$0xff]
    %v1793 = vld [vmem:[#allocation6 + $0x400] sm:$0xff]
    %v1794 = vld [vmem:[#allocation6 + $0x408] sm:$0xff]
    %v1795 = vld [vmem:[#allocation6 + $0x410] sm:$0xff]
    %v1796 = vld [vmem:[#allocation6 + $0x418] sm:$0xff]
    %v1797 = vld [vmem:[#allocation6 + $0x420] sm:$0xff]
    %v1798 = vld [vmem:[#allocation6 + $0x428] sm:$0xff]
    %v1799 = vld [vmem:[#allocation6 + $0x430] sm:$0xff]
    %v1800 = vld [vmem:[#allocation6 + $0x438] sm:$0xff]
    %v1801 = vld [vmem:[#allocation6 + $0x440] sm:$0xff]
    %v1802 = vld [vmem:[#allocation6 + $0x448] sm:$0xff]
    %v1803 = vld [vmem:[#allocation6 + $0x450] sm:$0xff]
    %v1804 = vld [vmem:[#allocation6 + $0x458] sm:$0xff]
    %v1805 = vld [vmem:[#allocation6 + $0x460] sm:$0xff]
    %v1806 = vld [vmem:[#allocation6 + $0x468] sm:$0xff]
    %v1807 = vld [vmem:[#allocation6 + $0x470] sm:$0xff]
    %v1808 = vld [vmem:[#allocation6 + $0x478] sm:$0xff]
    %v1809 = vld [vmem:[#allocation6 + $0x480] sm:$0xff]
    %v1810 = vld [vmem:[#allocation6 + $0x488] sm:$0xff]
    %v1811 = vld [vmem:[#allocation6 + $0x490] sm:$0xff]
    %v1812 = vld [vmem:[#allocation6 + $0x498] sm:$0xff]
    %v1813 = vld [vmem:[#allocation6 + $0x4a0] sm:$0xff]
    %v1814 = vld [vmem:[#allocation6 + $0x4a8] sm:$0xff]
    %v1815 = vld [vmem:[#allocation6 + $0x4b0] sm:$0xff]
    %v1816 = vld [vmem:[#allocation6 + $0x4b8] sm:$0xff]
    %v1817 = vld [vmem:[#allocation6 + $0x4c0] sm:$0xff]
    %v1818 = vld [vmem:[#allocation6 + $0x4c8] sm:$0xff]
    %v1819 = vld [vmem:[#allocation6 + $0x4d0] sm:$0xff]
    %v1820 = vld [vmem:[#allocation6 + $0x4d8] sm:$0xff]
    %v1821 = vld [vmem:[#allocation6 + $0x4e0] sm:$0xff]
    %v1822 = vld [vmem:[#allocation6 + $0x4e8] sm:$0xff]
    %v1823 = vld [vmem:[#allocation6 + $0x4f0] sm:$0xff]
    %v1824 = vld [vmem:[#allocation6 + $0x4f8] sm:$0xff]
    %v1825 = vld [vmem:[#allocation6 + $0x500] sm:$0xff]
    %v1826 = vld [vmem:[#allocation6 + $0x508] sm:$0xff]
    %v1827 = vld [vmem:[#allocation6 + $0x510] sm:$0xff]
    %v1828 = vld [vmem:[#allocation6 + $0x518] sm:$0xff]
    %v1829 = vld [vmem:[#allocation6 + $0x520] sm:$0xff]
    %v1830 = vld [vmem:[#allocation6 + $0x528] sm:$0xff]
    %v1831 = vld [vmem:[#allocation6 + $0x530] sm:$0xff]
    %v1832 = vld [vmem:[#allocation6 + $0x538] sm:$0xff]
    %v1833 = vld [vmem:[#allocation6 + $0x540] sm:$0xff]
    %v1834 = vld [vmem:[#allocation6 + $0x548] sm:$0xff]
    %v1835 = vld [vmem:[#allocation6 + $0x550] sm:$0xff]
    %v1836 = vld [vmem:[#allocation6 + $0x558] sm:$0xff]
    %v1837 = vld [vmem:[#allocation6 + $0x560] sm:$0xff]
    %v1838 = vld [vmem:[#allocation6 + $0x568] sm:$0xff]
    %v1839 = vld [vmem:[#allocation6 + $0x570] sm:$0xff]
    %v1840 = vld [vmem:[#allocation6 + $0x578] sm:$0xff]
    %v1841 = vld [vmem:[#allocation6 + $0x580] sm:$0xff]
    %v1842 = vld [vmem:[#allocation6 + $0x588] sm:$0xff]
    %v1843 = vld [vmem:[#allocation6 + $0x590] sm:$0xff]
    %v1844 = vld [vmem:[#allocation6 + $0x598] sm:$0xff]
    %v1845 = vld [vmem:[#allocation6 + $0x5a0] sm:$0xff]
    %v1846 = vld [vmem:[#allocation6 + $0x5a8] sm:$0xff]
    %v1847 = vld [vmem:[#allocation6 + $0x5b0] sm:$0xff]
    %v1848 = vld [vmem:[#allocation6 + $0x5b8] sm:$0xff]
    %v1849 = vld [vmem:[#allocation6 + $0x5c0] sm:$0xff]
    %v1850 = vld [vmem:[#allocation6 + $0x5c8] sm:$0xff]
    %v1851 = vld [vmem:[#allocation6 + $0x5d0] sm:$0xff]
    %v1852 = vld [vmem:[#allocation6 + $0x5d8] sm:$0xff]
    %v1853 = vld [vmem:[#allocation6 + $0x5e0] sm:$0xff]
    %v1854 = vld [vmem:[#allocation6 + $0x5e8] sm:$0xff]
    %v1855 = vld [vmem:[#allocation6 + $0x5f0] sm:$0xff]
    %v1856 = vld [vmem:[#allocation6 + $0x5f8] sm:$0xff]
    %v1857 = vld [vmem:[#allocation7] sm:$0x1]
    %v1858 = vld [vmem:[%s5] sm:$0xff]
    %v1859 = vld [vmem:[%s5 + $0x8] sm:$0xff]
    %v1860 = vld [vmem:[%s5 + $0x10] sm:$0xff]
    %v1861 = vld [vmem:[%s5 + $0x18] sm:$0xff]
    %v1862 = vld [vmem:[%s5 + $0x20] sm:$0xff]
    %v1863 = vld [vmem:[%s5 + $0x28] sm:$0xff]
    %v1864 = vld [vmem:[%s5 + $0x30] sm:$0xff]
    %v1865 = vld [vmem:[%s5 + $0x38] sm:$0xff]
    %v1866 = vld [vmem:[%s5 + $0x40] sm:$0xff]
    %v1867 = vld [vmem:[%s5 + $0x48] sm:$0xff]
    %v1868 = vld [vmem:[%s5 + $0x50] sm:$0xff]
    %v1869 = vld [vmem:[%s5 + $0x58] sm:$0xff]
    %v1870 = vld [vmem:[%s5 + $0x60] sm:$0xff]
    %v1871 = vld [vmem:[%s5 + $0x68] sm:$0xff]
    %v1872 = vld [vmem:[%s5 + $0x70] sm:$0xff]
    %v1873 = vld [vmem:[%s5 + $0x78] sm:$0xff]
    %v1874 = vld [vmem:[%s5 + $0x80] sm:$0xff]
    %v1875 = vld [vmem:[%s5 + $0x88] sm:$0xff]
    %v1876 = vld [vmem:[%s5 + $0x90] sm:$0xff]
    %v1877 = vld [vmem:[%s5 + $0x98] sm:$0xff]
    %v1878 = vld [vmem:[%s5 + $0xa0] sm:$0xff]
    %v1879 = vld [vmem:[%s5 + $0xa8] sm:$0xff]
    %v1880 = vld [vmem:[%s5 + $0xb0] sm:$0xff]
    %v1881 = vld [vmem:[%s5 + $0xb8] sm:$0xff]
    %v1882 = vld [vmem:[%s5 + $0xc0] sm:$0xff]
    %v1883 = vld [vmem:[%s5 + $0xc8] sm:$0xff]
    %v1884 = vld [vmem:[%s5 + $0xd0] sm:$0xff]
    %v1885 = vld [vmem:[%s5 + $0xd8] sm:$0xff]
    %v1886 = vld [vmem:[%s5 + $0xe0] sm:$0xff]
    %v1887 = vld [vmem:[%s5 + $0xe8] sm:$0xff]
    %v1888 = vld [vmem:[%s5 + $0xf0] sm:$0xff]
    %v1889 = vld [vmem:[%s5 + $0xf8] sm:$0xff]
    %v1890 = vld [vmem:[#allocation9] sm:$0xf]
    %v1891 = vld [vmem:[#allocation10] sm:$0xf]
    %v1892 = vld [vmem:[#allocation10 + $0x4] sm:$0xf]
    %v1893 = vld [vmem:[#allocation10 + $0x8] sm:$0xf]
    %v1894 = vld [vmem:[#allocation10 + $0xc] sm:$0xf]
    %v1895 = vld [vmem:[#allocation10 + $0x10] sm:$0xf]
    %v1896 = vld [vmem:[#allocation10 + $0x14] sm:$0xf]
    %v1897 = vld [vmem:[#allocation10 + $0x18] sm:$0xf]
    %v1898 = vld [vmem:[#allocation10 + $0x1c] sm:$0xf]
    %v1899 = vld [vmem:[#allocation10 + $0x20] sm:$0xf]
    %v1900 = vld [vmem:[#allocation10 + $0x24] sm:$0xf]
    %v1901 = vld [vmem:[#allocation10 + $0x28] sm:$0xf]
    %v1902 = vld [vmem:[#allocation10 + $0x2c] sm:$0xf]
    %v1903 = vld [vmem:[#allocation10 + $0x30] sm:$0xf]
    %v1904 = vld [vmem:[#allocation10 + $0x34] sm:$0xf]
    %v1905 = vld [vmem:[#allocation10 + $0x38] sm:$0xf]
    %v1906 = vld [vmem:[#allocation10 + $0x3c] sm:$0xf]
    %v1907 = vld [vmem:[#allocation10 + $0x40] sm:$0xf]
    %v1908 = vld [vmem:[#allocation10 + $0x44] sm:$0xf]
    %v1909 = vld [vmem:[#allocation10 + $0x48] sm:$0xf]
    %v1910 = vld [vmem:[#allocation10 + $0x4c] sm:$0xf]
    %v1911 = vld [vmem:[#allocation10 + $0x50] sm:$0xf]
    %v1912 = vld [vmem:[#allocation10 + $0x54] sm:$0xf]
    %v1913 = vld [vmem:[#allocation10 + $0x58] sm:$0xf]
    %v1914 = vld [vmem:[#allocation10 + $0x5c] sm:$0xf]
    %v1915 = vld [vmem:[#allocation10 + $0x60] sm:$0xf]
    %v1916 = vld [vmem:[#allocation10 + $0x64] sm:$0xf]
    %v1917 = vld [vmem:[#allocation10 + $0x68] sm:$0xf]
    %v1918 = vld [vmem:[#allocation10 + $0x6c] sm:$0xf]
    %v1919 = vld [vmem:[#allocation10 + $0x70] sm:$0xf]
    %v1920 = vld [vmem:[#allocation10 + $0x74] sm:$0xf]
    %v1921 = vld [vmem:[#allocation10 + $0x78] sm:$0xf]
    %v1922 = vld [vmem:[#allocation10 + $0x7c] sm:$0xf]
    %v1923 = vld [vmem:[#allocation10 + $0x80] sm:$0xf]
    %v1924 = vld [vmem:[#allocation10 + $0x84] sm:$0xf]
    %v1925 = vld [vmem:[#allocation10 + $0x88] sm:$0xf]
    %v1926 = vld [vmem:[#allocation10 + $0x8c] sm:$0xf]
    %v1927 = vld [vmem:[#allocation10 + $0x90] sm:$0xf]
    %v1928 = vld [vmem:[#allocation10 + $0x94] sm:$0xf]
    %v1929 = vld [vmem:[#allocation10 + $0x98] sm:$0xf]
    %v1930 = vld [vmem:[#allocation10 + $0x9c] sm:$0xf]
    %v1931 = vld [vmem:[#allocation10 + $0xa0] sm:$0xf]
    %v1932 = vld [vmem:[#allocation10 + $0xa4] sm:$0xf]
    %v1933 = vld [vmem:[#allocation10 + $0xa8] sm:$0xf]
    %v1934 = vld [vmem:[#allocation10 + $0xac] sm:$0xf]
    %v1935 = vld [vmem:[#allocation10 + $0xb0] sm:$0xf]
    %v1936 = vld [vmem:[#allocation10 + $0xb4] sm:$0xf]
    %v1937 = vld [vmem:[#allocation10 + $0xb8] sm:$0xf]
    %v1938 = vld [vmem:[#allocation10 + $0xbc] sm:$0xf]
    %v1939 = vld [vmem:[#allocation10 + $0xc0] sm:$0xf]
    %v1940 = vld [vmem:[#allocation10 + $0xc4] sm:$0xf]
    %v1941 = vld [vmem:[#allocation10 + $0xc8] sm:$0xf]
    %v1942 = vld [vmem:[#allocation10 + $0xcc] sm:$0xf]
    %v1943 = vld [vmem:[#allocation10 + $0xd0] sm:$0xf]
    %v1944 = vld [vmem:[#allocation10 + $0xd4] sm:$0xf]
    %v1945 = vld [vmem:[#allocation10 + $0xd8] sm:$0xf]
    %v1946 = vld [vmem:[#allocation10 + $0xdc] sm:$0xf]
    %v1947 = vld [vmem:[#allocation10 + $0xe0] sm:$0xf]
    %v1948 = vld [vmem:[#allocation10 + $0xe4] sm:$0xf]
    %v1949 = vld [vmem:[#allocation10 + $0xe8] sm:$0xf]
    %v1950 = vld [vmem:[#allocation10 + $0xec] sm:$0xf]
    %v1951 = vld [vmem:[#allocation10 + $0xf0] sm:$0xf]
    %v1952 = vld [vmem:[#allocation10 + $0xf4] sm:$0xf]
    %v1953 = vld [vmem:[#allocation10 + $0xf8] sm:$0x3]
    %v1954 = vld [vmem:[#allocation12] sm:$0x1]
    %v1955 = vpack.c.bf16 %v120, %v120
    %v1956 = vpack.c.bf16 %v121, %v121
    %v1957 = vpack.c.bf16 %v122, %v122
    %v1958 = vpack.c.bf16 %v123, %v123
    %v1959 = vpack.c.bf16 %v124, %v124
    %v1960 = vpack.c.bf16 %v125, %v125
    %v1961 = vpack.c.bf16 %v126, %v126
    %v1962 = vpack.c.bf16 %v127, %v127
    %v3499 = vunpack.c.l.b16 %v128
    %v3500 = vunpack.c.h.b16 %v128
    %v3501 = vunpack.c.l.b16 %v129
    %v3502 = vunpack.c.h.b16 %v129
    %v3503 = vunpack.c.l.b16 %v130
    %v3504 = vunpack.c.h.b16 %v130
    %v3505 = vunpack.c.l.b16 %v131
    %v3506 = vunpack.c.h.b16 %v131
    %v3507 = vunpack.c.l.b16 %v132
    %v3508 = vunpack.c.h.b16 %v132
    %v3509 = vunpack.c.l.b16 %v133
    %v3510 = vunpack.c.h.b16 %v133
    %v3511 = vunpack.c.l.b16 %v134
    %v3512 = vunpack.c.h.b16 %v134
    %v3513 = vunpack.c.l.b16 %v135
    %v3514 = vunpack.c.h.b16 %v135
    %v3515 = vunpack.c.l.b16 %v136
    %v3516 = vunpack.c.h.b16 %v136
    %v3517 = vunpack.c.l.b16 %v137
    %v3518 = vunpack.c.h.b16 %v137
    %v3519 = vunpack.c.l.b16 %v138
    %v3520 = vunpack.c.h.b16 %v138
    %v3521 = vunpack.c.l.b16 %v139
    %v3522 = vunpack.c.h.b16 %v139
    %v3523 = vunpack.c.l.b16 %v140
    %v3524 = vunpack.c.h.b16 %v140
    %v3525 = vunpack.c.l.b16 %v141
    %v3526 = vunpack.c.h.b16 %v141
    %v3527 = vunpack.c.l.b16 %v142
    %v3528 = vunpack.c.h.b16 %v142
    %v3529 = vunpack.c.l.b16 %v143
    %v3530 = vunpack.c.h.b16 %v143
    %v3531 = vunpack.c.l.b16 %v144
    %v3532 = vunpack.c.h.b16 %v144
    %v3533 = vunpack.c.l.b16 %v145
    %v3534 = vunpack.c.h.b16 %v145
    %v3535 = vunpack.c.l.b16 %v146
    %v3536 = vunpack.c.h.b16 %v146
    %v3537 = vunpack.c.l.b16 %v147
    %v3538 = vunpack.c.h.b16 %v147
    %v3539 = vunpack.c.l.b16 %v148
    %v3540 = vunpack.c.h.b16 %v148
    %v3541 = vunpack.c.l.b16 %v149
    %v3542 = vunpack.c.h.b16 %v149
    %v3543 = vunpack.c.l.b16 %v150
    %v3544 = vunpack.c.h.b16 %v150
    %v3545 = vunpack.c.l.b16 %v151
    %v3546 = vunpack.c.h.b16 %v151
    %v3547 = vunpack.c.l.b16 %v152
    %v3548 = vunpack.c.h.b16 %v152
    %v3549 = vunpack.c.l.b16 %v153
    %v3550 = vunpack.c.h.b16 %v153
    %v3551 = vunpack.c.l.b16 %v154
    %v3552 = vunpack.c.h.b16 %v154
    %v3553 = vunpack.c.l.b16 %v155
    %v3554 = vunpack.c.h.b16 %v155
    %v3555 = vunpack.c.l.b16 %v156
    %v3556 = vunpack.c.h.b16 %v156
    %v3557 = vunpack.c.l.b16 %v157
    %v3558 = vunpack.c.h.b16 %v157
    %v3559 = vunpack.c.l.b16 %v158
    %v3560 = vunpack.c.h.b16 %v158
    %v3561 = vunpack.c.l.b16 %v159
    %v3562 = vunpack.c.h.b16 %v159
    %v3563 = vunpack.c.l.b16 %v160
    %v3564 = vunpack.c.h.b16 %v160
    %v3565 = vunpack.c.l.b16 %v161
    %v3566 = vunpack.c.h.b16 %v161
    %v3567 = vunpack.c.l.b16 %v162
    %v3568 = vunpack.c.h.b16 %v162
    %v3569 = vunpack.c.l.b16 %v163
    %v3570 = vunpack.c.h.b16 %v163
    %v3571 = vunpack.c.l.b16 %v164
    %v3572 = vunpack.c.h.b16 %v164
    %v3573 = vunpack.c.l.b16 %v165
    %v3574 = vunpack.c.h.b16 %v165
    %v3575 = vunpack.c.l.b16 %v166
    %v3576 = vunpack.c.h.b16 %v166
    %v3577 = vunpack.c.l.b16 %v167
    %v3578 = vunpack.c.h.b16 %v167
    %v3579 = vunpack.c.l.b16 %v168
    %v3580 = vunpack.c.h.b16 %v168
    %v3581 = vunpack.c.l.b16 %v169
    %v3582 = vunpack.c.h.b16 %v169
    %v3583 = vunpack.c.l.b16 %v170
    %v3584 = vunpack.c.h.b16 %v170
    %v3585 = vunpack.c.l.b16 %v171
    %v3586 = vunpack.c.h.b16 %v171
    %v3587 = vunpack.c.l.b16 %v172
    %v3588 = vunpack.c.h.b16 %v172
    %v3589 = vunpack.c.l.b16 %v173
    %v3590 = vunpack.c.h.b16 %v173
    %v3591 = vunpack.c.l.b16 %v174
    %v3592 = vunpack.c.h.b16 %v174
    %v3593 = vunpack.c.l.b16 %v175
    %v3594 = vunpack.c.h.b16 %v175
    %v3595 = vunpack.c.l.b16 %v176
    %v3596 = vunpack.c.h.b16 %v176
    %v3597 = vunpack.c.l.b16 %v177
    %v3598 = vunpack.c.h.b16 %v177
    %v3599 = vunpack.c.l.b16 %v178
    %v3600 = vunpack.c.h.b16 %v178
    %v3601 = vunpack.c.l.b16 %v179
    %v3602 = vunpack.c.h.b16 %v179
    %v3603 = vunpack.c.l.b16 %v180
    %v3604 = vunpack.c.h.b16 %v180
    %v3605 = vunpack.c.l.b16 %v181
    %v3606 = vunpack.c.h.b16 %v181
    %v3607 = vunpack.c.l.b16 %v182
    %v3608 = vunpack.c.h.b16 %v182
    %v3609 = vunpack.c.l.b16 %v183
    %v3610 = vunpack.c.h.b16 %v183
    %v3611 = vunpack.c.l.b16 %v184
    %v3612 = vunpack.c.h.b16 %v184
    %v3613 = vunpack.c.l.b16 %v185
    %v3614 = vunpack.c.h.b16 %v185
    %v3615 = vunpack.c.l.b16 %v186
    %v3616 = vunpack.c.h.b16 %v186
    %v3617 = vunpack.c.l.b16 %v187
    %v3618 = vunpack.c.h.b16 %v187
    %v3619 = vunpack.c.l.b16 %v188
    %v3620 = vunpack.c.h.b16 %v188
    %v3621 = vunpack.c.l.b16 %v189
    %v3622 = vunpack.c.h.b16 %v189
    %v3623 = vunpack.c.l.b16 %v190
    %v3624 = vunpack.c.h.b16 %v190
    %v3625 = vunpack.c.l.b16 %v191
    %v3626 = vunpack.c.h.b16 %v191
    %v3627 = vunpack.c.l.b16 %v192
    %v3628 = vunpack.c.h.b16 %v192
    %v3629 = vunpack.c.l.b16 %v193
    %v3630 = vunpack.c.h.b16 %v193
    %v3631 = vunpack.c.l.b16 %v194
    %v3632 = vunpack.c.h.b16 %v194
    %v3633 = vunpack.c.l.b16 %v195
    %v3634 = vunpack.c.h.b16 %v195
    %v3635 = vunpack.c.l.b16 %v196
    %v3636 = vunpack.c.h.b16 %v196
    %v3637 = vunpack.c.l.b16 %v197
    %v3638 = vunpack.c.h.b16 %v197
    %v3639 = vunpack.c.l.b16 %v198
    %v3640 = vunpack.c.h.b16 %v198
    %v3641 = vunpack.c.l.b16 %v199
    %v3642 = vunpack.c.h.b16 %v199
    %v3643 = vunpack.c.l.b16 %v200
    %v3644 = vunpack.c.h.b16 %v200
    %v3645 = vunpack.c.l.b16 %v201
    %v3646 = vunpack.c.h.b16 %v201
    %v3647 = vunpack.c.l.b16 %v202
    %v3648 = vunpack.c.h.b16 %v202
    %v3649 = vunpack.c.l.b16 %v203
    %v3650 = vunpack.c.h.b16 %v203
    %v3651 = vunpack.c.l.b16 %v204
    %v3652 = vunpack.c.h.b16 %v204
    %v3653 = vunpack.c.l.b16 %v205
    %v3654 = vunpack.c.h.b16 %v205
    %v3655 = vunpack.c.l.b16 %v206
    %v3656 = vunpack.c.h.b16 %v206
    %v3657 = vunpack.c.l.b16 %v207
    %v3658 = vunpack.c.h.b16 %v207
    %v3659 = vunpack.c.l.b16 %v208
    %v3660 = vunpack.c.h.b16 %v208
    %v3661 = vunpack.c.l.b16 %v209
    %v3662 = vunpack.c.h.b16 %v209
    %v3663 = vunpack.c.l.b16 %v210
    %v3664 = vunpack.c.h.b16 %v210
    %v3665 = vunpack.c.l.b16 %v211
    %v3666 = vunpack.c.h.b16 %v211
    %v3667 = vunpack.c.l.b16 %v212
    %v3668 = vunpack.c.h.b16 %v212
    %v3669 = vunpack.c.l.b16 %v213
    %v3670 = vunpack.c.h.b16 %v213
    %v3671 = vunpack.c.l.b16 %v214
    %v3672 = vunpack.c.h.b16 %v214
    %v3673 = vunpack.c.l.b16 %v215
    %v3674 = vunpack.c.h.b16 %v215
    %v3675 = vunpack.c.l.b16 %v216
    %v3676 = vunpack.c.h.b16 %v216
    %v3677 = vunpack.c.l.b16 %v217
    %v3678 = vunpack.c.h.b16 %v217
    %v3679 = vunpack.c.l.b16 %v218
    %v3680 = vunpack.c.h.b16 %v218
    %v3681 = vunpack.c.l.b16 %v219
    %v3682 = vunpack.c.h.b16 %v219
    %v3683 = vunpack.c.l.b16 %v220
    %v3684 = vunpack.c.h.b16 %v220
    %v3685 = vunpack.c.l.b16 %v221
    %v3686 = vunpack.c.h.b16 %v221
    %v3687 = vunpack.c.l.b16 %v222
    %v3688 = vunpack.c.h.b16 %v222
    %v3689 = vunpack.c.l.b16 %v223
    %v3690 = vunpack.c.h.b16 %v223
    %v3691 = vunpack.c.l.b16 %v224
    %v3692 = vunpack.c.h.b16 %v224
    %v3693 = vunpack.c.l.b16 %v225
    %v3694 = vunpack.c.h.b16 %v225
    %v3695 = vunpack.c.l.b16 %v226
    %v3696 = vunpack.c.h.b16 %v226
    %v3697 = vunpack.c.l.b16 %v227
    %v3698 = vunpack.c.h.b16 %v227
    %v3699 = vunpack.c.l.b16 %v228
    %v3700 = vunpack.c.h.b16 %v228
    %v3701 = vunpack.c.l.b16 %v229
    %v3702 = vunpack.c.h.b16 %v229
    %v3703 = vunpack.c.l.b16 %v230
    %v3704 = vunpack.c.h.b16 %v230
    %v3705 = vunpack.c.l.b16 %v231
    %v3706 = vunpack.c.h.b16 %v231
    %v3707 = vunpack.c.l.b16 %v232
    %v3708 = vunpack.c.h.b16 %v232
    %v3709 = vunpack.c.l.b16 %v233
    %v3710 = vunpack.c.h.b16 %v233
    %v3711 = vunpack.c.l.b16 %v234
    %v3712 = vunpack.c.h.b16 %v234
    %v3713 = vunpack.c.l.b16 %v235
    %v3714 = vunpack.c.h.b16 %v235
    %v3715 = vunpack.c.l.b16 %v236
    %v3716 = vunpack.c.h.b16 %v236
    %v3717 = vunpack.c.l.b16 %v237
    %v3718 = vunpack.c.h.b16 %v237
    %v3719 = vunpack.c.l.b16 %v238
    %v3720 = vunpack.c.h.b16 %v238
    %v3721 = vunpack.c.l.b16 %v239
    %v3722 = vunpack.c.h.b16 %v239
    %v3723 = vunpack.c.l.b16 %v240
    %v3724 = vunpack.c.h.b16 %v240
    %v3725 = vunpack.c.l.b16 %v241
    %v3726 = vunpack.c.h.b16 %v241
    %v3727 = vunpack.c.l.b16 %v242
    %v3728 = vunpack.c.h.b16 %v242
    %v3729 = vunpack.c.l.b16 %v243
    %v3730 = vunpack.c.h.b16 %v243
    %v3731 = vunpack.c.l.b16 %v244
    %v3732 = vunpack.c.h.b16 %v244
    %v3733 = vunpack.c.l.b16 %v245
    %v3734 = vunpack.c.h.b16 %v245
    %v3735 = vunpack.c.l.b16 %v246
    %v3736 = vunpack.c.h.b16 %v246
    %v3737 = vunpack.c.l.b16 %v247
    %v3738 = vunpack.c.h.b16 %v247
    %v3739 = vunpack.c.l.b16 %v248
    %v3740 = vunpack.c.h.b16 %v248
    %v3741 = vunpack.c.l.b16 %v249
    %v3742 = vunpack.c.h.b16 %v249
    %v3743 = vunpack.c.l.b16 %v250
    %v3744 = vunpack.c.h.b16 %v250
    %v3745 = vunpack.c.l.b16 %v251
    %v3746 = vunpack.c.h.b16 %v251
    %v3747 = vunpack.c.l.b16 %v252
    %v3748 = vunpack.c.h.b16 %v252
    %v3749 = vunpack.c.l.b16 %v253
    %v3750 = vunpack.c.h.b16 %v253
    %v3751 = vunpack.c.l.b16 %v254
    %v3752 = vunpack.c.h.b16 %v254
    %v3753 = vunpack.c.l.b16 %v255
    %v3754 = vunpack.c.h.b16 %v255
    %v3755 = vunpack.c.l.b16 %v256
    %v3756 = vunpack.c.h.b16 %v256
    %v3757 = vunpack.c.l.b16 %v257
    %v3758 = vunpack.c.h.b16 %v257
    %v3759 = vunpack.c.l.b16 %v258
    %v3760 = vunpack.c.h.b16 %v258
    %v3761 = vunpack.c.l.b16 %v259
    %v3762 = vunpack.c.h.b16 %v259
    %v3763 = vunpack.c.l.b16 %v260
    %v3764 = vunpack.c.h.b16 %v260
    %v3765 = vunpack.c.l.b16 %v261
    %v3766 = vunpack.c.h.b16 %v261
    %v3767 = vunpack.c.l.b16 %v262
    %v3768 = vunpack.c.h.b16 %v262
    %v3769 = vunpack.c.l.b16 %v263
    %v3770 = vunpack.c.h.b16 %v263
    %v3771 = vunpack.c.l.b16 %v264
    %v3772 = vunpack.c.h.b16 %v264
    %v3773 = vunpack.c.l.b16 %v265
    %v3774 = vunpack.c.h.b16 %v265
    %v3775 = vunpack.c.l.b16 %v266
    %v3776 = vunpack.c.h.b16 %v266
    %v3777 = vunpack.c.l.b16 %v267
    %v3778 = vunpack.c.h.b16 %v267
    %v3779 = vunpack.c.l.b16 %v268
    %v3780 = vunpack.c.h.b16 %v268
    %v3781 = vunpack.c.l.b16 %v269
    %v3782 = vunpack.c.h.b16 %v269
    %v3783 = vunpack.c.l.b16 %v270
    %v3784 = vunpack.c.h.b16 %v270
    %v3785 = vunpack.c.l.b16 %v271
    %v3786 = vunpack.c.h.b16 %v271
    %v3787 = vunpack.c.l.b16 %v272
    %v3788 = vunpack.c.h.b16 %v272
    %v3789 = vunpack.c.l.b16 %v273
    %v3790 = vunpack.c.h.b16 %v273
    %v3791 = vunpack.c.l.b16 %v274
    %v3792 = vunpack.c.h.b16 %v274
    %v3793 = vunpack.c.l.b16 %v275
    %v3794 = vunpack.c.h.b16 %v275
    %v3795 = vunpack.c.l.b16 %v276
    %v3796 = vunpack.c.h.b16 %v276
    %v3797 = vunpack.c.l.b16 %v277
    %v3798 = vunpack.c.h.b16 %v277
    %v3799 = vunpack.c.l.b16 %v278
    %v3800 = vunpack.c.h.b16 %v278
    %v3801 = vunpack.c.l.b16 %v279
    %v3802 = vunpack.c.h.b16 %v279
    %v3803 = vunpack.c.l.b16 %v280
    %v3804 = vunpack.c.h.b16 %v280
    %v3805 = vunpack.c.l.b16 %v281
    %v3806 = vunpack.c.h.b16 %v281
    %v3807 = vunpack.c.l.b16 %v282
    %v3808 = vunpack.c.h.b16 %v282
    %v3809 = vunpack.c.l.b16 %v283
    %v3810 = vunpack.c.h.b16 %v283
    %v3811 = vunpack.c.l.b16 %v284
    %v3812 = vunpack.c.h.b16 %v284
    %v3813 = vunpack.c.l.b16 %v285
    %v3814 = vunpack.c.h.b16 %v285
    %v3815 = vunpack.c.l.b16 %v286
    %v3816 = vunpack.c.h.b16 %v286
    %v3817 = vunpack.c.l.b16 %v287
    %v3818 = vunpack.c.h.b16 %v287
    %v3819 = vunpack.c.l.b16 %v288
    %v3820 = vunpack.c.h.b16 %v288
    %v3821 = vunpack.c.l.b16 %v289
    %v3822 = vunpack.c.h.b16 %v289
    %v3823 = vunpack.c.l.b16 %v290
    %v3824 = vunpack.c.h.b16 %v290
    %v3825 = vunpack.c.l.b16 %v291
    %v3826 = vunpack.c.h.b16 %v291
    %v3827 = vunpack.c.l.b16 %v292
    %v3828 = vunpack.c.h.b16 %v292
    %v3829 = vunpack.c.l.b16 %v293
    %v3830 = vunpack.c.h.b16 %v293
    %v3831 = vunpack.c.l.b16 %v294
    %v3832 = vunpack.c.h.b16 %v294
    %v3833 = vunpack.c.l.b16 %v295
    %v3834 = vunpack.c.h.b16 %v295
    %v3835 = vunpack.c.l.b16 %v296
    %v3836 = vunpack.c.h.b16 %v296
    %v3837 = vunpack.c.l.b16 %v297
    %v3838 = vunpack.c.h.b16 %v297
    %v3839 = vunpack.c.l.b16 %v298
    %v3840 = vunpack.c.h.b16 %v298
    %v3841 = vunpack.c.l.b16 %v299
    %v3842 = vunpack.c.h.b16 %v299
    %v3843 = vunpack.c.l.b16 %v300
    %v3844 = vunpack.c.h.b16 %v300
    %v3845 = vunpack.c.l.b16 %v301
    %v3846 = vunpack.c.h.b16 %v301
    %v3847 = vunpack.c.l.b16 %v302
    %v3848 = vunpack.c.h.b16 %v302
    %v3849 = vunpack.c.l.b16 %v303
    %v3850 = vunpack.c.h.b16 %v303
    %v3851 = vunpack.c.l.b16 %v304
    %v3852 = vunpack.c.h.b16 %v304
    %v3853 = vunpack.c.l.b16 %v305
    %v3854 = vunpack.c.h.b16 %v305
    %v3855 = vunpack.c.l.b16 %v306
    %v3856 = vunpack.c.h.b16 %v306
    %v3857 = vunpack.c.l.b16 %v307
    %v3858 = vunpack.c.h.b16 %v307
    %v3859 = vunpack.c.l.b16 %v308
    %v3860 = vunpack.c.h.b16 %v308
    %v3861 = vunpack.c.l.b16 %v309
    %v3862 = vunpack.c.h.b16 %v309
    %v3863 = vunpack.c.l.b16 %v310
    %v3864 = vunpack.c.h.b16 %v310
    %v3865 = vunpack.c.l.b16 %v311
    %v3866 = vunpack.c.h.b16 %v311
    %v3867 = vunpack.c.l.b16 %v312
    %v3868 = vunpack.c.h.b16 %v312
    %v3869 = vunpack.c.l.b16 %v313
    %v3870 = vunpack.c.h.b16 %v313
    %v3871 = vunpack.c.l.b16 %v314
    %v3872 = vunpack.c.h.b16 %v314
    %v3873 = vunpack.c.l.b16 %v315
    %v3874 = vunpack.c.h.b16 %v315
    %v3875 = vunpack.c.l.b16 %v316
    %v3876 = vunpack.c.h.b16 %v316
    %v3877 = vunpack.c.l.b16 %v317
    %v3878 = vunpack.c.h.b16 %v317
    %v3879 = vunpack.c.l.b16 %v318
    %v3880 = vunpack.c.h.b16 %v318
    %v3881 = vunpack.c.l.b16 %v319
    %v3882 = vunpack.c.h.b16 %v319
    %v3883 = vunpack.c.l.b16 %v320
    %v3884 = vunpack.c.h.b16 %v320
    %v3885 = vunpack.c.l.b16 %v321
    %v3886 = vunpack.c.h.b16 %v321
    %v3887 = vunpack.c.l.b16 %v322
    %v3888 = vunpack.c.h.b16 %v322
    %v3889 = vunpack.c.l.b16 %v323
    %v3890 = vunpack.c.h.b16 %v323
    %v3891 = vunpack.c.l.b16 %v324
    %v3892 = vunpack.c.h.b16 %v324
    %v3893 = vunpack.c.l.b16 %v325
    %v3894 = vunpack.c.h.b16 %v325
    %v3895 = vunpack.c.l.b16 %v326
    %v3896 = vunpack.c.h.b16 %v326
    %v3897 = vunpack.c.l.b16 %v327
    %v3898 = vunpack.c.h.b16 %v327
    %v3899 = vunpack.c.l.b16 %v328
    %v3900 = vunpack.c.h.b16 %v328
    %v3901 = vunpack.c.l.b16 %v329
    %v3902 = vunpack.c.h.b16 %v329
    %v3903 = vunpack.c.l.b16 %v330
    %v3904 = vunpack.c.h.b16 %v330
    %v3905 = vunpack.c.l.b16 %v331
    %v3906 = vunpack.c.h.b16 %v331
    %v3907 = vunpack.c.l.b16 %v332
    %v3908 = vunpack.c.h.b16 %v332
    %v3909 = vunpack.c.l.b16 %v333
    %v3910 = vunpack.c.h.b16 %v333
    %v3911 = vunpack.c.l.b16 %v334
    %v3912 = vunpack.c.h.b16 %v334
    %v3913 = vunpack.c.l.b16 %v335
    %v3914 = vunpack.c.h.b16 %v335
    %v3915 = vunpack.c.l.b16 %v336
    %v3916 = vunpack.c.h.b16 %v336
    %v3917 = vunpack.c.l.b16 %v337
    %v3918 = vunpack.c.h.b16 %v337
    %v3919 = vunpack.c.l.b16 %v338
    %v3920 = vunpack.c.h.b16 %v338
    %v3921 = vunpack.c.l.b16 %v339
    %v3922 = vunpack.c.h.b16 %v339
    %v3923 = vunpack.c.l.b16 %v340
    %v3924 = vunpack.c.h.b16 %v340
    %v3925 = vunpack.c.l.b16 %v341
    %v3926 = vunpack.c.h.b16 %v341
    %v3927 = vunpack.c.l.b16 %v342
    %v3928 = vunpack.c.h.b16 %v342
    %v3929 = vunpack.c.l.b16 %v343
    %v3930 = vunpack.c.h.b16 %v343
    %v3931 = vunpack.c.l.b16 %v344
    %v3932 = vunpack.c.h.b16 %v344
    %v3933 = vunpack.c.l.b16 %v345
    %v3934 = vunpack.c.h.b16 %v345
    %v3935 = vunpack.c.l.b16 %v346
    %v3936 = vunpack.c.h.b16 %v346
    %v3937 = vunpack.c.l.b16 %v347
    %v3938 = vunpack.c.h.b16 %v347
    %v3939 = vunpack.c.l.b16 %v348
    %v3940 = vunpack.c.h.b16 %v348
    %v3941 = vunpack.c.l.b16 %v349
    %v3942 = vunpack.c.h.b16 %v349
    %v3943 = vunpack.c.l.b16 %v350
    %v3944 = vunpack.c.h.b16 %v350
    %v3945 = vunpack.c.l.b16 %v351
    %v3946 = vunpack.c.h.b16 %v351
    %v3947 = vunpack.c.l.b16 %v352
    %v3948 = vunpack.c.h.b16 %v352
    %v3949 = vunpack.c.l.b16 %v353
    %v3950 = vunpack.c.h.b16 %v353
    %v3951 = vunpack.c.l.b16 %v354
    %v3952 = vunpack.c.h.b16 %v354
    %v3953 = vunpack.c.l.b16 %v355
    %v3954 = vunpack.c.h.b16 %v355
    %v3955 = vunpack.c.l.b16 %v356
    %v3956 = vunpack.c.h.b16 %v356
    %v3957 = vunpack.c.l.b16 %v357
    %v3958 = vunpack.c.h.b16 %v357
    %v3959 = vunpack.c.l.b16 %v358
    %v3960 = vunpack.c.h.b16 %v358
    %v3961 = vunpack.c.l.b16 %v359
    %v3962 = vunpack.c.h.b16 %v359
    %v3963 = vunpack.c.l.b16 %v360
    %v3964 = vunpack.c.h.b16 %v360
    %v3965 = vunpack.c.l.b16 %v361
    %v3966 = vunpack.c.h.b16 %v361
    %v3967 = vunpack.c.l.b16 %v362
    %v3968 = vunpack.c.h.b16 %v362
    %v3969 = vunpack.c.l.b16 %v363
    %v3970 = vunpack.c.h.b16 %v363
    %v3971 = vunpack.c.l.b16 %v364
    %v3972 = vunpack.c.h.b16 %v364
    %v3973 = vunpack.c.l.b16 %v365
    %v3974 = vunpack.c.h.b16 %v365
    %v3975 = vunpack.c.l.b16 %v366
    %v3976 = vunpack.c.h.b16 %v366
    %v3977 = vunpack.c.l.b16 %v367
    %v3978 = vunpack.c.h.b16 %v367
    %v3979 = vunpack.c.l.b16 %v368
    %v3980 = vunpack.c.h.b16 %v368
    %v3981 = vunpack.c.l.b16 %v369
    %v3982 = vunpack.c.h.b16 %v369
    %v3983 = vunpack.c.l.b16 %v370
    %v3984 = vunpack.c.h.b16 %v370
    %v3985 = vunpack.c.l.b16 %v371
    %v3986 = vunpack.c.h.b16 %v371
    %v3987 = vunpack.c.l.b16 %v372
    %v3988 = vunpack.c.h.b16 %v372
    %v3989 = vunpack.c.l.b16 %v373
    %v3990 = vunpack.c.h.b16 %v373
    %v3991 = vunpack.c.l.b16 %v374
    %v3992 = vunpack.c.h.b16 %v374
    %v3993 = vunpack.c.l.b16 %v375
    %v3994 = vunpack.c.h.b16 %v375
    %v3995 = vunpack.c.l.b16 %v376
    %v3996 = vunpack.c.h.b16 %v376
    %v3997 = vunpack.c.l.b16 %v377
    %v3998 = vunpack.c.h.b16 %v377
    %v3999 = vunpack.c.l.b16 %v378
    %v4000 = vunpack.c.h.b16 %v378
    %v4001 = vunpack.c.l.b16 %v379
    %v4002 = vunpack.c.h.b16 %v379
    %v4003 = vunpack.c.l.b16 %v380
    %v4004 = vunpack.c.h.b16 %v380
    %v4005 = vunpack.c.l.b16 %v381
    %v4006 = vunpack.c.h.b16 %v381
    %v4007 = vunpack.c.l.b16 %v382
    %v4008 = vunpack.c.h.b16 %v382
    %v4009 = vunpack.c.l.b16 %v383
    %v4010 = vunpack.c.h.b16 %v383
    %v4011 = vunpack.c.l.b16 %v384
    %v4012 = vunpack.c.h.b16 %v384
    %v4013 = vunpack.c.l.b16 %v385
    %v4014 = vunpack.c.h.b16 %v385
    %v4015 = vunpack.c.l.b16 %v386
    %v4016 = vunpack.c.h.b16 %v386
    %v4017 = vunpack.c.l.b16 %v387
    %v4018 = vunpack.c.h.b16 %v387
    %v4019 = vunpack.c.l.b16 %v388
    %v4020 = vunpack.c.h.b16 %v388
    %v4021 = vunpack.c.l.b16 %v389
    %v4022 = vunpack.c.h.b16 %v389
    %v4023 = vunpack.c.l.b16 %v390
    %v4024 = vunpack.c.h.b16 %v390
    %v4025 = vunpack.c.l.b16 %v391
    %v4026 = vunpack.c.h.b16 %v391
    %v4027 = vunpack.c.l.b16 %v392
    %v4028 = vunpack.c.h.b16 %v392
    %v4029 = vunpack.c.l.b16 %v393
    %v4030 = vunpack.c.h.b16 %v393
    %v4031 = vunpack.c.l.b16 %v394
    %v4032 = vunpack.c.h.b16 %v394
    %v4033 = vunpack.c.l.b16 %v395
    %v4034 = vunpack.c.h.b16 %v395
    %v4035 = vunpack.c.l.b16 %v396
    %v4036 = vunpack.c.h.b16 %v396
    %v4037 = vunpack.c.l.b16 %v397
    %v4038 = vunpack.c.h.b16 %v397
    %v4039 = vunpack.c.l.b16 %v398
    %v4040 = vunpack.c.h.b16 %v398
    %v4041 = vunpack.c.l.b16 %v399
    %v4042 = vunpack.c.h.b16 %v399
    %v4043 = vunpack.c.l.b16 %v400
    %v4044 = vunpack.c.h.b16 %v400
    %v4045 = vunpack.c.l.b16 %v401
    %v4046 = vunpack.c.h.b16 %v401
    %v4047 = vunpack.c.l.b16 %v402
    %v4048 = vunpack.c.h.b16 %v402
    %v4049 = vunpack.c.l.b16 %v403
    %v4050 = vunpack.c.h.b16 %v403
    %v4051 = vunpack.c.l.b16 %v404
    %v4052 = vunpack.c.h.b16 %v404
    %v4053 = vunpack.c.l.b16 %v405
    %v4054 = vunpack.c.h.b16 %v405
    %v4055 = vunpack.c.l.b16 %v406
    %v4056 = vunpack.c.h.b16 %v406
    %v4057 = vunpack.c.l.b16 %v407
    %v4058 = vunpack.c.h.b16 %v407
    %v4059 = vunpack.c.l.b16 %v408
    %v4060 = vunpack.c.h.b16 %v408
    %v4061 = vunpack.c.l.b16 %v409
    %v4062 = vunpack.c.h.b16 %v409
    %v4063 = vunpack.c.l.b16 %v410
    %v4064 = vunpack.c.h.b16 %v410
    %v4065 = vunpack.c.l.b16 %v411
    %v4066 = vunpack.c.h.b16 %v411
    %v4067 = vunpack.c.l.b16 %v412
    %v4068 = vunpack.c.h.b16 %v412
    %v4069 = vunpack.c.l.b16 %v413
    %v4070 = vunpack.c.h.b16 %v413
    %v4071 = vunpack.c.l.b16 %v414
    %v4072 = vunpack.c.h.b16 %v414
    %v4073 = vunpack.c.l.b16 %v415
    %v4074 = vunpack.c.h.b16 %v415
    %v4075 = vunpack.c.l.b16 %v416
    %v4076 = vunpack.c.h.b16 %v416
    %v4077 = vunpack.c.l.b16 %v417
    %v4078 = vunpack.c.h.b16 %v417
    %v4079 = vunpack.c.l.b16 %v418
    %v4080 = vunpack.c.h.b16 %v418
    %v4081 = vunpack.c.l.b16 %v419
    %v4082 = vunpack.c.h.b16 %v419
    %v4083 = vunpack.c.l.b16 %v420
    %v4084 = vunpack.c.h.b16 %v420
    %v4085 = vunpack.c.l.b16 %v421
    %v4086 = vunpack.c.h.b16 %v421
    %v4087 = vunpack.c.l.b16 %v422
    %v4088 = vunpack.c.h.b16 %v422
    %v4089 = vunpack.c.l.b16 %v423
    %v4090 = vunpack.c.h.b16 %v423
    %v4091 = vunpack.c.l.b16 %v424
    %v4092 = vunpack.c.h.b16 %v424
    %v4093 = vunpack.c.l.b16 %v425
    %v4094 = vunpack.c.h.b16 %v425
    %v4095 = vunpack.c.l.b16 %v426
    %v4096 = vunpack.c.h.b16 %v426
    %v4097 = vunpack.c.l.b16 %v427
    %v4098 = vunpack.c.h.b16 %v427
    %v4099 = vunpack.c.l.b16 %v428
    %v4100 = vunpack.c.h.b16 %v428
    %v4101 = vunpack.c.l.b16 %v429
    %v4102 = vunpack.c.h.b16 %v429
    %v4103 = vunpack.c.l.b16 %v430
    %v4104 = vunpack.c.h.b16 %v430
    %v4105 = vunpack.c.l.b16 %v431
    %v4106 = vunpack.c.h.b16 %v431
    %v4107 = vunpack.c.l.b16 %v432
    %v4108 = vunpack.c.h.b16 %v432
    %v4109 = vunpack.c.l.b16 %v433
    %v4110 = vunpack.c.h.b16 %v433
    %v4111 = vunpack.c.l.b16 %v434
    %v4112 = vunpack.c.h.b16 %v434
    %v4113 = vunpack.c.l.b16 %v435
    %v4114 = vunpack.c.h.b16 %v435
    %v4115 = vunpack.c.l.b16 %v436
    %v4116 = vunpack.c.h.b16 %v436
    %v4117 = vunpack.c.l.b16 %v437
    %v4118 = vunpack.c.h.b16 %v437
    %v4119 = vunpack.c.l.b16 %v438
    %v4120 = vunpack.c.h.b16 %v438
    %v4121 = vunpack.c.l.b16 %v439
    %v4122 = vunpack.c.h.b16 %v439
    %v4123 = vunpack.c.l.b16 %v440
    %v4124 = vunpack.c.h.b16 %v440
    %v4125 = vunpack.c.l.b16 %v441
    %v4126 = vunpack.c.h.b16 %v441
    %v4127 = vunpack.c.l.b16 %v442
    %v4128 = vunpack.c.h.b16 %v442
    %v4129 = vunpack.c.l.b16 %v443
    %v4130 = vunpack.c.h.b16 %v443
    %v4131 = vunpack.c.l.b16 %v444
    %v4132 = vunpack.c.h.b16 %v444
    %v4133 = vunpack.c.l.b16 %v445
    %v4134 = vunpack.c.h.b16 %v445
    %v4135 = vunpack.c.l.b16 %v446
    %v4136 = vunpack.c.h.b16 %v446
    %v4137 = vunpack.c.l.b16 %v447
    %v4138 = vunpack.c.h.b16 %v447
    %v4139 = vunpack.c.l.b16 %v448
    %v4140 = vunpack.c.h.b16 %v448
    %v4141 = vunpack.c.l.b16 %v449
    %v4142 = vunpack.c.h.b16 %v449
    %v4143 = vunpack.c.l.b16 %v450
    %v4144 = vunpack.c.h.b16 %v450
    %v4145 = vunpack.c.l.b16 %v451
    %v4146 = vunpack.c.h.b16 %v451
    %v4147 = vunpack.c.l.b16 %v452
    %v4148 = vunpack.c.h.b16 %v452
    %v4149 = vunpack.c.l.b16 %v453
    %v4150 = vunpack.c.h.b16 %v453
    %v4151 = vunpack.c.l.b16 %v454
    %v4152 = vunpack.c.h.b16 %v454
    %v4153 = vunpack.c.l.b16 %v455
    %v4154 = vunpack.c.h.b16 %v455
    %v4155 = vunpack.c.l.b16 %v456
    %v4156 = vunpack.c.h.b16 %v456
    %v4157 = vunpack.c.l.b16 %v457
    %v4158 = vunpack.c.h.b16 %v457
    %v4159 = vunpack.c.l.b16 %v458
    %v4160 = vunpack.c.h.b16 %v458
    %v4161 = vunpack.c.l.b16 %v459
    %v4162 = vunpack.c.h.b16 %v459
    %v4163 = vunpack.c.l.b16 %v460
    %v4164 = vunpack.c.h.b16 %v460
    %v4165 = vunpack.c.l.b16 %v461
    %v4166 = vunpack.c.h.b16 %v461
    %v4167 = vunpack.c.l.b16 %v462
    %v4168 = vunpack.c.h.b16 %v462
    %v4169 = vunpack.c.l.b16 %v463
    %v4170 = vunpack.c.h.b16 %v463
    %v4171 = vunpack.c.l.b16 %v464
    %v4172 = vunpack.c.h.b16 %v464
    %v4173 = vunpack.c.l.b16 %v465
    %v4174 = vunpack.c.h.b16 %v465
    %v4175 = vunpack.c.l.b16 %v466
    %v4176 = vunpack.c.h.b16 %v466
    %v4177 = vunpack.c.l.b16 %v467
    %v4178 = vunpack.c.h.b16 %v467
    %v4179 = vunpack.c.l.b16 %v468
    %v4180 = vunpack.c.h.b16 %v468
    %v4181 = vunpack.c.l.b16 %v469
    %v4182 = vunpack.c.h.b16 %v469
    %v4183 = vunpack.c.l.b16 %v470
    %v4184 = vunpack.c.h.b16 %v470
    %v4185 = vunpack.c.l.b16 %v471
    %v4186 = vunpack.c.h.b16 %v471
    %v4187 = vunpack.c.l.b16 %v472
    %v4188 = vunpack.c.h.b16 %v472
    %v4189 = vunpack.c.l.b16 %v473
    %v4190 = vunpack.c.h.b16 %v473
    %v4191 = vunpack.c.l.b16 %v474
    %v4192 = vunpack.c.h.b16 %v474
    %v4193 = vunpack.c.l.b16 %v475
    %v4194 = vunpack.c.h.b16 %v475
    %v4195 = vunpack.c.l.b16 %v476
    %v4196 = vunpack.c.h.b16 %v476
    %v4197 = vunpack.c.l.b16 %v477
    %v4198 = vunpack.c.h.b16 %v477
    %v4199 = vunpack.c.l.b16 %v478
    %v4200 = vunpack.c.h.b16 %v478
    %v4201 = vunpack.c.l.b16 %v479
    %v4202 = vunpack.c.h.b16 %v479
    %v4203 = vunpack.c.l.b16 %v480
    %v4204 = vunpack.c.h.b16 %v480
    %v4205 = vunpack.c.l.b16 %v481
    %v4206 = vunpack.c.h.b16 %v481
    %v4207 = vunpack.c.l.b16 %v482
    %v4208 = vunpack.c.h.b16 %v482
    %v4209 = vunpack.c.l.b16 %v483
    %v4210 = vunpack.c.h.b16 %v483
    %v4211 = vunpack.c.l.b16 %v484
    %v4212 = vunpack.c.h.b16 %v484
    %v4213 = vunpack.c.l.b16 %v485
    %v4214 = vunpack.c.h.b16 %v485
    %v4215 = vunpack.c.l.b16 %v486
    %v4216 = vunpack.c.h.b16 %v486
    %v4217 = vunpack.c.l.b16 %v487
    %v4218 = vunpack.c.h.b16 %v487
    %v4219 = vunpack.c.l.b16 %v488
    %v4220 = vunpack.c.h.b16 %v488
    %v4221 = vunpack.c.l.b16 %v489
    %v4222 = vunpack.c.h.b16 %v489
    %v4223 = vunpack.c.l.b16 %v490
    %v4224 = vunpack.c.h.b16 %v490
    %v4225 = vunpack.c.l.b16 %v491
    %v4226 = vunpack.c.h.b16 %v491
    %v4227 = vunpack.c.l.b16 %v492
    %v4228 = vunpack.c.h.b16 %v492
    %v4229 = vunpack.c.l.b16 %v493
    %v4230 = vunpack.c.h.b16 %v493
    %v4231 = vunpack.c.l.b16 %v494
    %v4232 = vunpack.c.h.b16 %v494
    %v4233 = vunpack.c.l.b16 %v495
    %v4234 = vunpack.c.h.b16 %v495
    %v4235 = vunpack.c.l.b16 %v496
    %v4236 = vunpack.c.h.b16 %v496
    %v4237 = vunpack.c.l.b16 %v497
    %v4238 = vunpack.c.h.b16 %v497
    %v4239 = vunpack.c.l.b16 %v498
    %v4240 = vunpack.c.h.b16 %v498
    %v4241 = vunpack.c.l.b16 %v499
    %v4242 = vunpack.c.h.b16 %v499
    %v4243 = vunpack.c.l.b16 %v500
    %v4244 = vunpack.c.h.b16 %v500
    %v4245 = vunpack.c.l.b16 %v501
    %v4246 = vunpack.c.h.b16 %v501
    %v4247 = vunpack.c.l.b16 %v502
    %v4248 = vunpack.c.h.b16 %v502
    %v4249 = vunpack.c.l.b16 %v503
    %v4250 = vunpack.c.h.b16 %v503
    %v4251 = vunpack.c.l.b16 %v504
    %v4252 = vunpack.c.h.b16 %v504
    %v4253 = vunpack.c.l.b16 %v505
    %v4254 = vunpack.c.h.b16 %v505
    %v4255 = vunpack.c.l.b16 %v506
    %v4256 = vunpack.c.h.b16 %v506
    %v4257 = vunpack.c.l.b16 %v507
    %v4258 = vunpack.c.h.b16 %v507
    %v4259 = vunpack.c.l.b16 %v508
    %v4260 = vunpack.c.h.b16 %v508
    %v4261 = vunpack.c.l.b16 %v509
    %v4262 = vunpack.c.h.b16 %v509
    %v4263 = vunpack.c.l.b16 %v510
    %v4264 = vunpack.c.h.b16 %v510
    %v4265 = vunpack.c.l.b16 %v511
    %v4266 = vunpack.c.h.b16 %v511
    %v4267 = vunpack.c.l.b16 %v512
    %v4268 = vunpack.c.h.b16 %v512
    %v4269 = vunpack.c.l.b16 %v513
    %v4270 = vunpack.c.h.b16 %v513
    %v4271 = vunpack.c.l.b16 %v514
    %v4272 = vunpack.c.h.b16 %v514
    %v4273 = vunpack.c.l.b16 %v515
    %v4274 = vunpack.c.h.b16 %v515
    %v4275 = vunpack.c.l.b16 %v516
    %v4276 = vunpack.c.h.b16 %v516
    %v4277 = vunpack.c.l.b16 %v517
    %v4278 = vunpack.c.h.b16 %v517
    %v4279 = vunpack.c.l.b16 %v518
    %v4280 = vunpack.c.h.b16 %v518
    %v4281 = vunpack.c.l.b16 %v519
    %v4282 = vunpack.c.h.b16 %v519
    %v4283 = vunpack.c.l.b16 %v520
    %v4284 = vunpack.c.h.b16 %v520
    %v4285 = vunpack.c.l.b16 %v521
    %v4286 = vunpack.c.h.b16 %v521
    %v4287 = vunpack.c.l.b16 %v522
    %v4288 = vunpack.c.h.b16 %v522
    %v4289 = vunpack.c.l.b16 %v523
    %v4290 = vunpack.c.h.b16 %v523
    %v4291 = vunpack.c.l.b16 %v524
    %v4292 = vunpack.c.h.b16 %v524
    %v4293 = vunpack.c.l.b16 %v525
    %v4294 = vunpack.c.h.b16 %v525
    %v4295 = vunpack.c.l.b16 %v526
    %v4296 = vunpack.c.h.b16 %v526
    %v4297 = vunpack.c.l.b16 %v527
    %v4298 = vunpack.c.h.b16 %v527
    %v4299 = vunpack.c.l.b16 %v528
    %v4300 = vunpack.c.h.b16 %v528
    %v4301 = vunpack.c.l.b16 %v529
    %v4302 = vunpack.c.h.b16 %v529
    %v4303 = vunpack.c.l.b16 %v530
    %v4304 = vunpack.c.h.b16 %v530
    %v4305 = vunpack.c.l.b16 %v531
    %v4306 = vunpack.c.h.b16 %v531
    %v4307 = vunpack.c.l.b16 %v532
    %v4308 = vunpack.c.h.b16 %v532
    %v4309 = vunpack.c.l.b16 %v533
    %v4310 = vunpack.c.h.b16 %v533
    %v4311 = vunpack.c.l.b16 %v534
    %v4312 = vunpack.c.h.b16 %v534
    %v4313 = vunpack.c.l.b16 %v535
    %v4314 = vunpack.c.h.b16 %v535
    %v4315 = vunpack.c.l.b16 %v536
    %v4316 = vunpack.c.h.b16 %v536
    %v4317 = vunpack.c.l.b16 %v537
    %v4318 = vunpack.c.h.b16 %v537
    %v4319 = vunpack.c.l.b16 %v538
    %v4320 = vunpack.c.h.b16 %v538
    %v4321 = vunpack.c.l.b16 %v539
    %v4322 = vunpack.c.h.b16 %v539
    %v4323 = vunpack.c.l.b16 %v540
    %v4324 = vunpack.c.h.b16 %v540
    %v4325 = vunpack.c.l.b16 %v541
    %v4326 = vunpack.c.h.b16 %v541
    %v4327 = vunpack.c.l.b16 %v542
    %v4328 = vunpack.c.h.b16 %v542
    %v4329 = vunpack.c.l.b16 %v543
    %v4330 = vunpack.c.h.b16 %v543
    %v4331 = vunpack.c.l.b16 %v544
    %v4332 = vunpack.c.h.b16 %v544
    %v4333 = vunpack.c.l.b16 %v545
    %v4334 = vunpack.c.h.b16 %v545
    %v4335 = vunpack.c.l.b16 %v546
    %v4336 = vunpack.c.h.b16 %v546
    %v4337 = vunpack.c.l.b16 %v547
    %v4338 = vunpack.c.h.b16 %v547
    %v4339 = vunpack.c.l.b16 %v548
    %v4340 = vunpack.c.h.b16 %v548
    %v4341 = vunpack.c.l.b16 %v549
    %v4342 = vunpack.c.h.b16 %v549
    %v4343 = vunpack.c.l.b16 %v550
    %v4344 = vunpack.c.h.b16 %v550
    %v4345 = vunpack.c.l.b16 %v551
    %v4346 = vunpack.c.h.b16 %v551
    %v4347 = vunpack.c.l.b16 %v552
    %v4348 = vunpack.c.h.b16 %v552
    %v4349 = vunpack.c.l.b16 %v553
    %v4350 = vunpack.c.h.b16 %v553
    %v4351 = vunpack.c.l.b16 %v554
    %v4352 = vunpack.c.h.b16 %v554
    %v4353 = vunpack.c.l.b16 %v555
    %v4354 = vunpack.c.h.b16 %v555
    %v4355 = vunpack.c.l.b16 %v556
    %v4356 = vunpack.c.h.b16 %v556
    %v4357 = vunpack.c.l.b16 %v557
    %v4358 = vunpack.c.h.b16 %v557
    %v4359 = vunpack.c.l.b16 %v558
    %v4360 = vunpack.c.h.b16 %v558
    %v4361 = vunpack.c.l.b16 %v559
    %v4362 = vunpack.c.h.b16 %v559
    %v4363 = vunpack.c.l.b16 %v560
    %v4364 = vunpack.c.h.b16 %v560
    %v4365 = vunpack.c.l.b16 %v561
    %v4366 = vunpack.c.h.b16 %v561
    %v4367 = vunpack.c.l.b16 %v562
    %v4368 = vunpack.c.h.b16 %v562
    %v4369 = vunpack.c.l.b16 %v563
    %v4370 = vunpack.c.h.b16 %v563
    %v4371 = vunpack.c.l.b16 %v564
    %v4372 = vunpack.c.h.b16 %v564
    %v4373 = vunpack.c.l.b16 %v565
    %v4374 = vunpack.c.h.b16 %v565
    %v4375 = vunpack.c.l.b16 %v566
    %v4376 = vunpack.c.h.b16 %v566
    %v4377 = vunpack.c.l.b16 %v567
    %v4378 = vunpack.c.h.b16 %v567
    %v4379 = vunpack.c.l.b16 %v568
    %v4380 = vunpack.c.h.b16 %v568
    %v4381 = vunpack.c.l.b16 %v569
    %v4382 = vunpack.c.h.b16 %v569
    %v4383 = vunpack.c.l.b16 %v570
    %v4384 = vunpack.c.h.b16 %v570
    %v4385 = vunpack.c.l.b16 %v571
    %v4386 = vunpack.c.h.b16 %v571
    %v4387 = vunpack.c.l.b16 %v572
    %v4388 = vunpack.c.h.b16 %v572
    %v4389 = vunpack.c.l.b16 %v573
    %v4390 = vunpack.c.h.b16 %v573
    %v4391 = vunpack.c.l.b16 %v574
    %v4392 = vunpack.c.h.b16 %v574
    %v4393 = vunpack.c.l.b16 %v575
    %v4394 = vunpack.c.h.b16 %v575
    %v4395 = vunpack.c.l.b16 %v576
    %v4396 = vunpack.c.h.b16 %v576
    %v4397 = vunpack.c.l.b16 %v577
    %v4398 = vunpack.c.h.b16 %v577
    %v4399 = vunpack.c.l.b16 %v578
    %v4400 = vunpack.c.h.b16 %v578
    %v4401 = vunpack.c.l.b16 %v579
    %v4402 = vunpack.c.h.b16 %v579
    %v4403 = vunpack.c.l.b16 %v580
    %v4404 = vunpack.c.h.b16 %v580
    %v4405 = vunpack.c.l.b16 %v581
    %v4406 = vunpack.c.h.b16 %v581
    %v4407 = vunpack.c.l.b16 %v582
    %v4408 = vunpack.c.h.b16 %v582
    %v4409 = vunpack.c.l.b16 %v583
    %v4410 = vunpack.c.h.b16 %v583
    %v4411 = vunpack.c.l.b16 %v584
    %v4412 = vunpack.c.h.b16 %v584
    %v4413 = vunpack.c.l.b16 %v585
    %v4414 = vunpack.c.h.b16 %v585
    %v4415 = vunpack.c.l.b16 %v586
    %v4416 = vunpack.c.h.b16 %v586
    %v4417 = vunpack.c.l.b16 %v587
    %v4418 = vunpack.c.h.b16 %v587
    %v4419 = vunpack.c.l.b16 %v588
    %v4420 = vunpack.c.h.b16 %v588
    %v4421 = vunpack.c.l.b16 %v589
    %v4422 = vunpack.c.h.b16 %v589
    %v4423 = vunpack.c.l.b16 %v590
    %v4424 = vunpack.c.h.b16 %v590
    %v4425 = vunpack.c.l.b16 %v591
    %v4426 = vunpack.c.h.b16 %v591
    %v4427 = vunpack.c.l.b16 %v592
    %v4428 = vunpack.c.h.b16 %v592
    %v4429 = vunpack.c.l.b16 %v593
    %v4430 = vunpack.c.h.b16 %v593
    %v4431 = vunpack.c.l.b16 %v594
    %v4432 = vunpack.c.h.b16 %v594
    %v4433 = vunpack.c.l.b16 %v595
    %v4434 = vunpack.c.h.b16 %v595
    %v4435 = vunpack.c.l.b16 %v596
    %v4436 = vunpack.c.h.b16 %v596
    %v4437 = vunpack.c.l.b16 %v597
    %v4438 = vunpack.c.h.b16 %v597
    %v4439 = vunpack.c.l.b16 %v598
    %v4440 = vunpack.c.h.b16 %v598
    %v4441 = vunpack.c.l.b16 %v599
    %v4442 = vunpack.c.h.b16 %v599
    %v4443 = vunpack.c.l.b16 %v600
    %v4444 = vunpack.c.h.b16 %v600
    %v4445 = vunpack.c.l.b16 %v601
    %v4446 = vunpack.c.h.b16 %v601
    %v4447 = vunpack.c.l.b16 %v602
    %v4448 = vunpack.c.h.b16 %v602
    %v4449 = vunpack.c.l.b16 %v603
    %v4450 = vunpack.c.h.b16 %v603
    %v4451 = vunpack.c.l.b16 %v604
    %v4452 = vunpack.c.h.b16 %v604
    %v4453 = vunpack.c.l.b16 %v605
    %v4454 = vunpack.c.h.b16 %v605
    %v4455 = vunpack.c.l.b16 %v606
    %v4456 = vunpack.c.h.b16 %v606
    %v4457 = vunpack.c.l.b16 %v607
    %v4458 = vunpack.c.h.b16 %v607
    %v4459 = vunpack.c.l.b16 %v608
    %v4460 = vunpack.c.h.b16 %v608
    %v4461 = vunpack.c.l.b16 %v609
    %v4462 = vunpack.c.h.b16 %v609
    %v4463 = vunpack.c.l.b16 %v610
    %v4464 = vunpack.c.h.b16 %v610
    %v4465 = vunpack.c.l.b16 %v611
    %v4466 = vunpack.c.h.b16 %v611
    %v4467 = vunpack.c.l.b16 %v612
    %v4468 = vunpack.c.h.b16 %v612
    %v4469 = vunpack.c.l.b16 %v613
    %v4470 = vunpack.c.h.b16 %v613
    %v4471 = vunpack.c.l.b16 %v614
    %v4472 = vunpack.c.h.b16 %v614
    %v4473 = vunpack.c.l.b16 %v615
    %v4474 = vunpack.c.h.b16 %v615
    %v4475 = vunpack.c.l.b16 %v616
    %v4476 = vunpack.c.h.b16 %v616
    %v4477 = vunpack.c.l.b16 %v617
    %v4478 = vunpack.c.h.b16 %v617
    %v4479 = vunpack.c.l.b16 %v618
    %v4480 = vunpack.c.h.b16 %v618
    %v4481 = vunpack.c.l.b16 %v619
    %v4482 = vunpack.c.h.b16 %v619
    %v4483 = vunpack.c.l.b16 %v620
    %v4484 = vunpack.c.h.b16 %v620
    %v4485 = vunpack.c.l.b16 %v621
    %v4486 = vunpack.c.h.b16 %v621
    %v4487 = vunpack.c.l.b16 %v622
    %v4488 = vunpack.c.h.b16 %v622
    %v4489 = vunpack.c.l.b16 %v623
    %v4490 = vunpack.c.h.b16 %v623
    %v4491 = vunpack.c.l.b16 %v624
    %v4492 = vunpack.c.h.b16 %v624
    %v4493 = vunpack.c.l.b16 %v625
    %v4494 = vunpack.c.h.b16 %v625
    %v4495 = vunpack.c.l.b16 %v626
    %v4496 = vunpack.c.h.b16 %v626
    %v4497 = vunpack.c.l.b16 %v627
    %v4498 = vunpack.c.h.b16 %v627
    %v4499 = vunpack.c.l.b16 %v628
    %v4500 = vunpack.c.h.b16 %v628
    %v4501 = vunpack.c.l.b16 %v629
    %v4502 = vunpack.c.h.b16 %v629
    %v4503 = vunpack.c.l.b16 %v630
    %v4504 = vunpack.c.h.b16 %v630
    %v4505 = vunpack.c.l.b16 %v631
    %v4506 = vunpack.c.h.b16 %v631
    %v4507 = vunpack.c.l.b16 %v632
    %v4508 = vunpack.c.h.b16 %v632
    %v4509 = vunpack.c.l.b16 %v633
    %v4510 = vunpack.c.h.b16 %v633
    %v4511 = vunpack.c.l.b16 %v634
    %v4512 = vunpack.c.h.b16 %v634
    %v4513 = vunpack.c.l.b16 %v635
    %v4514 = vunpack.c.h.b16 %v635
    %v4515 = vunpack.c.l.b16 %v636
    %v4516 = vunpack.c.h.b16 %v636
    %v4517 = vunpack.c.l.b16 %v637
    %v4518 = vunpack.c.h.b16 %v637
    %v4519 = vunpack.c.l.b16 %v638
    %v4520 = vunpack.c.h.b16 %v638
    %v4521 = vunpack.c.l.b16 %v639
    %v4522 = vunpack.c.h.b16 %v639
    %v4523 = vunpack.c.l.b16 %v640
    %v4524 = vunpack.c.h.b16 %v640
    %v4525 = vunpack.c.l.b16 %v641
    %v4526 = vunpack.c.h.b16 %v641
    %v4527 = vunpack.c.l.b16 %v642
    %v4528 = vunpack.c.h.b16 %v642
    %v4529 = vunpack.c.l.b16 %v643
    %v4530 = vunpack.c.h.b16 %v643
    %v4531 = vunpack.c.l.b16 %v644
    %v4532 = vunpack.c.h.b16 %v644
    %v4533 = vunpack.c.l.b16 %v645
    %v4534 = vunpack.c.h.b16 %v645
    %v4535 = vunpack.c.l.b16 %v646
    %v4536 = vunpack.c.h.b16 %v646
    %v4537 = vunpack.c.l.b16 %v647
    %v4538 = vunpack.c.h.b16 %v647
    %v4539 = vunpack.c.l.b16 %v648
    %v4540 = vunpack.c.h.b16 %v648
    %v4541 = vunpack.c.l.b16 %v649
    %v4542 = vunpack.c.h.b16 %v649
    %v4543 = vunpack.c.l.b16 %v650
    %v4544 = vunpack.c.h.b16 %v650
    %v4545 = vunpack.c.l.b16 %v651
    %v4546 = vunpack.c.h.b16 %v651
    %v4547 = vunpack.c.l.b16 %v652
    %v4548 = vunpack.c.h.b16 %v652
    %v4549 = vunpack.c.l.b16 %v653
    %v4550 = vunpack.c.h.b16 %v653
    %v4551 = vunpack.c.l.b16 %v654
    %v4552 = vunpack.c.h.b16 %v654
    %v4553 = vunpack.c.l.b16 %v655
    %v4554 = vunpack.c.h.b16 %v655
    %v4555 = vunpack.c.l.b16 %v656
    %v4556 = vunpack.c.h.b16 %v656
    %v4557 = vunpack.c.l.b16 %v657
    %v4558 = vunpack.c.h.b16 %v657
    %v4559 = vunpack.c.l.b16 %v658
    %v4560 = vunpack.c.h.b16 %v658
    %v4561 = vunpack.c.l.b16 %v659
    %v4562 = vunpack.c.h.b16 %v659
    %v4563 = vunpack.c.l.b16 %v660
    %v4564 = vunpack.c.h.b16 %v660
    %v4565 = vunpack.c.l.b16 %v661
    %v4566 = vunpack.c.h.b16 %v661
    %v4567 = vunpack.c.l.b16 %v662
    %v4568 = vunpack.c.h.b16 %v662
    %v4569 = vunpack.c.l.b16 %v663
    %v4570 = vunpack.c.h.b16 %v663
    %v4571 = vunpack.c.l.b16 %v664
    %v4572 = vunpack.c.h.b16 %v664
    %v4573 = vunpack.c.l.b16 %v665
    %v4574 = vunpack.c.h.b16 %v665
    %v4575 = vunpack.c.l.b16 %v666
    %v4576 = vunpack.c.h.b16 %v666
    %v4577 = vunpack.c.l.b16 %v667
    %v4578 = vunpack.c.h.b16 %v667
    %v4579 = vunpack.c.l.b16 %v668
    %v4580 = vunpack.c.h.b16 %v668
    %v4581 = vunpack.c.l.b16 %v669
    %v4582 = vunpack.c.h.b16 %v669
    %v4583 = vunpack.c.l.b16 %v670
    %v4584 = vunpack.c.h.b16 %v670
    %v4585 = vunpack.c.l.b16 %v671
    %v4586 = vunpack.c.h.b16 %v671
    %v4587 = vunpack.c.l.b16 %v672
    %v4588 = vunpack.c.h.b16 %v672
    %v4589 = vunpack.c.l.b16 %v673
    %v4590 = vunpack.c.h.b16 %v673
    %v4591 = vunpack.c.l.b16 %v674
    %v4592 = vunpack.c.h.b16 %v674
    %v4593 = vunpack.c.l.b16 %v675
    %v4594 = vunpack.c.h.b16 %v675
    %v4595 = vunpack.c.l.b16 %v676
    %v4596 = vunpack.c.h.b16 %v676
    %v4597 = vunpack.c.l.b16 %v677
    %v4598 = vunpack.c.h.b16 %v677
    %v4599 = vunpack.c.l.b16 %v678
    %v4600 = vunpack.c.h.b16 %v678
    %v4601 = vunpack.c.l.b16 %v679
    %v4602 = vunpack.c.h.b16 %v679
    %v4603 = vunpack.c.l.b16 %v680
    %v4604 = vunpack.c.h.b16 %v680
    %v4605 = vunpack.c.l.b16 %v681
    %v4606 = vunpack.c.h.b16 %v681
    %v4607 = vunpack.c.l.b16 %v682
    %v4608 = vunpack.c.h.b16 %v682
    %v4609 = vunpack.c.l.b16 %v683
    %v4610 = vunpack.c.h.b16 %v683
    %v4611 = vunpack.c.l.b16 %v684
    %v4612 = vunpack.c.h.b16 %v684
    %v4613 = vunpack.c.l.b16 %v685
    %v4614 = vunpack.c.h.b16 %v685
    %v4615 = vunpack.c.l.b16 %v686
    %v4616 = vunpack.c.h.b16 %v686
    %v4617 = vunpack.c.l.b16 %v687
    %v4618 = vunpack.c.h.b16 %v687
    %v4619 = vunpack.c.l.b16 %v688
    %v4620 = vunpack.c.h.b16 %v688
    %v4621 = vunpack.c.l.b16 %v689
    %v4622 = vunpack.c.h.b16 %v689
    %v4623 = vunpack.c.l.b16 %v690
    %v4624 = vunpack.c.h.b16 %v690
    %v4625 = vunpack.c.l.b16 %v691
    %v4626 = vunpack.c.h.b16 %v691
    %v4627 = vunpack.c.l.b16 %v692
    %v4628 = vunpack.c.h.b16 %v692
    %v4629 = vunpack.c.l.b16 %v693
    %v4630 = vunpack.c.h.b16 %v693
    %v4631 = vunpack.c.l.b16 %v694
    %v4632 = vunpack.c.h.b16 %v694
    %v4633 = vunpack.c.l.b16 %v695
    %v4634 = vunpack.c.h.b16 %v695
    %v4635 = vunpack.c.l.b16 %v696
    %v4636 = vunpack.c.h.b16 %v696
    %v4637 = vunpack.c.l.b16 %v697
    %v4638 = vunpack.c.h.b16 %v697
    %v4639 = vunpack.c.l.b16 %v698
    %v4640 = vunpack.c.h.b16 %v698
    %v4641 = vunpack.c.l.b16 %v699
    %v4642 = vunpack.c.h.b16 %v699
    %v4643 = vunpack.c.l.b16 %v700
    %v4644 = vunpack.c.h.b16 %v700
    %v4645 = vunpack.c.l.b16 %v701
    %v4646 = vunpack.c.h.b16 %v701
    %v4647 = vunpack.c.l.b16 %v702
    %v4648 = vunpack.c.h.b16 %v702
    %v4649 = vunpack.c.l.b16 %v703
    %v4650 = vunpack.c.h.b16 %v703
    %v4651 = vunpack.c.l.b16 %v704
    %v4652 = vunpack.c.h.b16 %v704
    %v4653 = vunpack.c.l.b16 %v705
    %v4654 = vunpack.c.h.b16 %v705
    %v4655 = vunpack.c.l.b16 %v706
    %v4656 = vunpack.c.h.b16 %v706
    %v4657 = vunpack.c.l.b16 %v707
    %v4658 = vunpack.c.h.b16 %v707
    %v4659 = vunpack.c.l.b16 %v708
    %v4660 = vunpack.c.h.b16 %v708
    %v4661 = vunpack.c.l.b16 %v709
    %v4662 = vunpack.c.h.b16 %v709
    %v4663 = vunpack.c.l.b16 %v710
    %v4664 = vunpack.c.h.b16 %v710
    %v4665 = vunpack.c.l.b16 %v711
    %v4666 = vunpack.c.h.b16 %v711
    %v4667 = vunpack.c.l.b16 %v712
    %v4668 = vunpack.c.h.b16 %v712
    %v4669 = vunpack.c.l.b16 %v713
    %v4670 = vunpack.c.h.b16 %v713
    %v4671 = vunpack.c.l.b16 %v714
    %v4672 = vunpack.c.h.b16 %v714
    %v4673 = vunpack.c.l.b16 %v715
    %v4674 = vunpack.c.h.b16 %v715
    %v4675 = vunpack.c.l.b16 %v716
    %v4676 = vunpack.c.h.b16 %v716
    %v4677 = vunpack.c.l.b16 %v717
    %v4678 = vunpack.c.h.b16 %v717
    %v4679 = vunpack.c.l.b16 %v718
    %v4680 = vunpack.c.h.b16 %v718
    %v4681 = vunpack.c.l.b16 %v719
    %v4682 = vunpack.c.h.b16 %v719
    %v4683 = vunpack.c.l.b16 %v720
    %v4684 = vunpack.c.h.b16 %v720
    %v4685 = vunpack.c.l.b16 %v721
    %v4686 = vunpack.c.h.b16 %v721
    %v4687 = vunpack.c.l.b16 %v722
    %v4688 = vunpack.c.h.b16 %v722
    %v4689 = vunpack.c.l.b16 %v723
    %v4690 = vunpack.c.h.b16 %v723
    %v4691 = vunpack.c.l.b16 %v724
    %v4692 = vunpack.c.h.b16 %v724
    %v4693 = vunpack.c.l.b16 %v725
    %v4694 = vunpack.c.h.b16 %v725
    %v4695 = vunpack.c.l.b16 %v726
    %v4696 = vunpack.c.h.b16 %v726
    %v4697 = vunpack.c.l.b16 %v727
    %v4698 = vunpack.c.h.b16 %v727
    %v4699 = vunpack.c.l.b16 %v728
    %v4700 = vunpack.c.h.b16 %v728
    %v4701 = vunpack.c.l.b16 %v729
    %v4702 = vunpack.c.h.b16 %v729
    %v4703 = vunpack.c.l.b16 %v730
    %v4704 = vunpack.c.h.b16 %v730
    %v4705 = vunpack.c.l.b16 %v731
    %v4706 = vunpack.c.h.b16 %v731
    %v4707 = vunpack.c.l.b16 %v732
    %v4708 = vunpack.c.h.b16 %v732
    %v4709 = vunpack.c.l.b16 %v733
    %v4710 = vunpack.c.h.b16 %v733
    %v4711 = vunpack.c.l.b16 %v734
    %v4712 = vunpack.c.h.b16 %v734
    %v4713 = vunpack.c.l.b16 %v735
    %v4714 = vunpack.c.h.b16 %v735
    %v4715 = vunpack.c.l.b16 %v736
    %v4716 = vunpack.c.h.b16 %v736
    %v4717 = vunpack.c.l.b16 %v737
    %v4718 = vunpack.c.h.b16 %v737
    %v4719 = vunpack.c.l.b16 %v738
    %v4720 = vunpack.c.h.b16 %v738
    %v4721 = vunpack.c.l.b16 %v739
    %v4722 = vunpack.c.h.b16 %v739
    %v4723 = vunpack.c.l.b16 %v740
    %v4724 = vunpack.c.h.b16 %v740
    %v4725 = vunpack.c.l.b16 %v741
    %v4726 = vunpack.c.h.b16 %v741
    %v4727 = vunpack.c.l.b16 %v742
    %v4728 = vunpack.c.h.b16 %v742
    %v4729 = vunpack.c.l.b16 %v743
    %v4730 = vunpack.c.h.b16 %v743
    %v4731 = vunpack.c.l.b16 %v744
    %v4732 = vunpack.c.h.b16 %v744
    %v4733 = vunpack.c.l.b16 %v745
    %v4734 = vunpack.c.h.b16 %v745
    %v4735 = vunpack.c.l.b16 %v746
    %v4736 = vunpack.c.h.b16 %v746
    %v4737 = vunpack.c.l.b16 %v747
    %v4738 = vunpack.c.h.b16 %v747
    %v4739 = vunpack.c.l.b16 %v748
    %v4740 = vunpack.c.h.b16 %v748
    %v4741 = vunpack.c.l.b16 %v749
    %v4742 = vunpack.c.h.b16 %v749
    %v4743 = vunpack.c.l.b16 %v750
    %v4744 = vunpack.c.h.b16 %v750
    %v4745 = vunpack.c.l.b16 %v751
    %v4746 = vunpack.c.h.b16 %v751
    %v4747 = vunpack.c.l.b16 %v752
    %v4748 = vunpack.c.h.b16 %v752
    %v4749 = vunpack.c.l.b16 %v753
    %v4750 = vunpack.c.h.b16 %v753
    %v4751 = vunpack.c.l.b16 %v754
    %v4752 = vunpack.c.h.b16 %v754
    %v4753 = vunpack.c.l.b16 %v755
    %v4754 = vunpack.c.h.b16 %v755
    %v4755 = vunpack.c.l.b16 %v756
    %v4756 = vunpack.c.h.b16 %v756
    %v4757 = vunpack.c.l.b16 %v757
    %v4758 = vunpack.c.h.b16 %v757
    %v4759 = vunpack.c.l.b16 %v758
    %v4760 = vunpack.c.h.b16 %v758
    %v4761 = vunpack.c.l.b16 %v759
    %v4762 = vunpack.c.h.b16 %v759
    %v4763 = vunpack.c.l.b16 %v760
    %v4764 = vunpack.c.h.b16 %v760
    %v4765 = vunpack.c.l.b16 %v761
    %v4766 = vunpack.c.h.b16 %v761
    %v4767 = vunpack.c.l.b16 %v762
    %v4768 = vunpack.c.h.b16 %v762
    %v4769 = vunpack.c.l.b16 %v763
    %v4770 = vunpack.c.h.b16 %v763
    %v4771 = vunpack.c.l.b16 %v764
    %v4772 = vunpack.c.h.b16 %v764
    %v4773 = vunpack.c.l.b16 %v765
    %v4774 = vunpack.c.h.b16 %v765
    %v4775 = vunpack.c.l.b16 %v766
    %v4776 = vunpack.c.h.b16 %v766
    %v4777 = vunpack.c.l.b16 %v767
    %v4778 = vunpack.c.h.b16 %v767
    %v4779 = vunpack.c.l.b16 %v768
    %v4780 = vunpack.c.h.b16 %v768
    %v4781 = vunpack.c.l.b16 %v769
    %v4782 = vunpack.c.h.b16 %v769
    %v4783 = vunpack.c.l.b16 %v770
    %v4784 = vunpack.c.h.b16 %v770
    %v4785 = vunpack.c.l.b16 %v771
    %v4786 = vunpack.c.h.b16 %v771
    %v4787 = vunpack.c.l.b16 %v772
    %v4788 = vunpack.c.h.b16 %v772
    %v4789 = vunpack.c.l.b16 %v773
    %v4790 = vunpack.c.h.b16 %v773
    %v4791 = vunpack.c.l.b16 %v774
    %v4792 = vunpack.c.h.b16 %v774
    %v4793 = vunpack.c.l.b16 %v775
    %v4794 = vunpack.c.h.b16 %v775
    %v4795 = vunpack.c.l.b16 %v776
    %v4796 = vunpack.c.h.b16 %v776
    %v4797 = vunpack.c.l.b16 %v777
    %v4798 = vunpack.c.h.b16 %v777
    %v4799 = vunpack.c.l.b16 %v778
    %v4800 = vunpack.c.h.b16 %v778
    %v4801 = vunpack.c.l.b16 %v779
    %v4802 = vunpack.c.h.b16 %v779
    %v4803 = vunpack.c.l.b16 %v780
    %v4804 = vunpack.c.h.b16 %v780
    %v4805 = vunpack.c.l.b16 %v781
    %v4806 = vunpack.c.h.b16 %v781
    %v4807 = vunpack.c.l.b16 %v782
    %v4808 = vunpack.c.h.b16 %v782
    %v4809 = vunpack.c.l.b16 %v783
    %v4810 = vunpack.c.h.b16 %v783
    %v4811 = vunpack.c.l.b16 %v784
    %v4812 = vunpack.c.h.b16 %v784
    %v4813 = vunpack.c.l.b16 %v785
    %v4814 = vunpack.c.h.b16 %v785
    %v4815 = vunpack.c.l.b16 %v786
    %v4816 = vunpack.c.h.b16 %v786
    %v4817 = vunpack.c.l.b16 %v787
    %v4818 = vunpack.c.h.b16 %v787
    %v4819 = vunpack.c.l.b16 %v788
    %v4820 = vunpack.c.h.b16 %v788
    %v4821 = vunpack.c.l.b16 %v789
    %v4822 = vunpack.c.h.b16 %v789
    %v4823 = vunpack.c.l.b16 %v790
    %v4824 = vunpack.c.h.b16 %v790
    %v4825 = vunpack.c.l.b16 %v791
    %v4826 = vunpack.c.h.b16 %v791
    %v4827 = vunpack.c.l.b16 %v792
    %v4828 = vunpack.c.h.b16 %v792
    %v4829 = vunpack.c.l.b16 %v793
    %v4830 = vunpack.c.h.b16 %v793
    %v4831 = vunpack.c.l.b16 %v794
    %v4832 = vunpack.c.h.b16 %v794
    %v4833 = vunpack.c.l.b16 %v795
    %v4834 = vunpack.c.h.b16 %v795
    %v4835 = vunpack.c.l.b16 %v796
    %v4836 = vunpack.c.h.b16 %v796
    %v4837 = vunpack.c.l.b16 %v797
    %v4838 = vunpack.c.h.b16 %v797
    %v4839 = vunpack.c.l.b16 %v798
    %v4840 = vunpack.c.h.b16 %v798
    %v4841 = vunpack.c.l.b16 %v799
    %v4842 = vunpack.c.h.b16 %v799
    %v4843 = vunpack.c.l.b16 %v800
    %v4844 = vunpack.c.h.b16 %v800
    %v4845 = vunpack.c.l.b16 %v801
    %v4846 = vunpack.c.h.b16 %v801
    %v4847 = vunpack.c.l.b16 %v802
    %v4848 = vunpack.c.h.b16 %v802
    %v4849 = vunpack.c.l.b16 %v803
    %v4850 = vunpack.c.h.b16 %v803
    %v4851 = vunpack.c.l.b16 %v804
    %v4852 = vunpack.c.h.b16 %v804
    %v4853 = vunpack.c.l.b16 %v805
    %v4854 = vunpack.c.h.b16 %v805
    %v4855 = vunpack.c.l.b16 %v806
    %v4856 = vunpack.c.h.b16 %v806
    %v4857 = vunpack.c.l.b16 %v807
    %v4858 = vunpack.c.h.b16 %v807
    %v4859 = vunpack.c.l.b16 %v808
    %v4860 = vunpack.c.h.b16 %v808
    %v4861 = vunpack.c.l.b16 %v809
    %v4862 = vunpack.c.h.b16 %v809
    %v4863 = vunpack.c.l.b16 %v810
    %v4864 = vunpack.c.h.b16 %v810
    %v4865 = vunpack.c.l.b16 %v811
    %v4866 = vunpack.c.h.b16 %v811
    %v4867 = vunpack.c.l.b16 %v812
    %v4868 = vunpack.c.h.b16 %v812
    %v4869 = vunpack.c.l.b16 %v813
    %v4870 = vunpack.c.h.b16 %v813
    %v4871 = vunpack.c.l.b16 %v814
    %v4872 = vunpack.c.h.b16 %v814
    %v4873 = vunpack.c.l.b16 %v815
    %v4874 = vunpack.c.h.b16 %v815
    %v4875 = vunpack.c.l.b16 %v816
    %v4876 = vunpack.c.h.b16 %v816
    %v4877 = vunpack.c.l.b16 %v817
    %v4878 = vunpack.c.h.b16 %v817
    %v4879 = vunpack.c.l.b16 %v818
    %v4880 = vunpack.c.h.b16 %v818
    %v4881 = vunpack.c.l.b16 %v819
    %v4882 = vunpack.c.h.b16 %v819
    %v4883 = vunpack.c.l.b16 %v820
    %v4884 = vunpack.c.h.b16 %v820
    %v4885 = vunpack.c.l.b16 %v821
    %v4886 = vunpack.c.h.b16 %v821
    %v4887 = vunpack.c.l.b16 %v822
    %v4888 = vunpack.c.h.b16 %v822
    %v4889 = vunpack.c.l.b16 %v823
    %v4890 = vunpack.c.h.b16 %v823
    %v4891 = vunpack.c.l.b16 %v824
    %v4892 = vunpack.c.h.b16 %v824
    %v4893 = vunpack.c.l.b16 %v825
    %v4894 = vunpack.c.h.b16 %v825
    %v4895 = vunpack.c.l.b16 %v826
    %v4896 = vunpack.c.h.b16 %v826
    %v4897 = vunpack.c.l.b16 %v827
    %v4898 = vunpack.c.h.b16 %v827
    %v4899 = vunpack.c.l.b16 %v828
    %v4900 = vunpack.c.h.b16 %v828
    %v4901 = vunpack.c.l.b16 %v829
    %v4902 = vunpack.c.h.b16 %v829
    %v4903 = vunpack.c.l.b16 %v830
    %v4904 = vunpack.c.h.b16 %v830
    %v4905 = vunpack.c.l.b16 %v831
    %v4906 = vunpack.c.h.b16 %v831
    %v4907 = vunpack.c.l.b16 %v832
    %v4908 = vunpack.c.h.b16 %v832
    %v4909 = vunpack.c.l.b16 %v833
    %v4910 = vunpack.c.h.b16 %v833
    %v4911 = vunpack.c.l.b16 %v834
    %v4912 = vunpack.c.h.b16 %v834
    %v4913 = vunpack.c.l.b16 %v835
    %v4914 = vunpack.c.h.b16 %v835
    %v4915 = vunpack.c.l.b16 %v836
    %v4916 = vunpack.c.h.b16 %v836
    %v4917 = vunpack.c.l.b16 %v837
    %v4918 = vunpack.c.h.b16 %v837
    %v4919 = vunpack.c.l.b16 %v838
    %v4920 = vunpack.c.h.b16 %v838
    %v4921 = vunpack.c.l.b16 %v839
    %v4922 = vunpack.c.h.b16 %v839
    %v4923 = vunpack.c.l.b16 %v840
    %v4924 = vunpack.c.h.b16 %v840
    %v4925 = vunpack.c.l.b16 %v841
    %v4926 = vunpack.c.h.b16 %v841
    %v4927 = vunpack.c.l.b16 %v842
    %v4928 = vunpack.c.h.b16 %v842
    %v4929 = vunpack.c.l.b16 %v843
    %v4930 = vunpack.c.h.b16 %v843
    %v4931 = vunpack.c.l.b16 %v844
    %v4932 = vunpack.c.h.b16 %v844
    %v4933 = vunpack.c.l.b16 %v845
    %v4934 = vunpack.c.h.b16 %v845
    %v4935 = vunpack.c.l.b16 %v846
    %v4936 = vunpack.c.h.b16 %v846
    %v4937 = vunpack.c.l.b16 %v847
    %v4938 = vunpack.c.h.b16 %v847
    %v4939 = vunpack.c.l.b16 %v848
    %v4940 = vunpack.c.h.b16 %v848
    %v4941 = vunpack.c.l.b16 %v849
    %v4942 = vunpack.c.h.b16 %v849
    %v4943 = vunpack.c.l.b16 %v850
    %v4944 = vunpack.c.h.b16 %v850
    %v4945 = vunpack.c.l.b16 %v851
    %v4946 = vunpack.c.h.b16 %v851
    %v4947 = vunpack.c.l.b16 %v852
    %v4948 = vunpack.c.h.b16 %v852
    %v4949 = vunpack.c.l.b16 %v853
    %v4950 = vunpack.c.h.b16 %v853
    %v4951 = vunpack.c.l.b16 %v854
    %v4952 = vunpack.c.h.b16 %v854
    %v4953 = vunpack.c.l.b16 %v855
    %v4954 = vunpack.c.h.b16 %v855
    %v4955 = vunpack.c.l.b16 %v856
    %v4956 = vunpack.c.h.b16 %v856
    %v4957 = vunpack.c.l.b16 %v857
    %v4958 = vunpack.c.h.b16 %v857
    %v4959 = vunpack.c.l.b16 %v858
    %v4960 = vunpack.c.h.b16 %v858
    %v4961 = vunpack.c.l.b16 %v859
    %v4962 = vunpack.c.h.b16 %v859
    %v4963 = vunpack.c.l.b16 %v860
    %v4964 = vunpack.c.h.b16 %v860
    %v4965 = vunpack.c.l.b16 %v861
    %v4966 = vunpack.c.h.b16 %v861
    %v4967 = vunpack.c.l.b16 %v862
    %v4968 = vunpack.c.h.b16 %v862
    %v4969 = vunpack.c.l.b16 %v863
    %v4970 = vunpack.c.h.b16 %v863
    %v4971 = vunpack.c.l.b16 %v864
    %v4972 = vunpack.c.h.b16 %v864
    %v4973 = vunpack.c.l.b16 %v865
    %v4974 = vunpack.c.h.b16 %v865
    %v4975 = vunpack.c.l.b16 %v866
    %v4976 = vunpack.c.h.b16 %v866
    %v4977 = vunpack.c.l.b16 %v867
    %v4978 = vunpack.c.h.b16 %v867
    %v4979 = vunpack.c.l.b16 %v868
    %v4980 = vunpack.c.h.b16 %v868
    %v4981 = vunpack.c.l.b16 %v869
    %v4982 = vunpack.c.h.b16 %v869
    %v4983 = vunpack.c.l.b16 %v870
    %v4984 = vunpack.c.h.b16 %v870
    %v4985 = vunpack.c.l.b16 %v871
    %v4986 = vunpack.c.h.b16 %v871
    %v4987 = vunpack.c.l.b16 %v872
    %v4988 = vunpack.c.h.b16 %v872
    %v4989 = vunpack.c.l.b16 %v873
    %v4990 = vunpack.c.h.b16 %v873
    %v4991 = vunpack.c.l.b16 %v874
    %v4992 = vunpack.c.h.b16 %v874
    %v4993 = vunpack.c.l.b16 %v875
    %v4994 = vunpack.c.h.b16 %v875
    %v4995 = vunpack.c.l.b16 %v876
    %v4996 = vunpack.c.h.b16 %v876
    %v4997 = vunpack.c.l.b16 %v877
    %v4998 = vunpack.c.h.b16 %v877
    %v4999 = vunpack.c.l.b16 %v878
    %v5000 = vunpack.c.h.b16 %v878
    %v5001 = vunpack.c.l.b16 %v879
    %v5002 = vunpack.c.h.b16 %v879
    %v5003 = vunpack.c.l.b16 %v880
    %v5004 = vunpack.c.h.b16 %v880
    %v5005 = vunpack.c.l.b16 %v881
    %v5006 = vunpack.c.h.b16 %v881
    %v5007 = vunpack.c.l.b16 %v882
    %v5008 = vunpack.c.h.b16 %v882
    %v5009 = vunpack.c.l.b16 %v883
    %v5010 = vunpack.c.h.b16 %v883
    %v5011 = vunpack.c.l.b16 %v884
    %v5012 = vunpack.c.h.b16 %v884
    %v5013 = vunpack.c.l.b16 %v885
    %v5014 = vunpack.c.h.b16 %v885
    %v5015 = vunpack.c.l.b16 %v886
    %v5016 = vunpack.c.h.b16 %v886
    %v5017 = vunpack.c.l.b16 %v887
    %v5018 = vunpack.c.h.b16 %v887
    %v5019 = vunpack.c.l.b16 %v888
    %v5020 = vunpack.c.h.b16 %v888
    %v5021 = vunpack.c.l.b16 %v889
    %v5022 = vunpack.c.h.b16 %v889
    %v5023 = vunpack.c.l.b16 %v890
    %v5024 = vunpack.c.h.b16 %v890
    %v5025 = vunpack.c.l.b16 %v891
    %v5026 = vunpack.c.h.b16 %v891
    %v5027 = vunpack.c.l.b16 %v892
    %v5028 = vunpack.c.h.b16 %v892
    %v5029 = vunpack.c.l.b16 %v893
    %v5030 = vunpack.c.h.b16 %v893
    %v5031 = vunpack.c.l.b16 %v894
    %v5032 = vunpack.c.h.b16 %v894
    %v5033 = vunpack.c.l.b16 %v895
    %v5034 = vunpack.c.h.b16 %v895
    %v5035 = vunpack.c.l.b16 %v896
    %v5036 = vunpack.c.h.b16 %v896
    %v5037 = vunpack.c.l.b16 %v897
    %v5038 = vunpack.c.h.b16 %v897
    %v5039 = vunpack.c.l.b16 %v898
    %v5040 = vunpack.c.h.b16 %v898
    %v5041 = vunpack.c.l.b16 %v899
    %v5042 = vunpack.c.h.b16 %v899
    %v5043 = vunpack.c.l.b16 %v900
    %v5044 = vunpack.c.h.b16 %v900
    %v5045 = vunpack.c.l.b16 %v901
    %v5046 = vunpack.c.h.b16 %v901
    %v5047 = vunpack.c.l.b16 %v902
    %v5048 = vunpack.c.h.b16 %v902
    %v5049 = vunpack.c.l.b16 %v903
    %v5050 = vunpack.c.h.b16 %v903
    %v5051 = vunpack.c.l.b16 %v904
    %v5052 = vunpack.c.h.b16 %v904
    %v5053 = vunpack.c.l.b16 %v905
    %v5054 = vunpack.c.h.b16 %v905
    %v5055 = vunpack.c.l.b16 %v906
    %v5056 = vunpack.c.h.b16 %v906
    %v5057 = vunpack.c.l.b16 %v907
    %v5058 = vunpack.c.h.b16 %v907
    %v5059 = vunpack.c.l.b16 %v908
    %v5060 = vunpack.c.h.b16 %v908
    %v5061 = vunpack.c.l.b16 %v909
    %v5062 = vunpack.c.h.b16 %v909
    %v5063 = vunpack.c.l.b16 %v910
    %v5064 = vunpack.c.h.b16 %v910
    %v5065 = vunpack.c.l.b16 %v911
    %v5066 = vunpack.c.h.b16 %v911
    %v5067 = vunpack.c.l.b16 %v912
    %v5068 = vunpack.c.h.b16 %v912
    %v5069 = vunpack.c.l.b16 %v913
    %v5070 = vunpack.c.h.b16 %v913
    %v5071 = vunpack.c.l.b16 %v914
    %v5072 = vunpack.c.h.b16 %v914
    %v5073 = vunpack.c.l.b16 %v915
    %v5074 = vunpack.c.h.b16 %v915
    %v5075 = vunpack.c.l.b16 %v916
    %v5076 = vunpack.c.h.b16 %v916
    %v5077 = vunpack.c.l.b16 %v917
    %v5078 = vunpack.c.h.b16 %v917
    %v5079 = vunpack.c.l.b16 %v918
    %v5080 = vunpack.c.h.b16 %v918
    %v5081 = vunpack.c.l.b16 %v919
    %v5082 = vunpack.c.h.b16 %v919
    %v5083 = vunpack.c.l.b16 %v920
    %v5084 = vunpack.c.h.b16 %v920
    %v5085 = vunpack.c.l.b16 %v921
    %v5086 = vunpack.c.h.b16 %v921
    %v5087 = vunpack.c.l.b16 %v922
    %v5088 = vunpack.c.h.b16 %v922
    %v5089 = vunpack.c.l.b16 %v923
    %v5090 = vunpack.c.h.b16 %v923
    %v5091 = vunpack.c.l.b16 %v924
    %v5092 = vunpack.c.h.b16 %v924
    %v5093 = vunpack.c.l.b16 %v925
    %v5094 = vunpack.c.h.b16 %v925
    %v5095 = vunpack.c.l.b16 %v926
    %v5096 = vunpack.c.h.b16 %v926
    %v5097 = vunpack.c.l.b16 %v927
    %v5098 = vunpack.c.h.b16 %v927
    %v5099 = vunpack.c.l.b16 %v928
    %v5100 = vunpack.c.h.b16 %v928
    %v5101 = vunpack.c.l.b16 %v929
    %v5102 = vunpack.c.h.b16 %v929
    %v5103 = vunpack.c.l.b16 %v930
    %v5104 = vunpack.c.h.b16 %v930
    %v5105 = vunpack.c.l.b16 %v931
    %v5106 = vunpack.c.h.b16 %v931
    %v5107 = vunpack.c.l.b16 %v932
    %v5108 = vunpack.c.h.b16 %v932
    %v5109 = vunpack.c.l.b16 %v933
    %v5110 = vunpack.c.h.b16 %v933
    %v5111 = vunpack.c.l.b16 %v934
    %v5112 = vunpack.c.h.b16 %v934
    %v5113 = vunpack.c.l.b16 %v935
    %v5114 = vunpack.c.h.b16 %v935
    %v5115 = vunpack.c.l.b16 %v936
    %v5116 = vunpack.c.h.b16 %v936
    %v5117 = vunpack.c.l.b16 %v937
    %v5118 = vunpack.c.h.b16 %v937
    %v5119 = vunpack.c.l.b16 %v938
    %v5120 = vunpack.c.h.b16 %v938
    %v5121 = vunpack.c.l.b16 %v939
    %v5122 = vunpack.c.h.b16 %v939
    %v5123 = vunpack.c.l.b16 %v940
    %v5124 = vunpack.c.h.b16 %v940
    %v5125 = vunpack.c.l.b16 %v941
    %v5126 = vunpack.c.h.b16 %v941
    %v5127 = vunpack.c.l.b16 %v942
    %v5128 = vunpack.c.h.b16 %v942
    %v5129 = vunpack.c.l.b16 %v943
    %v5130 = vunpack.c.h.b16 %v943
    %v5131 = vunpack.c.l.b16 %v944
    %v5132 = vunpack.c.h.b16 %v944
    %v5133 = vunpack.c.l.b16 %v945
    %v5134 = vunpack.c.h.b16 %v945
    %v5135 = vunpack.c.l.b16 %v946
    %v5136 = vunpack.c.h.b16 %v946
    %v5137 = vunpack.c.l.b16 %v947
    %v5138 = vunpack.c.h.b16 %v947
    %v5139 = vunpack.c.l.b16 %v948
    %v5140 = vunpack.c.h.b16 %v948
    %v5141 = vunpack.c.l.b16 %v949
    %v5142 = vunpack.c.h.b16 %v949
    %v5143 = vunpack.c.l.b16 %v950
    %v5144 = vunpack.c.h.b16 %v950
    %v5145 = vunpack.c.l.b16 %v951
    %v5146 = vunpack.c.h.b16 %v951
    %v5147 = vunpack.c.l.b16 %v952
    %v5148 = vunpack.c.h.b16 %v952
    %v5149 = vunpack.c.l.b16 %v953
    %v5150 = vunpack.c.h.b16 %v953
    %v5151 = vunpack.c.l.b16 %v954
    %v5152 = vunpack.c.h.b16 %v954
    %v5153 = vunpack.c.l.b16 %v955
    %v5154 = vunpack.c.h.b16 %v955
    %v5155 = vunpack.c.l.b16 %v956
    %v5156 = vunpack.c.h.b16 %v956
    %v5157 = vunpack.c.l.b16 %v957
    %v5158 = vunpack.c.h.b16 %v957
    %v5159 = vunpack.c.l.b16 %v958
    %v5160 = vunpack.c.h.b16 %v958
    %v5161 = vunpack.c.l.b16 %v959
    %v5162 = vunpack.c.h.b16 %v959
    %v5163 = vunpack.c.l.b16 %v960
    %v5164 = vunpack.c.h.b16 %v960
    %v5165 = vunpack.c.l.b16 %v961
    %v5166 = vunpack.c.h.b16 %v961
    %v5167 = vunpack.c.l.b16 %v962
    %v5168 = vunpack.c.h.b16 %v962
    %v5169 = vunpack.c.l.b16 %v963
    %v5170 = vunpack.c.h.b16 %v963
    %v5171 = vunpack.c.l.b16 %v964
    %v5172 = vunpack.c.h.b16 %v964
    %v5173 = vunpack.c.l.b16 %v965
    %v5174 = vunpack.c.h.b16 %v965
    %v5175 = vunpack.c.l.b16 %v966
    %v5176 = vunpack.c.h.b16 %v966
    %v5177 = vunpack.c.l.b16 %v967
    %v5178 = vunpack.c.h.b16 %v967
    %v5179 = vunpack.c.l.b16 %v968
    %v5180 = vunpack.c.h.b16 %v968
    %v5181 = vunpack.c.l.b16 %v969
    %v5182 = vunpack.c.h.b16 %v969
    %v5183 = vunpack.c.l.b16 %v970
    %v5184 = vunpack.c.h.b16 %v970
    %v5185 = vunpack.c.l.b16 %v971
    %v5186 = vunpack.c.h.b16 %v971
    %v5187 = vunpack.c.l.b16 %v972
    %v5188 = vunpack.c.h.b16 %v972
    %v5189 = vunpack.c.l.b16 %v973
    %v5190 = vunpack.c.h.b16 %v973
    %v5191 = vunpack.c.l.b16 %v974
    %v5192 = vunpack.c.h.b16 %v974
    %v5193 = vunpack.c.l.b16 %v975
    %v5194 = vunpack.c.h.b16 %v975
    %v5195 = vunpack.c.l.b16 %v976
    %v5196 = vunpack.c.h.b16 %v976
    %v5197 = vunpack.c.l.b16 %v977
    %v5198 = vunpack.c.h.b16 %v977
    %v5199 = vunpack.c.l.b16 %v978
    %v5200 = vunpack.c.h.b16 %v978
    %v5201 = vunpack.c.l.b16 %v979
    %v5202 = vunpack.c.h.b16 %v979
    %v5203 = vunpack.c.l.b16 %v980
    %v5204 = vunpack.c.h.b16 %v980
    %v5205 = vunpack.c.l.b16 %v981
    %v5206 = vunpack.c.h.b16 %v981
    %v5207 = vunpack.c.l.b16 %v982
    %v5208 = vunpack.c.h.b16 %v982
    %v5209 = vunpack.c.l.b16 %v983
    %v5210 = vunpack.c.h.b16 %v983
    %v5211 = vunpack.c.l.b16 %v984
    %v5212 = vunpack.c.h.b16 %v984
    %v5213 = vunpack.c.l.b16 %v985
    %v5214 = vunpack.c.h.b16 %v985
    %v5215 = vunpack.c.l.b16 %v986
    %v5216 = vunpack.c.h.b16 %v986
    %v5217 = vunpack.c.l.b16 %v987
    %v5218 = vunpack.c.h.b16 %v987
    %v5219 = vunpack.c.l.b16 %v988
    %v5220 = vunpack.c.h.b16 %v988
    %v5221 = vunpack.c.l.b16 %v989
    %v5222 = vunpack.c.h.b16 %v989
    %v5223 = vunpack.c.l.b16 %v990
    %v5224 = vunpack.c.h.b16 %v990
    %v5225 = vunpack.c.l.b16 %v991
    %v5226 = vunpack.c.h.b16 %v991
    %v5227 = vunpack.c.l.b16 %v992
    %v5228 = vunpack.c.h.b16 %v992
    %v5229 = vunpack.c.l.b16 %v993
    %v5230 = vunpack.c.h.b16 %v993
    %v5231 = vunpack.c.l.b16 %v994
    %v5232 = vunpack.c.h.b16 %v994
    %v5233 = vunpack.c.l.b16 %v995
    %v5234 = vunpack.c.h.b16 %v995
    %v5235 = vunpack.c.l.b16 %v996
    %v5236 = vunpack.c.h.b16 %v996
    %v5237 = vunpack.c.l.b16 %v997
    %v5238 = vunpack.c.h.b16 %v997
    %v5239 = vunpack.c.l.b16 %v998
    %v5240 = vunpack.c.h.b16 %v998
    %v5241 = vunpack.c.l.b16 %v999
    %v5242 = vunpack.c.h.b16 %v999
    %v5243 = vunpack.c.l.b16 %v1000
    %v5244 = vunpack.c.h.b16 %v1000
    %v5245 = vunpack.c.l.b16 %v1001
    %v5246 = vunpack.c.h.b16 %v1001
    %v5247 = vunpack.c.l.b16 %v1002
    %v5248 = vunpack.c.h.b16 %v1002
    %v5249 = vunpack.c.l.b16 %v1003
    %v5250 = vunpack.c.h.b16 %v1003
    %v5251 = vunpack.c.l.b16 %v1004
    %v5252 = vunpack.c.h.b16 %v1004
    %v5253 = vunpack.c.l.b16 %v1005
    %v5254 = vunpack.c.h.b16 %v1005
    %v5255 = vunpack.c.l.b16 %v1006
    %v5256 = vunpack.c.h.b16 %v1006
    %v5257 = vunpack.c.l.b16 %v1007
    %v5258 = vunpack.c.h.b16 %v1007
    %v5259 = vunpack.c.l.b16 %v1008
    %v5260 = vunpack.c.h.b16 %v1008
    %v5261 = vunpack.c.l.b16 %v1009
    %v5262 = vunpack.c.h.b16 %v1009
    %v5263 = vunpack.c.l.b16 %v1010
    %v5264 = vunpack.c.h.b16 %v1010
    %v5265 = vunpack.c.l.b16 %v1011
    %v5266 = vunpack.c.h.b16 %v1011
    %v5267 = vunpack.c.l.b16 %v1012
    %v5268 = vunpack.c.h.b16 %v1012
    %v5269 = vunpack.c.l.b16 %v1013
    %v5270 = vunpack.c.h.b16 %v1013
    %v5271 = vunpack.c.l.b16 %v1014
    %v5272 = vunpack.c.h.b16 %v1014
    %v5273 = vunpack.c.l.b16 %v1015
    %v5274 = vunpack.c.h.b16 %v1015
    %v5275 = vunpack.c.l.b16 %v1016
    %v5276 = vunpack.c.h.b16 %v1016
    %v5277 = vunpack.c.l.b16 %v1017
    %v5278 = vunpack.c.h.b16 %v1017
    %v5279 = vunpack.c.l.b16 %v1018
    %v5280 = vunpack.c.h.b16 %v1018
    %v5281 = vunpack.c.l.b16 %v1019
    %v5282 = vunpack.c.h.b16 %v1019
    %v5283 = vunpack.c.l.b16 %v1020
    %v5284 = vunpack.c.h.b16 %v1020
    %v5285 = vunpack.c.l.b16 %v1021
    %v5286 = vunpack.c.h.b16 %v1021
    %v5287 = vunpack.c.l.b16 %v1022
    %v5288 = vunpack.c.h.b16 %v1022
    %v5289 = vunpack.c.l.b16 %v1023
    %v5290 = vunpack.c.h.b16 %v1023
    %v5291 = vunpack.c.l.b16 %v1024
    %v5292 = vunpack.c.h.b16 %v1024
    %v5293 = vunpack.c.l.b16 %v1025
    %v5294 = vunpack.c.h.b16 %v1025
    %v5295 = vunpack.c.l.b16 %v1026
    %v5296 = vunpack.c.h.b16 %v1026
    %v5297 = vunpack.c.l.b16 %v1027
    %v5298 = vunpack.c.h.b16 %v1027
    %v5299 = vunpack.c.l.b16 %v1028
    %v5300 = vunpack.c.h.b16 %v1028
    %v5301 = vunpack.c.l.b16 %v1029
    %v5302 = vunpack.c.h.b16 %v1029
    %v5303 = vunpack.c.l.b16 %v1030
    %v5304 = vunpack.c.h.b16 %v1030
    %v5305 = vunpack.c.l.b16 %v1031
    %v5306 = vunpack.c.h.b16 %v1031
    %v5307 = vunpack.c.l.b16 %v1032
    %v5308 = vunpack.c.h.b16 %v1032
    %v5309 = vunpack.c.l.b16 %v1033
    %v5310 = vunpack.c.h.b16 %v1033
    %v5311 = vunpack.c.l.b16 %v1034
    %v5312 = vunpack.c.h.b16 %v1034
    %v5313 = vunpack.c.l.b16 %v1035
    %v5314 = vunpack.c.h.b16 %v1035
    %v5315 = vunpack.c.l.b16 %v1036
    %v5316 = vunpack.c.h.b16 %v1036
    %v5317 = vunpack.c.l.b16 %v1037
    %v5318 = vunpack.c.h.b16 %v1037
    %v5319 = vunpack.c.l.b16 %v1038
    %v5320 = vunpack.c.h.b16 %v1038
    %v5321 = vunpack.c.l.b16 %v1039
    %v5322 = vunpack.c.h.b16 %v1039
    %v5323 = vunpack.c.l.b16 %v1040
    %v5324 = vunpack.c.h.b16 %v1040
    %v5325 = vunpack.c.l.b16 %v1041
    %v5326 = vunpack.c.h.b16 %v1041
    %v5327 = vunpack.c.l.b16 %v1042
    %v5328 = vunpack.c.h.b16 %v1042
    %v5329 = vunpack.c.l.b16 %v1043
    %v5330 = vunpack.c.h.b16 %v1043
    %v5331 = vunpack.c.l.b16 %v1044
    %v5332 = vunpack.c.h.b16 %v1044
    %v5333 = vunpack.c.l.b16 %v1045
    %v5334 = vunpack.c.h.b16 %v1045
    %v5335 = vunpack.c.l.b16 %v1046
    %v5336 = vunpack.c.h.b16 %v1046
    %v5337 = vunpack.c.l.b16 %v1047
    %v5338 = vunpack.c.h.b16 %v1047
    %v5339 = vunpack.c.l.b16 %v1048
    %v5340 = vunpack.c.h.b16 %v1048
    %v5341 = vunpack.c.l.b16 %v1049
    %v5342 = vunpack.c.h.b16 %v1049
    %v5343 = vunpack.c.l.b16 %v1050
    %v5344 = vunpack.c.h.b16 %v1050
    %v5345 = vunpack.c.l.b16 %v1051
    %v5346 = vunpack.c.h.b16 %v1051
    %v5347 = vunpack.c.l.b16 %v1052
    %v5348 = vunpack.c.h.b16 %v1052
    %v5349 = vunpack.c.l.b16 %v1053
    %v5350 = vunpack.c.h.b16 %v1053
    %v5351 = vunpack.c.l.b16 %v1054
    %v5352 = vunpack.c.h.b16 %v1054
    %v5353 = vunpack.c.l.b16 %v1055
    %v5354 = vunpack.c.h.b16 %v1055
    %v5355 = vunpack.c.l.b16 %v1056
    %v5356 = vunpack.c.h.b16 %v1056
    %v5357 = vunpack.c.l.b16 %v1057
    %v5358 = vunpack.c.h.b16 %v1057
    %v5359 = vunpack.c.l.b16 %v1058
    %v5360 = vunpack.c.h.b16 %v1058
    %v5361 = vunpack.c.l.b16 %v1059
    %v5362 = vunpack.c.h.b16 %v1059
    %v5363 = vunpack.c.l.b16 %v1060
    %v5364 = vunpack.c.h.b16 %v1060
    %v5365 = vunpack.c.l.b16 %v1061
    %v5366 = vunpack.c.h.b16 %v1061
    %v5367 = vunpack.c.l.b16 %v1062
    %v5368 = vunpack.c.h.b16 %v1062
    %v5369 = vunpack.c.l.b16 %v1063
    %v5370 = vunpack.c.h.b16 %v1063
    %v5371 = vunpack.c.l.b16 %v1064
    %v5372 = vunpack.c.h.b16 %v1064
    %v5373 = vunpack.c.l.b16 %v1065
    %v5374 = vunpack.c.h.b16 %v1065
    %v5375 = vunpack.c.l.b16 %v1066
    %v5376 = vunpack.c.h.b16 %v1066
    %v5377 = vunpack.c.l.b16 %v1067
    %v5378 = vunpack.c.h.b16 %v1067
    %v5379 = vunpack.c.l.b16 %v1068
    %v5380 = vunpack.c.h.b16 %v1068
    %v5381 = vunpack.c.l.b16 %v1069
    %v5382 = vunpack.c.h.b16 %v1069
    %v5383 = vunpack.c.l.b16 %v1070
    %v5384 = vunpack.c.h.b16 %v1070
    %v5385 = vunpack.c.l.b16 %v1071
    %v5386 = vunpack.c.h.b16 %v1071
    %v5387 = vunpack.c.l.b16 %v1072
    %v5388 = vunpack.c.h.b16 %v1072
    %v5389 = vunpack.c.l.b16 %v1073
    %v5390 = vunpack.c.h.b16 %v1073
    %v5391 = vunpack.c.l.b16 %v1074
    %v5392 = vunpack.c.h.b16 %v1074
    %v5393 = vunpack.c.l.b16 %v1075
    %v5394 = vunpack.c.h.b16 %v1075
    %v5395 = vunpack.c.l.b16 %v1076
    %v5396 = vunpack.c.h.b16 %v1076
    %v5397 = vunpack.c.l.b16 %v1077
    %v5398 = vunpack.c.h.b16 %v1077
    %v5399 = vunpack.c.l.b16 %v1078
    %v5400 = vunpack.c.h.b16 %v1078
    %v5401 = vunpack.c.l.b16 %v1079
    %v5402 = vunpack.c.h.b16 %v1079
    %v5403 = vunpack.c.l.b16 %v1080
    %v5404 = vunpack.c.h.b16 %v1080
    %v5405 = vunpack.c.l.b16 %v1081
    %v5406 = vunpack.c.h.b16 %v1081
    %v5407 = vunpack.c.l.b16 %v1082
    %v5408 = vunpack.c.h.b16 %v1082
    %v5409 = vunpack.c.l.b16 %v1083
    %v5410 = vunpack.c.h.b16 %v1083
    %v5411 = vunpack.c.l.b16 %v1084
    %v5412 = vunpack.c.h.b16 %v1084
    %v5413 = vunpack.c.l.b16 %v1085
    %v5414 = vunpack.c.h.b16 %v1085
    %v5415 = vunpack.c.l.b16 %v1086
    %v5416 = vunpack.c.h.b16 %v1086
    %v5417 = vunpack.c.l.b16 %v1087
    %v5418 = vunpack.c.h.b16 %v1087
    %v5419 = vunpack.c.l.b16 %v1088
    %v5420 = vunpack.c.h.b16 %v1088
    %v5421 = vunpack.c.l.b16 %v1089
    %v5422 = vunpack.c.h.b16 %v1089
    %v5423 = vunpack.c.l.b16 %v1090
    %v5424 = vunpack.c.h.b16 %v1090
    %v5425 = vunpack.c.l.b16 %v1091
    %v5426 = vunpack.c.h.b16 %v1091
    %v5427 = vunpack.c.l.b16 %v1092
    %v5428 = vunpack.c.h.b16 %v1092
    %v5429 = vunpack.c.l.b16 %v1093
    %v5430 = vunpack.c.h.b16 %v1093
    %v5431 = vunpack.c.l.b16 %v1094
    %v5432 = vunpack.c.h.b16 %v1094
    %v5433 = vunpack.c.l.b16 %v1095
    %v5434 = vunpack.c.h.b16 %v1095
    %v5435 = vunpack.c.l.b16 %v1096
    %v5436 = vunpack.c.h.b16 %v1096
    %v5437 = vunpack.c.l.b16 %v1097
    %v5438 = vunpack.c.h.b16 %v1097
    %v5439 = vunpack.c.l.b16 %v1098
    %v5440 = vunpack.c.h.b16 %v1098
    %v5441 = vunpack.c.l.b16 %v1099
    %v5442 = vunpack.c.h.b16 %v1099
    %v5443 = vunpack.c.l.b16 %v1100
    %v5444 = vunpack.c.h.b16 %v1100
    %v5445 = vunpack.c.l.b16 %v1101
    %v5446 = vunpack.c.h.b16 %v1101
    %v5447 = vunpack.c.l.b16 %v1102
    %v5448 = vunpack.c.h.b16 %v1102
    %v5449 = vunpack.c.l.b16 %v1103
    %v5450 = vunpack.c.h.b16 %v1103
    %v5451 = vunpack.c.l.b16 %v1104
    %v5452 = vunpack.c.h.b16 %v1104
    %v5453 = vunpack.c.l.b16 %v1105
    %v5454 = vunpack.c.h.b16 %v1105
    %v5455 = vunpack.c.l.b16 %v1106
    %v5456 = vunpack.c.h.b16 %v1106
    %v5457 = vunpack.c.l.b16 %v1107
    %v5458 = vunpack.c.h.b16 %v1107
    %v5459 = vunpack.c.l.b16 %v1108
    %v5460 = vunpack.c.h.b16 %v1108
    %v5461 = vunpack.c.l.b16 %v1109
    %v5462 = vunpack.c.h.b16 %v1109
    %v5463 = vunpack.c.l.b16 %v1110
    %v5464 = vunpack.c.h.b16 %v1110
    %v5465 = vunpack.c.l.b16 %v1111
    %v5466 = vunpack.c.h.b16 %v1111
    %v5467 = vunpack.c.l.b16 %v1112
    %v5468 = vunpack.c.h.b16 %v1112
    %v5469 = vunpack.c.l.b16 %v1113
    %v5470 = vunpack.c.h.b16 %v1113
    %v5471 = vunpack.c.l.b16 %v1114
    %v5472 = vunpack.c.h.b16 %v1114
    %v5473 = vunpack.c.l.b16 %v1115
    %v5474 = vunpack.c.h.b16 %v1115
    %v5475 = vunpack.c.l.b16 %v1116
    %v5476 = vunpack.c.h.b16 %v1116
    %v5477 = vunpack.c.l.b16 %v1117
    %v5478 = vunpack.c.h.b16 %v1117
    %v5479 = vunpack.c.l.b16 %v1118
    %v5480 = vunpack.c.h.b16 %v1118
    %v5481 = vunpack.c.l.b16 %v1119
    %v5482 = vunpack.c.h.b16 %v1119
    %v5483 = vunpack.c.l.b16 %v1120
    %v5484 = vunpack.c.h.b16 %v1120
    %v5485 = vunpack.c.l.b16 %v1121
    %v5486 = vunpack.c.h.b16 %v1121
    %v5487 = vunpack.c.l.b16 %v1122
    %v5488 = vunpack.c.h.b16 %v1122
    %v5489 = vunpack.c.l.b16 %v1123
    %v5490 = vunpack.c.h.b16 %v1123
    %v5491 = vunpack.c.l.b16 %v1124
    %v5492 = vunpack.c.h.b16 %v1124
    %v5493 = vunpack.c.l.b16 %v1125
    %v5494 = vunpack.c.h.b16 %v1125
    %v5495 = vunpack.c.l.b16 %v1126
    %v5496 = vunpack.c.h.b16 %v1126
    %v5497 = vunpack.c.l.b16 %v1127
    %v5498 = vunpack.c.h.b16 %v1127
    %v5499 = vunpack.c.l.b16 %v1128
    %v5500 = vunpack.c.h.b16 %v1128
    %v5501 = vunpack.c.l.b16 %v1129
    %v5502 = vunpack.c.h.b16 %v1129
    %v5503 = vunpack.c.l.b16 %v1130
    %v5504 = vunpack.c.h.b16 %v1130
    %v5505 = vunpack.c.l.b16 %v1131
    %v5506 = vunpack.c.h.b16 %v1131
    %v5507 = vunpack.c.l.b16 %v1132
    %v5508 = vunpack.c.h.b16 %v1132
    %v5509 = vunpack.c.l.b16 %v1133
    %v5510 = vunpack.c.h.b16 %v1133
    %v5511 = vunpack.c.l.b16 %v1134
    %v5512 = vunpack.c.h.b16 %v1134
    %v5513 = vunpack.c.l.b16 %v1135
    %v5514 = vunpack.c.h.b16 %v1135
    %v5515 = vunpack.c.l.b16 %v1136
    %v5516 = vunpack.c.h.b16 %v1136
    %v5517 = vunpack.c.l.b16 %v1137
    %v5518 = vunpack.c.h.b16 %v1137
    %v5519 = vunpack.c.l.b16 %v1138
    %v5520 = vunpack.c.h.b16 %v1138
    %v5521 = vunpack.c.l.b16 %v1139
    %v5522 = vunpack.c.h.b16 %v1139
    %v5523 = vunpack.c.l.b16 %v1140
    %v5524 = vunpack.c.h.b16 %v1140
    %v5525 = vunpack.c.l.b16 %v1141
    %v5526 = vunpack.c.h.b16 %v1141
    %v5527 = vunpack.c.l.b16 %v1142
    %v5528 = vunpack.c.h.b16 %v1142
    %v5529 = vunpack.c.l.b16 %v1143
    %v5530 = vunpack.c.h.b16 %v1143
    %v5531 = vunpack.c.l.b16 %v1144
    %v5532 = vunpack.c.h.b16 %v1144
    %v5533 = vunpack.c.l.b16 %v1145
    %v5534 = vunpack.c.h.b16 %v1145
    %v5535 = vunpack.c.l.b16 %v1146
    %v5536 = vunpack.c.h.b16 %v1146
    %v5537 = vunpack.c.l.b16 %v1147
    %v5538 = vunpack.c.h.b16 %v1147
    %v5539 = vunpack.c.l.b16 %v1148
    %v5540 = vunpack.c.h.b16 %v1148
    %v5541 = vunpack.c.l.b16 %v1149
    %v5542 = vunpack.c.h.b16 %v1149
    %v5543 = vunpack.c.l.b16 %v1150
    %v5544 = vunpack.c.h.b16 %v1150
    %v5545 = vunpack.c.l.b16 %v1151
    %v5546 = vunpack.c.h.b16 %v1151
    %v5547 = vunpack.c.l.b16 %v1152
    %v5548 = vunpack.c.h.b16 %v1152
    %v5549 = vunpack.c.l.b16 %v1153
    %v5550 = vunpack.c.h.b16 %v1153
    %v5551 = vunpack.c.l.b16 %v1154
    %v5552 = vunpack.c.h.b16 %v1154
    %v5553 = vunpack.c.l.b16 %v1155
    %v5554 = vunpack.c.h.b16 %v1155
    %v5555 = vunpack.c.l.b16 %v1156
    %v5556 = vunpack.c.h.b16 %v1156
    %v5557 = vunpack.c.l.b16 %v1157
    %v5558 = vunpack.c.h.b16 %v1157
    %v5559 = vunpack.c.l.b16 %v1158
    %v5560 = vunpack.c.h.b16 %v1158
    %v5561 = vunpack.c.l.b16 %v1159
    %v5562 = vunpack.c.h.b16 %v1159
    %v5563 = vunpack.c.l.b16 %v1160
    %v5564 = vunpack.c.h.b16 %v1160
    %v5565 = vunpack.c.l.b16 %v1161
    %v5566 = vunpack.c.h.b16 %v1161
    %v5567 = vunpack.c.l.b16 %v1162
    %v5568 = vunpack.c.h.b16 %v1162
    %v5569 = vunpack.c.l.b16 %v1163
    %v5570 = vunpack.c.h.b16 %v1163
    %v5571 = vunpack.c.l.b16 %v1164
    %v5572 = vunpack.c.h.b16 %v1164
    %v5573 = vunpack.c.l.b16 %v1165
    %v5574 = vunpack.c.h.b16 %v1165
    %v5575 = vunpack.c.l.b16 %v1166
    %v5576 = vunpack.c.h.b16 %v1166
    %v5577 = vunpack.c.l.b16 %v1167
    %v5578 = vunpack.c.h.b16 %v1167
    %v5579 = vunpack.c.l.b16 %v1168
    %v5580 = vunpack.c.h.b16 %v1168
    %v5581 = vunpack.c.l.b16 %v1169
    %v5582 = vunpack.c.h.b16 %v1169
    %v5583 = vunpack.c.l.b16 %v1170
    %v5584 = vunpack.c.h.b16 %v1170
    %v5585 = vunpack.c.l.b16 %v1171
    %v5586 = vunpack.c.h.b16 %v1171
    %v5587 = vunpack.c.l.b16 %v1172
    %v5588 = vunpack.c.h.b16 %v1172
    %v5589 = vunpack.c.l.b16 %v1173
    %v5590 = vunpack.c.h.b16 %v1173
    %v5591 = vunpack.c.l.b16 %v1174
    %v5592 = vunpack.c.h.b16 %v1174
    %v5593 = vunpack.c.l.b16 %v1175
    %v5594 = vunpack.c.h.b16 %v1175
    %v5595 = vunpack.c.l.b16 %v1176
    %v5596 = vunpack.c.h.b16 %v1176
    %v5597 = vunpack.c.l.b16 %v1177
    %v5598 = vunpack.c.h.b16 %v1177
    %v5599 = vunpack.c.l.b16 %v1178
    %v5600 = vunpack.c.h.b16 %v1178
    %v5601 = vunpack.c.l.b16 %v1179
    %v5602 = vunpack.c.h.b16 %v1179
    %v5603 = vunpack.c.l.b16 %v1180
    %v5604 = vunpack.c.h.b16 %v1180
    %v5605 = vunpack.c.l.b16 %v1181
    %v5606 = vunpack.c.h.b16 %v1181
    %v5607 = vunpack.c.l.b16 %v1182
    %v5608 = vunpack.c.h.b16 %v1182
    %v5609 = vunpack.c.l.b16 %v1183
    %v5610 = vunpack.c.h.b16 %v1183
    %v5611 = vunpack.c.l.b16 %v1184
    %v5612 = vunpack.c.h.b16 %v1184
    %v5613 = vunpack.c.l.b16 %v1185
    %v5614 = vunpack.c.h.b16 %v1185
    %v5615 = vunpack.c.l.b16 %v1186
    %v5616 = vunpack.c.h.b16 %v1186
    %v5617 = vunpack.c.l.b16 %v1187
    %v5618 = vunpack.c.h.b16 %v1187
    %v5619 = vunpack.c.l.b16 %v1188
    %v5620 = vunpack.c.h.b16 %v1188
    %v5621 = vunpack.c.l.b16 %v1189
    %v5622 = vunpack.c.h.b16 %v1189
    %v5623 = vunpack.c.l.b16 %v1190
    %v5624 = vunpack.c.h.b16 %v1190
    %v5625 = vunpack.c.l.b16 %v1191
    %v5626 = vunpack.c.h.b16 %v1191
    %v5627 = vunpack.c.l.b16 %v1192
    %v5628 = vunpack.c.h.b16 %v1192
    %v5629 = vunpack.c.l.b16 %v1193
    %v5630 = vunpack.c.h.b16 %v1193
    %v5631 = vunpack.c.l.b16 %v1194
    %v5632 = vunpack.c.h.b16 %v1194
    %v5633 = vunpack.c.l.b16 %v1195
    %v5634 = vunpack.c.h.b16 %v1195
    %v5635 = vunpack.c.l.b16 %v1196
    %v5636 = vunpack.c.h.b16 %v1196
    %v5637 = vunpack.c.l.b16 %v1197
    %v5638 = vunpack.c.h.b16 %v1197
    %v5639 = vunpack.c.l.b16 %v1198
    %v5640 = vunpack.c.h.b16 %v1198
    %v5641 = vunpack.c.l.b16 %v1199
    %v5642 = vunpack.c.h.b16 %v1199
    %v5643 = vunpack.c.l.b16 %v1200
    %v5644 = vunpack.c.h.b16 %v1200
    %v5645 = vunpack.c.l.b16 %v1201
    %v5646 = vunpack.c.h.b16 %v1201
    %v5647 = vunpack.c.l.b16 %v1202
    %v5648 = vunpack.c.h.b16 %v1202
    %v5649 = vunpack.c.l.b16 %v1203
    %v5650 = vunpack.c.h.b16 %v1203
    %v5651 = vunpack.c.l.b16 %v1204
    %v5652 = vunpack.c.h.b16 %v1204
    %v5653 = vunpack.c.l.b16 %v1205
    %v5654 = vunpack.c.h.b16 %v1205
    %v5655 = vunpack.c.l.b16 %v1206
    %v5656 = vunpack.c.h.b16 %v1206
    %v5657 = vunpack.c.l.b16 %v1207
    %v5658 = vunpack.c.h.b16 %v1207
    %v5659 = vunpack.c.l.b16 %v1208
    %v5660 = vunpack.c.h.b16 %v1208
    %v5661 = vunpack.c.l.b16 %v1209
    %v5662 = vunpack.c.h.b16 %v1209
    %v5663 = vunpack.c.l.b16 %v1210
    %v5664 = vunpack.c.h.b16 %v1210
    %v5665 = vunpack.c.l.b16 %v1211
    %v5666 = vunpack.c.h.b16 %v1211
    %v5667 = vunpack.c.l.b16 %v1212
    %v5668 = vunpack.c.h.b16 %v1212
    %v5669 = vunpack.c.l.b16 %v1213
    %v5670 = vunpack.c.h.b16 %v1213
    %v5671 = vunpack.c.l.b16 %v1214
    %v5672 = vunpack.c.h.b16 %v1214
    %v5673 = vunpack.c.l.b16 %v1215
    %v5674 = vunpack.c.h.b16 %v1215
    %v5675 = vunpack.c.l.b16 %v1216
    %v5676 = vunpack.c.h.b16 %v1216
    %v5677 = vunpack.c.l.b16 %v1217
    %v5678 = vunpack.c.h.b16 %v1217
    %v5679 = vunpack.c.l.b16 %v1218
    %v5680 = vunpack.c.h.b16 %v1218
    %v5681 = vunpack.c.l.b16 %v1219
    %v5682 = vunpack.c.h.b16 %v1219
    %v5683 = vunpack.c.l.b16 %v1220
    %v5684 = vunpack.c.h.b16 %v1220
    %v5685 = vunpack.c.l.b16 %v1221
    %v5686 = vunpack.c.h.b16 %v1221
    %v5687 = vunpack.c.l.b16 %v1222
    %v5688 = vunpack.c.h.b16 %v1222
    %v5689 = vunpack.c.l.b16 %v1223
    %v5690 = vunpack.c.h.b16 %v1223
    %v5691 = vunpack.c.l.b16 %v1224
    %v5692 = vunpack.c.h.b16 %v1224
    %v5693 = vunpack.c.l.b16 %v1225
    %v5694 = vunpack.c.h.b16 %v1225
    %v5695 = vunpack.c.l.b16 %v1226
    %v5696 = vunpack.c.h.b16 %v1226
    %v5697 = vunpack.c.l.b16 %v1227
    %v5698 = vunpack.c.h.b16 %v1227
    %v5699 = vunpack.c.l.b16 %v1228
    %v5700 = vunpack.c.h.b16 %v1228
    %v5701 = vunpack.c.l.b16 %v1229
    %v5702 = vunpack.c.h.b16 %v1229
    %v5703 = vunpack.c.l.b16 %v1230
    %v5704 = vunpack.c.h.b16 %v1230
    %v5705 = vunpack.c.l.b16 %v1231
    %v5706 = vunpack.c.h.b16 %v1231
    %v5707 = vunpack.c.l.b16 %v1232
    %v5708 = vunpack.c.h.b16 %v1232
    %v5709 = vunpack.c.l.b16 %v1233
    %v5710 = vunpack.c.h.b16 %v1233
    %v5711 = vunpack.c.l.b16 %v1234
    %v5712 = vunpack.c.h.b16 %v1234
    %v5713 = vunpack.c.l.b16 %v1235
    %v5714 = vunpack.c.h.b16 %v1235
    %v5715 = vunpack.c.l.b16 %v1236
    %v5716 = vunpack.c.h.b16 %v1236
    %v5717 = vunpack.c.l.b16 %v1237
    %v5718 = vunpack.c.h.b16 %v1237
    %v5719 = vunpack.c.l.b16 %v1238
    %v5720 = vunpack.c.h.b16 %v1238
    %v5721 = vunpack.c.l.b16 %v1239
    %v5722 = vunpack.c.h.b16 %v1239
    %v5723 = vunpack.c.l.b16 %v1240
    %v5724 = vunpack.c.h.b16 %v1240
    %v5725 = vunpack.c.l.b16 %v1241
    %v5726 = vunpack.c.h.b16 %v1241
    %v5727 = vunpack.c.l.b16 %v1242
    %v5728 = vunpack.c.h.b16 %v1242
    %v5729 = vunpack.c.l.b16 %v1243
    %v5730 = vunpack.c.h.b16 %v1243
    %v5731 = vunpack.c.l.b16 %v1244
    %v5732 = vunpack.c.h.b16 %v1244
    %v5733 = vunpack.c.l.b16 %v1245
    %v5734 = vunpack.c.h.b16 %v1245
    %v5735 = vunpack.c.l.b16 %v1246
    %v5736 = vunpack.c.h.b16 %v1246
    %v5737 = vunpack.c.l.b16 %v1247
    %v5738 = vunpack.c.h.b16 %v1247
    %v5739 = vunpack.c.l.b16 %v1248
    %v5740 = vunpack.c.h.b16 %v1248
    %v5741 = vunpack.c.l.b16 %v1249
    %v5742 = vunpack.c.h.b16 %v1249
    %v5743 = vunpack.c.l.b16 %v1250
    %v5744 = vunpack.c.h.b16 %v1250
    %v5745 = vunpack.c.l.b16 %v1251
    %v5746 = vunpack.c.h.b16 %v1251
    %v5747 = vunpack.c.l.b16 %v1252
    %v5748 = vunpack.c.h.b16 %v1252
    %v5749 = vunpack.c.l.b16 %v1253
    %v5750 = vunpack.c.h.b16 %v1253
    %v5751 = vunpack.c.l.b16 %v1254
    %v5752 = vunpack.c.h.b16 %v1254
    %v5753 = vunpack.c.l.b16 %v1255
    %v5754 = vunpack.c.h.b16 %v1255
    %v5755 = vunpack.c.l.b16 %v1256
    %v5756 = vunpack.c.h.b16 %v1256
    %v5757 = vunpack.c.l.b16 %v1257
    %v5758 = vunpack.c.h.b16 %v1257
    %v5759 = vunpack.c.l.b16 %v1258
    %v5760 = vunpack.c.h.b16 %v1258
    %v5761 = vunpack.c.l.b16 %v1259
    %v5762 = vunpack.c.h.b16 %v1259
    %v5763 = vunpack.c.l.b16 %v1260
    %v5764 = vunpack.c.h.b16 %v1260
    %v5765 = vunpack.c.l.b16 %v1261
    %v5766 = vunpack.c.h.b16 %v1261
    %v5767 = vunpack.c.l.b16 %v1262
    %v5768 = vunpack.c.h.b16 %v1262
    %v5769 = vunpack.c.l.b16 %v1263
    %v5770 = vunpack.c.h.b16 %v1263
    %v5771 = vunpack.c.l.b16 %v1264
    %v5772 = vunpack.c.h.b16 %v1264
    %v5773 = vunpack.c.l.b16 %v1265
    %v5774 = vunpack.c.h.b16 %v1265
    %v5775 = vunpack.c.l.b16 %v1266
    %v5776 = vunpack.c.h.b16 %v1266
    %v5777 = vunpack.c.l.b16 %v1267
    %v5778 = vunpack.c.h.b16 %v1267
    %v5779 = vunpack.c.l.b16 %v1268
    %v5780 = vunpack.c.h.b16 %v1268
    %v5781 = vunpack.c.l.b16 %v1269
    %v5782 = vunpack.c.h.b16 %v1269
    %v5783 = vunpack.c.l.b16 %v1270
    %v5784 = vunpack.c.h.b16 %v1270
    %v5785 = vunpack.c.l.b16 %v1271
    %v5786 = vunpack.c.h.b16 %v1271
    %v5787 = vunpack.c.l.b16 %v1272
    %v5788 = vunpack.c.h.b16 %v1272
    %v5789 = vunpack.c.l.b16 %v1273
    %v5790 = vunpack.c.h.b16 %v1273
    %v5791 = vunpack.c.l.b16 %v1274
    %v5792 = vunpack.c.h.b16 %v1274
    %v5793 = vunpack.c.l.b16 %v1275
    %v5794 = vunpack.c.h.b16 %v1275
    %v5795 = vunpack.c.l.b16 %v1276
    %v5796 = vunpack.c.h.b16 %v1276
    %v5797 = vunpack.c.l.b16 %v1277
    %v5798 = vunpack.c.h.b16 %v1277
    %v5799 = vunpack.c.l.b16 %v1278
    %v5800 = vunpack.c.h.b16 %v1278
    %v5801 = vunpack.c.l.b16 %v1279
    %v5802 = vunpack.c.h.b16 %v1279
    %v5803 = vunpack.c.l.b16 %v1280
    %v5804 = vunpack.c.h.b16 %v1280
    %v5805 = vunpack.c.l.b16 %v1281
    %v5806 = vunpack.c.h.b16 %v1281
    %v5807 = vunpack.c.l.b16 %v1282
    %v5808 = vunpack.c.h.b16 %v1282
    %v5809 = vunpack.c.l.b16 %v1283
    %v5810 = vunpack.c.h.b16 %v1283
    %v5811 = vunpack.c.l.b16 %v1284
    %v5812 = vunpack.c.h.b16 %v1284
    %v5813 = vunpack.c.l.b16 %v1285
    %v5814 = vunpack.c.h.b16 %v1285
    %v5815 = vunpack.c.l.b16 %v1286
    %v5816 = vunpack.c.h.b16 %v1286
    %v5817 = vunpack.c.l.b16 %v1287
    %v5818 = vunpack.c.h.b16 %v1287
    %v5819 = vunpack.c.l.b16 %v1288
    %v5820 = vunpack.c.h.b16 %v1288
    %v5821 = vunpack.c.l.b16 %v1289
    %v5822 = vunpack.c.h.b16 %v1289
    %v5823 = vunpack.c.l.b16 %v1290
    %v5824 = vunpack.c.h.b16 %v1290
    %v5825 = vunpack.c.l.b16 %v1291
    %v5826 = vunpack.c.h.b16 %v1291
    %v5827 = vunpack.c.l.b16 %v1292
    %v5828 = vunpack.c.h.b16 %v1292
    %v5829 = vunpack.c.l.b16 %v1293
    %v5830 = vunpack.c.h.b16 %v1293
    %v5831 = vunpack.c.l.b16 %v1294
    %v5832 = vunpack.c.h.b16 %v1294
    %v5833 = vunpack.c.l.b16 %v1295
    %v5834 = vunpack.c.h.b16 %v1295
    %v5835 = vunpack.c.l.b16 %v1296
    %v5836 = vunpack.c.h.b16 %v1296
    %v5837 = vunpack.c.l.b16 %v1297
    %v5838 = vunpack.c.h.b16 %v1297
    %v5839 = vunpack.c.l.b16 %v1298
    %v5840 = vunpack.c.h.b16 %v1298
    %v5841 = vunpack.c.l.b16 %v1299
    %v5842 = vunpack.c.h.b16 %v1299
    %v5843 = vunpack.c.l.b16 %v1300
    %v5844 = vunpack.c.h.b16 %v1300
    %v5845 = vunpack.c.l.b16 %v1301
    %v5846 = vunpack.c.h.b16 %v1301
    %v5847 = vunpack.c.l.b16 %v1302
    %v5848 = vunpack.c.h.b16 %v1302
    %v5849 = vunpack.c.l.b16 %v1303
    %v5850 = vunpack.c.h.b16 %v1303
    %v5851 = vunpack.c.l.b16 %v1304
    %v5852 = vunpack.c.h.b16 %v1304
    %v5853 = vunpack.c.l.b16 %v1305
    %v5854 = vunpack.c.h.b16 %v1305
    %v5855 = vunpack.c.l.b16 %v1306
    %v5856 = vunpack.c.h.b16 %v1306
    %v5857 = vunpack.c.l.b16 %v1307
    %v5858 = vunpack.c.h.b16 %v1307
    %v5859 = vunpack.c.l.b16 %v1308
    %v5860 = vunpack.c.h.b16 %v1308
    %v5861 = vunpack.c.l.b16 %v1309
    %v5862 = vunpack.c.h.b16 %v1309
    %v5863 = vunpack.c.l.b16 %v1310
    %v5864 = vunpack.c.h.b16 %v1310
    %v5865 = vunpack.c.l.b16 %v1311
    %v5866 = vunpack.c.h.b16 %v1311
    %v5867 = vunpack.c.l.b16 %v1312
    %v5868 = vunpack.c.h.b16 %v1312
    %v5869 = vunpack.c.l.b16 %v1313
    %v5870 = vunpack.c.h.b16 %v1313
    %v5871 = vunpack.c.l.b16 %v1314
    %v5872 = vunpack.c.h.b16 %v1314
    %v5873 = vunpack.c.l.b16 %v1315
    %v5874 = vunpack.c.h.b16 %v1315
    %v5875 = vunpack.c.l.b16 %v1316
    %v5876 = vunpack.c.h.b16 %v1316
    %v5877 = vunpack.c.l.b16 %v1317
    %v5878 = vunpack.c.h.b16 %v1317
    %v5879 = vunpack.c.l.b16 %v1318
    %v5880 = vunpack.c.h.b16 %v1318
    %v5881 = vunpack.c.l.b16 %v1319
    %v5882 = vunpack.c.h.b16 %v1319
    %v5883 = vunpack.c.l.b16 %v1320
    %v5884 = vunpack.c.h.b16 %v1320
    %v5885 = vunpack.c.l.b16 %v1321
    %v5886 = vunpack.c.h.b16 %v1321
    %v5887 = vunpack.c.l.b16 %v1322
    %v5888 = vunpack.c.h.b16 %v1322
    %v5889 = vunpack.c.l.b16 %v1323
    %v5890 = vunpack.c.h.b16 %v1323
    %v5891 = vunpack.c.l.b16 %v1324
    %v5892 = vunpack.c.h.b16 %v1324
    %v5893 = vunpack.c.l.b16 %v1325
    %v5894 = vunpack.c.h.b16 %v1325
    %v5895 = vunpack.c.l.b16 %v1326
    %v5896 = vunpack.c.h.b16 %v1326
    %v5897 = vunpack.c.l.b16 %v1327
    %v5898 = vunpack.c.h.b16 %v1327
    %v5899 = vunpack.c.l.b16 %v1328
    %v5900 = vunpack.c.h.b16 %v1328
    %v5901 = vunpack.c.l.b16 %v1329
    %v5902 = vunpack.c.h.b16 %v1329
    %v5903 = vunpack.c.l.b16 %v1330
    %v5904 = vunpack.c.h.b16 %v1330
    %v5905 = vunpack.c.l.b16 %v1331
    %v5906 = vunpack.c.h.b16 %v1331
    %v5907 = vunpack.c.l.b16 %v1332
    %v5908 = vunpack.c.h.b16 %v1332
    %v5909 = vunpack.c.l.b16 %v1333
    %v5910 = vunpack.c.h.b16 %v1333
    %v5911 = vunpack.c.l.b16 %v1334
    %v5912 = vunpack.c.h.b16 %v1334
    %v5913 = vunpack.c.l.b16 %v1335
    %v5914 = vunpack.c.h.b16 %v1335
    %v5915 = vunpack.c.l.b16 %v1336
    %v5916 = vunpack.c.h.b16 %v1336
    %v5917 = vunpack.c.l.b16 %v1337
    %v5918 = vunpack.c.h.b16 %v1337
    %v5919 = vunpack.c.l.b16 %v1338
    %v5920 = vunpack.c.h.b16 %v1338
    %v5921 = vunpack.c.l.b16 %v1339
    %v5922 = vunpack.c.h.b16 %v1339
    %v5923 = vunpack.c.l.b16 %v1340
    %v5924 = vunpack.c.h.b16 %v1340
    %v5925 = vunpack.c.l.b16 %v1341
    %v5926 = vunpack.c.h.b16 %v1341
    %v5927 = vunpack.c.l.b16 %v1342
    %v5928 = vunpack.c.h.b16 %v1342
    %v5929 = vunpack.c.l.b16 %v1343
    %v5930 = vunpack.c.h.b16 %v1343
    %v5931 = vunpack.c.l.b16 %v1344
    %v5932 = vunpack.c.h.b16 %v1344
    %v5933 = vunpack.c.l.b16 %v1345
    %v5934 = vunpack.c.h.b16 %v1345
    %v5935 = vunpack.c.l.b16 %v1346
    %v5936 = vunpack.c.h.b16 %v1346
    %v5937 = vunpack.c.l.b16 %v1347
    %v5938 = vunpack.c.h.b16 %v1347
    %v5939 = vunpack.c.l.b16 %v1348
    %v5940 = vunpack.c.h.b16 %v1348
    %v5941 = vunpack.c.l.b16 %v1349
    %v5942 = vunpack.c.h.b16 %v1349
    %v5943 = vunpack.c.l.b16 %v1350
    %v5944 = vunpack.c.h.b16 %v1350
    %v5945 = vunpack.c.l.b16 %v1351
    %v5946 = vunpack.c.h.b16 %v1351
    %v5947 = vunpack.c.l.b16 %v1352
    %v5948 = vunpack.c.h.b16 %v1352
    %v5949 = vunpack.c.l.b16 %v1353
    %v5950 = vunpack.c.h.b16 %v1353
    %v5951 = vunpack.c.l.b16 %v1354
    %v5952 = vunpack.c.h.b16 %v1354
    %v5953 = vunpack.c.l.b16 %v1355
    %v5954 = vunpack.c.h.b16 %v1355
    %v5955 = vunpack.c.l.b16 %v1356
    %v5956 = vunpack.c.h.b16 %v1356
    %v5957 = vunpack.c.l.b16 %v1357
    %v5958 = vunpack.c.h.b16 %v1357
    %v5959 = vunpack.c.l.b16 %v1358
    %v5960 = vunpack.c.h.b16 %v1358
    %v5961 = vunpack.c.l.b16 %v1359
    %v5962 = vunpack.c.h.b16 %v1359
    %v5963 = vunpack.c.l.b16 %v1360
    %v5964 = vunpack.c.h.b16 %v1360
    %v5965 = vunpack.c.l.b16 %v1361
    %v5966 = vunpack.c.h.b16 %v1361
    %v5967 = vunpack.c.l.b16 %v1362
    %v5968 = vunpack.c.h.b16 %v1362
    %v5969 = vunpack.c.l.b16 %v1363
    %v5970 = vunpack.c.h.b16 %v1363
    %v5971 = vunpack.c.l.b16 %v1364
    %v5972 = vunpack.c.h.b16 %v1364
    %v5973 = vunpack.c.l.b16 %v1365
    %v5974 = vunpack.c.h.b16 %v1365
    %v5975 = vunpack.c.l.b16 %v1366
    %v5976 = vunpack.c.h.b16 %v1366
    %v5977 = vunpack.c.l.b16 %v1367
    %v5978 = vunpack.c.h.b16 %v1367
    %v5979 = vunpack.c.l.b16 %v1368
    %v5980 = vunpack.c.h.b16 %v1368
    %v5981 = vunpack.c.l.b16 %v1369
    %v5982 = vunpack.c.h.b16 %v1369
    %v5983 = vunpack.c.l.b16 %v1370
    %v5984 = vunpack.c.h.b16 %v1370
    %v5985 = vunpack.c.l.b16 %v1371
    %v5986 = vunpack.c.h.b16 %v1371
    %v5987 = vunpack.c.l.b16 %v1372
    %v5988 = vunpack.c.h.b16 %v1372
    %v5989 = vunpack.c.l.b16 %v1373
    %v5990 = vunpack.c.h.b16 %v1373
    %v5991 = vunpack.c.l.b16 %v1374
    %v5992 = vunpack.c.h.b16 %v1374
    %v5993 = vunpack.c.l.b16 %v1375
    %v5994 = vunpack.c.h.b16 %v1375
    %v5995 = vunpack.c.l.b16 %v1376
    %v5996 = vunpack.c.h.b16 %v1376
    %v5997 = vunpack.c.l.b16 %v1377
    %v5998 = vunpack.c.h.b16 %v1377
    %v5999 = vunpack.c.l.b16 %v1378
    %v6000 = vunpack.c.h.b16 %v1378
    %v6001 = vunpack.c.l.b16 %v1379
    %v6002 = vunpack.c.h.b16 %v1379
    %v6003 = vunpack.c.l.b16 %v1380
    %v6004 = vunpack.c.h.b16 %v1380
    %v6005 = vunpack.c.l.b16 %v1381
    %v6006 = vunpack.c.h.b16 %v1381
    %v6007 = vunpack.c.l.b16 %v1382
    %v6008 = vunpack.c.h.b16 %v1382
    %v6009 = vunpack.c.l.b16 %v1383
    %v6010 = vunpack.c.h.b16 %v1383
    %v6011 = vunpack.c.l.b16 %v1384
    %v6012 = vunpack.c.h.b16 %v1384
    %v6013 = vunpack.c.l.b16 %v1385
    %v6014 = vunpack.c.h.b16 %v1385
    %v6015 = vunpack.c.l.b16 %v1386
    %v6016 = vunpack.c.h.b16 %v1386
    %v6017 = vunpack.c.l.b16 %v1387
    %v6018 = vunpack.c.h.b16 %v1387
    %v6019 = vunpack.c.l.b16 %v1388
    %v6020 = vunpack.c.h.b16 %v1388
    %v6021 = vunpack.c.l.b16 %v1389
    %v6022 = vunpack.c.h.b16 %v1389
    %v6023 = vunpack.c.l.b16 %v1390
    %v6024 = vunpack.c.h.b16 %v1390
    %v6025 = vunpack.c.l.b16 %v1391
    %v6026 = vunpack.c.h.b16 %v1391
    %v6027 = vunpack.c.l.b16 %v1392
    %v6028 = vunpack.c.h.b16 %v1392
    %v6029 = vunpack.c.l.b16 %v1393
    %v6030 = vunpack.c.h.b16 %v1393
    %v6031 = vunpack.c.l.b16 %v1394
    %v6032 = vunpack.c.h.b16 %v1394
    %v6033 = vunpack.c.l.b16 %v1395
    %v6034 = vunpack.c.h.b16 %v1395
    %v6035 = vunpack.c.l.b16 %v1396
    %v6036 = vunpack.c.h.b16 %v1396
    %v6037 = vunpack.c.l.b16 %v1397
    %v6038 = vunpack.c.h.b16 %v1397
    %v6039 = vunpack.c.l.b16 %v1398
    %v6040 = vunpack.c.h.b16 %v1398
    %v6041 = vunpack.c.l.b16 %v1399
    %v6042 = vunpack.c.h.b16 %v1399
    %v6043 = vunpack.c.l.b16 %v1400
    %v6044 = vunpack.c.h.b16 %v1400
    %v6045 = vunpack.c.l.b16 %v1401
    %v6046 = vunpack.c.h.b16 %v1401
    %v6047 = vunpack.c.l.b16 %v1402
    %v6048 = vunpack.c.h.b16 %v1402
    %v6049 = vunpack.c.l.b16 %v1403
    %v6050 = vunpack.c.h.b16 %v1403
    %v6051 = vunpack.c.l.b16 %v1404
    %v6052 = vunpack.c.h.b16 %v1404
    %v6053 = vunpack.c.l.b16 %v1405
    %v6054 = vunpack.c.h.b16 %v1405
    %v6055 = vunpack.c.l.b16 %v1406
    %v6056 = vunpack.c.h.b16 %v1406
    %v6057 = vunpack.c.l.b16 %v1407
    %v6058 = vunpack.c.h.b16 %v1407
    %v6059 = vunpack.c.l.b16 %v1408
    %v6060 = vunpack.c.h.b16 %v1408
    %v6061 = vunpack.c.l.b16 %v1409
    %v6062 = vunpack.c.h.b16 %v1409
    %v6063 = vunpack.c.l.b16 %v1410
    %v6064 = vunpack.c.h.b16 %v1410
    %v6065 = vunpack.c.l.b16 %v1411
    %v6066 = vunpack.c.h.b16 %v1411
    %v6067 = vunpack.c.l.b16 %v1412
    %v6068 = vunpack.c.h.b16 %v1412
    %v6069 = vunpack.c.l.b16 %v1413
    %v6070 = vunpack.c.h.b16 %v1413
    %v6071 = vunpack.c.l.b16 %v1414
    %v6072 = vunpack.c.h.b16 %v1414
    %v6073 = vunpack.c.l.b16 %v1415
    %v6074 = vunpack.c.h.b16 %v1415
    %v6075 = vunpack.c.l.b16 %v1416
    %v6076 = vunpack.c.h.b16 %v1416
    %v6077 = vunpack.c.l.b16 %v1417
    %v6078 = vunpack.c.h.b16 %v1417
    %v6079 = vunpack.c.l.b16 %v1418
    %v6080 = vunpack.c.h.b16 %v1418
    %v6081 = vunpack.c.l.b16 %v1419
    %v6082 = vunpack.c.h.b16 %v1419
    %v6083 = vunpack.c.l.b16 %v1420
    %v6084 = vunpack.c.h.b16 %v1420
    %v6085 = vunpack.c.l.b16 %v1421
    %v6086 = vunpack.c.h.b16 %v1421
    %v6087 = vunpack.c.l.b16 %v1422
    %v6088 = vunpack.c.h.b16 %v1422
    %v6089 = vunpack.c.l.b16 %v1423
    %v6090 = vunpack.c.h.b16 %v1423
    %v6091 = vunpack.c.l.b16 %v1424
    %v6092 = vunpack.c.h.b16 %v1424
    %v6093 = vunpack.c.l.b16 %v1425
    %v6094 = vunpack.c.h.b16 %v1425
    %v6095 = vunpack.c.l.b16 %v1426
    %v6096 = vunpack.c.h.b16 %v1426
    %v6097 = vunpack.c.l.b16 %v1427
    %v6098 = vunpack.c.h.b16 %v1427
    %v6099 = vunpack.c.l.b16 %v1428
    %v6100 = vunpack.c.h.b16 %v1428
    %v6101 = vunpack.c.l.b16 %v1429
    %v6102 = vunpack.c.h.b16 %v1429
    %v6103 = vunpack.c.l.b16 %v1430
    %v6104 = vunpack.c.h.b16 %v1430
    %v6105 = vunpack.c.l.b16 %v1431
    %v6106 = vunpack.c.h.b16 %v1431
    %v6107 = vunpack.c.l.b16 %v1432
    %v6108 = vunpack.c.h.b16 %v1432
    %v6109 = vunpack.c.l.b16 %v1433
    %v6110 = vunpack.c.h.b16 %v1433
    %v6111 = vunpack.c.l.b16 %v1434
    %v6112 = vunpack.c.h.b16 %v1434
    %v6113 = vunpack.c.l.b16 %v1435
    %v6114 = vunpack.c.h.b16 %v1435
    %v6115 = vunpack.c.l.b16 %v1436
    %v6116 = vunpack.c.h.b16 %v1436
    %v6117 = vunpack.c.l.b16 %v1437
    %v6118 = vunpack.c.h.b16 %v1437
    %v6119 = vunpack.c.l.b16 %v1438
    %v6120 = vunpack.c.h.b16 %v1438
    %v6121 = vunpack.c.l.b16 %v1439
    %v6122 = vunpack.c.h.b16 %v1439
    %v6123 = vunpack.c.l.b16 %v1440
    %v6124 = vunpack.c.h.b16 %v1440
    %v6125 = vunpack.c.l.b16 %v1441
    %v6126 = vunpack.c.h.b16 %v1441
    %v6127 = vunpack.c.l.b16 %v1442
    %v6128 = vunpack.c.h.b16 %v1442
    %v6129 = vunpack.c.l.b16 %v1443
    %v6130 = vunpack.c.h.b16 %v1443
    %v6131 = vunpack.c.l.b16 %v1444
    %v6132 = vunpack.c.h.b16 %v1444
    %v6133 = vunpack.c.l.b16 %v1445
    %v6134 = vunpack.c.h.b16 %v1445
    %v6135 = vunpack.c.l.b16 %v1446
    %v6136 = vunpack.c.h.b16 %v1446
    %v6137 = vunpack.c.l.b16 %v1447
    %v6138 = vunpack.c.h.b16 %v1447
    %v6139 = vunpack.c.l.b16 %v1448
    %v6140 = vunpack.c.h.b16 %v1448
    %v6141 = vunpack.c.l.b16 %v1449
    %v6142 = vunpack.c.h.b16 %v1449
    %v6143 = vunpack.c.l.b16 %v1450
    %v6144 = vunpack.c.h.b16 %v1450
    %v6145 = vunpack.c.l.b16 %v1451
    %v6146 = vunpack.c.h.b16 %v1451
    %v6147 = vunpack.c.l.b16 %v1452
    %v6148 = vunpack.c.h.b16 %v1452
    %v6149 = vunpack.c.l.b16 %v1453
    %v6150 = vunpack.c.h.b16 %v1453
    %v6151 = vunpack.c.l.b16 %v1454
    %v6152 = vunpack.c.h.b16 %v1454
    %v6153 = vunpack.c.l.b16 %v1455
    %v6154 = vunpack.c.h.b16 %v1455
    %v6155 = vunpack.c.l.b16 %v1456
    %v6156 = vunpack.c.h.b16 %v1456
    %v6157 = vunpack.c.l.b16 %v1457
    %v6158 = vunpack.c.h.b16 %v1457
    %v6159 = vunpack.c.l.b16 %v1458
    %v6160 = vunpack.c.h.b16 %v1458
    %v6161 = vunpack.c.l.b16 %v1459
    %v6162 = vunpack.c.h.b16 %v1459
    %v6163 = vunpack.c.l.b16 %v1460
    %v6164 = vunpack.c.h.b16 %v1460
    %v6165 = vunpack.c.l.b16 %v1461
    %v6166 = vunpack.c.h.b16 %v1461
    %v6167 = vunpack.c.l.b16 %v1462
    %v6168 = vunpack.c.h.b16 %v1462
    %v6169 = vunpack.c.l.b16 %v1463
    %v6170 = vunpack.c.h.b16 %v1463
    %v6171 = vunpack.c.l.b16 %v1464
    %v6172 = vunpack.c.h.b16 %v1464
    %v6173 = vunpack.c.l.b16 %v1465
    %v6174 = vunpack.c.h.b16 %v1465
    %v6175 = vunpack.c.l.b16 %v1466
    %v6176 = vunpack.c.h.b16 %v1466
    %v6177 = vunpack.c.l.b16 %v1467
    %v6178 = vunpack.c.h.b16 %v1467
    %v6179 = vunpack.c.l.b16 %v1468
    %v6180 = vunpack.c.h.b16 %v1468
    %v6181 = vunpack.c.l.b16 %v1469
    %v6182 = vunpack.c.h.b16 %v1469
    %v6183 = vunpack.c.l.b16 %v1470
    %v6184 = vunpack.c.h.b16 %v1470
    %v6185 = vunpack.c.l.b16 %v1471
    %v6186 = vunpack.c.h.b16 %v1471
    %v6187 = vunpack.c.l.b16 %v1472
    %v6188 = vunpack.c.h.b16 %v1472
    %v6189 = vunpack.c.l.b16 %v1473
    %v6190 = vunpack.c.h.b16 %v1473
    %v6191 = vunpack.c.l.b16 %v1474
    %v6192 = vunpack.c.h.b16 %v1474
    %v6193 = vunpack.c.l.b16 %v1475
    %v6194 = vunpack.c.h.b16 %v1475
    %v6195 = vunpack.c.l.b16 %v1476
    %v6196 = vunpack.c.h.b16 %v1476
    %v6197 = vunpack.c.l.b16 %v1477
    %v6198 = vunpack.c.h.b16 %v1477
    %v6199 = vunpack.c.l.b16 %v1478
    %v6200 = vunpack.c.h.b16 %v1478
    %v6201 = vunpack.c.l.b16 %v1479
    %v6202 = vunpack.c.h.b16 %v1479
    %v6203 = vunpack.c.l.b16 %v1480
    %v6204 = vunpack.c.h.b16 %v1480
    %v6205 = vunpack.c.l.b16 %v1481
    %v6206 = vunpack.c.h.b16 %v1481
    %v6207 = vunpack.c.l.b16 %v1482
    %v6208 = vunpack.c.h.b16 %v1482
    %v6209 = vunpack.c.l.b16 %v1483
    %v6210 = vunpack.c.h.b16 %v1483
    %v6211 = vunpack.c.l.b16 %v1484
    %v6212 = vunpack.c.h.b16 %v1484
    %v6213 = vunpack.c.l.b16 %v1485
    %v6214 = vunpack.c.h.b16 %v1485
    %v6215 = vunpack.c.l.b16 %v1486
    %v6216 = vunpack.c.h.b16 %v1486
    %v6217 = vunpack.c.l.b16 %v1487
    %v6218 = vunpack.c.h.b16 %v1487
    %v6219 = vunpack.c.l.b16 %v1488
    %v6220 = vunpack.c.h.b16 %v1488
    %v6221 = vunpack.c.l.b16 %v1489
    %v6222 = vunpack.c.h.b16 %v1489
    %v6223 = vunpack.c.l.b16 %v1490
    %v6224 = vunpack.c.h.b16 %v1490
    %v6225 = vunpack.c.l.b16 %v1491
    %v6226 = vunpack.c.h.b16 %v1491
    %v6227 = vunpack.c.l.b16 %v1492
    %v6228 = vunpack.c.h.b16 %v1492
    %v6229 = vunpack.c.l.b16 %v1493
    %v6230 = vunpack.c.h.b16 %v1493
    %v6231 = vunpack.c.l.b16 %v1494
    %v6232 = vunpack.c.h.b16 %v1494
    %v6233 = vunpack.c.l.b16 %v1495
    %v6234 = vunpack.c.h.b16 %v1495
    %v6235 = vunpack.c.l.b16 %v1496
    %v6236 = vunpack.c.h.b16 %v1496
    %v6237 = vunpack.c.l.b16 %v1497
    %v6238 = vunpack.c.h.b16 %v1497
    %v6239 = vunpack.c.l.b16 %v1498
    %v6240 = vunpack.c.h.b16 %v1498
    %v6241 = vunpack.c.l.b16 %v1499
    %v6242 = vunpack.c.h.b16 %v1499
    %v6243 = vunpack.c.l.b16 %v1500
    %v6244 = vunpack.c.h.b16 %v1500
    %v6245 = vunpack.c.l.b16 %v1501
    %v6246 = vunpack.c.h.b16 %v1501
    %v6247 = vunpack.c.l.b16 %v1502
    %v6248 = vunpack.c.h.b16 %v1502
    %v6249 = vunpack.c.l.b16 %v1503
    %v6250 = vunpack.c.h.b16 %v1503
    %v6251 = vunpack.c.l.b16 %v1504
    %v6252 = vunpack.c.h.b16 %v1504
    %v6253 = vunpack.c.l.b16 %v1505
    %v6254 = vunpack.c.h.b16 %v1505
    %v6255 = vunpack.c.l.b16 %v1506
    %v6256 = vunpack.c.h.b16 %v1506
    %v6257 = vunpack.c.l.b16 %v1507
    %v6258 = vunpack.c.h.b16 %v1507
    %v6259 = vunpack.c.l.b16 %v1508
    %v6260 = vunpack.c.h.b16 %v1508
    %v6261 = vunpack.c.l.b16 %v1509
    %v6262 = vunpack.c.h.b16 %v1509
    %v6263 = vunpack.c.l.b16 %v1510
    %v6264 = vunpack.c.h.b16 %v1510
    %v6265 = vunpack.c.l.b16 %v1511
    %v6266 = vunpack.c.h.b16 %v1511
    %v6267 = vunpack.c.l.b16 %v1512
    %v6268 = vunpack.c.h.b16 %v1512
    %v6269 = vunpack.c.l.b16 %v1513
    %v6270 = vunpack.c.h.b16 %v1513
    %v6271 = vunpack.c.l.b16 %v1514
    %v6272 = vunpack.c.h.b16 %v1514
    %v6273 = vunpack.c.l.b16 %v1515
    %v6274 = vunpack.c.h.b16 %v1515
    %v6275 = vunpack.c.l.b16 %v1516
    %v6276 = vunpack.c.h.b16 %v1516
    %v6277 = vunpack.c.l.b16 %v1517
    %v6278 = vunpack.c.h.b16 %v1517
    %v6279 = vunpack.c.l.b16 %v1518
    %v6280 = vunpack.c.h.b16 %v1518
    %v6281 = vunpack.c.l.b16 %v1519
    %v6282 = vunpack.c.h.b16 %v1519
    %v6283 = vunpack.c.l.b16 %v1520
    %v6284 = vunpack.c.h.b16 %v1520
    %v6285 = vunpack.c.l.b16 %v1521
    %v6286 = vunpack.c.h.b16 %v1521
    %v6287 = vunpack.c.l.b16 %v1522
    %v6288 = vunpack.c.h.b16 %v1522
    %v6289 = vunpack.c.l.b16 %v1523
    %v6290 = vunpack.c.h.b16 %v1523
    %v6291 = vunpack.c.l.b16 %v1524
    %v6292 = vunpack.c.h.b16 %v1524
    %v6293 = vunpack.c.l.b16 %v1525
    %v6294 = vunpack.c.h.b16 %v1525
    %v6295 = vunpack.c.l.b16 %v1526
    %v6296 = vunpack.c.h.b16 %v1526
    %v6297 = vunpack.c.l.b16 %v1527
    %v6298 = vunpack.c.h.b16 %v1527
    %v6299 = vunpack.c.l.b16 %v1528
    %v6300 = vunpack.c.h.b16 %v1528
    %v6301 = vunpack.c.l.b16 %v1529
    %v6302 = vunpack.c.h.b16 %v1529
    %v6303 = vunpack.c.l.b16 %v1530
    %v6304 = vunpack.c.h.b16 %v1530
    %v6305 = vunpack.c.l.b16 %v1531
    %v6306 = vunpack.c.h.b16 %v1531
    %v6307 = vunpack.c.l.b16 %v1532
    %v6308 = vunpack.c.h.b16 %v1532
    %v6309 = vunpack.c.l.b16 %v1533
    %v6310 = vunpack.c.h.b16 %v1533
    %v6311 = vunpack.c.l.b16 %v1534
    %v6312 = vunpack.c.h.b16 %v1534
    %v6313 = vunpack.c.l.b16 %v1535
    %v6314 = vunpack.c.h.b16 %v1535
    %v6315 = vunpack.c.l.b16 %v1536
    %v6316 = vunpack.c.h.b16 %v1536
    %v6317 = vunpack.c.l.b16 %v1537
    %v6318 = vunpack.c.h.b16 %v1537
    %v6319 = vunpack.c.l.b16 %v1538
    %v6320 = vunpack.c.h.b16 %v1538
    %v6321 = vunpack.c.l.b16 %v1539
    %v6322 = vunpack.c.h.b16 %v1539
    %v6323 = vunpack.c.l.b16 %v1540
    %v6324 = vunpack.c.h.b16 %v1540
    %v6325 = vunpack.c.l.b16 %v1541
    %v6326 = vunpack.c.h.b16 %v1541
    %v6327 = vunpack.c.l.b16 %v1542
    %v6328 = vunpack.c.h.b16 %v1542
    %v6329 = vunpack.c.l.b16 %v1543
    %v6330 = vunpack.c.h.b16 %v1543
    %v6331 = vunpack.c.l.b16 %v1544
    %v6332 = vunpack.c.h.b16 %v1544
    %v6333 = vunpack.c.l.b16 %v1545
    %v6334 = vunpack.c.h.b16 %v1545
    %v6335 = vunpack.c.l.b16 %v1546
    %v6336 = vunpack.c.h.b16 %v1546
    %v6337 = vunpack.c.l.b16 %v1547
    %v6338 = vunpack.c.h.b16 %v1547
    %v6339 = vunpack.c.l.b16 %v1548
    %v6340 = vunpack.c.h.b16 %v1548
    %v6341 = vunpack.c.l.b16 %v1549
    %v6342 = vunpack.c.h.b16 %v1549
    %v6343 = vunpack.c.l.b16 %v1550
    %v6344 = vunpack.c.h.b16 %v1550
    %v6345 = vunpack.c.l.b16 %v1551
    %v6346 = vunpack.c.h.b16 %v1551
    %v6347 = vunpack.c.l.b16 %v1552
    %v6348 = vunpack.c.h.b16 %v1552
    %v6349 = vunpack.c.l.b16 %v1553
    %v6350 = vunpack.c.h.b16 %v1553
    %v6351 = vunpack.c.l.b16 %v1554
    %v6352 = vunpack.c.h.b16 %v1554
    %v6353 = vunpack.c.l.b16 %v1555
    %v6354 = vunpack.c.h.b16 %v1555
    %v6355 = vunpack.c.l.b16 %v1556
    %v6356 = vunpack.c.h.b16 %v1556
    %v6357 = vunpack.c.l.b16 %v1557
    %v6358 = vunpack.c.h.b16 %v1557
    %v6359 = vunpack.c.l.b16 %v1558
    %v6360 = vunpack.c.h.b16 %v1558
    %v6361 = vunpack.c.l.b16 %v1559
    %v6362 = vunpack.c.h.b16 %v1559
    %v6363 = vunpack.c.l.b16 %v1560
    %v6364 = vunpack.c.h.b16 %v1560
    %v6365 = vunpack.c.l.b16 %v1561
    %v6366 = vunpack.c.h.b16 %v1561
    %v6367 = vunpack.c.l.b16 %v1562
    %v6368 = vunpack.c.h.b16 %v1562
    %v6369 = vunpack.c.l.b16 %v1563
    %v6370 = vunpack.c.h.b16 %v1563
    %v6371 = vunpack.c.l.b16 %v1564
    %v6372 = vunpack.c.h.b16 %v1564
    %v6373 = vunpack.c.l.b16 %v1565
    %v6374 = vunpack.c.h.b16 %v1565
    %v6375 = vunpack.c.l.b16 %v1566
    %v6376 = vunpack.c.h.b16 %v1566
    %v6377 = vunpack.c.l.b16 %v1567
    %v6378 = vunpack.c.h.b16 %v1567
    %v6379 = vunpack.c.l.b16 %v1568
    %v6380 = vunpack.c.h.b16 %v1568
    %v6381 = vunpack.c.l.b16 %v1569
    %v6382 = vunpack.c.h.b16 %v1569
    %v6383 = vunpack.c.l.b16 %v1570
    %v6384 = vunpack.c.h.b16 %v1570
    %v6385 = vunpack.c.l.b16 %v1571
    %v6386 = vunpack.c.h.b16 %v1571
    %v6387 = vunpack.c.l.b16 %v1572
    %v6388 = vunpack.c.h.b16 %v1572
    %v6389 = vunpack.c.l.b16 %v1573
    %v6390 = vunpack.c.h.b16 %v1573
    %v6391 = vunpack.c.l.b16 %v1574
    %v6392 = vunpack.c.h.b16 %v1574
    %v6393 = vunpack.c.l.b16 %v1575
    %v6394 = vunpack.c.h.b16 %v1575
    %v6395 = vunpack.c.l.b16 %v1576
    %v6396 = vunpack.c.h.b16 %v1576
    %v6397 = vunpack.c.l.b16 %v1577
    %v6398 = vunpack.c.h.b16 %v1577
    %v6399 = vunpack.c.l.b16 %v1578
    %v6400 = vunpack.c.h.b16 %v1578
    %v6401 = vunpack.c.l.b16 %v1579
    %v6402 = vunpack.c.h.b16 %v1579
    %v6403 = vunpack.c.l.b16 %v1580
    %v6404 = vunpack.c.h.b16 %v1580
    %v6405 = vunpack.c.l.b16 %v1581
    %v6406 = vunpack.c.h.b16 %v1581
    %v6407 = vunpack.c.l.b16 %v1582
    %v6408 = vunpack.c.h.b16 %v1582
    %v6409 = vunpack.c.l.b16 %v1583
    %v6410 = vunpack.c.h.b16 %v1583
    %v6411 = vunpack.c.l.b16 %v1584
    %v6412 = vunpack.c.h.b16 %v1584
    %v6413 = vunpack.c.l.b16 %v1585
    %v6414 = vunpack.c.h.b16 %v1585
    %v6415 = vunpack.c.l.b16 %v1586
    %v6416 = vunpack.c.h.b16 %v1586
    %v6417 = vunpack.c.l.b16 %v1587
    %v6418 = vunpack.c.h.b16 %v1587
    %v6419 = vunpack.c.l.b16 %v1588
    %v6420 = vunpack.c.h.b16 %v1588
    %v6421 = vunpack.c.l.b16 %v1589
    %v6422 = vunpack.c.h.b16 %v1589
    %v6423 = vunpack.c.l.b16 %v1590
    %v6424 = vunpack.c.h.b16 %v1590
    %v6425 = vunpack.c.l.b16 %v1591
    %v6426 = vunpack.c.h.b16 %v1591
    %v6427 = vunpack.c.l.b16 %v1592
    %v6428 = vunpack.c.h.b16 %v1592
    %v6429 = vunpack.c.l.b16 %v1593
    %v6430 = vunpack.c.h.b16 %v1593
    %v6431 = vunpack.c.l.b16 %v1594
    %v6432 = vunpack.c.h.b16 %v1594
    %v6433 = vunpack.c.l.b16 %v1595
    %v6434 = vunpack.c.h.b16 %v1595
    %v6435 = vunpack.c.l.b16 %v1596
    %v6436 = vunpack.c.h.b16 %v1596
    %v6437 = vunpack.c.l.b16 %v1597
    %v6438 = vunpack.c.h.b16 %v1597
    %v6439 = vunpack.c.l.b16 %v1598
    %v6440 = vunpack.c.h.b16 %v1598
    %v6441 = vunpack.c.l.b16 %v1599
    %v6442 = vunpack.c.h.b16 %v1599
    %v6443 = vunpack.c.l.b16 %v1600
    %v6444 = vunpack.c.h.b16 %v1600
    %v6445 = vunpack.c.l.b16 %v1601
    %v6446 = vunpack.c.h.b16 %v1601
    %v6447 = vunpack.c.l.b16 %v1602
    %v6448 = vunpack.c.h.b16 %v1602
    %v6449 = vunpack.c.l.b16 %v1603
    %v6450 = vunpack.c.h.b16 %v1603
    %v6451 = vunpack.c.l.b16 %v1604
    %v6452 = vunpack.c.h.b16 %v1604
    %v6453 = vunpack.c.l.b16 %v1605
    %v6454 = vunpack.c.h.b16 %v1605
    %v6455 = vunpack.c.l.b16 %v1606
    %v6456 = vunpack.c.h.b16 %v1606
    %v6457 = vunpack.c.l.b16 %v1607
    %v6458 = vunpack.c.h.b16 %v1607
    %v6459 = vunpack.c.l.b16 %v1608
    %v6460 = vunpack.c.h.b16 %v1608
    %v6461 = vunpack.c.l.b16 %v1609
    %v6462 = vunpack.c.h.b16 %v1609
    %v6463 = vunpack.c.l.b16 %v1610
    %v6464 = vunpack.c.h.b16 %v1610
    %v6465 = vunpack.c.l.b16 %v1611
    %v6466 = vunpack.c.h.b16 %v1611
    %v6467 = vunpack.c.l.b16 %v1612
    %v6468 = vunpack.c.h.b16 %v1612
    %v6469 = vunpack.c.l.b16 %v1613
    %v6470 = vunpack.c.h.b16 %v1613
    %v6471 = vunpack.c.l.b16 %v1614
    %v6472 = vunpack.c.h.b16 %v1614
    %v6473 = vunpack.c.l.b16 %v1615
    %v6474 = vunpack.c.h.b16 %v1615
    %v6475 = vunpack.c.l.b16 %v1616
    %v6476 = vunpack.c.h.b16 %v1616
    %v6477 = vunpack.c.l.b16 %v1617
    %v6478 = vunpack.c.h.b16 %v1617
    %v6479 = vunpack.c.l.b16 %v1618
    %v6480 = vunpack.c.h.b16 %v1618
    %v6481 = vunpack.c.l.b16 %v1619
    %v6482 = vunpack.c.h.b16 %v1619
    %v6483 = vunpack.c.l.b16 %v1620
    %v6484 = vunpack.c.h.b16 %v1620
    %v6485 = vunpack.c.l.b16 %v1621
    %v6486 = vunpack.c.h.b16 %v1621
    %v6487 = vunpack.c.l.b16 %v1622
    %v6488 = vunpack.c.h.b16 %v1622
    %v6489 = vunpack.c.l.b16 %v1623
    %v6490 = vunpack.c.h.b16 %v1623
    %v6491 = vunpack.c.l.b16 %v1624
    %v6492 = vunpack.c.h.b16 %v1624
    %v6493 = vunpack.c.l.b16 %v1625
    %v6494 = vunpack.c.h.b16 %v1625
    %v6495 = vunpack.c.l.b16 %v1626
    %v6496 = vunpack.c.h.b16 %v1626
    %v6497 = vunpack.c.l.b16 %v1627
    %v6498 = vunpack.c.h.b16 %v1627
    %v6499 = vunpack.c.l.b16 %v1628
    %v6500 = vunpack.c.h.b16 %v1628
    %v6501 = vunpack.c.l.b16 %v1629
    %v6502 = vunpack.c.h.b16 %v1629
    %v6503 = vunpack.c.l.b16 %v1630
    %v6504 = vunpack.c.h.b16 %v1630
    %v6505 = vunpack.c.l.b16 %v1631
    %v6506 = vunpack.c.h.b16 %v1631
    %v6507 = vunpack.c.l.b16 %v1632
    %v6508 = vunpack.c.h.b16 %v1632
    %v6509 = vunpack.c.l.b16 %v1633
    %v6510 = vunpack.c.h.b16 %v1633
    %v6511 = vunpack.c.l.b16 %v1634
    %v6512 = vunpack.c.h.b16 %v1634
    %v6513 = vunpack.c.l.b16 %v1635
    %v6514 = vunpack.c.h.b16 %v1635
    %v6515 = vunpack.c.l.b16 %v1636
    %v6516 = vunpack.c.h.b16 %v1636
    %v6517 = vunpack.c.l.b16 %v1637
    %v6518 = vunpack.c.h.b16 %v1637
    %v6519 = vunpack.c.l.b16 %v1638
    %v6520 = vunpack.c.h.b16 %v1638
    %v6521 = vunpack.c.l.b16 %v1639
    %v6522 = vunpack.c.h.b16 %v1639
    %v6523 = vunpack.c.l.b16 %v1640
    %v6524 = vunpack.c.h.b16 %v1640
    %v6525 = vunpack.c.l.b16 %v1641
    %v6526 = vunpack.c.h.b16 %v1641
    %v6527 = vunpack.c.l.b16 %v1642
    %v6528 = vunpack.c.h.b16 %v1642
    %v6529 = vunpack.c.l.b16 %v1643
    %v6530 = vunpack.c.h.b16 %v1643
    %v6531 = vunpack.c.l.b16 %v1644
    %v6532 = vunpack.c.h.b16 %v1644
    %v6533 = vunpack.c.l.b16 %v1645
    %v6534 = vunpack.c.h.b16 %v1645
    %v6535 = vunpack.c.l.b16 %v1646
    %v6536 = vunpack.c.h.b16 %v1646
    %v6537 = vunpack.c.l.b16 %v1647
    %v6538 = vunpack.c.h.b16 %v1647
    %v6539 = vunpack.c.l.b16 %v1648
    %v6540 = vunpack.c.h.b16 %v1648
    %v6541 = vunpack.c.l.b16 %v1649
    %v6542 = vunpack.c.h.b16 %v1649
    %v6543 = vunpack.c.l.b16 %v1650
    %v6544 = vunpack.c.h.b16 %v1650
    %v6545 = vunpack.c.l.b16 %v1651
    %v6546 = vunpack.c.h.b16 %v1651
    %v6547 = vunpack.c.l.b16 %v1652
    %v6548 = vunpack.c.h.b16 %v1652
    %v6549 = vunpack.c.l.b16 %v1653
    %v6550 = vunpack.c.h.b16 %v1653
    %v6551 = vunpack.c.l.b16 %v1654
    %v6552 = vunpack.c.h.b16 %v1654
    %v6553 = vunpack.c.l.b16 %v1655
    %v6554 = vunpack.c.h.b16 %v1655
    %v6555 = vunpack.c.l.b16 %v1656
    %v6556 = vunpack.c.h.b16 %v1656
    %v6557 = vunpack.c.l.b16 %v1657
    %v6558 = vunpack.c.h.b16 %v1657
    %v6559 = vunpack.c.l.b16 %v1658
    %v6560 = vunpack.c.h.b16 %v1658
    %v6561 = vunpack.c.l.b16 %v1659
    %v6562 = vunpack.c.h.b16 %v1659
    %v6563 = vunpack.c.l.b16 %v1660
    %v6564 = vunpack.c.h.b16 %v1660
    %v6565 = vunpack.c.l.b16 %v1661
    %v6566 = vunpack.c.h.b16 %v1661
    %v6567 = vunpack.c.l.b16 %v1662
    %v6568 = vunpack.c.h.b16 %v1662
    %v6569 = vunpack.c.l.b16 %v1663
    %v6570 = vunpack.c.h.b16 %v1663
    %v6571 = vpack.c.b16 %v3523, %v3499
    %v6572 = vpack.c.b16 %v3524, %v3500
    %v6573 = vpack.c.b16 %v3525, %v3501
    %v6574 = vpack.c.b16 %v3526, %v3502
    %v6575 = vpack.c.b16 %v3527, %v3503
    %v6576 = vpack.c.b16 %v3528, %v3504
    %v6577 = vpack.c.b16 %v3529, %v3505
    %v6578 = vpack.c.b16 %v3530, %v3506
    %v6579 = vpack.c.b16 %v3531, %v3507
    %v6580 = vpack.c.b16 %v3532, %v3508
    %v6581 = vpack.c.b16 %v3533, %v3509
    %v6582 = vpack.c.b16 %v3534, %v3510
    %v6583 = vpack.c.b16 %v3535, %v3511
    %v6584 = vpack.c.b16 %v3536, %v3512
    %v6585 = vpack.c.b16 %v3537, %v3513
    %v6586 = vpack.c.b16 %v3538, %v3514
    %v6587 = vpack.c.b16 %v3539, %v3515
    %v6588 = vpack.c.b16 %v3540, %v3516
    %v6589 = vpack.c.b16 %v3541, %v3517
    %v6590 = vpack.c.b16 %v3542, %v3518
    %v6591 = vpack.c.b16 %v3543, %v3519
    %v6592 = vpack.c.b16 %v3544, %v3520
    %v6593 = vpack.c.b16 %v3545, %v3521
    %v6594 = vpack.c.b16 %v3546, %v3522
    %v6595 = vpack.c.b16 %v3571, %v3547
    %v6596 = vpack.c.b16 %v3572, %v3548
    %v6597 = vpack.c.b16 %v3573, %v3549
    %v6598 = vpack.c.b16 %v3574, %v3550
    %v6599 = vpack.c.b16 %v3575, %v3551
    %v6600 = vpack.c.b16 %v3576, %v3552
    %v6601 = vpack.c.b16 %v3577, %v3553
    %v6602 = vpack.c.b16 %v3578, %v3554
    %v6603 = vpack.c.b16 %v3579, %v3555
    %v6604 = vpack.c.b16 %v3580, %v3556
    %v6605 = vpack.c.b16 %v3581, %v3557
    %v6606 = vpack.c.b16 %v3582, %v3558
    %v6607 = vpack.c.b16 %v3583, %v3559
    %v6608 = vpack.c.b16 %v3584, %v3560
    %v6609 = vpack.c.b16 %v3585, %v3561
    %v6610 = vpack.c.b16 %v3586, %v3562
    %v6611 = vpack.c.b16 %v3587, %v3563
    %v6612 = vpack.c.b16 %v3588, %v3564
    %v6613 = vpack.c.b16 %v3589, %v3565
    %v6614 = vpack.c.b16 %v3590, %v3566
    %v6615 = vpack.c.b16 %v3591, %v3567
    %v6616 = vpack.c.b16 %v3592, %v3568
    %v6617 = vpack.c.b16 %v3593, %v3569
    %v6618 = vpack.c.b16 %v3594, %v3570
    %v6619 = vpack.c.b16 %v3619, %v3595
    %v6620 = vpack.c.b16 %v3620, %v3596
    %v6621 = vpack.c.b16 %v3621, %v3597
    %v6622 = vpack.c.b16 %v3622, %v3598
    %v6623 = vpack.c.b16 %v3623, %v3599
    %v6624 = vpack.c.b16 %v3624, %v3600
    %v6625 = vpack.c.b16 %v3625, %v3601
    %v6626 = vpack.c.b16 %v3626, %v3602
    %v6627 = vpack.c.b16 %v3627, %v3603
    %v6628 = vpack.c.b16 %v3628, %v3604
    %v6629 = vpack.c.b16 %v3629, %v3605
    %v6630 = vpack.c.b16 %v3630, %v3606
    %v6631 = vpack.c.b16 %v3631, %v3607
    %v6632 = vpack.c.b16 %v3632, %v3608
    %v6633 = vpack.c.b16 %v3633, %v3609
    %v6634 = vpack.c.b16 %v3634, %v3610
    %v6635 = vpack.c.b16 %v3635, %v3611
    %v6636 = vpack.c.b16 %v3636, %v3612
    %v6637 = vpack.c.b16 %v3637, %v3613
    %v6638 = vpack.c.b16 %v3638, %v3614
    %v6639 = vpack.c.b16 %v3639, %v3615
    %v6640 = vpack.c.b16 %v3640, %v3616
    %v6641 = vpack.c.b16 %v3641, %v3617
    %v6642 = vpack.c.b16 %v3642, %v3618
    %v6643 = vpack.c.b16 %v3667, %v3643
    %v6644 = vpack.c.b16 %v3668, %v3644
    %v6645 = vpack.c.b16 %v3669, %v3645
    %v6646 = vpack.c.b16 %v3670, %v3646
    %v6647 = vpack.c.b16 %v3671, %v3647
    %v6648 = vpack.c.b16 %v3672, %v3648
    %v6649 = vpack.c.b16 %v3673, %v3649
    %v6650 = vpack.c.b16 %v3674, %v3650
    %v6651 = vpack.c.b16 %v3675, %v3651
    %v6652 = vpack.c.b16 %v3676, %v3652
    %v6653 = vpack.c.b16 %v3677, %v3653
    %v6654 = vpack.c.b16 %v3678, %v3654
    %v6655 = vpack.c.b16 %v3679, %v3655
    %v6656 = vpack.c.b16 %v3680, %v3656
    %v6657 = vpack.c.b16 %v3681, %v3657
    %v6658 = vpack.c.b16 %v3682, %v3658
    %v6659 = vpack.c.b16 %v3683, %v3659
    %v6660 = vpack.c.b16 %v3684, %v3660
    %v6661 = vpack.c.b16 %v3685, %v3661
    %v6662 = vpack.c.b16 %v3686, %v3662
    %v6663 = vpack.c.b16 %v3687, %v3663
    %v6664 = vpack.c.b16 %v3688, %v3664
    %v6665 = vpack.c.b16 %v3689, %v3665
    %v6666 = vpack.c.b16 %v3690, %v3666
    %v6667 = vpack.c.b16 %v3715, %v3691
    %v6668 = vpack.c.b16 %v3716, %v3692
    %v6669 = vpack.c.b16 %v3717, %v3693
    %v6670 = vpack.c.b16 %v3718, %v3694
    %v6671 = vpack.c.b16 %v3719, %v3695
    %v6672 = vpack.c.b16 %v3720, %v3696
    %v6673 = vpack.c.b16 %v3721, %v3697
    %v6674 = vpack.c.b16 %v3722, %v3698
    %v6675 = vpack.c.b16 %v3723, %v3699
    %v6676 = vpack.c.b16 %v3724, %v3700
    %v6677 = vpack.c.b16 %v3725, %v3701
    %v6678 = vpack.c.b16 %v3726, %v3702
    %v6679 = vpack.c.b16 %v3727, %v3703
    %v6680 = vpack.c.b16 %v3728, %v3704
    %v6681 = vpack.c.b16 %v3729, %v3705
    %v6682 = vpack.c.b16 %v3730, %v3706
    %v6683 = vpack.c.b16 %v3731, %v3707
    %v6684 = vpack.c.b16 %v3732, %v3708
    %v6685 = vpack.c.b16 %v3733, %v3709
    %v6686 = vpack.c.b16 %v3734, %v3710
    %v6687 = vpack.c.b16 %v3735, %v3711
    %v6688 = vpack.c.b16 %v3736, %v3712
    %v6689 = vpack.c.b16 %v3737, %v3713
    %v6690 = vpack.c.b16 %v3738, %v3714
    %v6691 = vpack.c.b16 %v3763, %v3739
    %v6692 = vpack.c.b16 %v3764, %v3740
    %v6693 = vpack.c.b16 %v3765, %v3741
    %v6694 = vpack.c.b16 %v3766, %v3742
    %v6695 = vpack.c.b16 %v3767, %v3743
    %v6696 = vpack.c.b16 %v3768, %v3744
    %v6697 = vpack.c.b16 %v3769, %v3745
    %v6698 = vpack.c.b16 %v3770, %v3746
    %v6699 = vpack.c.b16 %v3771, %v3747
    %v6700 = vpack.c.b16 %v3772, %v3748
    %v6701 = vpack.c.b16 %v3773, %v3749
    %v6702 = vpack.c.b16 %v3774, %v3750
    %v6703 = vpack.c.b16 %v3775, %v3751
    %v6704 = vpack.c.b16 %v3776, %v3752
    %v6705 = vpack.c.b16 %v3777, %v3753
    %v6706 = vpack.c.b16 %v3778, %v3754
    %v6707 = vpack.c.b16 %v3779, %v3755
    %v6708 = vpack.c.b16 %v3780, %v3756
    %v6709 = vpack.c.b16 %v3781, %v3757
    %v6710 = vpack.c.b16 %v3782, %v3758
    %v6711 = vpack.c.b16 %v3783, %v3759
    %v6712 = vpack.c.b16 %v3784, %v3760
    %v6713 = vpack.c.b16 %v3785, %v3761
    %v6714 = vpack.c.b16 %v3786, %v3762
    %v6715 = vpack.c.b16 %v3811, %v3787
    %v6716 = vpack.c.b16 %v3812, %v3788
    %v6717 = vpack.c.b16 %v3813, %v3789
    %v6718 = vpack.c.b16 %v3814, %v3790
    %v6719 = vpack.c.b16 %v3815, %v3791
    %v6720 = vpack.c.b16 %v3816, %v3792
    %v6721 = vpack.c.b16 %v3817, %v3793
    %v6722 = vpack.c.b16 %v3818, %v3794
    %v6723 = vpack.c.b16 %v3819, %v3795
    %v6724 = vpack.c.b16 %v3820, %v3796
    %v6725 = vpack.c.b16 %v3821, %v3797
    %v6726 = vpack.c.b16 %v3822, %v3798
    %v6727 = vpack.c.b16 %v3823, %v3799
    %v6728 = vpack.c.b16 %v3824, %v3800
    %v6729 = vpack.c.b16 %v3825, %v3801
    %v6730 = vpack.c.b16 %v3826, %v3802
    %v6731 = vpack.c.b16 %v3827, %v3803
    %v6732 = vpack.c.b16 %v3828, %v3804
    %v6733 = vpack.c.b16 %v3829, %v3805
    %v6734 = vpack.c.b16 %v3830, %v3806
    %v6735 = vpack.c.b16 %v3831, %v3807
    %v6736 = vpack.c.b16 %v3832, %v3808
    %v6737 = vpack.c.b16 %v3833, %v3809
    %v6738 = vpack.c.b16 %v3834, %v3810
    %v6739 = vpack.c.b16 %v3859, %v3835
    %v6740 = vpack.c.b16 %v3860, %v3836
    %v6741 = vpack.c.b16 %v3861, %v3837
    %v6742 = vpack.c.b16 %v3862, %v3838
    %v6743 = vpack.c.b16 %v3863, %v3839
    %v6744 = vpack.c.b16 %v3864, %v3840
    %v6745 = vpack.c.b16 %v3865, %v3841
    %v6746 = vpack.c.b16 %v3866, %v3842
    %v6747 = vpack.c.b16 %v3867, %v3843
    %v6748 = vpack.c.b16 %v3868, %v3844
    %v6749 = vpack.c.b16 %v3869, %v3845
    %v6750 = vpack.c.b16 %v3870, %v3846
    %v6751 = vpack.c.b16 %v3871, %v3847
    %v6752 = vpack.c.b16 %v3872, %v3848
    %v6753 = vpack.c.b16 %v3873, %v3849
    %v6754 = vpack.c.b16 %v3874, %v3850
    %v6755 = vpack.c.b16 %v3875, %v3851
    %v6756 = vpack.c.b16 %v3876, %v3852
    %v6757 = vpack.c.b16 %v3877, %v3853
    %v6758 = vpack.c.b16 %v3878, %v3854
    %v6759 = vpack.c.b16 %v3879, %v3855
    %v6760 = vpack.c.b16 %v3880, %v3856
    %v6761 = vpack.c.b16 %v3881, %v3857
    %v6762 = vpack.c.b16 %v3882, %v3858
    %v6763 = vpack.c.b16 %v3907, %v3883
    %v6764 = vpack.c.b16 %v3908, %v3884
    %v6765 = vpack.c.b16 %v3909, %v3885
    %v6766 = vpack.c.b16 %v3910, %v3886
    %v6767 = vpack.c.b16 %v3911, %v3887
    %v6768 = vpack.c.b16 %v3912, %v3888
    %v6769 = vpack.c.b16 %v3913, %v3889
    %v6770 = vpack.c.b16 %v3914, %v3890
    %v6771 = vpack.c.b16 %v3915, %v3891
    %v6772 = vpack.c.b16 %v3916, %v3892
    %v6773 = vpack.c.b16 %v3917, %v3893
    %v6774 = vpack.c.b16 %v3918, %v3894
    %v6775 = vpack.c.b16 %v3919, %v3895
    %v6776 = vpack.c.b16 %v3920, %v3896
    %v6777 = vpack.c.b16 %v3921, %v3897
    %v6778 = vpack.c.b16 %v3922, %v3898
    %v6779 = vpack.c.b16 %v3923, %v3899
    %v6780 = vpack.c.b16 %v3924, %v3900
    %v6781 = vpack.c.b16 %v3925, %v3901
    %v6782 = vpack.c.b16 %v3926, %v3902
    %v6783 = vpack.c.b16 %v3927, %v3903
    %v6784 = vpack.c.b16 %v3928, %v3904
    %v6785 = vpack.c.b16 %v3929, %v3905
    %v6786 = vpack.c.b16 %v3930, %v3906
    %v6787 = vpack.c.b16 %v3955, %v3931
    %v6788 = vpack.c.b16 %v3956, %v3932
    %v6789 = vpack.c.b16 %v3957, %v3933
    %v6790 = vpack.c.b16 %v3958, %v3934
    %v6791 = vpack.c.b16 %v3959, %v3935
    %v6792 = vpack.c.b16 %v3960, %v3936
    %v6793 = vpack.c.b16 %v3961, %v3937
    %v6794 = vpack.c.b16 %v3962, %v3938
    %v6795 = vpack.c.b16 %v3963, %v3939
    %v6796 = vpack.c.b16 %v3964, %v3940
    %v6797 = vpack.c.b16 %v3965, %v3941
    %v6798 = vpack.c.b16 %v3966, %v3942
    %v6799 = vpack.c.b16 %v3967, %v3943
    %v6800 = vpack.c.b16 %v3968, %v3944
    %v6801 = vpack.c.b16 %v3969, %v3945
    %v6802 = vpack.c.b16 %v3970, %v3946
    %v6803 = vpack.c.b16 %v3971, %v3947
    %v6804 = vpack.c.b16 %v3972, %v3948
    %v6805 = vpack.c.b16 %v3973, %v3949
    %v6806 = vpack.c.b16 %v3974, %v3950
    %v6807 = vpack.c.b16 %v3975, %v3951
    %v6808 = vpack.c.b16 %v3976, %v3952
    %v6809 = vpack.c.b16 %v3977, %v3953
    %v6810 = vpack.c.b16 %v3978, %v3954
    %v6811 = vpack.c.b16 %v4003, %v3979
    %v6812 = vpack.c.b16 %v4004, %v3980
    %v6813 = vpack.c.b16 %v4005, %v3981
    %v6814 = vpack.c.b16 %v4006, %v3982
    %v6815 = vpack.c.b16 %v4007, %v3983
    %v6816 = vpack.c.b16 %v4008, %v3984
    %v6817 = vpack.c.b16 %v4009, %v3985
    %v6818 = vpack.c.b16 %v4010, %v3986
    %v6819 = vpack.c.b16 %v4011, %v3987
    %v6820 = vpack.c.b16 %v4012, %v3988
    %v6821 = vpack.c.b16 %v4013, %v3989
    %v6822 = vpack.c.b16 %v4014, %v3990
    %v6823 = vpack.c.b16 %v4015, %v3991
    %v6824 = vpack.c.b16 %v4016, %v3992
    %v6825 = vpack.c.b16 %v4017, %v3993
    %v6826 = vpack.c.b16 %v4018, %v3994
    %v6827 = vpack.c.b16 %v4019, %v3995
    %v6828 = vpack.c.b16 %v4020, %v3996
    %v6829 = vpack.c.b16 %v4021, %v3997
    %v6830 = vpack.c.b16 %v4022, %v3998
    %v6831 = vpack.c.b16 %v4023, %v3999
    %v6832 = vpack.c.b16 %v4024, %v4000
    %v6833 = vpack.c.b16 %v4025, %v4001
    %v6834 = vpack.c.b16 %v4026, %v4002
    %v6835 = vpack.c.b16 %v4051, %v4027
    %v6836 = vpack.c.b16 %v4052, %v4028
    %v6837 = vpack.c.b16 %v4053, %v4029
    %v6838 = vpack.c.b16 %v4054, %v4030
    %v6839 = vpack.c.b16 %v4055, %v4031
    %v6840 = vpack.c.b16 %v4056, %v4032
    %v6841 = vpack.c.b16 %v4057, %v4033
    %v6842 = vpack.c.b16 %v4058, %v4034
    %v6843 = vpack.c.b16 %v4059, %v4035
    %v6844 = vpack.c.b16 %v4060, %v4036
    %v6845 = vpack.c.b16 %v4061, %v4037
    %v6846 = vpack.c.b16 %v4062, %v4038
    %v6847 = vpack.c.b16 %v4063, %v4039
    %v6848 = vpack.c.b16 %v4064, %v4040
    %v6849 = vpack.c.b16 %v4065, %v4041
    %v6850 = vpack.c.b16 %v4066, %v4042
    %v6851 = vpack.c.b16 %v4067, %v4043
    %v6852 = vpack.c.b16 %v4068, %v4044
    %v6853 = vpack.c.b16 %v4069, %v4045
    %v6854 = vpack.c.b16 %v4070, %v4046
    %v6855 = vpack.c.b16 %v4071, %v4047
    %v6856 = vpack.c.b16 %v4072, %v4048
    %v6857 = vpack.c.b16 %v4073, %v4049
    %v6858 = vpack.c.b16 %v4074, %v4050
    %v6859 = vpack.c.b16 %v4099, %v4075
    %v6860 = vpack.c.b16 %v4100, %v4076
    %v6861 = vpack.c.b16 %v4101, %v4077
    %v6862 = vpack.c.b16 %v4102, %v4078
    %v6863 = vpack.c.b16 %v4103, %v4079
    %v6864 = vpack.c.b16 %v4104, %v4080
    %v6865 = vpack.c.b16 %v4105, %v4081
    %v6866 = vpack.c.b16 %v4106, %v4082
    %v6867 = vpack.c.b16 %v4107, %v4083
    %v6868 = vpack.c.b16 %v4108, %v4084
    %v6869 = vpack.c.b16 %v4109, %v4085
    %v6870 = vpack.c.b16 %v4110, %v4086
    %v6871 = vpack.c.b16 %v4111, %v4087
    %v6872 = vpack.c.b16 %v4112, %v4088
    %v6873 = vpack.c.b16 %v4113, %v4089
    %v6874 = vpack.c.b16 %v4114, %v4090
    %v6875 = vpack.c.b16 %v4115, %v4091
    %v6876 = vpack.c.b16 %v4116, %v4092
    %v6877 = vpack.c.b16 %v4117, %v4093
    %v6878 = vpack.c.b16 %v4118, %v4094
    %v6879 = vpack.c.b16 %v4119, %v4095
    %v6880 = vpack.c.b16 %v4120, %v4096
    %v6881 = vpack.c.b16 %v4121, %v4097
    %v6882 = vpack.c.b16 %v4122, %v4098
    %v6883 = vpack.c.b16 %v4147, %v4123
    %v6884 = vpack.c.b16 %v4148, %v4124
    %v6885 = vpack.c.b16 %v4149, %v4125
    %v6886 = vpack.c.b16 %v4150, %v4126
    %v6887 = vpack.c.b16 %v4151, %v4127
    %v6888 = vpack.c.b16 %v4152, %v4128
    %v6889 = vpack.c.b16 %v4153, %v4129
    %v6890 = vpack.c.b16 %v4154, %v4130
    %v6891 = vpack.c.b16 %v4155, %v4131
    %v6892 = vpack.c.b16 %v4156, %v4132
    %v6893 = vpack.c.b16 %v4157, %v4133
    %v6894 = vpack.c.b16 %v4158, %v4134
    %v6895 = vpack.c.b16 %v4159, %v4135
    %v6896 = vpack.c.b16 %v4160, %v4136
    %v6897 = vpack.c.b16 %v4161, %v4137
    %v6898 = vpack.c.b16 %v4162, %v4138
    %v6899 = vpack.c.b16 %v4163, %v4139
    %v6900 = vpack.c.b16 %v4164, %v4140
    %v6901 = vpack.c.b16 %v4165, %v4141
    %v6902 = vpack.c.b16 %v4166, %v4142
    %v6903 = vpack.c.b16 %v4167, %v4143
    %v6904 = vpack.c.b16 %v4168, %v4144
    %v6905 = vpack.c.b16 %v4169, %v4145
    %v6906 = vpack.c.b16 %v4170, %v4146
    %v6907 = vpack.c.b16 %v4195, %v4171
    %v6908 = vpack.c.b16 %v4196, %v4172
    %v6909 = vpack.c.b16 %v4197, %v4173
    %v6910 = vpack.c.b16 %v4198, %v4174
    %v6911 = vpack.c.b16 %v4199, %v4175
    %v6912 = vpack.c.b16 %v4200, %v4176
    %v6913 = vpack.c.b16 %v4201, %v4177
    %v6914 = vpack.c.b16 %v4202, %v4178
    %v6915 = vpack.c.b16 %v4203, %v4179
    %v6916 = vpack.c.b16 %v4204, %v4180
    %v6917 = vpack.c.b16 %v4205, %v4181
    %v6918 = vpack.c.b16 %v4206, %v4182
    %v6919 = vpack.c.b16 %v4207, %v4183
    %v6920 = vpack.c.b16 %v4208, %v4184
    %v6921 = vpack.c.b16 %v4209, %v4185
    %v6922 = vpack.c.b16 %v4210, %v4186
    %v6923 = vpack.c.b16 %v4211, %v4187
    %v6924 = vpack.c.b16 %v4212, %v4188
    %v6925 = vpack.c.b16 %v4213, %v4189
    %v6926 = vpack.c.b16 %v4214, %v4190
    %v6927 = vpack.c.b16 %v4215, %v4191
    %v6928 = vpack.c.b16 %v4216, %v4192
    %v6929 = vpack.c.b16 %v4217, %v4193
    %v6930 = vpack.c.b16 %v4218, %v4194
    %v6931 = vpack.c.b16 %v4243, %v4219
    %v6932 = vpack.c.b16 %v4244, %v4220
    %v6933 = vpack.c.b16 %v4245, %v4221
    %v6934 = vpack.c.b16 %v4246, %v4222
    %v6935 = vpack.c.b16 %v4247, %v4223
    %v6936 = vpack.c.b16 %v4248, %v4224
    %v6937 = vpack.c.b16 %v4249, %v4225
    %v6938 = vpack.c.b16 %v4250, %v4226
    %v6939 = vpack.c.b16 %v4251, %v4227
    %v6940 = vpack.c.b16 %v4252, %v4228
    %v6941 = vpack.c.b16 %v4253, %v4229
    %v6942 = vpack.c.b16 %v4254, %v4230
    %v6943 = vpack.c.b16 %v4255, %v4231
    %v6944 = vpack.c.b16 %v4256, %v4232
    %v6945 = vpack.c.b16 %v4257, %v4233
    %v6946 = vpack.c.b16 %v4258, %v4234
    %v6947 = vpack.c.b16 %v4259, %v4235
    %v6948 = vpack.c.b16 %v4260, %v4236
    %v6949 = vpack.c.b16 %v4261, %v4237
    %v6950 = vpack.c.b16 %v4262, %v4238
    %v6951 = vpack.c.b16 %v4263, %v4239
    %v6952 = vpack.c.b16 %v4264, %v4240
    %v6953 = vpack.c.b16 %v4265, %v4241
    %v6954 = vpack.c.b16 %v4266, %v4242
    %v6955 = vpack.c.b16 %v4291, %v4267
    %v6956 = vpack.c.b16 %v4292, %v4268
    %v6957 = vpack.c.b16 %v4293, %v4269
    %v6958 = vpack.c.b16 %v4294, %v4270
    %v6959 = vpack.c.b16 %v4295, %v4271
    %v6960 = vpack.c.b16 %v4296, %v4272
    %v6961 = vpack.c.b16 %v4297, %v4273
    %v6962 = vpack.c.b16 %v4298, %v4274
    %v6963 = vpack.c.b16 %v4299, %v4275
    %v6964 = vpack.c.b16 %v4300, %v4276
    %v6965 = vpack.c.b16 %v4301, %v4277
    %v6966 = vpack.c.b16 %v4302, %v4278
    %v6967 = vpack.c.b16 %v4303, %v4279
    %v6968 = vpack.c.b16 %v4304, %v4280
    %v6969 = vpack.c.b16 %v4305, %v4281
    %v6970 = vpack.c.b16 %v4306, %v4282
    %v6971 = vpack.c.b16 %v4307, %v4283
    %v6972 = vpack.c.b16 %v4308, %v4284
    %v6973 = vpack.c.b16 %v4309, %v4285
    %v6974 = vpack.c.b16 %v4310, %v4286
    %v6975 = vpack.c.b16 %v4311, %v4287
    %v6976 = vpack.c.b16 %v4312, %v4288
    %v6977 = vpack.c.b16 %v4313, %v4289
    %v6978 = vpack.c.b16 %v4314, %v4290
    %v6979 = vpack.c.b16 %v4339, %v4315
    %v6980 = vpack.c.b16 %v4340, %v4316
    %v6981 = vpack.c.b16 %v4341, %v4317
    %v6982 = vpack.c.b16 %v4342, %v4318
    %v6983 = vpack.c.b16 %v4343, %v4319
    %v6984 = vpack.c.b16 %v4344, %v4320
    %v6985 = vpack.c.b16 %v4345, %v4321
    %v6986 = vpack.c.b16 %v4346, %v4322
    %v6987 = vpack.c.b16 %v4347, %v4323
    %v6988 = vpack.c.b16 %v4348, %v4324
    %v6989 = vpack.c.b16 %v4349, %v4325
    %v6990 = vpack.c.b16 %v4350, %v4326
    %v6991 = vpack.c.b16 %v4351, %v4327
    %v6992 = vpack.c.b16 %v4352, %v4328
    %v6993 = vpack.c.b16 %v4353, %v4329
    %v6994 = vpack.c.b16 %v4354, %v4330
    %v6995 = vpack.c.b16 %v4355, %v4331
    %v6996 = vpack.c.b16 %v4356, %v4332
    %v6997 = vpack.c.b16 %v4357, %v4333
    %v6998 = vpack.c.b16 %v4358, %v4334
    %v6999 = vpack.c.b16 %v4359, %v4335
    %v7000 = vpack.c.b16 %v4360, %v4336
    %v7001 = vpack.c.b16 %v4361, %v4337
    %v7002 = vpack.c.b16 %v4362, %v4338
    %v7003 = vpack.c.b16 %v4387, %v4363
    %v7004 = vpack.c.b16 %v4388, %v4364
    %v7005 = vpack.c.b16 %v4389, %v4365
    %v7006 = vpack.c.b16 %v4390, %v4366
    %v7007 = vpack.c.b16 %v4391, %v4367
    %v7008 = vpack.c.b16 %v4392, %v4368
    %v7009 = vpack.c.b16 %v4393, %v4369
    %v7010 = vpack.c.b16 %v4394, %v4370
    %v7011 = vpack.c.b16 %v4395, %v4371
    %v7012 = vpack.c.b16 %v4396, %v4372
    %v7013 = vpack.c.b16 %v4397, %v4373
    %v7014 = vpack.c.b16 %v4398, %v4374
    %v7015 = vpack.c.b16 %v4399, %v4375
    %v7016 = vpack.c.b16 %v4400, %v4376
    %v7017 = vpack.c.b16 %v4401, %v4377
    %v7018 = vpack.c.b16 %v4402, %v4378
    %v7019 = vpack.c.b16 %v4403, %v4379
    %v7020 = vpack.c.b16 %v4404, %v4380
    %v7021 = vpack.c.b16 %v4405, %v4381
    %v7022 = vpack.c.b16 %v4406, %v4382
    %v7023 = vpack.c.b16 %v4407, %v4383
    %v7024 = vpack.c.b16 %v4408, %v4384
    %v7025 = vpack.c.b16 %v4409, %v4385
    %v7026 = vpack.c.b16 %v4410, %v4386
    %v7027 = vpack.c.b16 %v4435, %v4411
    %v7028 = vpack.c.b16 %v4436, %v4412
    %v7029 = vpack.c.b16 %v4437, %v4413
    %v7030 = vpack.c.b16 %v4438, %v4414
    %v7031 = vpack.c.b16 %v4439, %v4415
    %v7032 = vpack.c.b16 %v4440, %v4416
    %v7033 = vpack.c.b16 %v4441, %v4417
    %v7034 = vpack.c.b16 %v4442, %v4418
    %v7035 = vpack.c.b16 %v4443, %v4419
    %v7036 = vpack.c.b16 %v4444, %v4420
    %v7037 = vpack.c.b16 %v4445, %v4421
    %v7038 = vpack.c.b16 %v4446, %v4422
    %v7039 = vpack.c.b16 %v4447, %v4423
    %v7040 = vpack.c.b16 %v4448, %v4424
    %v7041 = vpack.c.b16 %v4449, %v4425
    %v7042 = vpack.c.b16 %v4450, %v4426
    %v7043 = vpack.c.b16 %v4451, %v4427
    %v7044 = vpack.c.b16 %v4452, %v4428
    %v7045 = vpack.c.b16 %v4453, %v4429
    %v7046 = vpack.c.b16 %v4454, %v4430
    %v7047 = vpack.c.b16 %v4455, %v4431
    %v7048 = vpack.c.b16 %v4456, %v4432
    %v7049 = vpack.c.b16 %v4457, %v4433
    %v7050 = vpack.c.b16 %v4458, %v4434
    %v7051 = vpack.c.b16 %v4483, %v4459
    %v7052 = vpack.c.b16 %v4484, %v4460
    %v7053 = vpack.c.b16 %v4485, %v4461
    %v7054 = vpack.c.b16 %v4486, %v4462
    %v7055 = vpack.c.b16 %v4487, %v4463
    %v7056 = vpack.c.b16 %v4488, %v4464
    %v7057 = vpack.c.b16 %v4489, %v4465
    %v7058 = vpack.c.b16 %v4490, %v4466
    %v7059 = vpack.c.b16 %v4491, %v4467
    %v7060 = vpack.c.b16 %v4492, %v4468
    %v7061 = vpack.c.b16 %v4493, %v4469
    %v7062 = vpack.c.b16 %v4494, %v4470
    %v7063 = vpack.c.b16 %v4495, %v4471
    %v7064 = vpack.c.b16 %v4496, %v4472
    %v7065 = vpack.c.b16 %v4497, %v4473
    %v7066 = vpack.c.b16 %v4498, %v4474
    %v7067 = vpack.c.b16 %v4499, %v4475
    %v7068 = vpack.c.b16 %v4500, %v4476
    %v7069 = vpack.c.b16 %v4501, %v4477
    %v7070 = vpack.c.b16 %v4502, %v4478
    %v7071 = vpack.c.b16 %v4503, %v4479
    %v7072 = vpack.c.b16 %v4504, %v4480
    %v7073 = vpack.c.b16 %v4505, %v4481
    %v7074 = vpack.c.b16 %v4506, %v4482
    %v7075 = vpack.c.b16 %v4531, %v4507
    %v7076 = vpack.c.b16 %v4532, %v4508
    %v7077 = vpack.c.b16 %v4533, %v4509
    %v7078 = vpack.c.b16 %v4534, %v4510
    %v7079 = vpack.c.b16 %v4535, %v4511
    %v7080 = vpack.c.b16 %v4536, %v4512
    %v7081 = vpack.c.b16 %v4537, %v4513
    %v7082 = vpack.c.b16 %v4538, %v4514
    %v7083 = vpack.c.b16 %v4539, %v4515
    %v7084 = vpack.c.b16 %v4540, %v4516
    %v7085 = vpack.c.b16 %v4541, %v4517
    %v7086 = vpack.c.b16 %v4542, %v4518
    %v7087 = vpack.c.b16 %v4543, %v4519
    %v7088 = vpack.c.b16 %v4544, %v4520
    %v7089 = vpack.c.b16 %v4545, %v4521
    %v7090 = vpack.c.b16 %v4546, %v4522
    %v7091 = vpack.c.b16 %v4547, %v4523
    %v7092 = vpack.c.b16 %v4548, %v4524
    %v7093 = vpack.c.b16 %v4549, %v4525
    %v7094 = vpack.c.b16 %v4550, %v4526
    %v7095 = vpack.c.b16 %v4551, %v4527
    %v7096 = vpack.c.b16 %v4552, %v4528
    %v7097 = vpack.c.b16 %v4553, %v4529
    %v7098 = vpack.c.b16 %v4554, %v4530
    %v7099 = vpack.c.b16 %v4579, %v4555
    %v7100 = vpack.c.b16 %v4580, %v4556
    %v7101 = vpack.c.b16 %v4581, %v4557
    %v7102 = vpack.c.b16 %v4582, %v4558
    %v7103 = vpack.c.b16 %v4583, %v4559
    %v7104 = vpack.c.b16 %v4584, %v4560
    %v7105 = vpack.c.b16 %v4585, %v4561
    %v7106 = vpack.c.b16 %v4586, %v4562
    %v7107 = vpack.c.b16 %v4587, %v4563
    %v7108 = vpack.c.b16 %v4588, %v4564
    %v7109 = vpack.c.b16 %v4589, %v4565
    %v7110 = vpack.c.b16 %v4590, %v4566
    %v7111 = vpack.c.b16 %v4591, %v4567
    %v7112 = vpack.c.b16 %v4592, %v4568
    %v7113 = vpack.c.b16 %v4593, %v4569
    %v7114 = vpack.c.b16 %v4594, %v4570
    %v7115 = vpack.c.b16 %v4595, %v4571
    %v7116 = vpack.c.b16 %v4596, %v4572
    %v7117 = vpack.c.b16 %v4597, %v4573
    %v7118 = vpack.c.b16 %v4598, %v4574
    %v7119 = vpack.c.b16 %v4599, %v4575
    %v7120 = vpack.c.b16 %v4600, %v4576
    %v7121 = vpack.c.b16 %v4601, %v4577
    %v7122 = vpack.c.b16 %v4602, %v4578
    %v7123 = vpack.c.b16 %v4627, %v4603
    %v7124 = vpack.c.b16 %v4628, %v4604
    %v7125 = vpack.c.b16 %v4629, %v4605
    %v7126 = vpack.c.b16 %v4630, %v4606
    %v7127 = vpack.c.b16 %v4631, %v4607
    %v7128 = vpack.c.b16 %v4632, %v4608
    %v7129 = vpack.c.b16 %v4633, %v4609
    %v7130 = vpack.c.b16 %v4634, %v4610
    %v7131 = vpack.c.b16 %v4635, %v4611
    %v7132 = vpack.c.b16 %v4636, %v4612
    %v7133 = vpack.c.b16 %v4637, %v4613
    %v7134 = vpack.c.b16 %v4638, %v4614
    %v7135 = vpack.c.b16 %v4639, %v4615
    %v7136 = vpack.c.b16 %v4640, %v4616
    %v7137 = vpack.c.b16 %v4641, %v4617
    %v7138 = vpack.c.b16 %v4642, %v4618
    %v7139 = vpack.c.b16 %v4643, %v4619
    %v7140 = vpack.c.b16 %v4644, %v4620
    %v7141 = vpack.c.b16 %v4645, %v4621
    %v7142 = vpack.c.b16 %v4646, %v4622
    %v7143 = vpack.c.b16 %v4647, %v4623
    %v7144 = vpack.c.b16 %v4648, %v4624
    %v7145 = vpack.c.b16 %v4649, %v4625
    %v7146 = vpack.c.b16 %v4650, %v4626
    %v7147 = vpack.c.b16 %v4675, %v4651
    %v7148 = vpack.c.b16 %v4676, %v4652
    %v7149 = vpack.c.b16 %v4677, %v4653
    %v7150 = vpack.c.b16 %v4678, %v4654
    %v7151 = vpack.c.b16 %v4679, %v4655
    %v7152 = vpack.c.b16 %v4680, %v4656
    %v7153 = vpack.c.b16 %v4681, %v4657
    %v7154 = vpack.c.b16 %v4682, %v4658
    %v7155 = vpack.c.b16 %v4683, %v4659
    %v7156 = vpack.c.b16 %v4684, %v4660
    %v7157 = vpack.c.b16 %v4685, %v4661
    %v7158 = vpack.c.b16 %v4686, %v4662
    %v7159 = vpack.c.b16 %v4687, %v4663
    %v7160 = vpack.c.b16 %v4688, %v4664
    %v7161 = vpack.c.b16 %v4689, %v4665
    %v7162 = vpack.c.b16 %v4690, %v4666
    %v7163 = vpack.c.b16 %v4691, %v4667
    %v7164 = vpack.c.b16 %v4692, %v4668
    %v7165 = vpack.c.b16 %v4693, %v4669
    %v7166 = vpack.c.b16 %v4694, %v4670
    %v7167 = vpack.c.b16 %v4695, %v4671
    %v7168 = vpack.c.b16 %v4696, %v4672
    %v7169 = vpack.c.b16 %v4697, %v4673
    %v7170 = vpack.c.b16 %v4698, %v4674
    %v7171 = vpack.c.b16 %v4723, %v4699
    %v7172 = vpack.c.b16 %v4724, %v4700
    %v7173 = vpack.c.b16 %v4725, %v4701
    %v7174 = vpack.c.b16 %v4726, %v4702
    %v7175 = vpack.c.b16 %v4727, %v4703
    %v7176 = vpack.c.b16 %v4728, %v4704
    %v7177 = vpack.c.b16 %v4729, %v4705
    %v7178 = vpack.c.b16 %v4730, %v4706
    %v7179 = vpack.c.b16 %v4731, %v4707
    %v7180 = vpack.c.b16 %v4732, %v4708
    %v7181 = vpack.c.b16 %v4733, %v4709
    %v7182 = vpack.c.b16 %v4734, %v4710
    %v7183 = vpack.c.b16 %v4735, %v4711
    %v7184 = vpack.c.b16 %v4736, %v4712
    %v7185 = vpack.c.b16 %v4737, %v4713
    %v7186 = vpack.c.b16 %v4738, %v4714
    %v7187 = vpack.c.b16 %v4739, %v4715
    %v7188 = vpack.c.b16 %v4740, %v4716
    %v7189 = vpack.c.b16 %v4741, %v4717
    %v7190 = vpack.c.b16 %v4742, %v4718
    %v7191 = vpack.c.b16 %v4743, %v4719
    %v7192 = vpack.c.b16 %v4744, %v4720
    %v7193 = vpack.c.b16 %v4745, %v4721
    %v7194 = vpack.c.b16 %v4746, %v4722
    %v7195 = vpack.c.b16 %v4771, %v4747
    %v7196 = vpack.c.b16 %v4772, %v4748
    %v7197 = vpack.c.b16 %v4773, %v4749
    %v7198 = vpack.c.b16 %v4774, %v4750
    %v7199 = vpack.c.b16 %v4775, %v4751
    %v7200 = vpack.c.b16 %v4776, %v4752
    %v7201 = vpack.c.b16 %v4777, %v4753
    %v7202 = vpack.c.b16 %v4778, %v4754
    %v7203 = vpack.c.b16 %v4779, %v4755
    %v7204 = vpack.c.b16 %v4780, %v4756
    %v7205 = vpack.c.b16 %v4781, %v4757
    %v7206 = vpack.c.b16 %v4782, %v4758
    %v7207 = vpack.c.b16 %v4783, %v4759
    %v7208 = vpack.c.b16 %v4784, %v4760
    %v7209 = vpack.c.b16 %v4785, %v4761
    %v7210 = vpack.c.b16 %v4786, %v4762
    %v7211 = vpack.c.b16 %v4787, %v4763
    %v7212 = vpack.c.b16 %v4788, %v4764
    %v7213 = vpack.c.b16 %v4789, %v4765
    %v7214 = vpack.c.b16 %v4790, %v4766
    %v7215 = vpack.c.b16 %v4791, %v4767
    %v7216 = vpack.c.b16 %v4792, %v4768
    %v7217 = vpack.c.b16 %v4793, %v4769
    %v7218 = vpack.c.b16 %v4794, %v4770
    %v7219 = vpack.c.b16 %v4819, %v4795
    %v7220 = vpack.c.b16 %v4820, %v4796
    %v7221 = vpack.c.b16 %v4821, %v4797
    %v7222 = vpack.c.b16 %v4822, %v4798
    %v7223 = vpack.c.b16 %v4823, %v4799
    %v7224 = vpack.c.b16 %v4824, %v4800
    %v7225 = vpack.c.b16 %v4825, %v4801
    %v7226 = vpack.c.b16 %v4826, %v4802
    %v7227 = vpack.c.b16 %v4827, %v4803
    %v7228 = vpack.c.b16 %v4828, %v4804
    %v7229 = vpack.c.b16 %v4829, %v4805
    %v7230 = vpack.c.b16 %v4830, %v4806
    %v7231 = vpack.c.b16 %v4831, %v4807
    %v7232 = vpack.c.b16 %v4832, %v4808
    %v7233 = vpack.c.b16 %v4833, %v4809
    %v7234 = vpack.c.b16 %v4834, %v4810
    %v7235 = vpack.c.b16 %v4835, %v4811
    %v7236 = vpack.c.b16 %v4836, %v4812
    %v7237 = vpack.c.b16 %v4837, %v4813
    %v7238 = vpack.c.b16 %v4838, %v4814
    %v7239 = vpack.c.b16 %v4839, %v4815
    %v7240 = vpack.c.b16 %v4840, %v4816
    %v7241 = vpack.c.b16 %v4841, %v4817
    %v7242 = vpack.c.b16 %v4842, %v4818
    %v7243 = vpack.c.b16 %v4867, %v4843
    %v7244 = vpack.c.b16 %v4868, %v4844
    %v7245 = vpack.c.b16 %v4869, %v4845
    %v7246 = vpack.c.b16 %v4870, %v4846
    %v7247 = vpack.c.b16 %v4871, %v4847
    %v7248 = vpack.c.b16 %v4872, %v4848
    %v7249 = vpack.c.b16 %v4873, %v4849
    %v7250 = vpack.c.b16 %v4874, %v4850
    %v7251 = vpack.c.b16 %v4875, %v4851
    %v7252 = vpack.c.b16 %v4876, %v4852
    %v7253 = vpack.c.b16 %v4877, %v4853
    %v7254 = vpack.c.b16 %v4878, %v4854
    %v7255 = vpack.c.b16 %v4879, %v4855
    %v7256 = vpack.c.b16 %v4880, %v4856
    %v7257 = vpack.c.b16 %v4881, %v4857
    %v7258 = vpack.c.b16 %v4882, %v4858
    %v7259 = vpack.c.b16 %v4883, %v4859
    %v7260 = vpack.c.b16 %v4884, %v4860
    %v7261 = vpack.c.b16 %v4885, %v4861
    %v7262 = vpack.c.b16 %v4886, %v4862
    %v7263 = vpack.c.b16 %v4887, %v4863
    %v7264 = vpack.c.b16 %v4888, %v4864
    %v7265 = vpack.c.b16 %v4889, %v4865
    %v7266 = vpack.c.b16 %v4890, %v4866
    %v7267 = vpack.c.b16 %v4915, %v4891
    %v7268 = vpack.c.b16 %v4916, %v4892
    %v7269 = vpack.c.b16 %v4917, %v4893
    %v7270 = vpack.c.b16 %v4918, %v4894
    %v7271 = vpack.c.b16 %v4919, %v4895
    %v7272 = vpack.c.b16 %v4920, %v4896
    %v7273 = vpack.c.b16 %v4921, %v4897
    %v7274 = vpack.c.b16 %v4922, %v4898
    %v7275 = vpack.c.b16 %v4923, %v4899
    %v7276 = vpack.c.b16 %v4924, %v4900
    %v7277 = vpack.c.b16 %v4925, %v4901
    %v7278 = vpack.c.b16 %v4926, %v4902
    %v7279 = vpack.c.b16 %v4927, %v4903
    %v7280 = vpack.c.b16 %v4928, %v4904
    %v7281 = vpack.c.b16 %v4929, %v4905
    %v7282 = vpack.c.b16 %v4930, %v4906
    %v7283 = vpack.c.b16 %v4931, %v4907
    %v7284 = vpack.c.b16 %v4932, %v4908
    %v7285 = vpack.c.b16 %v4933, %v4909
    %v7286 = vpack.c.b16 %v4934, %v4910
    %v7287 = vpack.c.b16 %v4935, %v4911
    %v7288 = vpack.c.b16 %v4936, %v4912
    %v7289 = vpack.c.b16 %v4937, %v4913
    %v7290 = vpack.c.b16 %v4938, %v4914
    %v7291 = vpack.c.b16 %v4963, %v4939
    %v7292 = vpack.c.b16 %v4964, %v4940
    %v7293 = vpack.c.b16 %v4965, %v4941
    %v7294 = vpack.c.b16 %v4966, %v4942
    %v7295 = vpack.c.b16 %v4967, %v4943
    %v7296 = vpack.c.b16 %v4968, %v4944
    %v7297 = vpack.c.b16 %v4969, %v4945
    %v7298 = vpack.c.b16 %v4970, %v4946
    %v7299 = vpack.c.b16 %v4971, %v4947
    %v7300 = vpack.c.b16 %v4972, %v4948
    %v7301 = vpack.c.b16 %v4973, %v4949
    %v7302 = vpack.c.b16 %v4974, %v4950
    %v7303 = vpack.c.b16 %v4975, %v4951
    %v7304 = vpack.c.b16 %v4976, %v4952
    %v7305 = vpack.c.b16 %v4977, %v4953
    %v7306 = vpack.c.b16 %v4978, %v4954
    %v7307 = vpack.c.b16 %v4979, %v4955
    %v7308 = vpack.c.b16 %v4980, %v4956
    %v7309 = vpack.c.b16 %v4981, %v4957
    %v7310 = vpack.c.b16 %v4982, %v4958
    %v7311 = vpack.c.b16 %v4983, %v4959
    %v7312 = vpack.c.b16 %v4984, %v4960
    %v7313 = vpack.c.b16 %v4985, %v4961
    %v7314 = vpack.c.b16 %v4986, %v4962
    %v7315 = vpack.c.b16 %v5011, %v4987
    %v7316 = vpack.c.b16 %v5012, %v4988
    %v7317 = vpack.c.b16 %v5013, %v4989
    %v7318 = vpack.c.b16 %v5014, %v4990
    %v7319 = vpack.c.b16 %v5015, %v4991
    %v7320 = vpack.c.b16 %v5016, %v4992
    %v7321 = vpack.c.b16 %v5017, %v4993
    %v7322 = vpack.c.b16 %v5018, %v4994
    %v7323 = vpack.c.b16 %v5019, %v4995
    %v7324 = vpack.c.b16 %v5020, %v4996
    %v7325 = vpack.c.b16 %v5021, %v4997
    %v7326 = vpack.c.b16 %v5022, %v4998
    %v7327 = vpack.c.b16 %v5023, %v4999
    %v7328 = vpack.c.b16 %v5024, %v5000
    %v7329 = vpack.c.b16 %v5025, %v5001
    %v7330 = vpack.c.b16 %v5026, %v5002
    %v7331 = vpack.c.b16 %v5027, %v5003
    %v7332 = vpack.c.b16 %v5028, %v5004
    %v7333 = vpack.c.b16 %v5029, %v5005
    %v7334 = vpack.c.b16 %v5030, %v5006
    %v7335 = vpack.c.b16 %v5031, %v5007
    %v7336 = vpack.c.b16 %v5032, %v5008
    %v7337 = vpack.c.b16 %v5033, %v5009
    %v7338 = vpack.c.b16 %v5034, %v5010
    %v7339 = vpack.c.b16 %v5059, %v5035
    %v7340 = vpack.c.b16 %v5060, %v5036
    %v7341 = vpack.c.b16 %v5061, %v5037
    %v7342 = vpack.c.b16 %v5062, %v5038
    %v7343 = vpack.c.b16 %v5063, %v5039
    %v7344 = vpack.c.b16 %v5064, %v5040
    %v7345 = vpack.c.b16 %v5065, %v5041
    %v7346 = vpack.c.b16 %v5066, %v5042
    %v7347 = vpack.c.b16 %v5067, %v5043
    %v7348 = vpack.c.b16 %v5068, %v5044
    %v7349 = vpack.c.b16 %v5069, %v5045
    %v7350 = vpack.c.b16 %v5070, %v5046
    %v7351 = vpack.c.b16 %v5071, %v5047
    %v7352 = vpack.c.b16 %v5072, %v5048
    %v7353 = vpack.c.b16 %v5073, %v5049
    %v7354 = vpack.c.b16 %v5074, %v5050
    %v7355 = vpack.c.b16 %v5075, %v5051
    %v7356 = vpack.c.b16 %v5076, %v5052
    %v7357 = vpack.c.b16 %v5077, %v5053
    %v7358 = vpack.c.b16 %v5078, %v5054
    %v7359 = vpack.c.b16 %v5079, %v5055
    %v7360 = vpack.c.b16 %v5080, %v5056
    %v7361 = vpack.c.b16 %v5081, %v5057
    %v7362 = vpack.c.b16 %v5082, %v5058
    %v7363 = vpack.c.b16 %v5107, %v5083
    %v7364 = vpack.c.b16 %v5108, %v5084
    %v7365 = vpack.c.b16 %v5109, %v5085
    %v7366 = vpack.c.b16 %v5110, %v5086
    %v7367 = vpack.c.b16 %v5111, %v5087
    %v7368 = vpack.c.b16 %v5112, %v5088
    %v7369 = vpack.c.b16 %v5113, %v5089
    %v7370 = vpack.c.b16 %v5114, %v5090
    %v7371 = vpack.c.b16 %v5115, %v5091
    %v7372 = vpack.c.b16 %v5116, %v5092
    %v7373 = vpack.c.b16 %v5117, %v5093
    %v7374 = vpack.c.b16 %v5118, %v5094
    %v7375 = vpack.c.b16 %v5119, %v5095
    %v7376 = vpack.c.b16 %v5120, %v5096
    %v7377 = vpack.c.b16 %v5121, %v5097
    %v7378 = vpack.c.b16 %v5122, %v5098
    %v7379 = vpack.c.b16 %v5123, %v5099
    %v7380 = vpack.c.b16 %v5124, %v5100
    %v7381 = vpack.c.b16 %v5125, %v5101
    %v7382 = vpack.c.b16 %v5126, %v5102
    %v7383 = vpack.c.b16 %v5127, %v5103
    %v7384 = vpack.c.b16 %v5128, %v5104
    %v7385 = vpack.c.b16 %v5129, %v5105
    %v7386 = vpack.c.b16 %v5130, %v5106
    %v7387 = vpack.c.b16 %v5155, %v5131
    %v7388 = vpack.c.b16 %v5156, %v5132
    %v7389 = vpack.c.b16 %v5157, %v5133
    %v7390 = vpack.c.b16 %v5158, %v5134
    %v7391 = vpack.c.b16 %v5159, %v5135
    %v7392 = vpack.c.b16 %v5160, %v5136
    %v7393 = vpack.c.b16 %v5161, %v5137
    %v7394 = vpack.c.b16 %v5162, %v5138
    %v7395 = vpack.c.b16 %v5163, %v5139
    %v7396 = vpack.c.b16 %v5164, %v5140
    %v7397 = vpack.c.b16 %v5165, %v5141
    %v7398 = vpack.c.b16 %v5166, %v5142
    %v7399 = vpack.c.b16 %v5167, %v5143
    %v7400 = vpack.c.b16 %v5168, %v5144
    %v7401 = vpack.c.b16 %v5169, %v5145
    %v7402 = vpack.c.b16 %v5170, %v5146
    %v7403 = vpack.c.b16 %v5171, %v5147
    %v7404 = vpack.c.b16 %v5172, %v5148
    %v7405 = vpack.c.b16 %v5173, %v5149
    %v7406 = vpack.c.b16 %v5174, %v5150
    %v7407 = vpack.c.b16 %v5175, %v5151
    %v7408 = vpack.c.b16 %v5176, %v5152
    %v7409 = vpack.c.b16 %v5177, %v5153
    %v7410 = vpack.c.b16 %v5178, %v5154
    %v7411 = vpack.c.b16 %v5203, %v5179
    %v7412 = vpack.c.b16 %v5204, %v5180
    %v7413 = vpack.c.b16 %v5205, %v5181
    %v7414 = vpack.c.b16 %v5206, %v5182
    %v7415 = vpack.c.b16 %v5207, %v5183
    %v7416 = vpack.c.b16 %v5208, %v5184
    %v7417 = vpack.c.b16 %v5209, %v5185
    %v7418 = vpack.c.b16 %v5210, %v5186
    %v7419 = vpack.c.b16 %v5211, %v5187
    %v7420 = vpack.c.b16 %v5212, %v5188
    %v7421 = vpack.c.b16 %v5213, %v5189
    %v7422 = vpack.c.b16 %v5214, %v5190
    %v7423 = vpack.c.b16 %v5215, %v5191
    %v7424 = vpack.c.b16 %v5216, %v5192
    %v7425 = vpack.c.b16 %v5217, %v5193
    %v7426 = vpack.c.b16 %v5218, %v5194
    %v7427 = vpack.c.b16 %v5219, %v5195
    %v7428 = vpack.c.b16 %v5220, %v5196
    %v7429 = vpack.c.b16 %v5221, %v5197
    %v7430 = vpack.c.b16 %v5222, %v5198
    %v7431 = vpack.c.b16 %v5223, %v5199
    %v7432 = vpack.c.b16 %v5224, %v5200
    %v7433 = vpack.c.b16 %v5225, %v5201
    %v7434 = vpack.c.b16 %v5226, %v5202
    %v7435 = vpack.c.b16 %v5251, %v5227
    %v7436 = vpack.c.b16 %v5252, %v5228
    %v7437 = vpack.c.b16 %v5253, %v5229
    %v7438 = vpack.c.b16 %v5254, %v5230
    %v7439 = vpack.c.b16 %v5255, %v5231
    %v7440 = vpack.c.b16 %v5256, %v5232
    %v7441 = vpack.c.b16 %v5257, %v5233
    %v7442 = vpack.c.b16 %v5258, %v5234
    %v7443 = vpack.c.b16 %v5259, %v5235
    %v7444 = vpack.c.b16 %v5260, %v5236
    %v7445 = vpack.c.b16 %v5261, %v5237
    %v7446 = vpack.c.b16 %v5262, %v5238
    %v7447 = vpack.c.b16 %v5263, %v5239
    %v7448 = vpack.c.b16 %v5264, %v5240
    %v7449 = vpack.c.b16 %v5265, %v5241
    %v7450 = vpack.c.b16 %v5266, %v5242
    %v7451 = vpack.c.b16 %v5267, %v5243
    %v7452 = vpack.c.b16 %v5268, %v5244
    %v7453 = vpack.c.b16 %v5269, %v5245
    %v7454 = vpack.c.b16 %v5270, %v5246
    %v7455 = vpack.c.b16 %v5271, %v5247
    %v7456 = vpack.c.b16 %v5272, %v5248
    %v7457 = vpack.c.b16 %v5273, %v5249
    %v7458 = vpack.c.b16 %v5274, %v5250
    %v7459 = vpack.c.b16 %v5299, %v5275
    %v7460 = vpack.c.b16 %v5300, %v5276
    %v7461 = vpack.c.b16 %v5301, %v5277
    %v7462 = vpack.c.b16 %v5302, %v5278
    %v7463 = vpack.c.b16 %v5303, %v5279
    %v7464 = vpack.c.b16 %v5304, %v5280
    %v7465 = vpack.c.b16 %v5305, %v5281
    %v7466 = vpack.c.b16 %v5306, %v5282
    %v7467 = vpack.c.b16 %v5307, %v5283
    %v7468 = vpack.c.b16 %v5308, %v5284
    %v7469 = vpack.c.b16 %v5309, %v5285
    %v7470 = vpack.c.b16 %v5310, %v5286
    %v7471 = vpack.c.b16 %v5311, %v5287
    %v7472 = vpack.c.b16 %v5312, %v5288
    %v7473 = vpack.c.b16 %v5313, %v5289
    %v7474 = vpack.c.b16 %v5314, %v5290
    %v7475 = vpack.c.b16 %v5315, %v5291
    %v7476 = vpack.c.b16 %v5316, %v5292
    %v7477 = vpack.c.b16 %v5317, %v5293
    %v7478 = vpack.c.b16 %v5318, %v5294
    %v7479 = vpack.c.b16 %v5319, %v5295
    %v7480 = vpack.c.b16 %v5320, %v5296
    %v7481 = vpack.c.b16 %v5321, %v5297
    %v7482 = vpack.c.b16 %v5322, %v5298
    %v7483 = vpack.c.b16 %v5347, %v5323
    %v7484 = vpack.c.b16 %v5348, %v5324
    %v7485 = vpack.c.b16 %v5349, %v5325
    %v7486 = vpack.c.b16 %v5350, %v5326
    %v7487 = vpack.c.b16 %v5351, %v5327
    %v7488 = vpack.c.b16 %v5352, %v5328
    %v7489 = vpack.c.b16 %v5353, %v5329
    %v7490 = vpack.c.b16 %v5354, %v5330
    %v7491 = vpack.c.b16 %v5355, %v5331
    %v7492 = vpack.c.b16 %v5356, %v5332
    %v7493 = vpack.c.b16 %v5357, %v5333
    %v7494 = vpack.c.b16 %v5358, %v5334
    %v7495 = vpack.c.b16 %v5359, %v5335
    %v7496 = vpack.c.b16 %v5360, %v5336
    %v7497 = vpack.c.b16 %v5361, %v5337
    %v7498 = vpack.c.b16 %v5362, %v5338
    %v7499 = vpack.c.b16 %v5363, %v5339
    %v7500 = vpack.c.b16 %v5364, %v5340
    %v7501 = vpack.c.b16 %v5365, %v5341
    %v7502 = vpack.c.b16 %v5366, %v5342
    %v7503 = vpack.c.b16 %v5367, %v5343
    %v7504 = vpack.c.b16 %v5368, %v5344
    %v7505 = vpack.c.b16 %v5369, %v5345
    %v7506 = vpack.c.b16 %v5370, %v5346
    %v7507 = vpack.c.b16 %v5395, %v5371
    %v7508 = vpack.c.b16 %v5396, %v5372
    %v7509 = vpack.c.b16 %v5397, %v5373
    %v7510 = vpack.c.b16 %v5398, %v5374
    %v7511 = vpack.c.b16 %v5399, %v5375
    %v7512 = vpack.c.b16 %v5400, %v5376
    %v7513 = vpack.c.b16 %v5401, %v5377
    %v7514 = vpack.c.b16 %v5402, %v5378
    %v7515 = vpack.c.b16 %v5403, %v5379
    %v7516 = vpack.c.b16 %v5404, %v5380
    %v7517 = vpack.c.b16 %v5405, %v5381
    %v7518 = vpack.c.b16 %v5406, %v5382
    %v7519 = vpack.c.b16 %v5407, %v5383
    %v7520 = vpack.c.b16 %v5408, %v5384
    %v7521 = vpack.c.b16 %v5409, %v5385
    %v7522 = vpack.c.b16 %v5410, %v5386
    %v7523 = vpack.c.b16 %v5411, %v5387
    %v7524 = vpack.c.b16 %v5412, %v5388
    %v7525 = vpack.c.b16 %v5413, %v5389
    %v7526 = vpack.c.b16 %v5414, %v5390
    %v7527 = vpack.c.b16 %v5415, %v5391
    %v7528 = vpack.c.b16 %v5416, %v5392
    %v7529 = vpack.c.b16 %v5417, %v5393
    %v7530 = vpack.c.b16 %v5418, %v5394
    %v7531 = vpack.c.b16 %v5443, %v5419
    %v7532 = vpack.c.b16 %v5444, %v5420
    %v7533 = vpack.c.b16 %v5445, %v5421
    %v7534 = vpack.c.b16 %v5446, %v5422
    %v7535 = vpack.c.b16 %v5447, %v5423
    %v7536 = vpack.c.b16 %v5448, %v5424
    %v7537 = vpack.c.b16 %v5449, %v5425
    %v7538 = vpack.c.b16 %v5450, %v5426
    %v7539 = vpack.c.b16 %v5451, %v5427
    %v7540 = vpack.c.b16 %v5452, %v5428
    %v7541 = vpack.c.b16 %v5453, %v5429
    %v7542 = vpack.c.b16 %v5454, %v5430
    %v7543 = vpack.c.b16 %v5455, %v5431
    %v7544 = vpack.c.b16 %v5456, %v5432
    %v7545 = vpack.c.b16 %v5457, %v5433
    %v7546 = vpack.c.b16 %v5458, %v5434
    %v7547 = vpack.c.b16 %v5459, %v5435
    %v7548 = vpack.c.b16 %v5460, %v5436
    %v7549 = vpack.c.b16 %v5461, %v5437
    %v7550 = vpack.c.b16 %v5462, %v5438
    %v7551 = vpack.c.b16 %v5463, %v5439
    %v7552 = vpack.c.b16 %v5464, %v5440
    %v7553 = vpack.c.b16 %v5465, %v5441
    %v7554 = vpack.c.b16 %v5466, %v5442
    %v7555 = vpack.c.b16 %v5491, %v5467
    %v7556 = vpack.c.b16 %v5492, %v5468
    %v7557 = vpack.c.b16 %v5493, %v5469
    %v7558 = vpack.c.b16 %v5494, %v5470
    %v7559 = vpack.c.b16 %v5495, %v5471
    %v7560 = vpack.c.b16 %v5496, %v5472
    %v7561 = vpack.c.b16 %v5497, %v5473
    %v7562 = vpack.c.b16 %v5498, %v5474
    %v7563 = vpack.c.b16 %v5499, %v5475
    %v7564 = vpack.c.b16 %v5500, %v5476
    %v7565 = vpack.c.b16 %v5501, %v5477
    %v7566 = vpack.c.b16 %v5502, %v5478
    %v7567 = vpack.c.b16 %v5503, %v5479
    %v7568 = vpack.c.b16 %v5504, %v5480
    %v7569 = vpack.c.b16 %v5505, %v5481
    %v7570 = vpack.c.b16 %v5506, %v5482
    %v7571 = vpack.c.b16 %v5507, %v5483
    %v7572 = vpack.c.b16 %v5508, %v5484
    %v7573 = vpack.c.b16 %v5509, %v5485
    %v7574 = vpack.c.b16 %v5510, %v5486
    %v7575 = vpack.c.b16 %v5511, %v5487
    %v7576 = vpack.c.b16 %v5512, %v5488
    %v7577 = vpack.c.b16 %v5513, %v5489
    %v7578 = vpack.c.b16 %v5514, %v5490
    %v7579 = vpack.c.b16 %v5539, %v5515
    %v7580 = vpack.c.b16 %v5540, %v5516
    %v7581 = vpack.c.b16 %v5541, %v5517
    %v7582 = vpack.c.b16 %v5542, %v5518
    %v7583 = vpack.c.b16 %v5543, %v5519
    %v7584 = vpack.c.b16 %v5544, %v5520
    %v7585 = vpack.c.b16 %v5545, %v5521
    %v7586 = vpack.c.b16 %v5546, %v5522
    %v7587 = vpack.c.b16 %v5547, %v5523
    %v7588 = vpack.c.b16 %v5548, %v5524
    %v7589 = vpack.c.b16 %v5549, %v5525
    %v7590 = vpack.c.b16 %v5550, %v5526
    %v7591 = vpack.c.b16 %v5551, %v5527
    %v7592 = vpack.c.b16 %v5552, %v5528
    %v7593 = vpack.c.b16 %v5553, %v5529
    %v7594 = vpack.c.b16 %v5554, %v5530
    %v7595 = vpack.c.b16 %v5555, %v5531
    %v7596 = vpack.c.b16 %v5556, %v5532
    %v7597 = vpack.c.b16 %v5557, %v5533
    %v7598 = vpack.c.b16 %v5558, %v5534
    %v7599 = vpack.c.b16 %v5559, %v5535
    %v7600 = vpack.c.b16 %v5560, %v5536
    %v7601 = vpack.c.b16 %v5561, %v5537
    %v7602 = vpack.c.b16 %v5562, %v5538
    %v7603 = vpack.c.b16 %v5587, %v5563
    %v7604 = vpack.c.b16 %v5588, %v5564
    %v7605 = vpack.c.b16 %v5589, %v5565
    %v7606 = vpack.c.b16 %v5590, %v5566
    %v7607 = vpack.c.b16 %v5591, %v5567
    %v7608 = vpack.c.b16 %v5592, %v5568
    %v7609 = vpack.c.b16 %v5593, %v5569
    %v7610 = vpack.c.b16 %v5594, %v5570
    %v7611 = vpack.c.b16 %v5595, %v5571
    %v7612 = vpack.c.b16 %v5596, %v5572
    %v7613 = vpack.c.b16 %v5597, %v5573
    %v7614 = vpack.c.b16 %v5598, %v5574
    %v7615 = vpack.c.b16 %v5599, %v5575
    %v7616 = vpack.c.b16 %v5600, %v5576
    %v7617 = vpack.c.b16 %v5601, %v5577
    %v7618 = vpack.c.b16 %v5602, %v5578
    %v7619 = vpack.c.b16 %v5603, %v5579
    %v7620 = vpack.c.b16 %v5604, %v5580
    %v7621 = vpack.c.b16 %v5605, %v5581
    %v7622 = vpack.c.b16 %v5606, %v5582
    %v7623 = vpack.c.b16 %v5607, %v5583
    %v7624 = vpack.c.b16 %v5608, %v5584
    %v7625 = vpack.c.b16 %v5609, %v5585
    %v7626 = vpack.c.b16 %v5610, %v5586
    %v7627 = vpack.c.b16 %v5635, %v5611
    %v7628 = vpack.c.b16 %v5636, %v5612
    %v7629 = vpack.c.b16 %v5637, %v5613
    %v7630 = vpack.c.b16 %v5638, %v5614
    %v7631 = vpack.c.b16 %v5639, %v5615
    %v7632 = vpack.c.b16 %v5640, %v5616
    %v7633 = vpack.c.b16 %v5641, %v5617
    %v7634 = vpack.c.b16 %v5642, %v5618
    %v7635 = vpack.c.b16 %v5643, %v5619
    %v7636 = vpack.c.b16 %v5644, %v5620
    %v7637 = vpack.c.b16 %v5645, %v5621
    %v7638 = vpack.c.b16 %v5646, %v5622
    %v7639 = vpack.c.b16 %v5647, %v5623
    %v7640 = vpack.c.b16 %v5648, %v5624
    %v7641 = vpack.c.b16 %v5649, %v5625
    %v7642 = vpack.c.b16 %v5650, %v5626
    %v7643 = vpack.c.b16 %v5651, %v5627
    %v7644 = vpack.c.b16 %v5652, %v5628
    %v7645 = vpack.c.b16 %v5653, %v5629
    %v7646 = vpack.c.b16 %v5654, %v5630
    %v7647 = vpack.c.b16 %v5655, %v5631
    %v7648 = vpack.c.b16 %v5656, %v5632
    %v7649 = vpack.c.b16 %v5657, %v5633
    %v7650 = vpack.c.b16 %v5658, %v5634
    %v7651 = vpack.c.b16 %v5683, %v5659
    %v7652 = vpack.c.b16 %v5684, %v5660
    %v7653 = vpack.c.b16 %v5685, %v5661
    %v7654 = vpack.c.b16 %v5686, %v5662
    %v7655 = vpack.c.b16 %v5687, %v5663
    %v7656 = vpack.c.b16 %v5688, %v5664
    %v7657 = vpack.c.b16 %v5689, %v5665
    %v7658 = vpack.c.b16 %v5690, %v5666
    %v7659 = vpack.c.b16 %v5691, %v5667
    %v7660 = vpack.c.b16 %v5692, %v5668
    %v7661 = vpack.c.b16 %v5693, %v5669
    %v7662 = vpack.c.b16 %v5694, %v5670
    %v7663 = vpack.c.b16 %v5695, %v5671
    %v7664 = vpack.c.b16 %v5696, %v5672
    %v7665 = vpack.c.b16 %v5697, %v5673
    %v7666 = vpack.c.b16 %v5698, %v5674
    %v7667 = vpack.c.b16 %v5699, %v5675
    %v7668 = vpack.c.b16 %v5700, %v5676
    %v7669 = vpack.c.b16 %v5701, %v5677
    %v7670 = vpack.c.b16 %v5702, %v5678
    %v7671 = vpack.c.b16 %v5703, %v5679
    %v7672 = vpack.c.b16 %v5704, %v5680
    %v7673 = vpack.c.b16 %v5705, %v5681
    %v7674 = vpack.c.b16 %v5706, %v5682
    %v7675 = vpack.c.b16 %v5731, %v5707
    %v7676 = vpack.c.b16 %v5732, %v5708
    %v7677 = vpack.c.b16 %v5733, %v5709
    %v7678 = vpack.c.b16 %v5734, %v5710
    %v7679 = vpack.c.b16 %v5735, %v5711
    %v7680 = vpack.c.b16 %v5736, %v5712
    %v7681 = vpack.c.b16 %v5737, %v5713
    %v7682 = vpack.c.b16 %v5738, %v5714
    %v7683 = vpack.c.b16 %v5739, %v5715
    %v7684 = vpack.c.b16 %v5740, %v5716
    %v7685 = vpack.c.b16 %v5741, %v5717
    %v7686 = vpack.c.b16 %v5742, %v5718
    %v7687 = vpack.c.b16 %v5743, %v5719
    %v7688 = vpack.c.b16 %v5744, %v5720
    %v7689 = vpack.c.b16 %v5745, %v5721
    %v7690 = vpack.c.b16 %v5746, %v5722
    %v7691 = vpack.c.b16 %v5747, %v5723
    %v7692 = vpack.c.b16 %v5748, %v5724
    %v7693 = vpack.c.b16 %v5749, %v5725
    %v7694 = vpack.c.b16 %v5750, %v5726
    %v7695 = vpack.c.b16 %v5751, %v5727
    %v7696 = vpack.c.b16 %v5752, %v5728
    %v7697 = vpack.c.b16 %v5753, %v5729
    %v7698 = vpack.c.b16 %v5754, %v5730
    %v7699 = vpack.c.b16 %v5779, %v5755
    %v7700 = vpack.c.b16 %v5780, %v5756
    %v7701 = vpack.c.b16 %v5781, %v5757
    %v7702 = vpack.c.b16 %v5782, %v5758
    %v7703 = vpack.c.b16 %v5783, %v5759
    %v7704 = vpack.c.b16 %v5784, %v5760
    %v7705 = vpack.c.b16 %v5785, %v5761
    %v7706 = vpack.c.b16 %v5786, %v5762
    %v7707 = vpack.c.b16 %v5787, %v5763
    %v7708 = vpack.c.b16 %v5788, %v5764
    %v7709 = vpack.c.b16 %v5789, %v5765
    %v7710 = vpack.c.b16 %v5790, %v5766
    %v7711 = vpack.c.b16 %v5791, %v5767
    %v7712 = vpack.c.b16 %v5792, %v5768
    %v7713 = vpack.c.b16 %v5793, %v5769
    %v7714 = vpack.c.b16 %v5794, %v5770
    %v7715 = vpack.c.b16 %v5795, %v5771
    %v7716 = vpack.c.b16 %v5796, %v5772
    %v7717 = vpack.c.b16 %v5797, %v5773
    %v7718 = vpack.c.b16 %v5798, %v5774
    %v7719 = vpack.c.b16 %v5799, %v5775
    %v7720 = vpack.c.b16 %v5800, %v5776
    %v7721 = vpack.c.b16 %v5801, %v5777
    %v7722 = vpack.c.b16 %v5802, %v5778
    %v7723 = vpack.c.b16 %v5827, %v5803
    %v7724 = vpack.c.b16 %v5828, %v5804
    %v7725 = vpack.c.b16 %v5829, %v5805
    %v7726 = vpack.c.b16 %v5830, %v5806
    %v7727 = vpack.c.b16 %v5831, %v5807
    %v7728 = vpack.c.b16 %v5832, %v5808
    %v7729 = vpack.c.b16 %v5833, %v5809
    %v7730 = vpack.c.b16 %v5834, %v5810
    %v7731 = vpack.c.b16 %v5835, %v5811
    %v7732 = vpack.c.b16 %v5836, %v5812
    %v7733 = vpack.c.b16 %v5837, %v5813
    %v7734 = vpack.c.b16 %v5838, %v5814
    %v7735 = vpack.c.b16 %v5839, %v5815
    %v7736 = vpack.c.b16 %v5840, %v5816
    %v7737 = vpack.c.b16 %v5841, %v5817
    %v7738 = vpack.c.b16 %v5842, %v5818
    %v7739 = vpack.c.b16 %v5843, %v5819
    %v7740 = vpack.c.b16 %v5844, %v5820
    %v7741 = vpack.c.b16 %v5845, %v5821
    %v7742 = vpack.c.b16 %v5846, %v5822
    %v7743 = vpack.c.b16 %v5847, %v5823
    %v7744 = vpack.c.b16 %v5848, %v5824
    %v7745 = vpack.c.b16 %v5849, %v5825
    %v7746 = vpack.c.b16 %v5850, %v5826
    %v7747 = vpack.c.b16 %v5875, %v5851
    %v7748 = vpack.c.b16 %v5876, %v5852
    %v7749 = vpack.c.b16 %v5877, %v5853
    %v7750 = vpack.c.b16 %v5878, %v5854
    %v7751 = vpack.c.b16 %v5879, %v5855
    %v7752 = vpack.c.b16 %v5880, %v5856
    %v7753 = vpack.c.b16 %v5881, %v5857
    %v7754 = vpack.c.b16 %v5882, %v5858
    %v7755 = vpack.c.b16 %v5883, %v5859
    %v7756 = vpack.c.b16 %v5884, %v5860
    %v7757 = vpack.c.b16 %v5885, %v5861
    %v7758 = vpack.c.b16 %v5886, %v5862
    %v7759 = vpack.c.b16 %v5887, %v5863
    %v7760 = vpack.c.b16 %v5888, %v5864
    %v7761 = vpack.c.b16 %v5889, %v5865
    %v7762 = vpack.c.b16 %v5890, %v5866
    %v7763 = vpack.c.b16 %v5891, %v5867
    %v7764 = vpack.c.b16 %v5892, %v5868
    %v7765 = vpack.c.b16 %v5893, %v5869
    %v7766 = vpack.c.b16 %v5894, %v5870
    %v7767 = vpack.c.b16 %v5895, %v5871
    %v7768 = vpack.c.b16 %v5896, %v5872
    %v7769 = vpack.c.b16 %v5897, %v5873
    %v7770 = vpack.c.b16 %v5898, %v5874
    %v7771 = vpack.c.b16 %v5923, %v5899
    %v7772 = vpack.c.b16 %v5924, %v5900
    %v7773 = vpack.c.b16 %v5925, %v5901
    %v7774 = vpack.c.b16 %v5926, %v5902
    %v7775 = vpack.c.b16 %v5927, %v5903
    %v7776 = vpack.c.b16 %v5928, %v5904
    %v7777 = vpack.c.b16 %v5929, %v5905
    %v7778 = vpack.c.b16 %v5930, %v5906
    %v7779 = vpack.c.b16 %v5931, %v5907
    %v7780 = vpack.c.b16 %v5932, %v5908
    %v7781 = vpack.c.b16 %v5933, %v5909
    %v7782 = vpack.c.b16 %v5934, %v5910
    %v7783 = vpack.c.b16 %v5935, %v5911
    %v7784 = vpack.c.b16 %v5936, %v5912
    %v7785 = vpack.c.b16 %v5937, %v5913
    %v7786 = vpack.c.b16 %v5938, %v5914
    %v7787 = vpack.c.b16 %v5939, %v5915
    %v7788 = vpack.c.b16 %v5940, %v5916
    %v7789 = vpack.c.b16 %v5941, %v5917
    %v7790 = vpack.c.b16 %v5942, %v5918
    %v7791 = vpack.c.b16 %v5943, %v5919
    %v7792 = vpack.c.b16 %v5944, %v5920
    %v7793 = vpack.c.b16 %v5945, %v5921
    %v7794 = vpack.c.b16 %v5946, %v5922
    %v7795 = vpack.c.b16 %v5971, %v5947
    %v7796 = vpack.c.b16 %v5972, %v5948
    %v7797 = vpack.c.b16 %v5973, %v5949
    %v7798 = vpack.c.b16 %v5974, %v5950
    %v7799 = vpack.c.b16 %v5975, %v5951
    %v7800 = vpack.c.b16 %v5976, %v5952
    %v7801 = vpack.c.b16 %v5977, %v5953
    %v7802 = vpack.c.b16 %v5978, %v5954
    %v7803 = vpack.c.b16 %v5979, %v5955
    %v7804 = vpack.c.b16 %v5980, %v5956
    %v7805 = vpack.c.b16 %v5981, %v5957
    %v7806 = vpack.c.b16 %v5982, %v5958
    %v7807 = vpack.c.b16 %v5983, %v5959
    %v7808 = vpack.c.b16 %v5984, %v5960
    %v7809 = vpack.c.b16 %v5985, %v5961
    %v7810 = vpack.c.b16 %v5986, %v5962
    %v7811 = vpack.c.b16 %v5987, %v5963
    %v7812 = vpack.c.b16 %v5988, %v5964
    %v7813 = vpack.c.b16 %v5989, %v5965
    %v7814 = vpack.c.b16 %v5990, %v5966
    %v7815 = vpack.c.b16 %v5991, %v5967
    %v7816 = vpack.c.b16 %v5992, %v5968
    %v7817 = vpack.c.b16 %v5993, %v5969
    %v7818 = vpack.c.b16 %v5994, %v5970
    %v7819 = vpack.c.b16 %v6019, %v5995
    %v7820 = vpack.c.b16 %v6020, %v5996
    %v7821 = vpack.c.b16 %v6021, %v5997
    %v7822 = vpack.c.b16 %v6022, %v5998
    %v7823 = vpack.c.b16 %v6023, %v5999
    %v7824 = vpack.c.b16 %v6024, %v6000
    %v7825 = vpack.c.b16 %v6025, %v6001
    %v7826 = vpack.c.b16 %v6026, %v6002
    %v7827 = vpack.c.b16 %v6027, %v6003
    %v7828 = vpack.c.b16 %v6028, %v6004
    %v7829 = vpack.c.b16 %v6029, %v6005
    %v7830 = vpack.c.b16 %v6030, %v6006
    %v7831 = vpack.c.b16 %v6031, %v6007
    %v7832 = vpack.c.b16 %v6032, %v6008
    %v7833 = vpack.c.b16 %v6033, %v6009
    %v7834 = vpack.c.b16 %v6034, %v6010
    %v7835 = vpack.c.b16 %v6035, %v6011
    %v7836 = vpack.c.b16 %v6036, %v6012
    %v7837 = vpack.c.b16 %v6037, %v6013
    %v7838 = vpack.c.b16 %v6038, %v6014
    %v7839 = vpack.c.b16 %v6039, %v6015
    %v7840 = vpack.c.b16 %v6040, %v6016
    %v7841 = vpack.c.b16 %v6041, %v6017
    %v7842 = vpack.c.b16 %v6042, %v6018
    %v7843 = vpack.c.b16 %v6067, %v6043
    %v7844 = vpack.c.b16 %v6068, %v6044
    %v7845 = vpack.c.b16 %v6069, %v6045
    %v7846 = vpack.c.b16 %v6070, %v6046
    %v7847 = vpack.c.b16 %v6071, %v6047
    %v7848 = vpack.c.b16 %v6072, %v6048
    %v7849 = vpack.c.b16 %v6073, %v6049
    %v7850 = vpack.c.b16 %v6074, %v6050
    %v7851 = vpack.c.b16 %v6075, %v6051
    %v7852 = vpack.c.b16 %v6076, %v6052
    %v7853 = vpack.c.b16 %v6077, %v6053
    %v7854 = vpack.c.b16 %v6078, %v6054
    %v7855 = vpack.c.b16 %v6079, %v6055
    %v7856 = vpack.c.b16 %v6080, %v6056
    %v7857 = vpack.c.b16 %v6081, %v6057
    %v7858 = vpack.c.b16 %v6082, %v6058
    %v7859 = vpack.c.b16 %v6083, %v6059
    %v7860 = vpack.c.b16 %v6084, %v6060
    %v7861 = vpack.c.b16 %v6085, %v6061
    %v7862 = vpack.c.b16 %v6086, %v6062
    %v7863 = vpack.c.b16 %v6087, %v6063
    %v7864 = vpack.c.b16 %v6088, %v6064
    %v7865 = vpack.c.b16 %v6089, %v6065
    %v7866 = vpack.c.b16 %v6090, %v6066
    %v7867 = vpack.c.b16 %v6115, %v6091
    %v7868 = vpack.c.b16 %v6116, %v6092
    %v7869 = vpack.c.b16 %v6117, %v6093
    %v7870 = vpack.c.b16 %v6118, %v6094
    %v7871 = vpack.c.b16 %v6119, %v6095
    %v7872 = vpack.c.b16 %v6120, %v6096
    %v7873 = vpack.c.b16 %v6121, %v6097
    %v7874 = vpack.c.b16 %v6122, %v6098
    %v7875 = vpack.c.b16 %v6123, %v6099
    %v7876 = vpack.c.b16 %v6124, %v6100
    %v7877 = vpack.c.b16 %v6125, %v6101
    %v7878 = vpack.c.b16 %v6126, %v6102
    %v7879 = vpack.c.b16 %v6127, %v6103
    %v7880 = vpack.c.b16 %v6128, %v6104
    %v7881 = vpack.c.b16 %v6129, %v6105
    %v7882 = vpack.c.b16 %v6130, %v6106
    %v7883 = vpack.c.b16 %v6131, %v6107
    %v7884 = vpack.c.b16 %v6132, %v6108
    %v7885 = vpack.c.b16 %v6133, %v6109
    %v7886 = vpack.c.b16 %v6134, %v6110
    %v7887 = vpack.c.b16 %v6135, %v6111
    %v7888 = vpack.c.b16 %v6136, %v6112
    %v7889 = vpack.c.b16 %v6137, %v6113
    %v7890 = vpack.c.b16 %v6138, %v6114
    %v7891 = vpack.c.b16 %v6163, %v6139
    %v7892 = vpack.c.b16 %v6164, %v6140
    %v7893 = vpack.c.b16 %v6165, %v6141
    %v7894 = vpack.c.b16 %v6166, %v6142
    %v7895 = vpack.c.b16 %v6167, %v6143
    %v7896 = vpack.c.b16 %v6168, %v6144
    %v7897 = vpack.c.b16 %v6169, %v6145
    %v7898 = vpack.c.b16 %v6170, %v6146
    %v7899 = vpack.c.b16 %v6171, %v6147
    %v7900 = vpack.c.b16 %v6172, %v6148
    %v7901 = vpack.c.b16 %v6173, %v6149
    %v7902 = vpack.c.b16 %v6174, %v6150
    %v7903 = vpack.c.b16 %v6175, %v6151
    %v7904 = vpack.c.b16 %v6176, %v6152
    %v7905 = vpack.c.b16 %v6177, %v6153
    %v7906 = vpack.c.b16 %v6178, %v6154
    %v7907 = vpack.c.b16 %v6179, %v6155
    %v7908 = vpack.c.b16 %v6180, %v6156
    %v7909 = vpack.c.b16 %v6181, %v6157
    %v7910 = vpack.c.b16 %v6182, %v6158
    %v7911 = vpack.c.b16 %v6183, %v6159
    %v7912 = vpack.c.b16 %v6184, %v6160
    %v7913 = vpack.c.b16 %v6185, %v6161
    %v7914 = vpack.c.b16 %v6186, %v6162
    %v7915 = vpack.c.b16 %v6211, %v6187
    %v7916 = vpack.c.b16 %v6212, %v6188
    %v7917 = vpack.c.b16 %v6213, %v6189
    %v7918 = vpack.c.b16 %v6214, %v6190
    %v7919 = vpack.c.b16 %v6215, %v6191
    %v7920 = vpack.c.b16 %v6216, %v6192
    %v7921 = vpack.c.b16 %v6217, %v6193
    %v7922 = vpack.c.b16 %v6218, %v6194
    %v7923 = vpack.c.b16 %v6219, %v6195
    %v7924 = vpack.c.b16 %v6220, %v6196
    %v7925 = vpack.c.b16 %v6221, %v6197
    %v7926 = vpack.c.b16 %v6222, %v6198
    %v7927 = vpack.c.b16 %v6223, %v6199
    %v7928 = vpack.c.b16 %v6224, %v6200
    %v7929 = vpack.c.b16 %v6225, %v6201
    %v7930 = vpack.c.b16 %v6226, %v6202
    %v7931 = vpack.c.b16 %v6227, %v6203
    %v7932 = vpack.c.b16 %v6228, %v6204
    %v7933 = vpack.c.b16 %v6229, %v6205
    %v7934 = vpack.c.b16 %v6230, %v6206
    %v7935 = vpack.c.b16 %v6231, %v6207
    %v7936 = vpack.c.b16 %v6232, %v6208
    %v7937 = vpack.c.b16 %v6233, %v6209
    %v7938 = vpack.c.b16 %v6234, %v6210
    %v7939 = vpack.c.b16 %v6259, %v6235
    %v7940 = vpack.c.b16 %v6260, %v6236
    %v7941 = vpack.c.b16 %v6261, %v6237
    %v7942 = vpack.c.b16 %v6262, %v6238
    %v7943 = vpack.c.b16 %v6263, %v6239
    %v7944 = vpack.c.b16 %v6264, %v6240
    %v7945 = vpack.c.b16 %v6265, %v6241
    %v7946 = vpack.c.b16 %v6266, %v6242
    %v7947 = vpack.c.b16 %v6267, %v6243
    %v7948 = vpack.c.b16 %v6268, %v6244
    %v7949 = vpack.c.b16 %v6269, %v6245
    %v7950 = vpack.c.b16 %v6270, %v6246
    %v7951 = vpack.c.b16 %v6271, %v6247
    %v7952 = vpack.c.b16 %v6272, %v6248
    %v7953 = vpack.c.b16 %v6273, %v6249
    %v7954 = vpack.c.b16 %v6274, %v6250
    %v7955 = vpack.c.b16 %v6275, %v6251
    %v7956 = vpack.c.b16 %v6276, %v6252
    %v7957 = vpack.c.b16 %v6277, %v6253
    %v7958 = vpack.c.b16 %v6278, %v6254
    %v7959 = vpack.c.b16 %v6279, %v6255
    %v7960 = vpack.c.b16 %v6280, %v6256
    %v7961 = vpack.c.b16 %v6281, %v6257
    %v7962 = vpack.c.b16 %v6282, %v6258
    %v7963 = vpack.c.b16 %v6307, %v6283
    %v7964 = vpack.c.b16 %v6308, %v6284
    %v7965 = vpack.c.b16 %v6309, %v6285
    %v7966 = vpack.c.b16 %v6310, %v6286
    %v7967 = vpack.c.b16 %v6311, %v6287
    %v7968 = vpack.c.b16 %v6312, %v6288
    %v7969 = vpack.c.b16 %v6313, %v6289
    %v7970 = vpack.c.b16 %v6314, %v6290
    %v7971 = vpack.c.b16 %v6315, %v6291
    %v7972 = vpack.c.b16 %v6316, %v6292
    %v7973 = vpack.c.b16 %v6317, %v6293
    %v7974 = vpack.c.b16 %v6318, %v6294
    %v7975 = vpack.c.b16 %v6319, %v6295
    %v7976 = vpack.c.b16 %v6320, %v6296
    %v7977 = vpack.c.b16 %v6321, %v6297
    %v7978 = vpack.c.b16 %v6322, %v6298
    %v7979 = vpack.c.b16 %v6323, %v6299
    %v7980 = vpack.c.b16 %v6324, %v6300
    %v7981 = vpack.c.b16 %v6325, %v6301
    %v7982 = vpack.c.b16 %v6326, %v6302
    %v7983 = vpack.c.b16 %v6327, %v6303
    %v7984 = vpack.c.b16 %v6328, %v6304
    %v7985 = vpack.c.b16 %v6329, %v6305
    %v7986 = vpack.c.b16 %v6330, %v6306
    %v7987 = vpack.c.b16 %v6355, %v6331
    %v7988 = vpack.c.b16 %v6356, %v6332
    %v7989 = vpack.c.b16 %v6357, %v6333
    %v7990 = vpack.c.b16 %v6358, %v6334
    %v7991 = vpack.c.b16 %v6359, %v6335
    %v7992 = vpack.c.b16 %v6360, %v6336
    %v7993 = vpack.c.b16 %v6361, %v6337
    %v7994 = vpack.c.b16 %v6362, %v6338
    %v7995 = vpack.c.b16 %v6363, %v6339
    %v7996 = vpack.c.b16 %v6364, %v6340
    %v7997 = vpack.c.b16 %v6365, %v6341
    %v7998 = vpack.c.b16 %v6366, %v6342
    %v7999 = vpack.c.b16 %v6367, %v6343
    %v8000 = vpack.c.b16 %v6368, %v6344
    %v8001 = vpack.c.b16 %v6369, %v6345
    %v8002 = vpack.c.b16 %v6370, %v6346
    %v8003 = vpack.c.b16 %v6371, %v6347
    %v8004 = vpack.c.b16 %v6372, %v6348
    %v8005 = vpack.c.b16 %v6373, %v6349
    %v8006 = vpack.c.b16 %v6374, %v6350
    %v8007 = vpack.c.b16 %v6375, %v6351
    %v8008 = vpack.c.b16 %v6376, %v6352
    %v8009 = vpack.c.b16 %v6377, %v6353
    %v8010 = vpack.c.b16 %v6378, %v6354
    %v8011 = vpack.c.b16 %v6403, %v6379
    %v8012 = vpack.c.b16 %v6404, %v6380
    %v8013 = vpack.c.b16 %v6405, %v6381
    %v8014 = vpack.c.b16 %v6406, %v6382
    %v8015 = vpack.c.b16 %v6407, %v6383
    %v8016 = vpack.c.b16 %v6408, %v6384
    %v8017 = vpack.c.b16 %v6409, %v6385
    %v8018 = vpack.c.b16 %v6410, %v6386
    %v8019 = vpack.c.b16 %v6411, %v6387
    %v8020 = vpack.c.b16 %v6412, %v6388
    %v8021 = vpack.c.b16 %v6413, %v6389
    %v8022 = vpack.c.b16 %v6414, %v6390
    %v8023 = vpack.c.b16 %v6415, %v6391
    %v8024 = vpack.c.b16 %v6416, %v6392
    %v8025 = vpack.c.b16 %v6417, %v6393
    %v8026 = vpack.c.b16 %v6418, %v6394
    %v8027 = vpack.c.b16 %v6419, %v6395
    %v8028 = vpack.c.b16 %v6420, %v6396
    %v8029 = vpack.c.b16 %v6421, %v6397
    %v8030 = vpack.c.b16 %v6422, %v6398
    %v8031 = vpack.c.b16 %v6423, %v6399
    %v8032 = vpack.c.b16 %v6424, %v6400
    %v8033 = vpack.c.b16 %v6425, %v6401
    %v8034 = vpack.c.b16 %v6426, %v6402
    %v8035 = vpack.c.b16 %v6451, %v6427
    %v8036 = vpack.c.b16 %v6452, %v6428
    %v8037 = vpack.c.b16 %v6453, %v6429
    %v8038 = vpack.c.b16 %v6454, %v6430
    %v8039 = vpack.c.b16 %v6455, %v6431
    %v8040 = vpack.c.b16 %v6456, %v6432
    %v8041 = vpack.c.b16 %v6457, %v6433
    %v8042 = vpack.c.b16 %v6458, %v6434
    %v8043 = vpack.c.b16 %v6459, %v6435
    %v8044 = vpack.c.b16 %v6460, %v6436
    %v8045 = vpack.c.b16 %v6461, %v6437
    %v8046 = vpack.c.b16 %v6462, %v6438
    %v8047 = vpack.c.b16 %v6463, %v6439
    %v8048 = vpack.c.b16 %v6464, %v6440
    %v8049 = vpack.c.b16 %v6465, %v6441
    %v8050 = vpack.c.b16 %v6466, %v6442
    %v8051 = vpack.c.b16 %v6467, %v6443
    %v8052 = vpack.c.b16 %v6468, %v6444
    %v8053 = vpack.c.b16 %v6469, %v6445
    %v8054 = vpack.c.b16 %v6470, %v6446
    %v8055 = vpack.c.b16 %v6471, %v6447
    %v8056 = vpack.c.b16 %v6472, %v6448
    %v8057 = vpack.c.b16 %v6473, %v6449
    %v8058 = vpack.c.b16 %v6474, %v6450
    %v8059 = vpack.c.b16 %v6499, %v6475
    %v8060 = vpack.c.b16 %v6500, %v6476
    %v8061 = vpack.c.b16 %v6501, %v6477
    %v8062 = vpack.c.b16 %v6502, %v6478
    %v8063 = vpack.c.b16 %v6503, %v6479
    %v8064 = vpack.c.b16 %v6504, %v6480
    %v8065 = vpack.c.b16 %v6505, %v6481
    %v8066 = vpack.c.b16 %v6506, %v6482
    %v8067 = vpack.c.b16 %v6507, %v6483
    %v8068 = vpack.c.b16 %v6508, %v6484
    %v8069 = vpack.c.b16 %v6509, %v6485
    %v8070 = vpack.c.b16 %v6510, %v6486
    %v8071 = vpack.c.b16 %v6511, %v6487
    %v8072 = vpack.c.b16 %v6512, %v6488
    %v8073 = vpack.c.b16 %v6513, %v6489
    %v8074 = vpack.c.b16 %v6514, %v6490
    %v8075 = vpack.c.b16 %v6515, %v6491
    %v8076 = vpack.c.b16 %v6516, %v6492
    %v8077 = vpack.c.b16 %v6517, %v6493
    %v8078 = vpack.c.b16 %v6518, %v6494
    %v8079 = vpack.c.b16 %v6519, %v6495
    %v8080 = vpack.c.b16 %v6520, %v6496
    %v8081 = vpack.c.b16 %v6521, %v6497
    %v8082 = vpack.c.b16 %v6522, %v6498
    %v8083 = vpack.c.b16 %v6547, %v6523
    %v8084 = vpack.c.b16 %v6548, %v6524
    %v8085 = vpack.c.b16 %v6549, %v6525
    %v8086 = vpack.c.b16 %v6550, %v6526
    %v8087 = vpack.c.b16 %v6551, %v6527
    %v8088 = vpack.c.b16 %v6552, %v6528
    %v8089 = vpack.c.b16 %v6553, %v6529
    %v8090 = vpack.c.b16 %v6554, %v6530
    %v8091 = vpack.c.b16 %v6555, %v6531
    %v8092 = vpack.c.b16 %v6556, %v6532
    %v8093 = vpack.c.b16 %v6557, %v6533
    %v8094 = vpack.c.b16 %v6558, %v6534
    %v8095 = vpack.c.b16 %v6559, %v6535
    %v8096 = vpack.c.b16 %v6560, %v6536
    %v8097 = vpack.c.b16 %v6561, %v6537
    %v8098 = vpack.c.b16 %v6562, %v6538
    %v8099 = vpack.c.b16 %v6563, %v6539
    %v8100 = vpack.c.b16 %v6564, %v6540
    %v8101 = vpack.c.b16 %v6565, %v6541
    %v8102 = vpack.c.b16 %v6566, %v6542
    %v8103 = vpack.c.b16 %v6567, %v6543
    %v8104 = vpack.c.b16 %v6568, %v6544
    %v8105 = vpack.c.b16 %v6569, %v6545
    %v8106 = vpack.c.b16 %v6570, %v6546
    %9643 = vmatprep.subr.bf16.mxu0 %v6572
    %9644 = vmatpush1.bf16.msra.mxu0 %v6571
    %9645 = vmatprep.subr.bf16.mxu0 %v6596
    %9646 = vmatpush1.bf16.msra.mxu0 %v6595
    %9647 = vmatprep.subr.bf16.mxu0 %v6620
    %9648 = vmatpush1.bf16.msra.mxu0 %v6619
    %9649 = vmatprep.subr.bf16.mxu0 %v6644
    %9650 = vmatpush1.bf16.msra.mxu0 %v6643
    %9651 = vmatprep.subr.bf16.mxu0 %v6668
    %9652 = vmatpush1.bf16.msra.mxu0 %v6667
    %9653 = vmatprep.subr.bf16.mxu0 %v6692
    %9654 = vmatpush1.bf16.msra.mxu0 %v6691
    %9655 = vmatprep.subr.bf16.mxu0 %v6716
    %9656 = vmatpush1.bf16.msra.mxu0 %v6715
    %9657 = vmatprep.subr.bf16.mxu0 %v6740
    %9658 = vmatpush1.bf16.msra.mxu0 %v6739
    %9659 = vmatprep.subr.bf16.mxu0 %v6764
    %9660 = vmatpush1.bf16.msra.mxu0 %v6763
    %9661 = vmatprep.subr.bf16.mxu0 %v6788
    %9662 = vmatpush1.bf16.msra.mxu0 %v6787
    %9663 = vmatprep.subr.bf16.mxu0 %v6812
    %9664 = vmatpush1.bf16.msra.mxu0 %v6811
    %9665 = vmatprep.subr.bf16.mxu0 %v6836
    %9666 = vmatpush1.bf16.msra.mxu0 %v6835
    %9667 = vmatprep.subr.bf16.mxu0 %v6860
    %9668 = vmatpush1.bf16.msra.mxu0 %v6859
    %9669 = vmatprep.subr.bf16.mxu0 %v6884
    %9670 = vmatpush1.bf16.msra.mxu0 %v6883
    %9671 = vmatprep.subr.bf16.mxu0 %v6908
    %9672 = vmatpush1.bf16.msra.mxu0 %v6907
    %9673 = vmatprep.subr.bf16.mxu0 %v6932
    %9674 = vmatpush1.bf16.msra.mxu0 %v6931
    %9675 = vmatprep.mubr.bf16.mxu0 %v1956
    %9676 = vmatmul.mubr.bf16.gmra.mrb[0].mxu0 %v1955
    %v9677 = vpop.f32.mrb[0].mxu0
    %v9678 = vadd.f32 0.0, %v9677
    %v9679 = vpop.f32.mrb[0].mxu0
    %v9680 = vadd.f32 0.0, %v9679
    %v9681 = vpop.f32.mrb[0].mxu0
    %v9682 = vpop.f32.mrb[0].mxu0
    %9683 = vdwg.mxu0
    %9684 = vmatprep.subr.bf16.mxu0 %v6956
    %9685 = vmatpush1.bf16.msra.mxu0 %v6955
    %9686 = vmatprep.subr.bf16.mxu0 %v6980
    %9687 = vmatpush1.bf16.msra.mxu0 %v6979
    %9688 = vmatprep.subr.bf16.mxu0 %v7004
    %9689 = vmatpush1.bf16.msra.mxu0 %v7003
    %9690 = vmatprep.subr.bf16.mxu0 %v7028
    %9691 = vmatpush1.bf16.msra.mxu0 %v7027
    %9692 = vmatprep.subr.bf16.mxu0 %v7052
    %9693 = vmatpush1.bf16.msra.mxu0 %v7051
    %9694 = vmatprep.subr.bf16.mxu0 %v7076
    %9695 = vmatpush1.bf16.msra.mxu0 %v7075
    %9696 = vmatprep.subr.bf16.mxu0 %v7100
    %9697 = vmatpush1.bf16.msra.mxu0 %v7099
    %9698 = vmatprep.subr.bf16.mxu0 %v7124
    %9699 = vmatpush1.bf16.msra.mxu0 %v7123
    %9700 = vmatprep.subr.bf16.mxu0 %v7148
    %9701 = vmatpush1.bf16.msra.mxu0 %v7147
    %9702 = vmatprep.subr.bf16.mxu0 %v7172
    %9703 = vmatpush1.bf16.msra.mxu0 %v7171
    %9704 = vmatprep.subr.bf16.mxu0 %v7196
    %9705 = vmatpush1.bf16.msra.mxu0 %v7195
    %9706 = vmatprep.subr.bf16.mxu0 %v7220
    %9707 = vmatpush1.bf16.msra.mxu0 %v7219
    %9708 = vmatprep.subr.bf16.mxu0 %v7244
    %9709 = vmatpush1.bf16.msra.mxu0 %v7243
    %9710 = vmatprep.subr.bf16.mxu0 %v7268
    %9711 = vmatpush1.bf16.msra.mxu0 %v7267
    %9712 = vmatprep.subr.bf16.mxu0 %v7292
    %9713 = vmatpush1.bf16.msra.mxu0 %v7291
    %9714 = vmatprep.subr.bf16.mxu0 %v7316
    %9715 = vmatpush1.bf16.msra.mxu0 %v7315
    %9716 = vmatprep.mubr.bf16.mxu0 %v1958
    %9717 = vmatmul.mubr.bf16.gmra.mrb[0].mxu0 %v1957
    %v9718 = vpop.f32.mrb[0].mxu0
    %v9719 = vadd.f32 %v9678, %v9718
    %v9720 = vpop.f32.mrb[0].mxu0
    %v9721 = vadd.f32 %v9680, %v9720
    %v9722 = vpop.f32.mrb[0].mxu0
    %v9723 = vpop.f32.mrb[0].mxu0
    %9724 = vdwg.mxu0
    %9725 = vmatprep.subr.bf16.mxu0 %v7340
    %9726 = vmatpush1.bf16.msra.mxu0 %v7339
    %9727 = vmatprep.subr.bf16.mxu0 %v7364
    %9728 = vmatpush1.bf16.msra.mxu0 %v7363
    %9729 = vmatprep.subr.bf16.mxu0 %v7388
    %9730 = vmatpush1.bf16.msra.mxu0 %v7387
    %9731 = vmatprep.subr.bf16.mxu0 %v7412
    %9732 = vmatpush1.bf16.msra.mxu0 %v7411
    %9733 = vmatprep.subr.bf16.mxu0 %v7436
    %9734 = vmatpush1.bf16.msra.mxu0 %v7435
    %9735 = vmatprep.subr.bf16.mxu0 %v7460
    %9736 = vmatpush1.bf16.msra.mxu0 %v7459
    %9737 = vmatprep.subr.bf16.mxu0 %v7484
    %9738 = vmatpush1.bf16.msra.mxu0 %v7483
    %9739 = vmatprep.subr.bf16.mxu0 %v7508
    %9740 = vmatpush1.bf16.msra.mxu0 %v7507
    %9741 = vmatprep.subr.bf16.mxu0 %v7532
    %9742 = vmatpush1.bf16.msra.mxu0 %v7531
    %9743 = vmatprep.subr.bf16.mxu0 %v7556
    %9744 = vmatpush1.bf16.msra.mxu0 %v7555
    %9745 = vmatprep.subr.bf16.mxu0 %v7580
    %9746 = vmatpush1.bf16.msra.mxu0 %v7579
    %9747 = vmatprep.subr.bf16.mxu0 %v7604
    %9748 = vmatpush1.bf16.msra.mxu0 %v7603
    %9749 = vmatprep.subr.bf16.mxu0 %v7628
    %9750 = vmatpush1.bf16.msra.mxu0 %v7627
    %9751 = vmatprep.subr.bf16.mxu0 %v7652
    %9752 = vmatpush1.bf16.msra.mxu0 %v7651
    %9753 = vmatprep.subr.bf16.mxu0 %v7676
    %9754 = vmatpush1.bf16.msra.mxu0 %v7675
    %9755 = vmatprep.subr.bf16.mxu0 %v7700
    %9756 = vmatpush1.bf16.msra.mxu0 %v7699
    %9757 = vmatprep.mubr.bf16.mxu0 %v1960
    %9758 = vmatmul.mubr.bf16.gmra.mrb[0].mxu0 %v1959
    %v9759 = vpop.f32.mrb[0].mxu0
    %v9760 = vadd.f32 %v9719, %v9759
    %v9761 = vpop.f32.mrb[0].mxu0
    %v9762 = vadd.f32 %v9721, %v9761
    %v9763 = vpop.f32.mrb[0].mxu0
    %v9764 = vpop.f32.mrb[0].mxu0
    %9765 = vdwg.mxu0
    %9766 = vmatprep.subr.bf16.mxu0 %v7724
    %9767 = vmatpush1.bf16.msra.mxu0 %v7723
    %9768 = vmatprep.subr.bf16.mxu0 %v7748
    %9769 = vmatpush1.bf16.msra.mxu0 %v7747
    %9770 = vmatprep.subr.bf16.mxu0 %v7772
    %9771 = vmatpush1.bf16.msra.mxu0 %v7771
    %9772 = vmatprep.subr.bf16.mxu0 %v7796
    %9773 = vmatpush1.bf16.msra.mxu0 %v7795
    %9774 = vmatprep.subr.bf16.mxu0 %v7820
    %9775 = vmatpush1.bf16.msra.mxu0 %v7819
    %9776 = vmatprep.subr.bf16.mxu0 %v7844
    %9777 = vmatpush1.bf16.msra.mxu0 %v7843
    %9778 = vmatprep.subr.bf16.mxu0 %v7868
    %9779 = vmatpush1.bf16.msra.mxu0 %v7867
    %9780 = vmatprep.subr.bf16.mxu0 %v7892
    %9781 = vmatpush1.bf16.msra.mxu0 %v7891
    %9782 = vmatprep.subr.bf16.mxu0 %v7916
    %9783 = vmatpush1.bf16.msra.mxu0 %v7915
    %9784 = vmatprep.subr.bf16.mxu0 %v7940
    %9785 = vmatpush1.bf16.msra.mxu0 %v7939
    %9786 = vmatprep.subr.bf16.mxu0 %v7964
    %9787 = vmatpush1.bf16.msra.mxu0 %v7963
    %9788 = vmatprep.subr.bf16.mxu0 %v7988
    %9789 = vmatpush1.bf16.msra.mxu0 %v7987
    %9790 = vmatprep.subr.bf16.mxu0 %v8012
    %9791 = vmatpush1.bf16.msra.mxu0 %v8011
    %9792 = vmatprep.subr.bf16.mxu0 %v8036
    %9793 = vmatpush1.bf16.msra.mxu0 %v8035
    %9794 = vmatprep.subr.bf16.mxu0 %v8060
    %9795 = vmatpush1.bf16.msra.mxu0 %v8059
    %9796 = vmatprep.subr.bf16.mxu0 %v8084
    %9797 = vmatpush1.bf16.msra.mxu0 %v8083
    %9798 = vmatprep.mubr.bf16.mxu0 %v1962
    %9799 = vmatmul.mubr.bf16.gmra.mrb[0].mxu0 %v1961
    %v9800 = vpop.f32.mrb[0].mxu0
    %v9801 = vadd.f32 %v9760, %v9800
    %v9802 = vpop.f32.mrb[0].mxu0
    %v9803 = vadd.f32 %v9762, %v9802
    %v9804 = vpop.f32.mrb[0].mxu0
    %v9805 = vpop.f32.mrb[0].mxu0
    %9806 = vdwg.mxu0
    %9807 = vmatprep.subr.bf16.mxu0 %v6574
    %9808 = vmatpush1.bf16.msra.mxu0 %v6573
    %9809 = vmatprep.subr.bf16.mxu0 %v6598
    %9810 = vmatpush1.bf16.msra.mxu0 %v6597
    %9811 = vmatprep.subr.bf16.mxu0 %v6622
    %9812 = vmatpush1.bf16.msra.mxu0 %v6621
    %9813 = vmatprep.subr.bf16.mxu0 %v6646
    %9814 = vmatpush1.bf16.msra.mxu0 %v6645
    %9815 = vmatprep.subr.bf16.mxu0 %v6670
    %9816 = vmatpush1.bf16.msra.mxu0 %v6669
    %9817 = vmatprep.subr.bf16.mxu0 %v6694
    %9818 = vmatpush1.bf16.msra.mxu0 %v6693
    %9819 = vmatprep.subr.bf16.mxu0 %v6718
    %9820 = vmatpush1.bf16.msra.mxu0 %v6717
    %9821 = vmatprep.subr.bf16.mxu0 %v6742
    %9822 = vmatpush1.bf16.msra.mxu0 %v6741
    %9823 = vmatprep.subr.bf16.mxu0 %v6766
    %9824 = vmatpush1.bf16.msra.mxu0 %v6765
    %9825 = vmatprep.subr.bf16.mxu0 %v6790
    %9826 = vmatpush1.bf16.msra.mxu0 %v6789
    %9827 = vmatprep.subr.bf16.mxu0 %v6814
    %9828 = vmatpush1.bf16.msra.mxu0 %v6813
    %9829 = vmatprep.subr.bf16.mxu0 %v6838
    %9830 = vmatpush1.bf16.msra.mxu0 %v6837
    %9831 = vmatprep.subr.bf16.mxu0 %v6862
    %9832 = vmatpush1.bf16.msra.mxu0 %v6861
    %9833 = vmatprep.subr.bf16.mxu0 %v6886
    %9834 = vmatpush1.bf16.msra.mxu0 %v6885
    %9835 = vmatprep.subr.bf16.mxu0 %v6910
    %9836 = vmatpush1.bf16.msra.mxu0 %v6909
    %9837 = vmatprep.subr.bf16.mxu0 %v6934
    %9838 = vmatpush1.bf16.msra.mxu0 %v6933
    %9839 = vmatprep.mubr.bf16.mxu0 %v1956
    %9840 = vmatmul.mubr.bf16.gmra.mrb[0].mxu0 %v1955
    %v9841 = vpop.f32.mrb[0].mxu0
    %v9842 = vadd.f32 0.0, %v9841
    %v9843 = vpop.f32.mrb[0].mxu0
    %v9844 = vadd.f32 0.0, %v9843
    %v9845 = vpop.f32.mrb[0].mxu0
    %v9846 = vpop.f32.mrb[0].mxu0
    %9847 = vdwg.mxu0
    %9848 = vmatprep.subr.bf16.mxu0 %v6958
    %9849 = vmatpush1.bf16.msra.mxu0 %v6957
    %9850 = vmatprep.subr.bf16.mxu0 %v6982
    %9851 = vmatpush1.bf16.msra.mxu0 %v6981
    %9852 = vmatprep.subr.bf16.mxu0 %v7006
    %9853 = vmatpush1.bf16.msra.mxu0 %v7005
    %9854 = vmatprep.subr.bf16.mxu0 %v7030
    %9855 = vmatpush1.bf16.msra.mxu0 %v7029
    %9856 = vmatprep.subr.bf16.mxu0 %v7054
    %9857 = vmatpush1.bf16.msra.mxu0 %v7053
    %9858 = vmatprep.subr.bf16.mxu0 %v7078
    %9859 = vmatpush1.bf16.msra.mxu0 %v7077
    %9860 = vmatprep.subr.bf16.mxu0 %v7102
    %9861 = vmatpush1.bf16.msra.mxu0 %v7101
    %9862 = vmatprep.subr.bf16.mxu0 %v7126
    %9863 = vmatpush1.bf16.msra.mxu0 %v7125
    %9864 = vmatprep.subr.bf16.mxu0 %v7150
    %9865 = vmatpush1.bf16.msra.mxu0 %v7149
    %9866 = vmatprep.subr.bf16.mxu0 %v7174
    %9867 = vmatpush1.bf16.msra.mxu0 %v7173
    %9868 = vmatprep.subr.bf16.mxu0 %v7198
    %9869 = vmatpush1.bf16.msra.mxu0 %v7197
    %9870 = vmatprep.subr.bf16.mxu0 %v7222
    %9871 = vmatpush1.bf16.msra.mxu0 %v7221
    %9872 = vmatprep.subr.bf16.mxu0 %v7246
    %9873 = vmatpush1.bf16.msra.mxu0 %v7245
    %9874 = vmatprep.subr.bf16.mxu0 %v7270
    %9875 = vmatpush1.bf16.msra.mxu0 %v7269
    %9876 = vmatprep.subr.bf16.mxu0 %v7294
    %9877 = vmatpush1.bf16.msra.mxu0 %v7293
    %9878 = vmatprep.subr.bf16.mxu0 %v7318
    %9879 = vmatpush1.bf16.msra.mxu0 %v7317
    %9880 = vmatprep.mubr.bf16.mxu0 %v1958
    %9881 = vmatmul.mubr.bf16.gmra.mrb[0].mxu0 %v1957
    %v9882 = vpop.f32.mrb[0].mxu0
    %v9883 = vadd.f32 %v9842, %v9882
    %v9884 = vpop.f32.mrb[0].mxu0
    %v9885 = vadd.f32 %v9844, %v9884
    %v9886 = vpop.f32.mrb[0].mxu0
    %v9887 = vpop.f32.mrb[0].mxu0
    %9888 = vdwg.mxu0
    %9889 = vmatprep.subr.bf16.mxu0 %v7342
    %9890 = vmatpush1.bf16.msra.mxu0 %v7341
    %9891 = vmatprep.subr.bf16.mxu0 %v7366
    %9892 = vmatpush1.bf16.msra.mxu0 %v7365
    %9893 = vmatprep.subr.bf16.mxu0 %v7390
    %9894 = vmatpush1.bf16.msra.mxu0 %v7389
    %9895 = vmatprep.subr.bf16.mxu0 %v7414
    %9896 = vmatpush1.bf16.msra.mxu0 %v7413
    %9897 = vmatprep.subr.bf16.mxu0 %v7438
    %9898 = vmatpush1.bf16.msra.mxu0 %v7437
    %9899 = vmatprep.subr.bf16.mxu0 %v7462
    %9900 = vmatpush1.bf16.msra.mxu0 %v7461
    %9901 = vmatprep.subr.bf16.mxu0 %v7486
    %9902 = vmatpush1.bf16.msra.mxu0 %v7485
    %9903 = vmatprep.subr.bf16.mxu0 %v7510
    %9904 = vmatpush1.bf16.msra.mxu0 %v7509
    %9905 = vmatprep.subr.bf16.mxu0 %v7534
    %9906 = vmatpush1.bf16.msra.mxu0 %v7533
    %9907 = vmatprep.subr.bf16.mxu0 %v7558
    %9908 = vmatpush1.bf16.msra.mxu0 %v7557
    %9909 = vmatprep.subr.bf16.mxu0 %v7582
    %9910 = vmatpush1.bf16.msra.mxu0 %v7581
    %9911 = vmatprep.subr.bf16.mxu0 %v7606
    %9912 = vmatpush1.bf16.msra.mxu0 %v7605
    %9913 = vmatprep.subr.bf16.mxu0 %v7630
    %9914 = vmatpush1.bf16.msra.mxu0 %v7629
    %9915 = vmatprep.subr.bf16.mxu0 %v7654
    %9916 = vmatpush1.bf16.msra.mxu0 %v7653
    %9917 = vmatprep.subr.bf16.mxu0 %v7678
    %9918 = vmatpush1.bf16.msra.mxu0 %v7677
    %9919 = vmatprep.subr.bf16.mxu0 %v7702
    %9920 = vmatpush1.bf16.msra.mxu0 %v7701
    %9921 = vmatprep.mubr.bf16.mxu0 %v1960
    %9922 = vmatmul.mubr.bf16.gmra.mrb[0].mxu0 %v1959
    %v9923 = vpop.f32.mrb[0].mxu0
    %v9924 = vadd.f32 %v9883, %v9923
    %v9925 = vpop.f32.mrb[0].mxu0
    %v9926 = vadd.f32 %v9885, %v9925
    %v9927 = vpop.f32.mrb[0].mxu0
    %v9928 = vpop.f32.mrb[0].mxu0
    %9929 = vdwg.mxu0
    %9930 = vmatprep.subr.bf16.mxu0 %v7726
    %9931 = vmatpush1.bf16.msra.mxu0 %v7725
    %9932 = vmatprep.subr.bf16.mxu0 %v7750
    %9933 = vmatpush1.bf16.msra.mxu0 %v7749
    %9934 = vmatprep.subr.bf16.mxu0 %v7774
    %9935 = vmatpush1.bf16.msra.mxu0 %v7773
    %9936 = vmatprep.subr.bf16.mxu0 %v7798
    %9937 = vmatpush1.bf16.msra.mxu0 %v7797
    %9938 = vmatprep.subr.bf16.mxu0 %v7822
    %9939 = vmatpush1.bf16.msra.mxu0 %v7821
    %9940 = vmatprep.subr.bf16.mxu0 %v7846
    %9941 = vmatpush1.bf16.msra.mxu0 %v7845
    %9942 = vmatprep.subr.bf16.mxu0 %v7870
    %9943 = vmatpush1.bf16.msra.mxu0 %v7869
    %9944 = vmatprep.subr.bf16.mxu0 %v7894
    %9945 = vmatpush1.bf16.msra.mxu0 %v7893
    %9946 = vmatprep.subr.bf16.mxu0 %v7918
    %9947 = vmatpush1.bf16.msra.mxu0 %v7917
    %9948 = vmatprep.subr.bf16.mxu0 %v7942
    %9949 = vmatpush1.bf16.msra.mxu0 %v7941
    %9950 = vmatprep.subr.bf16.mxu0 %v7966
    %9951 = vmatpush1.bf16.msra.mxu0 %v7965
    %9952 = vmatprep.subr.bf16.mxu0 %v7990
    %9953 = vmatpush1.bf16.msra.mxu0 %v7989
    %9954 = vmatprep.subr.bf16.mxu0 %v8014
    %9955 = vmatpush1.bf16.msra.mxu0 %v8013
    %9956 = vmatprep.subr.bf16.mxu0 %v8038
    %9957 = vmatpush1.bf16.msra.mxu0 %v8037
    %9958 = vmatprep.subr.bf16.mxu0 %v8062
    %9959 = vmatpush1.bf16.msra.mxu0 %v8061
    %9960 = vmatprep.subr.bf16.mxu0 %v8086
    %9961 = vmatpush1.bf16.msra.mxu0 %v8085
    %9962 = vmatprep.mubr.bf16.mxu0 %v1962
    %9963 = vmatmul.mubr.bf16.gmra.mrb[0].mxu0 %v1961
    %v9964 = vpop.f32.mrb[0].mxu0
    %v9965 = vadd.f32 %v9924, %v9964
    %v9966 = vpop.f32.mrb[0].mxu0
    %v9967 = vadd.f32 %v9926, %v9966
    %v9968 = vpop.f32.mrb[0].mxu0
    %v9969 = vpop.f32.mrb[0].mxu0
    %9970 = vdwg.mxu0
    %9971 = vmatprep.subr.bf16.mxu0 %v6576
    %9972 = vmatpush1.bf16.msra.mxu0 %v6575
    %9973 = vmatprep.subr.bf16.mxu0 %v6600
    %9974 = vmatpush1.bf16.msra.mxu0 %v6599
    %9975 = vmatprep.subr.bf16.mxu0 %v6624
    %9976 = vmatpush1.bf16.msra.mxu0 %v6623
    %9977 = vmatprep.subr.bf16.mxu0 %v6648
    %9978 = vmatpush1.bf16.msra.mxu0 %v6647
    %9979 = vmatprep.subr.bf16.mxu0 %v6672
    %9980 = vmatpush1.bf16.msra.mxu0 %v6671
    %9981 = vmatprep.subr.bf16.mxu0 %v6696
    %9982 = vmatpush1.bf16.msra.mxu0 %v6695
    %9983 = vmatprep.subr.bf16.mxu0 %v6720
    %9984 = vmatpush1.bf16.msra.mxu0 %v6719
    %9985 = vmatprep.subr.bf16.mxu0 %v6744
    %9986 = vmatpush1.bf16.msra.mxu0 %v6743
    %9987 = vmatprep.subr.bf16.mxu0 %v6768
    %9988 = vmatpush1.bf16.msra.mxu0 %v6767
    %9989 = vmatprep.subr.bf16.mxu0 %v6792
    %9990 = vmatpush1.bf16.msra.mxu0 %v6791
    %9991 = vmatprep.subr.bf16.mxu0 %v6816
    %9992 = vmatpush1.bf16.msra.mxu0 %v6815
    %9993 = vmatprep.subr.bf16.mxu0 %v6840
    %9994 = vmatpush1.bf16.msra.mxu0 %v6839
    %9995 = vmatprep.subr.bf16.mxu0 %v6864
    %9996 = vmatpush1.bf16.msra.mxu0 %v6863
    %9997 = vmatprep.subr.bf16.mxu0 %v6888
    %9998 = vmatpush1.bf16.msra.mxu0 %v6887
    %9999 = vmatprep.subr.bf16.mxu0 %v6912
    %10000 = vmatpush1.bf16.msra.mxu0 %v6911
    %10001 = vmatprep.subr.bf16.mxu0 %v6936
    %10002 = vmatpush1.bf16.msra.mxu0 %v6935
    %10003 = vmatprep.mubr.bf16.mxu0 %v1956
    %10004 = vmatmul.mubr.bf16.gmra.mrb[0].mxu0 %v1955
    %v10005 = vpop.f32.mrb[0].mxu0
    %v10006 = vadd.f32 0.0, %v10005
    %v10007 = vpop.f32.mrb[0].mxu0
    %v10008 = vadd.f32 0.0, %v10007
    %v10009 = vpop.f32.mrb[0].mxu0
    %v10010 = vpop.f32.mrb[0].mxu0
    %10011 = vdwg.mxu0
    %10012 = vmatprep.subr.bf16.mxu0 %v6960
    %10013 = vmatpush1.bf16.msra.mxu0 %v6959
    %10014 = vmatprep.subr.bf16.mxu0 %v6984
    %10015 = vmatpush1.bf16.msra.mxu0 %v6983
    %10016 = vmatprep.subr.bf16.mxu0 %v7008
    %10017 = vmatpush1.bf16.msra.mxu0 %v7007
    %10018 = vmatprep.subr.bf16.mxu0 %v7032
    %10019 = vmatpush1.bf16.msra.mxu0 %v7031
    %10020 = vmatprep.subr.bf16.mxu0 %v7056
    %10021 = vmatpush1.bf16.msra.mxu0 %v7055
    %10022 = vmatprep.subr.bf16.mxu0 %v7080
    %10023 = vmatpush1.bf16.msra.mxu0 %v7079
    %10024 = vmatprep.subr.bf16.mxu0 %v7104
    %10025 = vmatpush1.bf16.msra.mxu0 %v7103
    %10026 = vmatprep.subr.bf16.mxu0 %v7128
    %10027 = vmatpush1.bf16.msra.mxu0 %v7127
    %10028 = vmatprep.subr.bf16.mxu0 %v7152
    %10029 = vmatpush1.bf16.msra.mxu0 %v7151
    %10030 = vmatprep.subr.bf16.mxu0 %v7176
    %10031 = vmatpush1.bf16.msra.mxu0 %v7175
    %10032 = vmatprep.subr.bf16.mxu0 %v7200
    %10033 = vmatpush1.bf16.msra.mxu0 %v7199
    %10034 = vmatprep.subr.bf16.mxu0 %v7224
    %10035 = vmatpush1.bf16.msra.mxu0 %v7223
    %10036 = vmatprep.subr.bf16.mxu0 %v7248
    %10037 = vmatpush1.bf16.msra.mxu0 %v7247
    %10038 = vmatprep.subr.bf16.mxu0 %v7272
    %10039 = vmatpush1.bf16.msra.mxu0 %v7271
    %10040 = vmatprep.subr.bf16.mxu0 %v7296
    %10041 = vmatpush1.bf16.msra.mxu0 %v7295
    %10042 = vmatprep.subr.bf16.mxu0 %v7320
    %10043 = vmatpush1.bf16.msra.mxu0 %v7319
    %10044 = vmatprep.mubr.bf16.mxu0 %v1958
    %10045 = vmatmul.mubr.bf16.gmra.mrb[0].mxu0 %v1957
    %v10046 = vpop.f32.mrb[0].mxu0
    %v10047 = vadd.f32 %v10006, %v10046
    %v10048 = vpop.f32.mrb[0].mxu0
    %v10049 = vadd.f32 %v10008, %v10048
    %v10050 = vpop.f32.mrb[0].mxu0
    %v10051 = vpop.f32.mrb[0].mxu0
    %10052 = vdwg.mxu0
    %10053 = vmatprep.subr.bf16.mxu0 %v7344
    %10054 = vmatpush1.bf16.msra.mxu0 %v7343
    %10055 = vmatprep.subr.bf16.mxu0 %v7368
    %10056 = vmatpush1.bf16.msra.mxu0 %v7367
    %10057 = vmatprep.subr.bf16.mxu0 %v7392
    %10058 = vmatpush1.bf16.msra.mxu0 %v7391
    %10059 = vmatprep.subr.bf16.mxu0 %v7416
    %10060 = vmatpush1.bf16.msra.mxu0 %v7415
    %10061 = vmatprep.subr.bf16.mxu0 %v7440
    %10062 = vmatpush1.bf16.msra.mxu0 %v7439
    %10063 = vmatprep.subr.bf16.mxu0 %v7464
    %10064 = vmatpush1.bf16.msra.mxu0 %v7463
    %10065 = vmatprep.subr.bf16.mxu0 %v7488
    %10066 = vmatpush1.bf16.msra.mxu0 %v7487
    %10067 = vmatprep.subr.bf16.mxu0 %v7512
    %10068 = vmatpush1.bf16.msra.mxu0 %v7511
    %10069 = vmatprep.subr.bf16.mxu0 %v7536
    %10070 = vmatpush1.bf16.msra.mxu0 %v7535
    %10071 = vmatprep.subr.bf16.mxu0 %v7560
    %10072 = vmatpush1.bf16.msra.mxu0 %v7559
    %10073 = vmatprep.subr.bf16.mxu0 %v7584
    %10074 = vmatpush1.bf16.msra.mxu0 %v7583
    %10075 = vmatprep.subr.bf16.mxu0 %v7608
    %10076 = vmatpush1.bf16.msra.mxu0 %v7607
    %10077 = vmatprep.subr.bf16.mxu0 %v7632
    %10078 = vmatpush1.bf16.msra.mxu0 %v7631
    %10079 = vmatprep.subr.bf16.mxu0 %v7656
    %10080 = vmatpush1.bf16.msra.mxu0 %v7655
    %10081 = vmatprep.subr.bf16.mxu0 %v7680
    %10082 = vmatpush1.bf16.msra.mxu0 %v7679
    %10083 = vmatprep.subr.bf16.mxu0 %v7704
    %10084 = vmatpush1.bf16.msra.mxu0 %v7703
    %10085 = vmatprep.mubr.bf16.mxu0 %v1960
    %10086 = vmatmul.mubr.bf16.gmra.mrb[0].mxu0 %v1959
    %v10087 = vpop.f32.mrb[0].mxu0
    %v10088 = vadd.f32 %v10047, %v10087
    %v10089 = vpop.f32.mrb[0].mxu0
    %v10090 = vadd.f32 %v10049, %v10089
    %v10091 = vpop.f32.mrb[0].mxu0
    %v10092 = vpop.f32.mrb[0].mxu0
    %10093 = vdwg.mxu0
    %10094 = vmatprep.subr.bf16.mxu0 %v7728
    %10095 = vmatpush1.bf16.msra.mxu0 %v7727
    %10096 = vmatprep.subr.bf16.mxu0 %v7752
    %10097 = vmatpush1.bf16.msra.mxu0 %v7751
    %10098 = vmatprep.subr.bf16.mxu0 %v7776
    %10099 = vmatpush1.bf16.msra.mxu0 %v7775
    %10100 = vmatprep.subr.bf16.mxu0 %v7800
    %10101 = vmatpush1.bf16.msra.mxu0 %v7799
    %10102 = vmatprep.subr.bf16.mxu0 %v7824
    %10103 = vmatpush1.bf16.msra.mxu0 %v7823
    %10104 = vmatprep.subr.bf16.mxu0 %v7848
    %10105 = vmatpush1.bf16.msra.mxu0 %v7847
    %10106 = vmatprep.subr.bf16.mxu0 %v7872
    %10107 = vmatpush1.bf16.msra.mxu0 %v7871
    %10108 = vmatprep.subr.bf16.mxu0 %v7896
    %10109 = vmatpush1.bf16.msra.mxu0 %v7895
    %10110 = vmatprep.subr.bf16.mxu0 %v7920
    %10111 = vmatpush1.bf16.msra.mxu0 %v7919
    %10112 = vmatprep.subr.bf16.mxu0 %v7944
    %10113 = vmatpush1.bf16.msra.mxu0 %v7943
    %10114 = vmatprep.subr.bf16.mxu0 %v7968
    %10115 = vmatpush1.bf16.msra.mxu0 %v7967
    %10116 = vmatprep.subr.bf16.mxu0 %v7992
    %10117 = vmatpush1.bf16.msra.mxu0 %v7991
    %10118 = vmatprep.subr.bf16.mxu0 %v8016
    %10119 = vmatpush1.bf16.msra.mxu0 %v8015
    %10120 = vmatprep.subr.bf16.mxu0 %v8040
    %10121 = vmatpush1.bf16.msra.mxu0 %v8039
    %10122 = vmatprep.subr.bf16.mxu0 %v8064
    %10123 = vmatpush1.bf16.msra.mxu0 %v8063
    %10124 = vmatprep.subr.bf16.mxu0 %v8088
    %10125 = vmatpush1.bf16.msra.mxu0 %v8087
    %10126 = vmatprep.mubr.bf16.mxu0 %v1962
    %10127 = vmatmul.mubr.bf16.gmra.mrb[0].mxu0 %v1961
    %v10128 = vpop.f32.mrb[0].mxu0
    %v10129 = vadd.f32 %v10088, %v10128
    %v10130 = vpop.f32.mrb[0].mxu0
    %v10131 = vadd.f32 %v10090, %v10130
    %v10132 = vpop.f32.mrb[0].mxu0
    %v10133 = vpop.f32.mrb[0].mxu0
    %10134 = vdwg.mxu0
    %10135 = vmatprep.subr.bf16.mxu0 %v6578
    %10136 = vmatpush1.bf16.msra.mxu0 %v6577
    %10137 = vmatprep.subr.bf16.mxu0 %v6602
    %10138 = vmatpush1.bf16.msra.mxu0 %v6601
    %10139 = vmatprep.subr.bf16.mxu0 %v6626
    %10140 = vmatpush1.bf16.msra.mxu0 %v6625
    %10141 = vmatprep.subr.bf16.mxu0 %v6650
    %10142 = vmatpush1.bf16.msra.mxu0 %v6649
    %10143 = vmatprep.subr.bf16.mxu0 %v6674
    %10144 = vmatpush1.bf16.msra.mxu0 %v6673
    %10145 = vmatprep.subr.bf16.mxu0 %v6698
    %10146 = vmatpush1.bf16.msra.mxu0 %v6697
    %10147 = vmatprep.subr.bf16.mxu0 %v6722
    %10148 = vmatpush1.bf16.msra.mxu0 %v6721
    %10149 = vmatprep.subr.bf16.mxu0 %v6746
    %10150 = vmatpush1.bf16.msra.mxu0 %v6745
    %10151 = vmatprep.subr.bf16.mxu0 %v6770
    %10152 = vmatpush1.bf16.msra.mxu0 %v6769
    %10153 = vmatprep.subr.bf16.mxu0 %v6794
    %10154 = vmatpush1.bf16.msra.mxu0 %v6793
    %10155 = vmatprep.subr.bf16.mxu0 %v6818
    %10156 = vmatpush1.bf16.msra.mxu0 %v6817
    %10157 = vmatprep.subr.bf16.mxu0 %v6842
    %10158 = vmatpush1.bf16.msra.mxu0 %v6841
    %10159 = vmatprep.subr.bf16.mxu0 %v6866
    %10160 = vmatpush1.bf16.msra.mxu0 %v6865
    %10161 = vmatprep.subr.bf16.mxu0 %v6890
    %10162 = vmatpush1.bf16.msra.mxu0 %v6889
    %10163 = vmatprep.subr.bf16.mxu0 %v6914
    %10164 = vmatpush1.bf16.msra.mxu0 %v6913
    %10165 = vmatprep.subr.bf16.mxu0 %v6938
    %10166 = vmatpush1.bf16.msra.mxu0 %v6937
    %10167 = vmatprep.mubr.bf16.mxu0 %v1956
    %10168 = vmatmul.mubr.bf16.gmra.mrb[0].mxu0 %v1955
    %v10169 = vpop.f32.mrb[0].mxu0
    %v10170 = vadd.f32 0.0, %v10169
    %v10171 = vpop.f32.mrb[0].mxu0
    %v10172 = vadd.f32 0.0, %v10171
    %v10173 = vpop.f32.mrb[0].mxu0
    %v10174 = vpop.f32.mrb[0].mxu0
    %10175 = vdwg.mxu0
    %10176 = vmatprep.subr.bf16.mxu0 %v6962
    %10177 = vmatpush1.bf16.msra.mxu0 %v6961
    %10178 = vmatprep.subr.bf16.mxu0 %v6986
    %10179 = vmatpush1.bf16.msra.mxu0 %v6985
    %10180 = vmatprep.subr.bf16.mxu0 %v7010
    %10181 = vmatpush1.bf16.msra.mxu0 %v7009
    %10182 = vmatprep.subr.bf16.mxu0 %v7034
    %10183 = vmatpush1.bf16.msra.mxu0 %v7033
    %10184 = vmatprep.subr.bf16.mxu0 %v7058
    %10185 = vmatpush1.bf16.msra.mxu0 %v7057
    %10186 = vmatprep.subr.bf16.mxu0 %v7082
    %10187 = vmatpush1.bf16.msra.mxu0 %v7081
    %10188 = vmatprep.subr.bf16.mxu0 %v7106
    %10189 = vmatpush1.bf16.msra.mxu0 %v7105
    %10190 = vmatprep.subr.bf16.mxu0 %v7130
    %10191 = vmatpush1.bf16.msra.mxu0 %v7129
    %10192 = vmatprep.subr.bf16.mxu0 %v7154
    %10193 = vmatpush1.bf16.msra.mxu0 %v7153
    %10194 = vmatprep.subr.bf16.mxu0 %v7178
    %10195 = vmatpush1.bf16.msra.mxu0 %v7177
    %10196 = vmatprep.subr.bf16.mxu0 %v7202
    %10197 = vmatpush1.bf16.msra.mxu0 %v7201
    %10198 = vmatprep.subr.bf16.mxu0 %v7226
    %10199 = vmatpush1.bf16.msra.mxu0 %v7225
    %10200 = vmatprep.subr.bf16.mxu0 %v7250
    %10201 = vmatpush1.bf16.msra.mxu0 %v7249
    %10202 = vmatprep.subr.bf16.mxu0 %v7274
    %10203 = vmatpush1.bf16.msra.mxu0 %v7273
    %10204 = vmatprep.subr.bf16.mxu0 %v7298
    %10205 = vmatpush1.bf16.msra.mxu0 %v7297
    %10206 = vmatprep.subr.bf16.mxu0 %v7322
    %10207 = vmatpush1.bf16.msra.mxu0 %v7321
    %10208 = vmatprep.mubr.bf16.mxu0 %v1958
    %10209 = vmatmul.mubr.bf16.gmra.mrb[0].mxu0 %v1957
    %v10210 = vpop.f32.mrb[0].mxu0
    %v10211 = vadd.f32 %v10170, %v10210
    %v10212 = vpop.f32.mrb[0].mxu0
    %v10213 = vadd.f32 %v10172, %v10212
    %v10214 = vpop.f32.mrb[0].mxu0
    %v10215 = vpop.f32.mrb[0].mxu0
    %10216 = vdwg.mxu0
    %10217 = vmatprep.subr.bf16.mxu0 %v7346
    %10218 = vmatpush1.bf16.msra.mxu0 %v7345
    %10219 = vmatprep.subr.bf16.mxu0 %v7370
    %10220 = vmatpush1.bf16.msra.mxu0 %v7369
    %10221 = vmatprep.subr.bf16.mxu0 %v7394
    %10222 = vmatpush1.bf16.msra.mxu0 %v7393
    %10223 = vmatprep.subr.bf16.mxu0 %v7418
    %10224 = vmatpush1.bf16.msra.mxu0 %v7417
    %10225 = vmatprep.subr.bf16.mxu0 %v7442
    %10226 = vmatpush1.bf16.msra.mxu0 %v7441
    %10227 = vmatprep.subr.bf16.mxu0 %v7466
    %10228 = vmatpush1.bf16.msra.mxu0 %v7465
    %10229 = vmatprep.subr.bf16.mxu0 %v7490
    %10230 = vmatpush1.bf16.msra.mxu0 %v7489
    %10231 = vmatprep.subr.bf16.mxu0 %v7514
    %10232 = vmatpush1.bf16.msra.mxu0 %v7513
    %10233 = vmatprep.subr.bf16.mxu0 %v7538
    %10234 = vmatpush1.bf16.msra.mxu0 %v7537
    %10235 = vmatprep.subr.bf16.mxu0 %v7562
    %10236 = vmatpush1.bf16.msra.mxu0 %v7561
    %10237 = vmatprep.subr.bf16.mxu0 %v7586
    %10238 = vmatpush1.bf16.msra.mxu0 %v7585
    %10239 = vmatprep.subr.bf16.mxu0 %v7610
    %10240 = vmatpush1.bf16.msra.mxu0 %v7609
    %10241 = vmatprep.subr.bf16.mxu0 %v7634
    %10242 = vmatpush1.bf16.msra.mxu0 %v7633
    %10243 = vmatprep.subr.bf16.mxu0 %v7658
    %10244 = vmatpush1.bf16.msra.mxu0 %v7657
    %10245 = vmatprep.subr.bf16.mxu0 %v7682
    %10246 = vmatpush1.bf16.msra.mxu0 %v7681
    %10247 = vmatprep.subr.bf16.mxu0 %v7706
    %10248 = vmatpush1.bf16.msra.mxu0 %v7705
    %10249 = vmatprep.mubr.bf16.mxu0 %v1960
    %10250 = vmatmul.mubr.bf16.gmra.mrb[0].mxu0 %v1959
    %v10251 = vpop.f32.mrb[0].mxu0
    %v10252 = vadd.f32 %v10211, %v10251
    %v10253 = vpop.f32.mrb[0].mxu0
    %v10254 = vadd.f32 %v10213, %v10253
    %v10255 = vpop.f32.mrb[0].mxu0
    %v10256 = vpop.f32.mrb[0].mxu0
    %10257 = vdwg.mxu0
    %10258 = vmatprep.subr.bf16.mxu0 %v7730
    %10259 = vmatpush1.bf16.msra.mxu0 %v7729
    %10260 = vmatprep.subr.bf16.mxu0 %v7754
    %10261 = vmatpush1.bf16.msra.mxu0 %v7753
    %10262 = vmatprep.subr.bf16.mxu0 %v7778
    %10263 = vmatpush1.bf16.msra.mxu0 %v7777
    %10264 = vmatprep.subr.bf16.mxu0 %v7802
    %10265 = vmatpush1.bf16.msra.mxu0 %v7801
    %10266 = vmatprep.subr.bf16.mxu0 %v7826
    %10267 = vmatpush1.bf16.msra.mxu0 %v7825
    %10268 = vmatprep.subr.bf16.mxu0 %v7850
    %10269 = vmatpush1.bf16.msra.mxu0 %v7849
    %10270 = vmatprep.subr.bf16.mxu0 %v7874
    %10271 = vmatpush1.bf16.msra.mxu0 %v7873
    %10272 = vmatprep.subr.bf16.mxu0 %v7898
    %10273 = vmatpush1.bf16.msra.mxu0 %v7897
    %10274 = vmatprep.subr.bf16.mxu0 %v7922
    %10275 = vmatpush1.bf16.msra.mxu0 %v7921
    %10276 = vmatprep.subr.bf16.mxu0 %v7946
    %10277 = vmatpush1.bf16.msra.mxu0 %v7945
    %10278 = vmatprep.subr.bf16.mxu0 %v7970
    %10279 = vmatpush1.bf16.msra.mxu0 %v7969
    %10280 = vmatprep.subr.bf16.mxu0 %v7994
    %10281 = vmatpush1.bf16.msra.mxu0 %v7993
    %10282 = vmatprep.subr.bf16.mxu0 %v8018
    %10283 = vmatpush1.bf16.msra.mxu0 %v8017
    %10284 = vmatprep.subr.bf16.mxu0 %v8042
    %10285 = vmatpush1.bf16.msra.mxu0 %v8041
    %10286 = vmatprep.subr.bf16.mxu0 %v8066
    %10287 = vmatpush1.bf16.msra.mxu0 %v8065
    %10288 = vmatprep.subr.bf16.mxu0 %v8090
    %10289 = vmatpush1.bf16.msra.mxu0 %v8089
    %10290 = vmatprep.mubr.bf16.mxu0 %v1962
    %10291 = vmatmul.mubr.bf16.gmra.mrb[0].mxu0 %v1961
    %v10292 = vpop.f32.mrb[0].mxu0
    %v10293 = vadd.f32 %v10252, %v10292
    %v10294 = vpop.f32.mrb[0].mxu0
    %v10295 = vadd.f32 %v10254, %v10294
    %v10296 = vpop.f32.mrb[0].mxu0
    %v10297 = vpop.f32.mrb[0].mxu0
    %10298 = vdwg.mxu0
    %10299 = vmatprep.subr.bf16.mxu0 %v6580
    %10300 = vmatpush1.bf16.msra.mxu0 %v6579
    %10301 = vmatprep.subr.bf16.mxu0 %v6604
    %10302 = vmatpush1.bf16.msra.mxu0 %v6603
    %10303 = vmatprep.subr.bf16.mxu0 %v6628
    %10304 = vmatpush1.bf16.msra.mxu0 %v6627
    %10305 = vmatprep.subr.bf16.mxu0 %v6652
    %10306 = vmatpush1.bf16.msra.mxu0 %v6651
    %10307 = vmatprep.subr.bf16.mxu0 %v6676
    %10308 = vmatpush1.bf16.msra.mxu0 %v6675
    %10309 = vmatprep.subr.bf16.mxu0 %v6700
    %10310 = vmatpush1.bf16.msra.mxu0 %v6699
    %10311 = vmatprep.subr.bf16.mxu0 %v6724
    %10312 = vmatpush1.bf16.msra.mxu0 %v6723
    %10313 = vmatprep.subr.bf16.mxu0 %v6748
    %10314 = vmatpush1.bf16.msra.mxu0 %v6747
    %10315 = vmatprep.subr.bf16.mxu0 %v6772
    %10316 = vmatpush1.bf16.msra.mxu0 %v6771
    %10317 = vmatprep.subr.bf16.mxu0 %v6796
    %10318 = vmatpush1.bf16.msra.mxu0 %v6795
    %10319 = vmatprep.subr.bf16.mxu0 %v6820
    %10320 = vmatpush1.bf16.msra.mxu0 %v6819
    %10321 = vmatprep.subr.bf16.mxu0 %v6844
    %10322 = vmatpush1.bf16.msra.mxu0 %v6843
    %10323 = vmatprep.subr.bf16.mxu0 %v6868
    %10324 = vmatpush1.bf16.msra.mxu0 %v6867
    %10325 = vmatprep.subr.bf16.mxu0 %v6892
    %10326 = vmatpush1.bf16.msra.mxu0 %v6891
    %10327 = vmatprep.subr.bf16.mxu0 %v6916
    %10328 = vmatpush1.bf16.msra.mxu0 %v6915
    %10329 = vmatprep.subr.bf16.mxu0 %v6940
    %10330 = vmatpush1.bf16.msra.mxu0 %v6939
    %10331 = vmatprep.mubr.bf16.mxu0 %v1956
    %10332 = vmatmul.mubr.bf16.gmra.mrb[0].mxu0 %v1955
    %v10333 = vpop.f32.mrb[0].mxu0
    %v10334 = vadd.f32 0.0, %v10333
    %v10335 = vpop.f32.mrb[0].mxu0
    %v10336 = vadd.f32 0.0, %v10335
    %v10337 = vpop.f32.mrb[0].mxu0
    %v10338 = vpop.f32.mrb[0].mxu0
    %10339 = vdwg.mxu0
    %10340 = vmatprep.subr.bf16.mxu0 %v6964
    %10341 = vmatpush1.bf16.msra.mxu0 %v6963
    %10342 = vmatprep.subr.bf16.mxu0 %v6988
    %10343 = vmatpush1.bf16.msra.mxu0 %v6987
    %10344 = vmatprep.subr.bf16.mxu0 %v7012
    %10345 = vmatpush1.bf16.msra.mxu0 %v7011
    %10346 = vmatprep.subr.bf16.mxu0 %v7036
    %10347 = vmatpush1.bf16.msra.mxu0 %v7035
    %10348 = vmatprep.subr.bf16.mxu0 %v7060
    %10349 = vmatpush1.bf16.msra.mxu0 %v7059
    %10350 = vmatprep.subr.bf16.mxu0 %v7084
    %10351 = vmatpush1.bf16.msra.mxu0 %v7083
    %10352 = vmatprep.subr.bf16.mxu0 %v7108
    %10353 = vmatpush1.bf16.msra.mxu0 %v7107
    %10354 = vmatprep.subr.bf16.mxu0 %v7132
    %10355 = vmatpush1.bf16.msra.mxu0 %v7131
    %10356 = vmatprep.subr.bf16.mxu0 %v7156
    %10357 = vmatpush1.bf16.msra.mxu0 %v7155
    %10358 = vmatprep.subr.bf16.mxu0 %v7180
    %10359 = vmatpush1.bf16.msra.mxu0 %v7179
    %10360 = vmatprep.subr.bf16.mxu0 %v7204
    %10361 = vmatpush1.bf16.msra.mxu0 %v7203
    %10362 = vmatprep.subr.bf16.mxu0 %v7228
    %10363 = vmatpush1.bf16.msra.mxu0 %v7227
    %10364 = vmatprep.subr.bf16.mxu0 %v7252
    %10365 = vmatpush1.bf16.msra.mxu0 %v7251
    %10366 = vmatprep.subr.bf16.mxu0 %v7276
    %10367 = vmatpush1.bf16.msra.mxu0 %v7275
    %10368 = vmatprep.subr.bf16.mxu0 %v7300
    %10369 = vmatpush1.bf16.msra.mxu0 %v7299
    %10370 = vmatprep.subr.bf16.mxu0 %v7324
    %10371 = vmatpush1.bf16.msra.mxu0 %v7323
    %10372 = vmatprep.mubr.bf16.mxu0 %v1958
    %10373 = vmatmul.mubr.bf16.gmra.mrb[0].mxu0 %v1957
    %v10374 = vpop.f32.mrb[0].mxu0
    %v10375 = vadd.f32 %v10334, %v10374
    %v10376 = vpop.f32.mrb[0].mxu0
    %v10377 = vadd.f32 %v10336, %v10376
    %v10378 = vpop.f32.mrb[0].mxu0
    %v10379 = vpop.f32.mrb[0].mxu0
    %10380 = vdwg.mxu0
    %10381 = vmatprep.subr.bf16.mxu0 %v7348
    %10382 = vmatpush1.bf16.msra.mxu0 %v7347
    %10383 = vmatprep.subr.bf16.mxu0 %v7372
    %10384 = vmatpush1.bf16.msra.mxu0 %v7371
    %10385 = vmatprep.subr.bf16.mxu0 %v7396
    %10386 = vmatpush1.bf16.msra.mxu0 %v7395
    %10387 = vmatprep.subr.bf16.mxu0 %v7420
    %10388 = vmatpush1.bf16.msra.mxu0 %v7419
    %10389 = vmatprep.subr.bf16.mxu0 %v7444
    %10390 = vmatpush1.bf16.msra.mxu0 %v7443
    %10391 = vmatprep.subr.bf16.mxu0 %v7468
    %10392 = vmatpush1.bf16.msra.mxu0 %v7467
    %10393 = vmatprep.subr.bf16.mxu0 %v7492
    %10394 = vmatpush1.bf16.msra.mxu0 %v7491
    %10395 = vmatprep.subr.bf16.mxu0 %v7516
    %10396 = vmatpush1.bf16.msra.mxu0 %v7515
    %10397 = vmatprep.subr.bf16.mxu0 %v7540
    %10398 = vmatpush1.bf16.msra.mxu0 %v7539
    %10399 = vmatprep.subr.bf16.mxu0 %v7564
    %10400 = vmatpush1.bf16.msra.mxu0 %v7563
    %10401 = vmatprep.subr.bf16.mxu0 %v7588
    %10402 = vmatpush1.bf16.msra.mxu0 %v7587
    %10403 = vmatprep.subr.bf16.mxu0 %v7612
    %10404 = vmatpush1.bf16.msra.mxu0 %v7611
    %10405 = vmatprep.subr.bf16.mxu0 %v7636
    %10406 = vmatpush1.bf16.msra.mxu0 %v7635
    %10407 = vmatprep.subr.bf16.mxu0 %v7660
    %10408 = vmatpush1.bf16.msra.mxu0 %v7659
    %10409 = vmatprep.subr.bf16.mxu0 %v7684
    %10410 = vmatpush1.bf16.msra.mxu0 %v7683
    %10411 = vmatprep.subr.bf16.mxu0 %v7708
    %10412 = vmatpush1.bf16.msra.mxu0 %v7707
    %10413 = vmatprep.mubr.bf16.mxu0 %v1960
    %10414 = vmatmul.mubr.bf16.gmra.mrb[0].mxu0 %v1959
    %v10415 = vpop.f32.mrb[0].mxu0
    %v10416 = vadd.f32 %v10375, %v10415
    %v10417 = vpop.f32.mrb[0].mxu0
    %v10418 = vadd.f32 %v10377, %v10417
    %v10419 = vpop.f32.mrb[0].mxu0
    %v10420 = vpop.f32.mrb[0].mxu0
    %10421 = vdwg.mxu0
    %10422 = vmatprep.subr.bf16.mxu0 %v7732
    %10423 = vmatpush1.bf16.msra.mxu0 %v7731
    %10424 = vmatprep.subr.bf16.mxu0 %v7756
    %10425 = vmatpush1.bf16.msra.mxu0 %v7755
    %10426 = vmatprep.subr.bf16.mxu0 %v7780
    %10427 = vmatpush1.bf16.msra.mxu0 %v7779
    %10428 = vmatprep.subr.bf16.mxu0 %v7804
    %10429 = vmatpush1.bf16.msra.mxu0 %v7803
    %10430 = vmatprep.subr.bf16.mxu0 %v7828
    %10431 = vmatpush1.bf16.msra.mxu0 %v7827
    %10432 = vmatprep.subr.bf16.mxu0 %v7852
    %10433 = vmatpush1.bf16.msra.mxu0 %v7851
    %10434 = vmatprep.subr.bf16.mxu0 %v7876
    %10435 = vmatpush1.bf16.msra.mxu0 %v7875
    %10436 = vmatprep.subr.bf16.mxu0 %v7900
    %10437 = vmatpush1.bf16.msra.mxu0 %v7899
    %10438 = vmatprep.subr.bf16.mxu0 %v7924
    %10439 = vmatpush1.bf16.msra.mxu0 %v7923
    %10440 = vmatprep.subr.bf16.mxu0 %v7948
    %10441 = vmatpush1.bf16.msra.mxu0 %v7947
    %10442 = vmatprep.subr.bf16.mxu0 %v7972
    %10443 = vmatpush1.bf16.msra.mxu0 %v7971
    %10444 = vmatprep.subr.bf16.mxu0 %v7996
    %10445 = vmatpush1.bf16.msra.mxu0 %v7995
    %10446 = vmatprep.subr.bf16.mxu0 %v8020
    %10447 = vmatpush1.bf16.msra.mxu0 %v8019
    %10448 = vmatprep.subr.bf16.mxu0 %v8044
    %10449 = vmatpush1.bf16.msra.mxu0 %v8043
    %10450 = vmatprep.subr.bf16.mxu0 %v8068
    %10451 = vmatpush1.bf16.msra.mxu0 %v8067
    %10452 = vmatprep.subr.bf16.mxu0 %v8092
    %10453 = vmatpush1.bf16.msra.mxu0 %v8091
    %10454 = vmatprep.mubr.bf16.mxu0 %v1962
    %10455 = vmatmul.mubr.bf16.gmra.mrb[0].mxu0 %v1961
    %v10456 = vpop.f32.mrb[0].mxu0
    %v10457 = vadd.f32 %v10416, %v10456
    %v10458 = vpop.f32.mrb[0].mxu0
    %v10459 = vadd.f32 %v10418, %v10458
    %v10460 = vpop.f32.mrb[0].mxu0
    %v10461 = vpop.f32.mrb[0].mxu0
    %10462 = vdwg.mxu0
    %10463 = vmatprep.subr.bf16.mxu0 %v6582
    %10464 = vmatpush1.bf16.msra.mxu0 %v6581
    %10465 = vmatprep.subr.bf16.mxu0 %v6606
    %10466 = vmatpush1.bf16.msra.mxu0 %v6605
    %10467 = vmatprep.subr.bf16.mxu0 %v6630
    %10468 = vmatpush1.bf16.msra.mxu0 %v6629
    %10469 = vmatprep.subr.bf16.mxu0 %v6654
    %10470 = vmatpush1.bf16.msra.mxu0 %v6653
    %10471 = vmatprep.subr.bf16.mxu0 %v6678
    %10472 = vmatpush1.bf16.msra.mxu0 %v6677
    %10473 = vmatprep.subr.bf16.mxu0 %v6702
    %10474 = vmatpush1.bf16.msra.mxu0 %v6701
    %10475 = vmatprep.subr.bf16.mxu0 %v6726
    %10476 = vmatpush1.bf16.msra.mxu0 %v6725
    %10477 = vmatprep.subr.bf16.mxu0 %v6750
    %10478 = vmatpush1.bf16.msra.mxu0 %v6749
    %10479 = vmatprep.subr.bf16.mxu0 %v6774
    %10480 = vmatpush1.bf16.msra.mxu0 %v6773
    %10481 = vmatprep.subr.bf16.mxu0 %v6798
    %10482 = vmatpush1.bf16.msra.mxu0 %v6797
    %10483 = vmatprep.subr.bf16.mxu0 %v6822
    %10484 = vmatpush1.bf16.msra.mxu0 %v6821
    %10485 = vmatprep.subr.bf16.mxu0 %v6846
    %10486 = vmatpush1.bf16.msra.mxu0 %v6845
    %10487 = vmatprep.subr.bf16.mxu0 %v6870
    %10488 = vmatpush1.bf16.msra.mxu0 %v6869
    %10489 = vmatprep.subr.bf16.mxu0 %v6894
    %10490 = vmatpush1.bf16.msra.mxu0 %v6893
    %10491 = vmatprep.subr.bf16.mxu0 %v6918
    %10492 = vmatpush1.bf16.msra.mxu0 %v6917
    %10493 = vmatprep.subr.bf16.mxu0 %v6942
    %10494 = vmatpush1.bf16.msra.mxu0 %v6941
    %10495 = vmatprep.mubr.bf16.mxu0 %v1956
    %10496 = vmatmul.mubr.bf16.gmra.mrb[0].mxu0 %v1955
    %v10497 = vpop.f32.mrb[0].mxu0
    %v10498 = vadd.f32 0.0, %v10497
    %v10499 = vpop.f32.mrb[0].mxu0
    %v10500 = vadd.f32 0.0, %v10499
    %v10501 = vpop.f32.mrb[0].mxu0
    %v10502 = vpop.f32.mrb[0].mxu0
    %10503 = vdwg.mxu0
    %10504 = vmatprep.subr.bf16.mxu0 %v6966
    %10505 = vmatpush1.bf16.msra.mxu0 %v6965
    %10506 = vmatprep.subr.bf16.mxu0 %v6990
    %10507 = vmatpush1.bf16.msra.mxu0 %v6989
    %10508 = vmatprep.subr.bf16.mxu0 %v7014
    %10509 = vmatpush1.bf16.msra.mxu0 %v7013
    %10510 = vmatprep.subr.bf16.mxu0 %v7038
    %10511 = vmatpush1.bf16.msra.mxu0 %v7037
    %10512 = vmatprep.subr.bf16.mxu0 %v7062
    %10513 = vmatpush1.bf16.msra.mxu0 %v7061
    %10514 = vmatprep.subr.bf16.mxu0 %v7086
    %10515 = vmatpush1.bf16.msra.mxu0 %v7085
    %10516 = vmatprep.subr.bf16.mxu0 %v7110
    %10517 = vmatpush1.bf16.msra.mxu0 %v7109
    %10518 = vmatprep.subr.bf16.mxu0 %v7134
    %10519 = vmatpush1.bf16.msra.mxu0 %v7133
    %10520 = vmatprep.subr.bf16.mxu0 %v7158
    %10521 = vmatpush1.bf16.msra.mxu0 %v7157
    %10522 = vmatprep.subr.bf16.mxu0 %v7182
    %10523 = vmatpush1.bf16.msra.mxu0 %v7181
    %10524 = vmatprep.subr.bf16.mxu0 %v7206
    %10525 = vmatpush1.bf16.msra.mxu0 %v7205
    %10526 = vmatprep.subr.bf16.mxu0 %v7230
    %10527 = vmatpush1.bf16.msra.mxu0 %v7229
    %10528 = vmatprep.subr.bf16.mxu0 %v7254
    %10529 = vmatpush1.bf16.msra.mxu0 %v7253
    %10530 = vmatprep.subr.bf16.mxu0 %v7278
    %10531 = vmatpush1.bf16.msra.mxu0 %v7277
    %10532 = vmatprep.subr.bf16.mxu0 %v7302
    %10533 = vmatpush1.bf16.msra.mxu0 %v7301
    %10534 = vmatprep.subr.bf16.mxu0 %v7326
    %10535 = vmatpush1.bf16.msra.mxu0 %v7325
    %10536 = vmatprep.mubr.bf16.mxu0 %v1958
    %10537 = vmatmul.mubr.bf16.gmra.mrb[0].mxu0 %v1957
    %v10538 = vpop.f32.mrb[0].mxu0
    %v10539 = vadd.f32 %v10498, %v10538
    %v10540 = vpop.f32.mrb[0].mxu0
    %v10541 = vadd.f32 %v10500, %v10540
    %v10542 = vpop.f32.mrb[0].mxu0
    %v10543 = vpop.f32.mrb[0].mxu0
    %10544 = vdwg.mxu0
    %10545 = vmatprep.subr.bf16.mxu0 %v7350
    %10546 = vmatpush1.bf16.msra.mxu0 %v7349
    %10547 = vmatprep.subr.bf16.mxu0 %v7374
    %10548 = vmatpush1.bf16.msra.mxu0 %v7373
    %10549 = vmatprep.subr.bf16.mxu0 %v7398
    %10550 = vmatpush1.bf16.msra.mxu0 %v7397
    %10551 = vmatprep.subr.bf16.mxu0 %v7422
    %10552 = vmatpush1.bf16.msra.mxu0 %v7421
    %10553 = vmatprep.subr.bf16.mxu0 %v7446
    %10554 = vmatpush1.bf16.msra.mxu0 %v7445
    %10555 = vmatprep.subr.bf16.mxu0 %v7470
    %10556 = vmatpush1.bf16.msra.mxu0 %v7469
    %10557 = vmatprep.subr.bf16.mxu0 %v7494
    %10558 = vmatpush1.bf16.msra.mxu0 %v7493
    %10559 = vmatprep.subr.bf16.mxu0 %v7518
    %10560 = vmatpush1.bf16.msra.mxu0 %v7517
    %10561 = vmatprep.subr.bf16.mxu0 %v7542
    %10562 = vmatpush1.bf16.msra.mxu0 %v7541
    %10563 = vmatprep.subr.bf16.mxu0 %v7566
    %10564 = vmatpush1.bf16.msra.mxu0 %v7565
    %10565 = vmatprep.subr.bf16.mxu0 %v7590
    %10566 = vmatpush1.bf16.msra.mxu0 %v7589
    %10567 = vmatprep.subr.bf16.mxu0 %v7614
    %10568 = vmatpush1.bf16.msra.mxu0 %v7613
    %10569 = vmatprep.subr.bf16.mxu0 %v7638
    %10570 = vmatpush1.bf16.msra.mxu0 %v7637
    %10571 = vmatprep.subr.bf16.mxu0 %v7662
    %10572 = vmatpush1.bf16.msra.mxu0 %v7661
    %10573 = vmatprep.subr.bf16.mxu0 %v7686
    %10574 = vmatpush1.bf16.msra.mxu0 %v7685
    %10575 = vmatprep.subr.bf16.mxu0 %v7710
    %10576 = vmatpush1.bf16.msra.mxu0 %v7709
    %10577 = vmatprep.mubr.bf16.mxu0 %v1960
    %10578 = vmatmul.mubr.bf16.gmra.mrb[0].mxu0 %v1959
    %v10579 = vpop.f32.mrb[0].mxu0
    %v10580 = vadd.f32 %v10539, %v10579
    %v10581 = vpop.f32.mrb[0].mxu0
    %v10582 = vadd.f32 %v10541, %v10581
    %v10583 = vpop.f32.mrb[0].mxu0
    %v10584 = vpop.f32.mrb[0].mxu0
    %10585 = vdwg.mxu0
    %10586 = vmatprep.subr.bf16.mxu0 %v7734
    %10587 = vmatpush1.bf16.msra.mxu0 %v7733
    %10588 = vmatprep.subr.bf16.mxu0 %v7758
    %10589 = vmatpush1.bf16.msra.mxu0 %v7757
    %10590 = vmatprep.subr.bf16.mxu0 %v7782
    %10591 = vmatpush1.bf16.msra.mxu0 %v7781
    %10592 = vmatprep.subr.bf16.mxu0 %v7806
    %10593 = vmatpush1.bf16.msra.mxu0 %v7805
    %10594 = vmatprep.subr.bf16.mxu0 %v7830
    %10595 = vmatpush1.bf16.msra.mxu0 %v7829
    %10596 = vmatprep.subr.bf16.mxu0 %v7854
    %10597 = vmatpush1.bf16.msra.mxu0 %v7853
    %10598 = vmatprep.subr.bf16.mxu0 %v7878
    %10599 = vmatpush1.bf16.msra.mxu0 %v7877
    %10600 = vmatprep.subr.bf16.mxu0 %v7902
    %10601 = vmatpush1.bf16.msra.mxu0 %v7901
    %10602 = vmatprep.subr.bf16.mxu0 %v7926
    %10603 = vmatpush1.bf16.msra.mxu0 %v7925
    %10604 = vmatprep.subr.bf16.mxu0 %v7950
    %10605 = vmatpush1.bf16.msra.mxu0 %v7949
    %10606 = vmatprep.subr.bf16.mxu0 %v7974
    %10607 = vmatpush1.bf16.msra.mxu0 %v7973
    %10608 = vmatprep.subr.bf16.mxu0 %v7998
    %10609 = vmatpush1.bf16.msra.mxu0 %v7997
    %10610 = vmatprep.subr.bf16.mxu0 %v8022
    %10611 = vmatpush1.bf16.msra.mxu0 %v8021
    %10612 = vmatprep.subr.bf16.mxu0 %v8046
    %10613 = vmatpush1.bf16.msra.mxu0 %v8045
    %10614 = vmatprep.subr.bf16.mxu0 %v8070
    %10615 = vmatpush1.bf16.msra.mxu0 %v8069
    %10616 = vmatprep.subr.bf16.mxu0 %v8094
    %10617 = vmatpush1.bf16.msra.mxu0 %v8093
    %10618 = vmatprep.mubr.bf16.mxu0 %v1962
    %10619 = vmatmul.mubr.bf16.gmra.mrb[0].mxu0 %v1961
    %v10620 = vpop.f32.mrb[0].mxu0
    %v10621 = vadd.f32 %v10580, %v10620
    %v10622 = vpop.f32.mrb[0].mxu0
    %v10623 = vadd.f32 %v10582, %v10622
    %v10624 = vpop.f32.mrb[0].mxu0
    %v10625 = vpop.f32.mrb[0].mxu0
    %10626 = vdwg.mxu0
    %10627 = vmatprep.subr.bf16.mxu0 %v6584
    %10628 = vmatpush1.bf16.msra.mxu0 %v6583
    %10629 = vmatprep.subr.bf16.mxu0 %v6608
    %10630 = vmatpush1.bf16.msra.mxu0 %v6607
    %10631 = vmatprep.subr.bf16.mxu0 %v6632
    %10632 = vmatpush1.bf16.msra.mxu0 %v6631
    %10633 = vmatprep.subr.bf16.mxu0 %v6656
    %10634 = vmatpush1.bf16.msra.mxu0 %v6655
    %10635 = vmatprep.subr.bf16.mxu0 %v6680
    %10636 = vmatpush1.bf16.msra.mxu0 %v6679
    %10637 = vmatprep.subr.bf16.mxu0 %v6704
    %10638 = vmatpush1.bf16.msra.mxu0 %v6703
    %10639 = vmatprep.subr.bf16.mxu0 %v6728
    %10640 = vmatpush1.bf16.msra.mxu0 %v6727
    %10641 = vmatprep.subr.bf16.mxu0 %v6752
    %10642 = vmatpush1.bf16.msra.mxu0 %v6751
    %10643 = vmatprep.subr.bf16.mxu0 %v6776
    %10644 = vmatpush1.bf16.msra.mxu0 %v6775
    %10645 = vmatprep.subr.bf16.mxu0 %v6800
    %10646 = vmatpush1.bf16.msra.mxu0 %v6799
    %10647 = vmatprep.subr.bf16.mxu0 %v6824
    %10648 = vmatpush1.bf16.msra.mxu0 %v6823
    %10649 = vmatprep.subr.bf16.mxu0 %v6848
    %10650 = vmatpush1.bf16.msra.mxu0 %v6847
    %10651 = vmatprep.subr.bf16.mxu0 %v6872
    %10652 = vmatpush1.bf16.msra.mxu0 %v6871
    %10653 = vmatprep.subr.bf16.mxu0 %v6896
    %10654 = vmatpush1.bf16.msra.mxu0 %v6895
    %10655 = vmatprep.subr.bf16.mxu0 %v6920
    %10656 = vmatpush1.bf16.msra.mxu0 %v6919
    %10657 = vmatprep.subr.bf16.mxu0 %v6944
    %10658 = vmatpush1.bf16.msra.mxu0 %v6943
    %10659 = vmatprep.mubr.bf16.mxu0 %v1956
    %10660 = vmatmul.mubr.bf16.gmra.mrb[0].mxu0 %v1955
    %v10661 = vpop.f32.mrb[0].mxu0
    %v10662 = vadd.f32 0.0, %v10661
    %v10663 = vpop.f32.mrb[0].mxu0
    %v10664 = vadd.f32 0.0, %v10663
    %v10665 = vpop.f32.mrb[0].mxu0
    %v10666 = vpop.f32.mrb[0].mxu0
    %10667 = vdwg.mxu0
    %10668 = vmatprep.subr.bf16.mxu0 %v6968
    %10669 = vmatpush1.bf16.msra.mxu0 %v6967
    %10670 = vmatprep.subr.bf16.mxu0 %v6992
    %10671 = vmatpush1.bf16.msra.mxu0 %v6991
    %10672 = vmatprep.subr.bf16.mxu0 %v7016
    %10673 = vmatpush1.bf16.msra.mxu0 %v7015
    %10674 = vmatprep.subr.bf16.mxu0 %v7040
    %10675 = vmatpush1.bf16.msra.mxu0 %v7039
    %10676 = vmatprep.subr.bf16.mxu0 %v7064
    %10677 = vmatpush1.bf16.msra.mxu0 %v7063
    %10678 = vmatprep.subr.bf16.mxu0 %v7088
    %10679 = vmatpush1.bf16.msra.mxu0 %v7087
    %10680 = vmatprep.subr.bf16.mxu0 %v7112
    %10681 = vmatpush1.bf16.msra.mxu0 %v7111
    %10682 = vmatprep.subr.bf16.mxu0 %v7136
    %10683 = vmatpush1.bf16.msra.mxu0 %v7135
    %10684 = vmatprep.subr.bf16.mxu0 %v7160
    %10685 = vmatpush1.bf16.msra.mxu0 %v7159
    %10686 = vmatprep.subr.bf16.mxu0 %v7184
    %10687 = vmatpush1.bf16.msra.mxu0 %v7183
    %10688 = vmatprep.subr.bf16.mxu0 %v7208
    %10689 = vmatpush1.bf16.msra.mxu0 %v7207
    %10690 = vmatprep.subr.bf16.mxu0 %v7232
    %10691 = vmatpush1.bf16.msra.mxu0 %v7231
    %10692 = vmatprep.subr.bf16.mxu0 %v7256
    %10693 = vmatpush1.bf16.msra.mxu0 %v7255
    %10694 = vmatprep.subr.bf16.mxu0 %v7280
    %10695 = vmatpush1.bf16.msra.mxu0 %v7279
    %10696 = vmatprep.subr.bf16.mxu0 %v7304
    %10697 = vmatpush1.bf16.msra.mxu0 %v7303
    %10698 = vmatprep.subr.bf16.mxu0 %v7328
    %10699 = vmatpush1.bf16.msra.mxu0 %v7327
    %10700 = vmatprep.mubr.bf16.mxu0 %v1958
    %10701 = vmatmul.mubr.bf16.gmra.mrb[0].mxu0 %v1957
    %v10702 = vpop.f32.mrb[0].mxu0
    %v10703 = vadd.f32 %v10662, %v10702
    %v10704 = vpop.f32.mrb[0].mxu0
    %v10705 = vadd.f32 %v10664, %v10704
    %v10706 = vpop.f32.mrb[0].mxu0
    %v10707 = vpop.f32.mrb[0].mxu0
    %10708 = vdwg.mxu0
    %10709 = vmatprep.subr.bf16.mxu0 %v7352
    %10710 = vmatpush1.bf16.msra.mxu0 %v7351
    %10711 = vmatprep.subr.bf16.mxu0 %v7376
    %10712 = vmatpush1.bf16.msra.mxu0 %v7375
    %10713 = vmatprep.subr.bf16.mxu0 %v7400
    %10714 = vmatpush1.bf16.msra.mxu0 %v7399
    %10715 = vmatprep.subr.bf16.mxu0 %v7424
    %10716 = vmatpush1.bf16.msra.mxu0 %v7423
    %10717 = vmatprep.subr.bf16.mxu0 %v7448
    %10718 = vmatpush1.bf16.msra.mxu0 %v7447
    %10719 = vmatprep.subr.bf16.mxu0 %v7472
    %10720 = vmatpush1.bf16.msra.mxu0 %v7471
    %10721 = vmatprep.subr.bf16.mxu0 %v7496
    %10722 = vmatpush1.bf16.msra.mxu0 %v7495
    %10723 = vmatprep.subr.bf16.mxu0 %v7520
    %10724 = vmatpush1.bf16.msra.mxu0 %v7519
    %10725 = vmatprep.subr.bf16.mxu0 %v7544
    %10726 = vmatpush1.bf16.msra.mxu0 %v7543
    %10727 = vmatprep.subr.bf16.mxu0 %v7568
    %10728 = vmatpush1.bf16.msra.mxu0 %v7567
    %10729 = vmatprep.subr.bf16.mxu0 %v7592
    %10730 = vmatpush1.bf16.msra.mxu0 %v7591
    %10731 = vmatprep.subr.bf16.mxu0 %v7616
    %10732 = vmatpush1.bf16.msra.mxu0 %v7615
    %10733 = vmatprep.subr.bf16.mxu0 %v7640
    %10734 = vmatpush1.bf16.msra.mxu0 %v7639
    %10735 = vmatprep.subr.bf16.mxu0 %v7664
    %10736 = vmatpush1.bf16.msra.mxu0 %v7663
    %10737 = vmatprep.subr.bf16.mxu0 %v7688
    %10738 = vmatpush1.bf16.msra.mxu0 %v7687
    %10739 = vmatprep.subr.bf16.mxu0 %v7712
    %10740 = vmatpush1.bf16.msra.mxu0 %v7711
    %10741 = vmatprep.mubr.bf16.mxu0 %v1960
    %10742 = vmatmul.mubr.bf16.gmra.mrb[0].mxu0 %v1959
    %v10743 = vpop.f32.mrb[0].mxu0
    %v10744 = vadd.f32 %v10703, %v10743
    %v10745 = vpop.f32.mrb[0].mxu0
    %v10746 = vadd.f32 %v10705, %v10745
    %v10747 = vpop.f32.mrb[0].mxu0
    %v10748 = vpop.f32.mrb[0].mxu0
    %10749 = vdwg.mxu0
    %10750 = vmatprep.subr.bf16.mxu0 %v7736
    %10751 = vmatpush1.bf16.msra.mxu0 %v7735
    %10752 = vmatprep.subr.bf16.mxu0 %v7760
    %10753 = vmatpush1.bf16.msra.mxu0 %v7759
    %10754 = vmatprep.subr.bf16.mxu0 %v7784
    %10755 = vmatpush1.bf16.msra.mxu0 %v7783
    %10756 = vmatprep.subr.bf16.mxu0 %v7808
    %10757 = vmatpush1.bf16.msra.mxu0 %v7807
    %10758 = vmatprep.subr.bf16.mxu0 %v7832
    %10759 = vmatpush1.bf16.msra.mxu0 %v7831
    %10760 = vmatprep.subr.bf16.mxu0 %v7856
    %10761 = vmatpush1.bf16.msra.mxu0 %v7855
    %10762 = vmatprep.subr.bf16.mxu0 %v7880
    %10763 = vmatpush1.bf16.msra.mxu0 %v7879
    %10764 = vmatprep.subr.bf16.mxu0 %v7904
    %10765 = vmatpush1.bf16.msra.mxu0 %v7903
    %10766 = vmatprep.subr.bf16.mxu0 %v7928
    %10767 = vmatpush1.bf16.msra.mxu0 %v7927
    %10768 = vmatprep.subr.bf16.mxu0 %v7952
    %10769 = vmatpush1.bf16.msra.mxu0 %v7951
    %10770 = vmatprep.subr.bf16.mxu0 %v7976
    %10771 = vmatpush1.bf16.msra.mxu0 %v7975
    %10772 = vmatprep.subr.bf16.mxu0 %v8000
    %10773 = vmatpush1.bf16.msra.mxu0 %v7999
    %10774 = vmatprep.subr.bf16.mxu0 %v8024
    %10775 = vmatpush1.bf16.msra.mxu0 %v8023
    %10776 = vmatprep.subr.bf16.mxu0 %v8048
    %10777 = vmatpush1.bf16.msra.mxu0 %v8047
    %10778 = vmatprep.subr.bf16.mxu0 %v8072
    %10779 = vmatpush1.bf16.msra.mxu0 %v8071
    %10780 = vmatprep.subr.bf16.mxu0 %v8096
    %10781 = vmatpush1.bf16.msra.mxu0 %v8095
    %10782 = vmatprep.mubr.bf16.mxu0 %v1962
    %10783 = vmatmul.mubr.bf16.gmra.mrb[0].mxu0 %v1961
    %v10784 = vpop.f32.mrb[0].mxu0
    %v10785 = vadd.f32 %v10744, %v10784
    %v10786 = vpop.f32.mrb[0].mxu0
    %v10787 = vadd.f32 %v10746, %v10786
    %v10788 = vpop.f32.mrb[0].mxu0
    %v10789 = vpop.f32.mrb[0].mxu0
    %10790 = vdwg.mxu0
    %10791 = vmatprep.subr.bf16.mxu0 %v6586
    %10792 = vmatpush1.bf16.msra.mxu0 %v6585
    %10793 = vmatprep.subr.bf16.mxu0 %v6610
    %10794 = vmatpush1.bf16.msra.mxu0 %v6609
    %10795 = vmatprep.subr.bf16.mxu0 %v6634
    %10796 = vmatpush1.bf16.msra.mxu0 %v6633
    %10797 = vmatprep.subr.bf16.mxu0 %v6658
    %10798 = vmatpush1.bf16.msra.mxu0 %v6657
    %10799 = vmatprep.subr.bf16.mxu0 %v6682
    %10800 = vmatpush1.bf16.msra.mxu0 %v6681
    %10801 = vmatprep.subr.bf16.mxu0 %v6706
    %10802 = vmatpush1.bf16.msra.mxu0 %v6705
    %10803 = vmatprep.subr.bf16.mxu0 %v6730
    %10804 = vmatpush1.bf16.msra.mxu0 %v6729
    %10805 = vmatprep.subr.bf16.mxu0 %v6754
    %10806 = vmatpush1.bf16.msra.mxu0 %v6753
    %10807 = vmatprep.subr.bf16.mxu0 %v6778
    %10808 = vmatpush1.bf16.msra.mxu0 %v6777
    %10809 = vmatprep.subr.bf16.mxu0 %v6802
    %10810 = vmatpush1.bf16.msra.mxu0 %v6801
    %10811 = vmatprep.subr.bf16.mxu0 %v6826
    %10812 = vmatpush1.bf16.msra.mxu0 %v6825
    %10813 = vmatprep.subr.bf16.mxu0 %v6850
    %10814 = vmatpush1.bf16.msra.mxu0 %v6849
    %10815 = vmatprep.subr.bf16.mxu0 %v6874
    %10816 = vmatpush1.bf16.msra.mxu0 %v6873
    %10817 = vmatprep.subr.bf16.mxu0 %v6898
    %10818 = vmatpush1.bf16.msra.mxu0 %v6897
    %10819 = vmatprep.subr.bf16.mxu0 %v6922
    %10820 = vmatpush1.bf16.msra.mxu0 %v6921
    %10821 = vmatprep.subr.bf16.mxu0 %v6946
    %10822 = vmatpush1.bf16.msra.mxu0 %v6945
    %10823 = vmatprep.mubr.bf16.mxu0 %v1956
    %10824 = vmatmul.mubr.bf16.gmra.mrb[0].mxu0 %v1955
    %v10825 = vpop.f32.mrb[0].mxu0
    %v10826 = vadd.f32 0.0, %v10825
    %v10827 = vpop.f32.mrb[0].mxu0
    %v10828 = vadd.f32 0.0, %v10827
    %v10829 = vpop.f32.mrb[0].mxu0
    %v10830 = vpop.f32.mrb[0].mxu0
    %10831 = vdwg.mxu0
    %10832 = vmatprep.subr.bf16.mxu0 %v6970
    %10833 = vmatpush1.bf16.msra.mxu0 %v6969
    %10834 = vmatprep.subr.bf16.mxu0 %v6994
    %10835 = vmatpush1.bf16.msra.mxu0 %v6993
    %10836 = vmatprep.subr.bf16.mxu0 %v7018
    %10837 = vmatpush1.bf16.msra.mxu0 %v7017
    %10838 = vmatprep.subr.bf16.mxu0 %v7042
    %10839 = vmatpush1.bf16.msra.mxu0 %v7041
    %10840 = vmatprep.subr.bf16.mxu0 %v7066
    %10841 = vmatpush1.bf16.msra.mxu0 %v7065
    %10842 = vmatprep.subr.bf16.mxu0 %v7090
    %10843 = vmatpush1.bf16.msra.mxu0 %v7089
    %10844 = vmatprep.subr.bf16.mxu0 %v7114
    %10845 = vmatpush1.bf16.msra.mxu0 %v7113
    %10846 = vmatprep.subr.bf16.mxu0 %v7138
    %10847 = vmatpush1.bf16.msra.mxu0 %v7137
    %10848 = vmatprep.subr.bf16.mxu0 %v7162
    %10849 = vmatpush1.bf16.msra.mxu0 %v7161
    %10850 = vmatprep.subr.bf16.mxu0 %v7186
    %10851 = vmatpush1.bf16.msra.mxu0 %v7185
    %10852 = vmatprep.subr.bf16.mxu0 %v7210
    %10853 = vmatpush1.bf16.msra.mxu0 %v7209
    %10854 = vmatprep.subr.bf16.mxu0 %v7234
    %10855 = vmatpush1.bf16.msra.mxu0 %v7233
    %10856 = vmatprep.subr.bf16.mxu0 %v7258
    %10857 = vmatpush1.bf16.msra.mxu0 %v7257
    %10858 = vmatprep.subr.bf16.mxu0 %v7282
    %10859 = vmatpush1.bf16.msra.mxu0 %v7281
    %10860 = vmatprep.subr.bf16.mxu0 %v7306
    %10861 = vmatpush1.bf16.msra.mxu0 %v7305
    %10862 = vmatprep.subr.bf16.mxu0 %v7330
    %10863 = vmatpush1.bf16.msra.mxu0 %v7329
    %10864 = vmatprep.mubr.bf16.mxu0 %v1958
    %10865 = vmatmul.mubr.bf16.gmra.mrb[0].mxu0 %v1957
    %v10866 = vpop.f32.mrb[0].mxu0
    %v10867 = vadd.f32 %v10826, %v10866
    %v10868 = vpop.f32.mrb[0].mxu0
    %v10869 = vadd.f32 %v10828, %v10868
    %v10870 = vpop.f32.mrb[0].mxu0
    %v10871 = vpop.f32.mrb[0].mxu0
    %10872 = vdwg.mxu0
    %10873 = vmatprep.subr.bf16.mxu0 %v7354
    %10874 = vmatpush1.bf16.msra.mxu0 %v7353
    %10875 = vmatprep.subr.bf16.mxu0 %v7378
    %10876 = vmatpush1.bf16.msra.mxu0 %v7377
    %10877 = vmatprep.subr.bf16.mxu0 %v7402
    %10878 = vmatpush1.bf16.msra.mxu0 %v7401
    %10879 = vmatprep.subr.bf16.mxu0 %v7426
    %10880 = vmatpush1.bf16.msra.mxu0 %v7425
    %10881 = vmatprep.subr.bf16.mxu0 %v7450
    %10882 = vmatpush1.bf16.msra.mxu0 %v7449
    %10883 = vmatprep.subr.bf16.mxu0 %v7474
    %10884 = vmatpush1.bf16.msra.mxu0 %v7473
    %10885 = vmatprep.subr.bf16.mxu0 %v7498
    %10886 = vmatpush1.bf16.msra.mxu0 %v7497
    %10887 = vmatprep.subr.bf16.mxu0 %v7522
    %10888 = vmatpush1.bf16.msra.mxu0 %v7521
    %10889 = vmatprep.subr.bf16.mxu0 %v7546
    %10890 = vmatpush1.bf16.msra.mxu0 %v7545
    %10891 = vmatprep.subr.bf16.mxu0 %v7570
    %10892 = vmatpush1.bf16.msra.mxu0 %v7569
    %10893 = vmatprep.subr.bf16.mxu0 %v7594
    %10894 = vmatpush1.bf16.msra.mxu0 %v7593
    %10895 = vmatprep.subr.bf16.mxu0 %v7618
    %10896 = vmatpush1.bf16.msra.mxu0 %v7617
    %10897 = vmatprep.subr.bf16.mxu0 %v7642
    %10898 = vmatpush1.bf16.msra.mxu0 %v7641
    %10899 = vmatprep.subr.bf16.mxu0 %v7666
    %10900 = vmatpush1.bf16.msra.mxu0 %v7665
    %10901 = vmatprep.subr.bf16.mxu0 %v7690
    %10902 = vmatpush1.bf16.msra.mxu0 %v7689
    %10903 = vmatprep.subr.bf16.mxu0 %v7714
    %10904 = vmatpush1.bf16.msra.mxu0 %v7713
    %10905 = vmatprep.mubr.bf16.mxu0 %v1960
    %10906 = vmatmul.mubr.bf16.gmra.mrb[0].mxu0 %v1959
    %v10907 = vpop.f32.mrb[0].mxu0
    %v10908 = vadd.f32 %v10867, %v10907
    %v10909 = vpop.f32.mrb[0].mxu0
    %v10910 = vadd.f32 %v10869, %v10909
    %v10911 = vpop.f32.mrb[0].mxu0
    %v10912 = vpop.f32.mrb[0].mxu0
    %10913 = vdwg.mxu0
    %10914 = vmatprep.subr.bf16.mxu0 %v7738
    %10915 = vmatpush1.bf16.msra.mxu0 %v7737
    %10916 = vmatprep.subr.bf16.mxu0 %v7762
    %10917 = vmatpush1.bf16.msra.mxu0 %v7761
    %10918 = vmatprep.subr.bf16.mxu0 %v7786
    %10919 = vmatpush1.bf16.msra.mxu0 %v7785
    %10920 = vmatprep.subr.bf16.mxu0 %v7810
    %10921 = vmatpush1.bf16.msra.mxu0 %v7809
    %10922 = vmatprep.subr.bf16.mxu0 %v7834
    %10923 = vmatpush1.bf16.msra.mxu0 %v7833
    %10924 = vmatprep.subr.bf16.mxu0 %v7858
    %10925 = vmatpush1.bf16.msra.mxu0 %v7857
    %10926 = vmatprep.subr.bf16.mxu0 %v7882
    %10927 = vmatpush1.bf16.msra.mxu0 %v7881
    %10928 = vmatprep.subr.bf16.mxu0 %v7906
    %10929 = vmatpush1.bf16.msra.mxu0 %v7905
    %10930 = vmatprep.subr.bf16.mxu0 %v7930
    %10931 = vmatpush1.bf16.msra.mxu0 %v7929
    %10932 = vmatprep.subr.bf16.mxu0 %v7954
    %10933 = vmatpush1.bf16.msra.mxu0 %v7953
    %10934 = vmatprep.subr.bf16.mxu0 %v7978
    %10935 = vmatpush1.bf16.msra.mxu0 %v7977
    %10936 = vmatprep.subr.bf16.mxu0 %v8002
    %10937 = vmatpush1.bf16.msra.mxu0 %v8001
    %10938 = vmatprep.subr.bf16.mxu0 %v8026
    %10939 = vmatpush1.bf16.msra.mxu0 %v8025
    %10940 = vmatprep.subr.bf16.mxu0 %v8050
    %10941 = vmatpush1.bf16.msra.mxu0 %v8049
    %10942 = vmatprep.subr.bf16.mxu0 %v8074
    %10943 = vmatpush1.bf16.msra.mxu0 %v8073
    %10944 = vmatprep.subr.bf16.mxu0 %v8098
    %10945 = vmatpush1.bf16.msra.mxu0 %v8097
    %10946 = vmatprep.mubr.bf16.mxu0 %v1962
    %10947 = vmatmul.mubr.bf16.gmra.mrb[0].mxu0 %v1961
    %v10948 = vpop.f32.mrb[0].mxu0
    %v10949 = vadd.f32 %v10908, %v10948
    %v10950 = vpop.f32.mrb[0].mxu0
    %v10951 = vadd.f32 %v10910, %v10950
    %v10952 = vpop.f32.mrb[0].mxu0
    %v10953 = vpop.f32.mrb[0].mxu0
    %10954 = vdwg.mxu0
    %10955 = vmatprep.subr.bf16.mxu0 %v6588
    %10956 = vmatpush1.bf16.msra.mxu0 %v6587
    %10957 = vmatprep.subr.bf16.mxu0 %v6612
    %10958 = vmatpush1.bf16.msra.mxu0 %v6611
    %10959 = vmatprep.subr.bf16.mxu0 %v6636
    %10960 = vmatpush1.bf16.msra.mxu0 %v6635
    %10961 = vmatprep.subr.bf16.mxu0 %v6660
    %10962 = vmatpush1.bf16.msra.mxu0 %v6659
    %10963 = vmatprep.subr.bf16.mxu0 %v6684
    %10964 = vmatpush1.bf16.msra.mxu0 %v6683
    %10965 = vmatprep.subr.bf16.mxu0 %v6708
    %10966 = vmatpush1.bf16.msra.mxu0 %v6707
    %10967 = vmatprep.subr.bf16.mxu0 %v6732
    %10968 = vmatpush1.bf16.msra.mxu0 %v6731
    %10969 = vmatprep.subr.bf16.mxu0 %v6756
    %10970 = vmatpush1.bf16.msra.mxu0 %v6755
    %10971 = vmatprep.subr.bf16.mxu0 %v6780
    %10972 = vmatpush1.bf16.msra.mxu0 %v6779
    %10973 = vmatprep.subr.bf16.mxu0 %v6804
    %10974 = vmatpush1.bf16.msra.mxu0 %v6803
    %10975 = vmatprep.subr.bf16.mxu0 %v6828
    %10976 = vmatpush1.bf16.msra.mxu0 %v6827
    %10977 = vmatprep.subr.bf16.mxu0 %v6852
    %10978 = vmatpush1.bf16.msra.mxu0 %v6851
    %10979 = vmatprep.subr.bf16.mxu0 %v6876
    %10980 = vmatpush1.bf16.msra.mxu0 %v6875
    %10981 = vmatprep.subr.bf16.mxu0 %v6900
    %10982 = vmatpush1.bf16.msra.mxu0 %v6899
    %10983 = vmatprep.subr.bf16.mxu0 %v6924
    %10984 = vmatpush1.bf16.msra.mxu0 %v6923
    %10985 = vmatprep.subr.bf16.mxu0 %v6948
    %10986 = vmatpush1.bf16.msra.mxu0 %v6947
    %10987 = vmatprep.mubr.bf16.mxu0 %v1956
    %10988 = vmatmul.mubr.bf16.gmra.mrb[0].mxu0 %v1955
    %v10989 = vpop.f32.mrb[0].mxu0
    %v10990 = vadd.f32 0.0, %v10989
    %v10991 = vpop.f32.mrb[0].mxu0
    %v10992 = vadd.f32 0.0, %v10991
    %v10993 = vpop.f32.mrb[0].mxu0
    %v10994 = vpop.f32.mrb[0].mxu0
    %10995 = vdwg.mxu0
    %10996 = vmatprep.subr.bf16.mxu0 %v6972
    %10997 = vmatpush1.bf16.msra.mxu0 %v6971
    %10998 = vmatprep.subr.bf16.mxu0 %v6996
    %10999 = vmatpush1.bf16.msra.mxu0 %v6995
    %11000 = vmatprep.subr.bf16.mxu0 %v7020
    %11001 = vmatpush1.bf16.msra.mxu0 %v7019
    %11002 = vmatprep.subr.bf16.mxu0 %v7044
    %11003 = vmatpush1.bf16.msra.mxu0 %v7043
    %11004 = vmatprep.subr.bf16.mxu0 %v7068
    %11005 = vmatpush1.bf16.msra.mxu0 %v7067
    %11006 = vmatprep.subr.bf16.mxu0 %v7092
    %11007 = vmatpush1.bf16.msra.mxu0 %v7091
    %11008 = vmatprep.subr.bf16.mxu0 %v7116
    %11009 = vmatpush1.bf16.msra.mxu0 %v7115
    %11010 = vmatprep.subr.bf16.mxu0 %v7140
    %11011 = vmatpush1.bf16.msra.mxu0 %v7139
    %11012 = vmatprep.subr.bf16.mxu0 %v7164
    %11013 = vmatpush1.bf16.msra.mxu0 %v7163
    %11014 = vmatprep.subr.bf16.mxu0 %v7188
    %11015 = vmatpush1.bf16.msra.mxu0 %v7187
    %11016 = vmatprep.subr.bf16.mxu0 %v7212
    %11017 = vmatpush1.bf16.msra.mxu0 %v7211
    %11018 = vmatprep.subr.bf16.mxu0 %v7236
    %11019 = vmatpush1.bf16.msra.mxu0 %v7235
    %11020 = vmatprep.subr.bf16.mxu0 %v7260
    %11021 = vmatpush1.bf16.msra.mxu0 %v7259
    %11022 = vmatprep.subr.bf16.mxu0 %v7284
    %11023 = vmatpush1.bf16.msra.mxu0 %v7283
    %11024 = vmatprep.subr.bf16.mxu0 %v7308
    %11025 = vmatpush1.bf16.msra.mxu0 %v7307
    %11026 = vmatprep.subr.bf16.mxu0 %v7332
    %11027 = vmatpush1.bf16.msra.mxu0 %v7331
    %11028 = vmatprep.mubr.bf16.mxu0 %v1958
    %11029 = vmatmul.mubr.bf16.gmra.mrb[0].mxu0 %v1957
    %v11030 = vpop.f32.mrb[0].mxu0
    %v11031 = vadd.f32 %v10990, %v11030
    %v11032 = vpop.f32.mrb[0].mxu0
    %v11033 = vadd.f32 %v10992, %v11032
    %v11034 = vpop.f32.mrb[0].mxu0
    %v11035 = vpop.f32.mrb[0].mxu0
    %11036 = vdwg.mxu0
    %11037 = vmatprep.subr.bf16.mxu0 %v7356
    %11038 = vmatpush1.bf16.msra.mxu0 %v7355
    %11039 = vmatprep.subr.bf16.mxu0 %v7380
    %11040 = vmatpush1.bf16.msra.mxu0 %v7379
    %11041 = vmatprep.subr.bf16.mxu0 %v7404
    %11042 = vmatpush1.bf16.msra.mxu0 %v7403
    %11043 = vmatprep.subr.bf16.mxu0 %v7428
    %11044 = vmatpush1.bf16.msra.mxu0 %v7427
    %11045 = vmatprep.subr.bf16.mxu0 %v7452
    %11046 = vmatpush1.bf16.msra.mxu0 %v7451
    %11047 = vmatprep.subr.bf16.mxu0 %v7476
    %11048 = vmatpush1.bf16.msra.mxu0 %v7475
    %11049 = vmatprep.subr.bf16.mxu0 %v7500
    %11050 = vmatpush1.bf16.msra.mxu0 %v7499
    %11051 = vmatprep.subr.bf16.mxu0 %v7524
    %11052 = vmatpush1.bf16.msra.mxu0 %v7523
    %11053 = vmatprep.subr.bf16.mxu0 %v7548
    %11054 = vmatpush1.bf16.msra.mxu0 %v7547
    %11055 = vmatprep.subr.bf16.mxu0 %v7572
    %11056 = vmatpush1.bf16.msra.mxu0 %v7571
    %11057 = vmatprep.subr.bf16.mxu0 %v7596
    %11058 = vmatpush1.bf16.msra.mxu0 %v7595
    %11059 = vmatprep.subr.bf16.mxu0 %v7620
    %11060 = vmatpush1.bf16.msra.mxu0 %v7619
    %11061 = vmatprep.subr.bf16.mxu0 %v7644
    %11062 = vmatpush1.bf16.msra.mxu0 %v7643
    %11063 = vmatprep.subr.bf16.mxu0 %v7668
    %11064 = vmatpush1.bf16.msra.mxu0 %v7667
    %11065 = vmatprep.subr.bf16.mxu0 %v7692
    %11066 = vmatpush1.bf16.msra.mxu0 %v7691
    %11067 = vmatprep.subr.bf16.mxu0 %v7716
    %11068 = vmatpush1.bf16.msra.mxu0 %v7715
    %11069 = vmatprep.mubr.bf16.mxu0 %v1960
    %11070 = vmatmul.mubr.bf16.gmra.mrb[0].mxu0 %v1959
    %v11071 = vpop.f32.mrb[0].mxu0
    %v11072 = vadd.f32 %v11031, %v11071
    %v11073 = vpop.f32.mrb[0].mxu0
    %v11074 = vadd.f32 %v11033, %v11073
    %v11075 = vpop.f32.mrb[0].mxu0
    %v11076 = vpop.f32.mrb[0].mxu0
    %11077 = vdwg.mxu0
    %11078 = vmatprep.subr.bf16.mxu0 %v7740
    %11079 = vmatpush1.bf16.msra.mxu0 %v7739
    %11080 = vmatprep.subr.bf16.mxu0 %v7764
    %11081 = vmatpush1.bf16.msra.mxu0 %v7763
    %11082 = vmatprep.subr.bf16.mxu0 %v7788
    %11083 = vmatpush1.bf16.msra.mxu0 %v7787
    %11084 = vmatprep.subr.bf16.mxu0 %v7812
    %11085 = vmatpush1.bf16.msra.mxu0 %v7811
    %11086 = vmatprep.subr.bf16.mxu0 %v7836
    %11087 = vmatpush1.bf16.msra.mxu0 %v7835
    %11088 = vmatprep.subr.bf16.mxu0 %v7860
    %11089 = vmatpush1.bf16.msra.mxu0 %v7859
    %11090 = vmatprep.subr.bf16.mxu0 %v7884
    %11091 = vmatpush1.bf16.msra.mxu0 %v7883
    %11092 = vmatprep.subr.bf16.mxu0 %v7908
    %11093 = vmatpush1.bf16.msra.mxu0 %v7907
    %11094 = vmatprep.subr.bf16.mxu0 %v7932
    %11095 = vmatpush1.bf16.msra.mxu0 %v7931
    %11096 = vmatprep.subr.bf16.mxu0 %v7956
    %11097 = vmatpush1.bf16.msra.mxu0 %v7955
    %11098 = vmatprep.subr.bf16.mxu0 %v7980
    %11099 = vmatpush1.bf16.msra.mxu0 %v7979
    %11100 = vmatprep.subr.bf16.mxu0 %v8004
    %11101 = vmatpush1.bf16.msra.mxu0 %v8003
    %11102 = vmatprep.subr.bf16.mxu0 %v8028
    %11103 = vmatpush1.bf16.msra.mxu0 %v8027
    %11104 = vmatprep.subr.bf16.mxu0 %v8052
    %11105 = vmatpush1.bf16.msra.mxu0 %v8051
    %11106 = vmatprep.subr.bf16.mxu0 %v8076
    %11107 = vmatpush1.bf16.msra.mxu0 %v8075
    %11108 = vmatprep.subr.bf16.mxu0 %v8100
    %11109 = vmatpush1.bf16.msra.mxu0 %v8099
    %11110 = vmatprep.mubr.bf16.mxu0 %v1962
    %11111 = vmatmul.mubr.bf16.gmra.mrb[0].mxu0 %v1961
    %v11112 = vpop.f32.mrb[0].mxu0
    %v11113 = vadd.f32 %v11072, %v11112
    %v11114 = vpop.f32.mrb[0].mxu0
    %v11115 = vadd.f32 %v11074, %v11114
    %v11116 = vpop.f32.mrb[0].mxu0
    %v11117 = vpop.f32.mrb[0].mxu0
    %11118 = vdwg.mxu0
    %11119 = vmatprep.subr.bf16.mxu0 %v6590
    %11120 = vmatpush1.bf16.msra.mxu0 %v6589
    %11121 = vmatprep.subr.bf16.mxu0 %v6614
    %11122 = vmatpush1.bf16.msra.mxu0 %v6613
    %11123 = vmatprep.subr.bf16.mxu0 %v6638
    %11124 = vmatpush1.bf16.msra.mxu0 %v6637
    %11125 = vmatprep.subr.bf16.mxu0 %v6662
    %11126 = vmatpush1.bf16.msra.mxu0 %v6661
    %11127 = vmatprep.subr.bf16.mxu0 %v6686
    %11128 = vmatpush1.bf16.msra.mxu0 %v6685
    %11129 = vmatprep.subr.bf16.mxu0 %v6710
    %11130 = vmatpush1.bf16.msra.mxu0 %v6709
    %11131 = vmatprep.subr.bf16.mxu0 %v6734
    %11132 = vmatpush1.bf16.msra.mxu0 %v6733
    %11133 = vmatprep.subr.bf16.mxu0 %v6758
    %11134 = vmatpush1.bf16.msra.mxu0 %v6757
    %11135 = vmatprep.subr.bf16.mxu0 %v6782
    %11136 = vmatpush1.bf16.msra.mxu0 %v6781
    %11137 = vmatprep.subr.bf16.mxu0 %v6806
    %11138 = vmatpush1.bf16.msra.mxu0 %v6805
    %11139 = vmatprep.subr.bf16.mxu0 %v6830
    %11140 = vmatpush1.bf16.msra.mxu0 %v6829
    %11141 = vmatprep.subr.bf16.mxu0 %v6854
    %11142 = vmatpush1.bf16.msra.mxu0 %v6853
    %11143 = vmatprep.subr.bf16.mxu0 %v6878
    %11144 = vmatpush1.bf16.msra.mxu0 %v6877
    %11145 = vmatprep.subr.bf16.mxu0 %v6902
    %11146 = vmatpush1.bf16.msra.mxu0 %v6901
    %11147 = vmatprep.subr.bf16.mxu0 %v6926
    %11148 = vmatpush1.bf16.msra.mxu0 %v6925
    %11149 = vmatprep.subr.bf16.mxu0 %v6950
    %11150 = vmatpush1.bf16.msra.mxu0 %v6949
    %11151 = vmatprep.mubr.bf16.mxu0 %v1956
    %11152 = vmatmul.mubr.bf16.gmra.mrb[0].mxu0 %v1955
    %v11153 = vpop.f32.mrb[0].mxu0
    %v11154 = vadd.f32 0.0, %v11153
    %v11155 = vpop.f32.mrb[0].mxu0
    %v11156 = vadd.f32 0.0, %v11155
    %v11157 = vpop.f32.mrb[0].mxu0
    %v11158 = vpop.f32.mrb[0].mxu0
    %11159 = vdwg.mxu0
    %11160 = vmatprep.subr.bf16.mxu0 %v6974
    %11161 = vmatpush1.bf16.msra.mxu0 %v6973
    %11162 = vmatprep.subr.bf16.mxu0 %v6998
    %11163 = vmatpush1.bf16.msra.mxu0 %v6997
    %11164 = vmatprep.subr.bf16.mxu0 %v7022
    %11165 = vmatpush1.bf16.msra.mxu0 %v7021
    %11166 = vmatprep.subr.bf16.mxu0 %v7046
    %11167 = vmatpush1.bf16.msra.mxu0 %v7045
    %11168 = vmatprep.subr.bf16.mxu0 %v7070
    %11169 = vmatpush1.bf16.msra.mxu0 %v7069
    %11170 = vmatprep.subr.bf16.mxu0 %v7094
    %11171 = vmatpush1.bf16.msra.mxu0 %v7093
    %11172 = vmatprep.subr.bf16.mxu0 %v7118
    %11173 = vmatpush1.bf16.msra.mxu0 %v7117
    %11174 = vmatprep.subr.bf16.mxu0 %v7142
    %11175 = vmatpush1.bf16.msra.mxu0 %v7141
    %11176 = vmatprep.subr.bf16.mxu0 %v7166
    %11177 = vmatpush1.bf16.msra.mxu0 %v7165
    %11178 = vmatprep.subr.bf16.mxu0 %v7190
    %11179 = vmatpush1.bf16.msra.mxu0 %v7189
    %11180 = vmatprep.subr.bf16.mxu0 %v7214
    %11181 = vmatpush1.bf16.msra.mxu0 %v7213
    %11182 = vmatprep.subr.bf16.mxu0 %v7238
    %11183 = vmatpush1.bf16.msra.mxu0 %v7237
    %11184 = vmatprep.subr.bf16.mxu0 %v7262
    %11185 = vmatpush1.bf16.msra.mxu0 %v7261
    %11186 = vmatprep.subr.bf16.mxu0 %v7286
    %11187 = vmatpush1.bf16.msra.mxu0 %v7285
    %11188 = vmatprep.subr.bf16.mxu0 %v7310
    %11189 = vmatpush1.bf16.msra.mxu0 %v7309
    %11190 = vmatprep.subr.bf16.mxu0 %v7334
    %11191 = vmatpush1.bf16.msra.mxu0 %v7333
    %11192 = vmatprep.mubr.bf16.mxu0 %v1958
    %11193 = vmatmul.mubr.bf16.gmra.mrb[0].mxu0 %v1957
    %v11194 = vpop.f32.mrb[0].mxu0
    %v11195 = vadd.f32 %v11154, %v11194
    %v11196 = vpop.f32.mrb[0].mxu0
    %v11197 = vadd.f32 %v11156, %v11196
    %v11198 = vpop.f32.mrb[0].mxu0
    %v11199 = vpop.f32.mrb[0].mxu0
    %11200 = vdwg.mxu0
    %11201 = vmatprep.subr.bf16.mxu0 %v7358
    %11202 = vmatpush1.bf16.msra.mxu0 %v7357
    %11203 = vmatprep.subr.bf16.mxu0 %v7382
    %11204 = vmatpush1.bf16.msra.mxu0 %v7381
    %11205 = vmatprep.subr.bf16.mxu0 %v7406
    %11206 = vmatpush1.bf16.msra.mxu0 %v7405
    %11207 = vmatprep.subr.bf16.mxu0 %v7430
    %11208 = vmatpush1.bf16.msra.mxu0 %v7429
    %11209 = vmatprep.subr.bf16.mxu0 %v7454
    %11210 = vmatpush1.bf16.msra.mxu0 %v7453
    %11211 = vmatprep.subr.bf16.mxu0 %v7478
    %11212 = vmatpush1.bf16.msra.mxu0 %v7477
    %11213 = vmatprep.subr.bf16.mxu0 %v7502
    %11214 = vmatpush1.bf16.msra.mxu0 %v7501
    %11215 = vmatprep.subr.bf16.mxu0 %v7526
    %11216 = vmatpush1.bf16.msra.mxu0 %v7525
    %11217 = vmatprep.subr.bf16.mxu0 %v7550
    %11218 = vmatpush1.bf16.msra.mxu0 %v7549
    %11219 = vmatprep.subr.bf16.mxu0 %v7574
    %11220 = vmatpush1.bf16.msra.mxu0 %v7573
    %11221 = vmatprep.subr.bf16.mxu0 %v7598
    %11222 = vmatpush1.bf16.msra.mxu0 %v7597
    %11223 = vmatprep.subr.bf16.mxu0 %v7622
    %11224 = vmatpush1.bf16.msra.mxu0 %v7621
    %11225 = vmatprep.subr.bf16.mxu0 %v7646
    %11226 = vmatpush1.bf16.msra.mxu0 %v7645
    %11227 = vmatprep.subr.bf16.mxu0 %v7670
    %11228 = vmatpush1.bf16.msra.mxu0 %v7669
    %11229 = vmatprep.subr.bf16.mxu0 %v7694
    %11230 = vmatpush1.bf16.msra.mxu0 %v7693
    %11231 = vmatprep.subr.bf16.mxu0 %v7718
    %11232 = vmatpush1.bf16.msra.mxu0 %v7717
    %11233 = vmatprep.mubr.bf16.mxu0 %v1960
    %11234 = vmatmul.mubr.bf16.gmra.mrb[0].mxu0 %v1959
    %v11235 = vpop.f32.mrb[0].mxu0
    %v11236 = vadd.f32 %v11195, %v11235
    %v11237 = vpop.f32.mrb[0].mxu0
    %v11238 = vadd.f32 %v11197, %v11237
    %v11239 = vpop.f32.mrb[0].mxu0
    %v11240 = vpop.f32.mrb[0].mxu0
    %11241 = vdwg.mxu0
    %11242 = vmatprep.subr.bf16.mxu0 %v7742
    %11243 = vmatpush1.bf16.msra.mxu0 %v7741
    %11244 = vmatprep.subr.bf16.mxu0 %v7766
    %11245 = vmatpush1.bf16.msra.mxu0 %v7765
    %11246 = vmatprep.subr.bf16.mxu0 %v7790
    %11247 = vmatpush1.bf16.msra.mxu0 %v7789
    %11248 = vmatprep.subr.bf16.mxu0 %v7814
    %11249 = vmatpush1.bf16.msra.mxu0 %v7813
    %11250 = vmatprep.subr.bf16.mxu0 %v7838
    %11251 = vmatpush1.bf16.msra.mxu0 %v7837
    %11252 = vmatprep.subr.bf16.mxu0 %v7862
    %11253 = vmatpush1.bf16.msra.mxu0 %v7861
    %11254 = vmatprep.subr.bf16.mxu0 %v7886
    %11255 = vmatpush1.bf16.msra.mxu0 %v7885
    %11256 = vmatprep.subr.bf16.mxu0 %v7910
    %11257 = vmatpush1.bf16.msra.mxu0 %v7909
    %11258 = vmatprep.subr.bf16.mxu0 %v7934
    %11259 = vmatpush1.bf16.msra.mxu0 %v7933
    %11260 = vmatprep.subr.bf16.mxu0 %v7958
    %11261 = vmatpush1.bf16.msra.mxu0 %v7957
    %11262 = vmatprep.subr.bf16.mxu0 %v7982
    %11263 = vmatpush1.bf16.msra.mxu0 %v7981
    %11264 = vmatprep.subr.bf16.mxu0 %v8006
    %11265 = vmatpush1.bf16.msra.mxu0 %v8005
    %11266 = vmatprep.subr.bf16.mxu0 %v8030
    %11267 = vmatpush1.bf16.msra.mxu0 %v8029
    %11268 = vmatprep.subr.bf16.mxu0 %v8054
    %11269 = vmatpush1.bf16.msra.mxu0 %v8053
    %11270 = vmatprep.subr.bf16.mxu0 %v8078
    %11271 = vmatpush1.bf16.msra.mxu0 %v8077
    %11272 = vmatprep.subr.bf16.mxu0 %v8102
    %11273 = vmatpush1.bf16.msra.mxu0 %v8101
    %11274 = vmatprep.mubr.bf16.mxu0 %v1962
    %11275 = vmatmul.mubr.bf16.gmra.mrb[0].mxu0 %v1961
    %v11276 = vpop.f32.mrb[0].mxu0
    %v11277 = vadd.f32 %v11236, %v11276
    %v11278 = vpop.f32.mrb[0].mxu0
    %v11279 = vadd.f32 %v11238, %v11278
    %v11280 = vpop.f32.mrb[0].mxu0
    %v11281 = vpop.f32.mrb[0].mxu0
    %11282 = vdwg.mxu0
    %11283 = vmatprep.subr.bf16.mxu0 %v6592
    %11284 = vmatpush1.bf16.msra.mxu0 %v6591
    %11285 = vmatprep.subr.bf16.mxu0 %v6616
    %11286 = vmatpush1.bf16.msra.mxu0 %v6615
    %11287 = vmatprep.subr.bf16.mxu0 %v6640
    %11288 = vmatpush1.bf16.msra.mxu0 %v6639
    %11289 = vmatprep.subr.bf16.mxu0 %v6664
    %11290 = vmatpush1.bf16.msra.mxu0 %v6663
    %11291 = vmatprep.subr.bf16.mxu0 %v6688
    %11292 = vmatpush1.bf16.msra.mxu0 %v6687
    %11293 = vmatprep.subr.bf16.mxu0 %v6712
    %11294 = vmatpush1.bf16.msra.mxu0 %v6711
    %11295 = vmatprep.subr.bf16.mxu0 %v6736
    %11296 = vmatpush1.bf16.msra.mxu0 %v6735
    %11297 = vmatprep.subr.bf16.mxu0 %v6760
    %11298 = vmatpush1.bf16.msra.mxu0 %v6759
    %11299 = vmatprep.subr.bf16.mxu0 %v6784
    %11300 = vmatpush1.bf16.msra.mxu0 %v6783
    %11301 = vmatprep.subr.bf16.mxu0 %v6808
    %11302 = vmatpush1.bf16.msra.mxu0 %v6807
    %11303 = vmatprep.subr.bf16.mxu0 %v6832
    %11304 = vmatpush1.bf16.msra.mxu0 %v6831
    %11305 = vmatprep.subr.bf16.mxu0 %v6856
    %11306 = vmatpush1.bf16.msra.mxu0 %v6855
    %11307 = vmatprep.subr.bf16.mxu0 %v6880
    %11308 = vmatpush1.bf16.msra.mxu0 %v6879
    %11309 = vmatprep.subr.bf16.mxu0 %v6904
    %11310 = vmatpush1.bf16.msra.mxu0 %v6903
    %11311 = vmatprep.subr.bf16.mxu0 %v6928
    %11312 = vmatpush1.bf16.msra.mxu0 %v6927
    %11313 = vmatprep.subr.bf16.mxu0 %v6952
    %11314 = vmatpush1.bf16.msra.mxu0 %v6951
    %11315 = vmatprep.mubr.bf16.mxu0 %v1956
    %11316 = vmatmul.mubr.bf16.gmra.mrb[0].mxu0 %v1955
    %v11317 = vpop.f32.mrb[0].mxu0
    %v11318 = vadd.f32 0.0, %v11317
    %v11319 = vpop.f32.mrb[0].mxu0
    %v11320 = vadd.f32 0.0, %v11319
    %v11321 = vpop.f32.mrb[0].mxu0
    %v11322 = vpop.f32.mrb[0].mxu0
    %11323 = vdwg.mxu0
    %11324 = vmatprep.subr.bf16.mxu0 %v6976
    %11325 = vmatpush1.bf16.msra.mxu0 %v6975
    %11326 = vmatprep.subr.bf16.mxu0 %v7000
    %11327 = vmatpush1.bf16.msra.mxu0 %v6999
    %11328 = vmatprep.subr.bf16.mxu0 %v7024
    %11329 = vmatpush1.bf16.msra.mxu0 %v7023
    %11330 = vmatprep.subr.bf16.mxu0 %v7048
    %11331 = vmatpush1.bf16.msra.mxu0 %v7047
    %11332 = vmatprep.subr.bf16.mxu0 %v7072
    %11333 = vmatpush1.bf16.msra.mxu0 %v7071
    %11334 = vmatprep.subr.bf16.mxu0 %v7096
    %11335 = vmatpush1.bf16.msra.mxu0 %v7095
    %11336 = vmatprep.subr.bf16.mxu0 %v7120
    %11337 = vmatpush1.bf16.msra.mxu0 %v7119
    %11338 = vmatprep.subr.bf16.mxu0 %v7144
    %11339 = vmatpush1.bf16.msra.mxu0 %v7143
    %11340 = vmatprep.subr.bf16.mxu0 %v7168
    %11341 = vmatpush1.bf16.msra.mxu0 %v7167
    %11342 = vmatprep.subr.bf16.mxu0 %v7192
    %11343 = vmatpush1.bf16.msra.mxu0 %v7191
    %11344 = vmatprep.subr.bf16.mxu0 %v7216
    %11345 = vmatpush1.bf16.msra.mxu0 %v7215
    %11346 = vmatprep.subr.bf16.mxu0 %v7240
    %11347 = vmatpush1.bf16.msra.mxu0 %v7239
    %11348 = vmatprep.subr.bf16.mxu0 %v7264
    %11349 = vmatpush1.bf16.msra.mxu0 %v7263
    %11350 = vmatprep.subr.bf16.mxu0 %v7288
    %11351 = vmatpush1.bf16.msra.mxu0 %v7287
    %11352 = vmatprep.subr.bf16.mxu0 %v7312
    %11353 = vmatpush1.bf16.msra.mxu0 %v7311
    %11354 = vmatprep.subr.bf16.mxu0 %v7336
    %11355 = vmatpush1.bf16.msra.mxu0 %v7335
    %11356 = vmatprep.mubr.bf16.mxu0 %v1958
    %11357 = vmatmul.mubr.bf16.gmra.mrb[0].mxu0 %v1957
    %v11358 = vpop.f32.mrb[0].mxu0
    %v11359 = vadd.f32 %v11318, %v11358
    %v11360 = vpop.f32.mrb[0].mxu0
    %v11361 = vadd.f32 %v11320, %v11360
    %v11362 = vpop.f32.mrb[0].mxu0
    %v11363 = vpop.f32.mrb[0].mxu0
    %11364 = vdwg.mxu0
    %11365 = vmatprep.subr.bf16.mxu0 %v7360
    %11366 = vmatpush1.bf16.msra.mxu0 %v7359
    %11367 = vmatprep.subr.bf16.mxu0 %v7384
    %11368 = vmatpush1.bf16.msra.mxu0 %v7383
    %11369 = vmatprep.subr.bf16.mxu0 %v7408
    %11370 = vmatpush1.bf16.msra.mxu0 %v7407
    %11371 = vmatprep.subr.bf16.mxu0 %v7432
    %11372 = vmatpush1.bf16.msra.mxu0 %v7431
    %11373 = vmatprep.subr.bf16.mxu0 %v7456
    %11374 = vmatpush1.bf16.msra.mxu0 %v7455
    %11375 = vmatprep.subr.bf16.mxu0 %v7480
    %11376 = vmatpush1.bf16.msra.mxu0 %v7479
    %11377 = vmatprep.subr.bf16.mxu0 %v7504
    %11378 = vmatpush1.bf16.msra.mxu0 %v7503
    %11379 = vmatprep.subr.bf16.mxu0 %v7528
    %11380 = vmatpush1.bf16.msra.mxu0 %v7527
    %11381 = vmatprep.subr.bf16.mxu0 %v7552
    %11382 = vmatpush1.bf16.msra.mxu0 %v7551
    %11383 = vmatprep.subr.bf16.mxu0 %v7576
    %11384 = vmatpush1.bf16.msra.mxu0 %v7575
    %11385 = vmatprep.subr.bf16.mxu0 %v7600
    %11386 = vmatpush1.bf16.msra.mxu0 %v7599
    %11387 = vmatprep.subr.bf16.mxu0 %v7624
    %11388 = vmatpush1.bf16.msra.mxu0 %v7623
    %11389 = vmatprep.subr.bf16.mxu0 %v7648
    %11390 = vmatpush1.bf16.msra.mxu0 %v7647
    %11391 = vmatprep.subr.bf16.mxu0 %v7672
    %11392 = vmatpush1.bf16.msra.mxu0 %v7671
    %11393 = vmatprep.subr.bf16.mxu0 %v7696
    %11394 = vmatpush1.bf16.msra.mxu0 %v7695
    %11395 = vmatprep.subr.bf16.mxu0 %v7720
    %11396 = vmatpush1.bf16.msra.mxu0 %v7719
    %11397 = vmatprep.mubr.bf16.mxu0 %v1960
    %11398 = vmatmul.mubr.bf16.gmra.mrb[0].mxu0 %v1959
    %v11399 = vpop.f32.mrb[0].mxu0
    %v11400 = vadd.f32 %v11359, %v11399
    %v11401 = vpop.f32.mrb[0].mxu0
    %v11402 = vadd.f32 %v11361, %v11401
    %v11403 = vpop.f32.mrb[0].mxu0
    %v11404 = vpop.f32.mrb[0].mxu0
    %11405 = vdwg.mxu0
    %11406 = vmatprep.subr.bf16.mxu0 %v7744
    %11407 = vmatpush1.bf16.msra.mxu0 %v7743
    %11408 = vmatprep.subr.bf16.mxu0 %v7768
    %11409 = vmatpush1.bf16.msra.mxu0 %v7767
    %11410 = vmatprep.subr.bf16.mxu0 %v7792
    %11411 = vmatpush1.bf16.msra.mxu0 %v7791
    %11412 = vmatprep.subr.bf16.mxu0 %v7816
    %11413 = vmatpush1.bf16.msra.mxu0 %v7815
    %11414 = vmatprep.subr.bf16.mxu0 %v7840
    %11415 = vmatpush1.bf16.msra.mxu0 %v7839
    %11416 = vmatprep.subr.bf16.mxu0 %v7864
    %11417 = vmatpush1.bf16.msra.mxu0 %v7863
    %11418 = vmatprep.subr.bf16.mxu0 %v7888
    %11419 = vmatpush1.bf16.msra.mxu0 %v7887
    %11420 = vmatprep.subr.bf16.mxu0 %v7912
    %11421 = vmatpush1.bf16.msra.mxu0 %v7911
    %11422 = vmatprep.subr.bf16.mxu0 %v7936
    %11423 = vmatpush1.bf16.msra.mxu0 %v7935
    %11424 = vmatprep.subr.bf16.mxu0 %v7960
    %11425 = vmatpush1.bf16.msra.mxu0 %v7959
    %11426 = vmatprep.subr.bf16.mxu0 %v7984
    %11427 = vmatpush1.bf16.msra.mxu0 %v7983
    %11428 = vmatprep.subr.bf16.mxu0 %v8008
    %11429 = vmatpush1.bf16.msra.mxu0 %v8007
    %11430 = vmatprep.subr.bf16.mxu0 %v8032
    %11431 = vmatpush1.bf16.msra.mxu0 %v8031
    %11432 = vmatprep.subr.bf16.mxu0 %v8056
    %11433 = vmatpush1.bf16.msra.mxu0 %v8055
    %11434 = vmatprep.subr.bf16.mxu0 %v8080
    %11435 = vmatpush1.bf16.msra.mxu0 %v8079
    %11436 = vmatprep.subr.bf16.mxu0 %v8104
    %11437 = vmatpush1.bf16.msra.mxu0 %v8103
    %11438 = vmatprep.mubr.bf16.mxu0 %v1962
    %11439 = vmatmul.mubr.bf16.gmra.mrb[0].mxu0 %v1961
    %v11440 = vpop.f32.mrb[0].mxu0
    %v11441 = vadd.f32 %v11400, %v11440
    %v11442 = vpop.f32.mrb[0].mxu0
    %v11443 = vadd.f32 %v11402, %v11442
    %v11444 = vpop.f32.mrb[0].mxu0
    %v11445 = vpop.f32.mrb[0].mxu0
    %11446 = vdwg.mxu0
    %11447 = vmatprep.subr.bf16.mxu0 %v6594
    %11448 = vmatpush1.bf16.msra.mxu0 %v6593
    %11449 = vmatprep.subr.bf16.mxu0 %v6618
    %11450 = vmatpush1.bf16.msra.mxu0 %v6617
    %11451 = vmatprep.subr.bf16.mxu0 %v6642
    %11452 = vmatpush1.bf16.msra.mxu0 %v6641
    %11453 = vmatprep.subr.bf16.mxu0 %v6666
    %11454 = vmatpush1.bf16.msra.mxu0 %v6665
    %11455 = vmatprep.subr.bf16.mxu0 %v6690
    %11456 = vmatpush1.bf16.msra.mxu0 %v6689
    %11457 = vmatprep.subr.bf16.mxu0 %v6714
    %11458 = vmatpush1.bf16.msra.mxu0 %v6713
    %11459 = vmatprep.subr.bf16.mxu0 %v6738
    %11460 = vmatpush1.bf16.msra.mxu0 %v6737
    %11461 = vmatprep.subr.bf16.mxu0 %v6762
    %11462 = vmatpush1.bf16.msra.mxu0 %v6761
    %11463 = vmatprep.subr.bf16.mxu0 %v6786
    %11464 = vmatpush1.bf16.msra.mxu0 %v6785
    %11465 = vmatprep.subr.bf16.mxu0 %v6810
    %11466 = vmatpush1.bf16.msra.mxu0 %v6809
    %11467 = vmatprep.subr.bf16.mxu0 %v6834
    %11468 = vmatpush1.bf16.msra.mxu0 %v6833
    %11469 = vmatprep.subr.bf16.mxu0 %v6858
    %11470 = vmatpush1.bf16.msra.mxu0 %v6857
    %11471 = vmatprep.subr.bf16.mxu0 %v6882
    %11472 = vmatpush1.bf16.msra.mxu0 %v6881
    %11473 = vmatprep.subr.bf16.mxu0 %v6906
    %11474 = vmatpush1.bf16.msra.mxu0 %v6905
    %11475 = vmatprep.subr.bf16.mxu0 %v6930
    %11476 = vmatpush1.bf16.msra.mxu0 %v6929
    %11477 = vmatprep.subr.bf16.mxu0 %v6954
    %11478 = vmatpush1.bf16.msra.mxu0 %v6953
    %11479 = vmatprep.mubr.bf16.mxu0 %v1956
    %11480 = vmatmul.mubr.bf16.gmra.mrb[0].mxu0 %v1955
    %v11481 = vpop.f32.mrb[0].mxu0
    %v11482 = vadd.f32 0.0, %v11481
    %v11483 = vpop.f32.mrb[0].mxu0
    %v11484 = vadd.f32 0.0, %v11483
    %v11485 = vpop.f32.mrb[0].mxu0
    %v11486 = vpop.f32.mrb[0].mxu0
    %11487 = vdwg.mxu0
    %11488 = vmatprep.subr.bf16.mxu0 %v6978
    %11489 = vmatpush1.bf16.msra.mxu0 %v6977
    %11490 = vmatprep.subr.bf16.mxu0 %v7002
    %11491 = vmatpush1.bf16.msra.mxu0 %v7001
    %11492 = vmatprep.subr.bf16.mxu0 %v7026
    %11493 = vmatpush1.bf16.msra.mxu0 %v7025
    %11494 = vmatprep.subr.bf16.mxu0 %v7050
    %11495 = vmatpush1.bf16.msra.mxu0 %v7049
    %11496 = vmatprep.subr.bf16.mxu0 %v7074
    %11497 = vmatpush1.bf16.msra.mxu0 %v7073
    %11498 = vmatprep.subr.bf16.mxu0 %v7098
    %11499 = vmatpush1.bf16.msra.mxu0 %v7097
    %11500 = vmatprep.subr.bf16.mxu0 %v7122
    %11501 = vmatpush1.bf16.msra.mxu0 %v7121
    %11502 = vmatprep.subr.bf16.mxu0 %v7146
    %11503 = vmatpush1.bf16.msra.mxu0 %v7145
    %11504 = vmatprep.subr.bf16.mxu0 %v7170
    %11505 = vmatpush1.bf16.msra.mxu0 %v7169
    %11506 = vmatprep.subr.bf16.mxu0 %v7194
    %11507 = vmatpush1.bf16.msra.mxu0 %v7193
    %11508 = vmatprep.subr.bf16.mxu0 %v7218
    %11509 = vmatpush1.bf16.msra.mxu0 %v7217
    %11510 = vmatprep.subr.bf16.mxu0 %v7242
    %11511 = vmatpush1.bf16.msra.mxu0 %v7241
    %11512 = vmatprep.subr.bf16.mxu0 %v7266
    %11513 = vmatpush1.bf16.msra.mxu0 %v7265
    %11514 = vmatprep.subr.bf16.mxu0 %v7290
    %11515 = vmatpush1.bf16.msra.mxu0 %v7289
    %11516 = vmatprep.subr.bf16.mxu0 %v7314
    %11517 = vmatpush1.bf16.msra.mxu0 %v7313
    %11518 = vmatprep.subr.bf16.mxu0 %v7338
    %11519 = vmatpush1.bf16.msra.mxu0 %v7337
    %11520 = vmatprep.mubr.bf16.mxu0 %v1958
    %11521 = vmatmul.mubr.bf16.gmra.mrb[0].mxu0 %v1957
    %v11522 = vpop.f32.mrb[0].mxu0
    %v11523 = vadd.f32 %v11482, %v11522
    %v11524 = vpop.f32.mrb[0].mxu0
    %v11525 = vadd.f32 %v11484, %v11524
    %v11526 = vpop.f32.mrb[0].mxu0
    %v11527 = vpop.f32.mrb[0].mxu0
    %11528 = vdwg.mxu0
    %11529 = vmatprep.subr.bf16.mxu0 %v7362
    %11530 = vmatpush1.bf16.msra.mxu0 %v7361
    %11531 = vmatprep.subr.bf16.mxu0 %v7386
    %11532 = vmatpush1.bf16.msra.mxu0 %v7385
    %11533 = vmatprep.subr.bf16.mxu0 %v7410
    %11534 = vmatpush1.bf16.msra.mxu0 %v7409
    %11535 = vmatprep.subr.bf16.mxu0 %v7434
    %11536 = vmatpush1.bf16.msra.mxu0 %v7433
    %11537 = vmatprep.subr.bf16.mxu0 %v7458
    %11538 = vmatpush1.bf16.msra.mxu0 %v7457
    %11539 = vmatprep.subr.bf16.mxu0 %v7482
    %11540 = vmatpush1.bf16.msra.mxu0 %v7481
    %11541 = vmatprep.subr.bf16.mxu0 %v7506
    %11542 = vmatpush1.bf16.msra.mxu0 %v7505
    %11543 = vmatprep.subr.bf16.mxu0 %v7530
    %11544 = vmatpush1.bf16.msra.mxu0 %v7529
    %11545 = vmatprep.subr.bf16.mxu0 %v7554
    %11546 = vmatpush1.bf16.msra.mxu0 %v7553
    %11547 = vmatprep.subr.bf16.mxu0 %v7578
    %11548 = vmatpush1.bf16.msra.mxu0 %v7577
    %11549 = vmatprep.subr.bf16.mxu0 %v7602
    %11550 = vmatpush1.bf16.msra.mxu0 %v7601
    %11551 = vmatprep.subr.bf16.mxu0 %v7626
    %11552 = vmatpush1.bf16.msra.mxu0 %v7625
    %11553 = vmatprep.subr.bf16.mxu0 %v7650
    %11554 = vmatpush1.bf16.msra.mxu0 %v7649
    %11555 = vmatprep.subr.bf16.mxu0 %v7674
    %11556 = vmatpush1.bf16.msra.mxu0 %v7673
    %11557 = vmatprep.subr.bf16.mxu0 %v7698
    %11558 = vmatpush1.bf16.msra.mxu0 %v7697
    %11559 = vmatprep.subr.bf16.mxu0 %v7722
    %11560 = vmatpush1.bf16.msra.mxu0 %v7721
    %11561 = vmatprep.mubr.bf16.mxu0 %v1960
    %11562 = vmatmul.mubr.bf16.gmra.mrb[0].mxu0 %v1959
    %v11563 = vpop.f32.mrb[0].mxu0
    %v11564 = vadd.f32 %v11523, %v11563
    %v11565 = vpop.f32.mrb[0].mxu0
    %v11566 = vadd.f32 %v11525, %v11565
    %v11567 = vpop.f32.mrb[0].mxu0
    %v11568 = vpop.f32.mrb[0].mxu0
    %11569 = vdwg.mxu0
    %11570 = vmatprep.subr.bf16.mxu0 %v7746
    %11571 = vmatpush1.bf16.msra.mxu0 %v7745
    %11572 = vmatprep.subr.bf16.mxu0 %v7770
    %11573 = vmatpush1.bf16.msra.mxu0 %v7769
    %11574 = vmatprep.subr.bf16.mxu0 %v7794
    %11575 = vmatpush1.bf16.msra.mxu0 %v7793
    %11576 = vmatprep.subr.bf16.mxu0 %v7818
    %11577 = vmatpush1.bf16.msra.mxu0 %v7817
    %11578 = vmatprep.subr.bf16.mxu0 %v7842
    %11579 = vmatpush1.bf16.msra.mxu0 %v7841
    %11580 = vmatprep.subr.bf16.mxu0 %v7866
    %11581 = vmatpush1.bf16.msra.mxu0 %v7865
    %11582 = vmatprep.subr.bf16.mxu0 %v7890
    %11583 = vmatpush1.bf16.msra.mxu0 %v7889
    %11584 = vmatprep.subr.bf16.mxu0 %v7914
    %11585 = vmatpush1.bf16.msra.mxu0 %v7913
    %11586 = vmatprep.subr.bf16.mxu0 %v7938
    %11587 = vmatpush1.bf16.msra.mxu0 %v7937
    %11588 = vmatprep.subr.bf16.mxu0 %v7962
    %11589 = vmatpush1.bf16.msra.mxu0 %v7961
    %11590 = vmatprep.subr.bf16.mxu0 %v7986
    %11591 = vmatpush1.bf16.msra.mxu0 %v7985
    %11592 = vmatprep.subr.bf16.mxu0 %v8010
    %11593 = vmatpush1.bf16.msra.mxu0 %v8009
    %11594 = vmatprep.subr.bf16.mxu0 %v8034
    %11595 = vmatpush1.bf16.msra.mxu0 %v8033
    %11596 = vmatprep.subr.bf16.mxu0 %v8058
    %11597 = vmatpush1.bf16.msra.mxu0 %v8057
    %11598 = vmatprep.subr.bf16.mxu0 %v8082
    %11599 = vmatpush1.bf16.msra.mxu0 %v8081
    %11600 = vmatprep.subr.bf16.mxu0 %v8106
    %11601 = vmatpush1.bf16.msra.mxu0 %v8105
    %11602 = vmatprep.mubr.bf16.mxu0 %v1962
    %11603 = vmatmul.mubr.bf16.gmra.mrb[0].mxu0 %v1961
    %v11604 = vpop.f32.mrb[0].mxu0
    %v11605 = vadd.f32 %v11564, %v11604
    %v11606 = vpop.f32.mrb[0].mxu0
    %v11607 = vadd.f32 %v11566, %v11606
    %v11608 = vpop.f32.mrb[0].mxu0
    %v11609 = vpop.f32.mrb[0].mxu0
    %11610 = vdwg.mxu0
    %v11611 = vmax.f32 %v9801, %v10293
    %v11612 = vmax.f32 %v9803, %v10295
    %v11613 = vmax.f32 %v9965, %v10457
    %v11614 = vmax.f32 %v9967, %v10459
    %v11615 = vmax.f32 %v10129, %v10621
    %v11616 = vmax.f32 %v10131, %v10623
    %v11617 = vmax.f32 %v10785, %v11277
    %v11618 = vmax.f32 %v10787, %v11279
    %v11619 = vmax.f32 %v10949, %v11441
    %v11620 = vmax.f32 %v10951, %v11443
    %v11621 = vmax.f32 %v11113, %v11605
    %v11622 = vmax.f32 %v11115, %v11607
    %v11623 = vmax.f32 %v11611, %v11617
    %v11624 = vmax.f32 %v11612, %v11618
    %v11625 = vmax.f32 %v11613, %v11619
    %v11626 = vmax.f32 %v11614, %v11620
    %v11627 = vmax.f32 %v11615, %v11621
    %v11628 = vmax.f32 %v11616, %v11622
    %v11630 = vlaneseq
    %v11631 = vshrl.u32 %v11630, 7
    %v11632 = vsub.s32 0, %v11631
    %v11633 = vrot.slane %v1664, %v11632
    %v11634 = vlaneseq
    %v11635 = vshrl.u32 %v11634, 7
    %v11636 = vsub.s32 1, %v11635
    %v11637 = vrot.slane %v1664, %v11636
    %v11638 = vlaneseq
    %v11639 = vshrl.u32 %v11638, 7
    %v11640 = vsub.s32 2, %v11639
    %v11641 = vrot.slane %v1664, %v11640
    %v11642 = vlaneseq
    %v11643 = vshrl.u32 %v11642, 7
    %v11644 = vsub.s32 3, %v11643
    %v11645 = vrot.slane %v1664, %v11644
    %v11646 = vlaneseq
    %v11647 = vshrl.u32 %v11646, 7
    %v11648 = vsub.s32 4, %v11647
    %v11649 = vrot.slane %v1664, %v11648
    %v11650 = vlaneseq
    %v11651 = vshrl.u32 %v11650, 7
    %v11652 = vsub.s32 5, %v11651
    %v11653 = vrot.slane %v1664, %v11652
    %v11660 = vadd.f32 %v11623, %v11633
    %v11661 = vadd.f32 %v11624, %v11637
    %v11662 = vadd.f32 %v11625, %v11641
    %v11663 = vadd.f32 %v11626, %v11645
    %v11664 = vadd.f32 %v11627, %v11649
    %v11665 = vadd.f32 %v11628, %v11653
    %v11666 = vmax.f32 %v11660, 0.0
    %v11667 = vmax.f32 %v11661, 0.0
    %v11668 = vmax.f32 %v11662, 0.0
    %v11669 = vmax.f32 %v11663, 0.0
    %v11670 = vmax.f32 %v11664, 0.0
    %v11671 = vmax.f32 %v11665, 0.0
    %v11672 = vpack.c.bf16 %v11666, %v11666
    %v11673 = vpack.c.bf16 %v11667, %v11667
    %v11674 = vpack.c.bf16 %v11668, %v11668
    %v11675 = vpack.c.bf16 %v11669, %v11669
    %v11676 = vpack.c.bf16 %v11670, %v11670
    %v11677 = vpack.c.bf16 %v11671, %v11671
    %v11870 = vunpack.c.l.b16 %v1665
    %v11871 = vunpack.c.h.b16 %v1665
    %v11872 = vunpack.c.l.b16 %v1666
    %v11873 = vunpack.c.h.b16 %v1666
    %v11874 = vunpack.c.l.b16 %v1667
    %v11875 = vunpack.c.h.b16 %v1667
    %v11876 = vunpack.c.l.b16 %v1668
    %v11877 = vunpack.c.h.b16 %v1668
    %v11878 = vunpack.c.l.b16 %v1669
    %v11879 = vunpack.c.h.b16 %v1669
    %v11880 = vunpack.c.l.b16 %v1670
    %v11881 = vunpack.c.h.b16 %v1670
    %v11882 = vunpack.c.l.b16 %v1671
    %v11883 = vunpack.c.h.b16 %v1671
    %v11884 = vunpack.c.l.b16 %v1672
    %v11885 = vunpack.c.h.b16 %v1672
    %v11886 = vunpack.c.l.b16 %v1673
    %v11887 = vunpack.c.h.b16 %v1673
    %v11888 = vunpack.c.l.b16 %v1674
    %v11889 = vunpack.c.h.b16 %v1674
    %v11890 = vunpack.c.l.b16 %v1675
    %v11891 = vunpack.c.h.b16 %v1675
    %v11892 = vunpack.c.l.b16 %v1676
    %v11893 = vunpack.c.h.b16 %v1676
    %v11894 = vunpack.c.l.b16 %v1677
    %v11895 = vunpack.c.h.b16 %v1677
    %v11896 = vunpack.c.l.b16 %v1678
    %v11897 = vunpack.c.h.b16 %v1678
    %v11898 = vunpack.c.l.b16 %v1679
    %v11899 = vunpack.c.h.b16 %v1679
    %v11900 = vunpack.c.l.b16 %v1680
    %v11901 = vunpack.c.h.b16 %v1680
    %v11902 = vunpack.c.l.b16 %v1681
    %v11903 = vunpack.c.h.b16 %v1681
    %v11904 = vunpack.c.l.b16 %v1682
    %v11905 = vunpack.c.h.b16 %v1682
    %v11906 = vunpack.c.l.b16 %v1683
    %v11907 = vunpack.c.h.b16 %v1683
    %v11908 = vunpack.c.l.b16 %v1684
    %v11909 = vunpack.c.h.b16 %v1684
    %v11910 = vunpack.c.l.b16 %v1685
    %v11911 = vunpack.c.h.b16 %v1685
    %v11912 = vunpack.c.l.b16 %v1686
    %v11913 = vunpack.c.h.b16 %v1686
    %v11914 = vunpack.c.l.b16 %v1687
    %v11915 = vunpack.c.h.b16 %v1687
    %v11916 = vunpack.c.l.b16 %v1688
    %v11917 = vunpack.c.h.b16 %v1688
    %v11918 = vunpack.c.l.b16 %v1689
    %v11919 = vunpack.c.h.b16 %v1689
    %v11920 = vunpack.c.l.b16 %v1690
    %v11921 = vunpack.c.h.b16 %v1690
    %v11922 = vunpack.c.l.b16 %v1691
    %v11923 = vunpack.c.h.b16 %v1691
    %v11924 = vunpack.c.l.b16 %v1692
    %v11925 = vunpack.c.h.b16 %v1692
    %v11926 = vunpack.c.l.b16 %v1693
    %v11927 = vunpack.c.h.b16 %v1693
    %v11928 = vunpack.c.l.b16 %v1694
    %v11929 = vunpack.c.h.b16 %v1694
    %v11930 = vunpack.c.l.b16 %v1695
    %v11931 = vunpack.c.h.b16 %v1695
    %v11932 = vunpack.c.l.b16 %v1696
    %v11933 = vunpack.c.h.b16 %v1696
    %v11934 = vunpack.c.l.b16 %v1697
    %v11935 = vunpack.c.h.b16 %v1697
    %v11936 = vunpack.c.l.b16 %v1698
    %v11937 = vunpack.c.h.b16 %v1698
    %v11938 = vunpack.c.l.b16 %v1699
    %v11939 = vunpack.c.h.b16 %v1699
    %v11940 = vunpack.c.l.b16 %v1700
    %v11941 = vunpack.c.h.b16 %v1700
    %v11942 = vunpack.c.l.b16 %v1701
    %v11943 = vunpack.c.h.b16 %v1701
    %v11944 = vunpack.c.l.b16 %v1702
    %v11945 = vunpack.c.h.b16 %v1702
    %v11946 = vunpack.c.l.b16 %v1703
    %v11947 = vunpack.c.h.b16 %v1703
    %v11948 = vunpack.c.l.b16 %v1704
    %v11949 = vunpack.c.h.b16 %v1704
    %v11950 = vunpack.c.l.b16 %v1705
    %v11951 = vunpack.c.h.b16 %v1705
    %v11952 = vunpack.c.l.b16 %v1706
    %v11953 = vunpack.c.h.b16 %v1706
    %v11954 = vunpack.c.l.b16 %v1707
    %v11955 = vunpack.c.h.b16 %v1707
    %v11956 = vunpack.c.l.b16 %v1708
    %v11957 = vunpack.c.h.b16 %v1708
    %v11958 = vunpack.c.l.b16 %v1709
    %v11959 = vunpack.c.h.b16 %v1709
    %v11960 = vunpack.c.l.b16 %v1710
    %v11961 = vunpack.c.h.b16 %v1710
    %v11962 = vunpack.c.l.b16 %v1711
    %v11963 = vunpack.c.h.b16 %v1711
    %v11964 = vunpack.c.l.b16 %v1712
    %v11965 = vunpack.c.h.b16 %v1712
    %v11966 = vunpack.c.l.b16 %v1713
    %v11967 = vunpack.c.h.b16 %v1713
    %v11968 = vunpack.c.l.b16 %v1714
    %v11969 = vunpack.c.h.b16 %v1714
    %v11970 = vunpack.c.l.b16 %v1715
    %v11971 = vunpack.c.h.b16 %v1715
    %v11972 = vunpack.c.l.b16 %v1716
    %v11973 = vunpack.c.h.b16 %v1716
    %v11974 = vunpack.c.l.b16 %v1717
    %v11975 = vunpack.c.h.b16 %v1717
    %v11976 = vunpack.c.l.b16 %v1718
    %v11977 = vunpack.c.h.b16 %v1718
    %v11978 = vunpack.c.l.b16 %v1719
    %v11979 = vunpack.c.h.b16 %v1719
    %v11980 = vunpack.c.l.b16 %v1720
    %v11981 = vunpack.c.h.b16 %v1720
    %v11982 = vunpack.c.l.b16 %v1721
    %v11983 = vunpack.c.h.b16 %v1721
    %v11984 = vunpack.c.l.b16 %v1722
    %v11985 = vunpack.c.h.b16 %v1722
    %v11986 = vunpack.c.l.b16 %v1723
    %v11987 = vunpack.c.h.b16 %v1723
    %v11988 = vunpack.c.l.b16 %v1724
    %v11989 = vunpack.c.h.b16 %v1724
    %v11990 = vunpack.c.l.b16 %v1725
    %v11991 = vunpack.c.h.b16 %v1725
    %v11992 = vunpack.c.l.b16 %v1726
    %v11993 = vunpack.c.h.b16 %v1726
    %v11994 = vunpack.c.l.b16 %v1727
    %v11995 = vunpack.c.h.b16 %v1727
    %v11996 = vunpack.c.l.b16 %v1728
    %v11997 = vunpack.c.h.b16 %v1728
    %v11998 = vunpack.c.l.b16 %v1729
    %v11999 = vunpack.c.h.b16 %v1729
    %v12000 = vunpack.c.l.b16 %v1730
    %v12001 = vunpack.c.h.b16 %v1730
    %v12002 = vunpack.c.l.b16 %v1731
    %v12003 = vunpack.c.h.b16 %v1731
    %v12004 = vunpack.c.l.b16 %v1732
    %v12005 = vunpack.c.h.b16 %v1732
    %v12006 = vunpack.c.l.b16 %v1733
    %v12007 = vunpack.c.h.b16 %v1733
    %v12008 = vunpack.c.l.b16 %v1734
    %v12009 = vunpack.c.h.b16 %v1734
    %v12010 = vunpack.c.l.b16 %v1735
    %v12011 = vunpack.c.h.b16 %v1735
    %v12012 = vunpack.c.l.b16 %v1736
    %v12013 = vunpack.c.h.b16 %v1736
    %v12014 = vunpack.c.l.b16 %v1737
    %v12015 = vunpack.c.h.b16 %v1737
    %v12016 = vunpack.c.l.b16 %v1738
    %v12017 = vunpack.c.h.b16 %v1738
    %v12018 = vunpack.c.l.b16 %v1739
    %v12019 = vunpack.c.h.b16 %v1739
    %v12020 = vunpack.c.l.b16 %v1740
    %v12021 = vunpack.c.h.b16 %v1740
    %v12022 = vunpack.c.l.b16 %v1741
    %v12023 = vunpack.c.h.b16 %v1741
    %v12024 = vunpack.c.l.b16 %v1742
    %v12025 = vunpack.c.h.b16 %v1742
    %v12026 = vunpack.c.l.b16 %v1743
    %v12027 = vunpack.c.h.b16 %v1743
    %v12028 = vunpack.c.l.b16 %v1744
    %v12029 = vunpack.c.h.b16 %v1744
    %v12030 = vunpack.c.l.b16 %v1745
    %v12031 = vunpack.c.h.b16 %v1745
    %v12032 = vunpack.c.l.b16 %v1746
    %v12033 = vunpack.c.h.b16 %v1746
    %v12034 = vunpack.c.l.b16 %v1747
    %v12035 = vunpack.c.h.b16 %v1747
    %v12036 = vunpack.c.l.b16 %v1748
    %v12037 = vunpack.c.h.b16 %v1748
    %v12038 = vunpack.c.l.b16 %v1749
    %v12039 = vunpack.c.h.b16 %v1749
    %v12040 = vunpack.c.l.b16 %v1750
    %v12041 = vunpack.c.h.b16 %v1750
    %v12042 = vunpack.c.l.b16 %v1751
    %v12043 = vunpack.c.h.b16 %v1751
    %v12044 = vunpack.c.l.b16 %v1752
    %v12045 = vunpack.c.h.b16 %v1752
    %v12046 = vunpack.c.l.b16 %v1753
    %v12047 = vunpack.c.h.b16 %v1753
    %v12048 = vunpack.c.l.b16 %v1754
    %v12049 = vunpack.c.h.b16 %v1754
    %v12050 = vunpack.c.l.b16 %v1755
    %v12051 = vunpack.c.h.b16 %v1755
    %v12052 = vunpack.c.l.b16 %v1756
    %v12053 = vunpack.c.h.b16 %v1756
    %v12054 = vunpack.c.l.b16 %v1757
    %v12055 = vunpack.c.h.b16 %v1757
    %v12056 = vunpack.c.l.b16 %v1758
    %v12057 = vunpack.c.h.b16 %v1758
    %v12058 = vunpack.c.l.b16 %v1759
    %v12059 = vunpack.c.h.b16 %v1759
    %v12060 = vunpack.c.l.b16 %v1760
    %v12061 = vunpack.c.h.b16 %v1760
    %v12062 = vunpack.c.l.b16 %v1761
    %v12063 = vunpack.c.h.b16 %v1761
    %v12064 = vunpack.c.l.b16 %v1762
    %v12065 = vunpack.c.h.b16 %v1762
    %v12066 = vunpack.c.l.b16 %v1763
    %v12067 = vunpack.c.h.b16 %v1763
    %v12068 = vunpack.c.l.b16 %v1764
    %v12069 = vunpack.c.h.b16 %v1764
    %v12070 = vunpack.c.l.b16 %v1765
    %v12071 = vunpack.c.h.b16 %v1765
    %v12072 = vunpack.c.l.b16 %v1766
    %v12073 = vunpack.c.h.b16 %v1766
    %v12074 = vunpack.c.l.b16 %v1767
    %v12075 = vunpack.c.h.b16 %v1767
    %v12076 = vunpack.c.l.b16 %v1768
    %v12077 = vunpack.c.h.b16 %v1768
    %v12078 = vunpack.c.l.b16 %v1769
    %v12079 = vunpack.c.h.b16 %v1769
    %v12080 = vunpack.c.l.b16 %v1770
    %v12081 = vunpack.c.h.b16 %v1770
    %v12082 = vunpack.c.l.b16 %v1771
    %v12083 = vunpack.c.h.b16 %v1771
    %v12084 = vunpack.c.l.b16 %v1772
    %v12085 = vunpack.c.h.b16 %v1772
    %v12086 = vunpack.c.l.b16 %v1773
    %v12087 = vunpack.c.h.b16 %v1773
    %v12088 = vunpack.c.l.b16 %v1774
    %v12089 = vunpack.c.h.b16 %v1774
    %v12090 = vunpack.c.l.b16 %v1775
    %v12091 = vunpack.c.h.b16 %v1775
    %v12092 = vunpack.c.l.b16 %v1776
    %v12093 = vunpack.c.h.b16 %v1776
    %v12094 = vunpack.c.l.b16 %v1777
    %v12095 = vunpack.c.h.b16 %v1777
    %v12096 = vunpack.c.l.b16 %v1778
    %v12097 = vunpack.c.h.b16 %v1778
    %v12098 = vunpack.c.l.b16 %v1779
    %v12099 = vunpack.c.h.b16 %v1779
    %v12100 = vunpack.c.l.b16 %v1780
    %v12101 = vunpack.c.h.b16 %v1780
    %v12102 = vunpack.c.l.b16 %v1781
    %v12103 = vunpack.c.h.b16 %v1781
    %v12104 = vunpack.c.l.b16 %v1782
    %v12105 = vunpack.c.h.b16 %v1782
    %v12106 = vunpack.c.l.b16 %v1783
    %v12107 = vunpack.c.h.b16 %v1783
    %v12108 = vunpack.c.l.b16 %v1784
    %v12109 = vunpack.c.h.b16 %v1784
    %v12110 = vunpack.c.l.b16 %v1785
    %v12111 = vunpack.c.h.b16 %v1785
    %v12112 = vunpack.c.l.b16 %v1786
    %v12113 = vunpack.c.h.b16 %v1786
    %v12114 = vunpack.c.l.b16 %v1787
    %v12115 = vunpack.c.h.b16 %v1787
    %v12116 = vunpack.c.l.b16 %v1788
    %v12117 = vunpack.c.h.b16 %v1788
    %v12118 = vunpack.c.l.b16 %v1789
    %v12119 = vunpack.c.h.b16 %v1789
    %v12120 = vunpack.c.l.b16 %v1790
    %v12121 = vunpack.c.h.b16 %v1790
    %v12122 = vunpack.c.l.b16 %v1791
    %v12123 = vunpack.c.h.b16 %v1791
    %v12124 = vunpack.c.l.b16 %v1792
    %v12125 = vunpack.c.h.b16 %v1792
    %v12126 = vunpack.c.l.b16 %v1793
    %v12127 = vunpack.c.h.b16 %v1793
    %v12128 = vunpack.c.l.b16 %v1794
    %v12129 = vunpack.c.h.b16 %v1794
    %v12130 = vunpack.c.l.b16 %v1795
    %v12131 = vunpack.c.h.b16 %v1795
    %v12132 = vunpack.c.l.b16 %v1796
    %v12133 = vunpack.c.h.b16 %v1796
    %v12134 = vunpack.c.l.b16 %v1797
    %v12135 = vunpack.c.h.b16 %v1797
    %v12136 = vunpack.c.l.b16 %v1798
    %v12137 = vunpack.c.h.b16 %v1798
    %v12138 = vunpack.c.l.b16 %v1799
    %v12139 = vunpack.c.h.b16 %v1799
    %v12140 = vunpack.c.l.b16 %v1800
    %v12141 = vunpack.c.h.b16 %v1800
    %v12142 = vunpack.c.l.b16 %v1801
    %v12143 = vunpack.c.h.b16 %v1801
    %v12144 = vunpack.c.l.b16 %v1802
    %v12145 = vunpack.c.h.b16 %v1802
    %v12146 = vunpack.c.l.b16 %v1803
    %v12147 = vunpack.c.h.b16 %v1803
    %v12148 = vunpack.c.l.b16 %v1804
    %v12149 = vunpack.c.h.b16 %v1804
    %v12150 = vunpack.c.l.b16 %v1805
    %v12151 = vunpack.c.h.b16 %v1805
    %v12152 = vunpack.c.l.b16 %v1806
    %v12153 = vunpack.c.h.b16 %v1806
    %v12154 = vunpack.c.l.b16 %v1807
    %v12155 = vunpack.c.h.b16 %v1807
    %v12156 = vunpack.c.l.b16 %v1808
    %v12157 = vunpack.c.h.b16 %v1808
    %v12158 = vunpack.c.l.b16 %v1809
    %v12159 = vunpack.c.h.b16 %v1809
    %v12160 = vunpack.c.l.b16 %v1810
    %v12161 = vunpack.c.h.b16 %v1810
    %v12162 = vunpack.c.l.b16 %v1811
    %v12163 = vunpack.c.h.b16 %v1811
    %v12164 = vunpack.c.l.b16 %v1812
    %v12165 = vunpack.c.h.b16 %v1812
    %v12166 = vunpack.c.l.b16 %v1813
    %v12167 = vunpack.c.h.b16 %v1813
    %v12168 = vunpack.c.l.b16 %v1814
    %v12169 = vunpack.c.h.b16 %v1814
    %v12170 = vunpack.c.l.b16 %v1815
    %v12171 = vunpack.c.h.b16 %v1815
    %v12172 = vunpack.c.l.b16 %v1816
    %v12173 = vunpack.c.h.b16 %v1816
    %v12174 = vunpack.c.l.b16 %v1817
    %v12175 = vunpack.c.h.b16 %v1817
    %v12176 = vunpack.c.l.b16 %v1818
    %v12177 = vunpack.c.h.b16 %v1818
    %v12178 = vunpack.c.l.b16 %v1819
    %v12179 = vunpack.c.h.b16 %v1819
    %v12180 = vunpack.c.l.b16 %v1820
    %v12181 = vunpack.c.h.b16 %v1820
    %v12182 = vunpack.c.l.b16 %v1821
    %v12183 = vunpack.c.h.b16 %v1821
    %v12184 = vunpack.c.l.b16 %v1822
    %v12185 = vunpack.c.h.b16 %v1822
    %v12186 = vunpack.c.l.b16 %v1823
    %v12187 = vunpack.c.h.b16 %v1823
    %v12188 = vunpack.c.l.b16 %v1824
    %v12189 = vunpack.c.h.b16 %v1824
    %v12190 = vunpack.c.l.b16 %v1825
    %v12191 = vunpack.c.h.b16 %v1825
    %v12192 = vunpack.c.l.b16 %v1826
    %v12193 = vunpack.c.h.b16 %v1826
    %v12194 = vunpack.c.l.b16 %v1827
    %v12195 = vunpack.c.h.b16 %v1827
    %v12196 = vunpack.c.l.b16 %v1828
    %v12197 = vunpack.c.h.b16 %v1828
    %v12198 = vunpack.c.l.b16 %v1829
    %v12199 = vunpack.c.h.b16 %v1829
    %v12200 = vunpack.c.l.b16 %v1830
    %v12201 = vunpack.c.h.b16 %v1830
    %v12202 = vunpack.c.l.b16 %v1831
    %v12203 = vunpack.c.h.b16 %v1831
    %v12204 = vunpack.c.l.b16 %v1832
    %v12205 = vunpack.c.h.b16 %v1832
    %v12206 = vunpack.c.l.b16 %v1833
    %v12207 = vunpack.c.h.b16 %v1833
    %v12208 = vunpack.c.l.b16 %v1834
    %v12209 = vunpack.c.h.b16 %v1834
    %v12210 = vunpack.c.l.b16 %v1835
    %v12211 = vunpack.c.h.b16 %v1835
    %v12212 = vunpack.c.l.b16 %v1836
    %v12213 = vunpack.c.h.b16 %v1836
    %v12214 = vunpack.c.l.b16 %v1837
    %v12215 = vunpack.c.h.b16 %v1837
    %v12216 = vunpack.c.l.b16 %v1838
    %v12217 = vunpack.c.h.b16 %v1838
    %v12218 = vunpack.c.l.b16 %v1839
    %v12219 = vunpack.c.h.b16 %v1839
    %v12220 = vunpack.c.l.b16 %v1840
    %v12221 = vunpack.c.h.b16 %v1840
    %v12222 = vunpack.c.l.b16 %v1841
    %v12223 = vunpack.c.h.b16 %v1841
    %v12224 = vunpack.c.l.b16 %v1842
    %v12225 = vunpack.c.h.b16 %v1842
    %v12226 = vunpack.c.l.b16 %v1843
    %v12227 = vunpack.c.h.b16 %v1843
    %v12228 = vunpack.c.l.b16 %v1844
    %v12229 = vunpack.c.h.b16 %v1844
    %v12230 = vunpack.c.l.b16 %v1845
    %v12231 = vunpack.c.h.b16 %v1845
    %v12232 = vunpack.c.l.b16 %v1846
    %v12233 = vunpack.c.h.b16 %v1846
    %v12234 = vunpack.c.l.b16 %v1847
    %v12235 = vunpack.c.h.b16 %v1847
    %v12236 = vunpack.c.l.b16 %v1848
    %v12237 = vunpack.c.h.b16 %v1848
    %v12238 = vunpack.c.l.b16 %v1849
    %v12239 = vunpack.c.h.b16 %v1849
    %v12240 = vunpack.c.l.b16 %v1850
    %v12241 = vunpack.c.h.b16 %v1850
    %v12242 = vunpack.c.l.b16 %v1851
    %v12243 = vunpack.c.h.b16 %v1851
    %v12244 = vunpack.c.l.b16 %v1852
    %v12245 = vunpack.c.h.b16 %v1852
    %v12246 = vunpack.c.l.b16 %v1853
    %v12247 = vunpack.c.h.b16 %v1853
    %v12248 = vunpack.c.l.b16 %v1854
    %v12249 = vunpack.c.h.b16 %v1854
    %v12250 = vunpack.c.l.b16 %v1855
    %v12251 = vunpack.c.h.b16 %v1855
    %v12252 = vunpack.c.l.b16 %v1856
    %v12253 = vunpack.c.h.b16 %v1856
    %v12254 = vpack.c.b16 %v11874, %v11870
    %v12255 = vpack.c.b16 %v11875, %v11871
    %v12256 = vpack.c.b16 %v11876, %v11872
    %v12257 = vpack.c.b16 %v11877, %v11873
    %v12258 = vpack.c.b16 %v11882, %v11878
    %v12259 = vpack.c.b16 %v11883, %v11879
    %v12260 = vpack.c.b16 %v11884, %v11880
    %v12261 = vpack.c.b16 %v11885, %v11881
    %v12262 = vpack.c.b16 %v11890, %v11886
    %v12263 = vpack.c.b16 %v11891, %v11887
    %v12264 = vpack.c.b16 %v11892, %v11888
    %v12265 = vpack.c.b16 %v11893, %v11889
    %v12266 = vpack.c.b16 %v11898, %v11894
    %v12267 = vpack.c.b16 %v11899, %v11895
    %v12268 = vpack.c.b16 %v11900, %v11896
    %v12269 = vpack.c.b16 %v11901, %v11897
    %v12270 = vpack.c.b16 %v11906, %v11902
    %v12271 = vpack.c.b16 %v11907, %v11903
    %v12272 = vpack.c.b16 %v11908, %v11904
    %v12273 = vpack.c.b16 %v11909, %v11905
    %v12274 = vpack.c.b16 %v11914, %v11910
    %v12275 = vpack.c.b16 %v11915, %v11911
    %v12276 = vpack.c.b16 %v11916, %v11912
    %v12277 = vpack.c.b16 %v11917, %v11913
    %v12278 = vpack.c.b16 %v11922, %v11918
    %v12279 = vpack.c.b16 %v11923, %v11919
    %v12280 = vpack.c.b16 %v11924, %v11920
    %v12281 = vpack.c.b16 %v11925, %v11921
    %v12282 = vpack.c.b16 %v11930, %v11926
    %v12283 = vpack.c.b16 %v11931, %v11927
    %v12284 = vpack.c.b16 %v11932, %v11928
    %v12285 = vpack.c.b16 %v11933, %v11929
    %v12286 = vpack.c.b16 %v11938, %v11934
    %v12287 = vpack.c.b16 %v11939, %v11935
    %v12288 = vpack.c.b16 %v11940, %v11936
    %v12289 = vpack.c.b16 %v11941, %v11937
    %v12290 = vpack.c.b16 %v11946, %v11942
    %v12291 = vpack.c.b16 %v11947, %v11943
    %v12292 = vpack.c.b16 %v11948, %v11944
    %v12293 = vpack.c.b16 %v11949, %v11945
    %v12294 = vpack.c.b16 %v11954, %v11950
    %v12295 = vpack.c.b16 %v11955, %v11951
    %v12296 = vpack.c.b16 %v11956, %v11952
    %v12297 = vpack.c.b16 %v11957, %v11953
    %v12298 = vpack.c.b16 %v11962, %v11958
    %v12299 = vpack.c.b16 %v11963, %v11959
    %v12300 = vpack.c.b16 %v11964, %v11960
    %v12301 = vpack.c.b16 %v11965, %v11961
    %v12302 = vpack.c.b16 %v11970, %v11966
    %v12303 = vpack.c.b16 %v11971, %v11967
    %v12304 = vpack.c.b16 %v11972, %v11968
    %v12305 = vpack.c.b16 %v11973, %v11969
    %v12306 = vpack.c.b16 %v11978, %v11974
    %v12307 = vpack.c.b16 %v11979, %v11975
    %v12308 = vpack.c.b16 %v11980, %v11976
    %v12309 = vpack.c.b16 %v11981, %v11977
    %v12310 = vpack.c.b16 %v11986, %v11982
    %v12311 = vpack.c.b16 %v11987, %v11983
    %v12312 = vpack.c.b16 %v11988, %v11984
    %v12313 = vpack.c.b16 %v11989, %v11985
    %v12314 = vpack.c.b16 %v11994, %v11990
    %v12315 = vpack.c.b16 %v11995, %v11991
    %v12316 = vpack.c.b16 %v11996, %v11992
    %v12317 = vpack.c.b16 %v11997, %v11993
    %v12318 = vpack.c.b16 %v12002, %v11998
    %v12319 = vpack.c.b16 %v12003, %v11999
    %v12320 = vpack.c.b16 %v12004, %v12000
    %v12321 = vpack.c.b16 %v12005, %v12001
    %v12322 = vpack.c.b16 %v12010, %v12006
    %v12323 = vpack.c.b16 %v12011, %v12007
    %v12324 = vpack.c.b16 %v12012, %v12008
    %v12325 = vpack.c.b16 %v12013, %v12009
    %v12326 = vpack.c.b16 %v12018, %v12014
    %v12327 = vpack.c.b16 %v12019, %v12015
    %v12328 = vpack.c.b16 %v12020, %v12016
    %v12329 = vpack.c.b16 %v12021, %v12017
    %v12330 = vpack.c.b16 %v12026, %v12022
    %v12331 = vpack.c.b16 %v12027, %v12023
    %v12332 = vpack.c.b16 %v12028, %v12024
    %v12333 = vpack.c.b16 %v12029, %v12025
    %v12334 = vpack.c.b16 %v12034, %v12030
    %v12335 = vpack.c.b16 %v12035, %v12031
    %v12336 = vpack.c.b16 %v12036, %v12032
    %v12337 = vpack.c.b16 %v12037, %v12033
    %v12338 = vpack.c.b16 %v12042, %v12038
    %v12339 = vpack.c.b16 %v12043, %v12039
    %v12340 = vpack.c.b16 %v12044, %v12040
    %v12341 = vpack.c.b16 %v12045, %v12041
    %v12342 = vpack.c.b16 %v12050, %v12046
    %v12343 = vpack.c.b16 %v12051, %v12047
    %v12344 = vpack.c.b16 %v12052, %v12048
    %v12345 = vpack.c.b16 %v12053, %v12049
    %v12346 = vpack.c.b16 %v12058, %v12054
    %v12347 = vpack.c.b16 %v12059, %v12055
    %v12348 = vpack.c.b16 %v12060, %v12056
    %v12349 = vpack.c.b16 %v12061, %v12057
    %v12350 = vpack.c.b16 %v12066, %v12062
    %v12351 = vpack.c.b16 %v12067, %v12063
    %v12352 = vpack.c.b16 %v12068, %v12064
    %v12353 = vpack.c.b16 %v12069, %v12065
    %v12354 = vpack.c.b16 %v12074, %v12070
    %v12355 = vpack.c.b16 %v12075, %v12071
    %v12356 = vpack.c.b16 %v12076, %v12072
    %v12357 = vpack.c.b16 %v12077, %v12073
    %v12358 = vpack.c.b16 %v12082, %v12078
    %v12359 = vpack.c.b16 %v12083, %v12079
    %v12360 = vpack.c.b16 %v12084, %v12080
    %v12361 = vpack.c.b16 %v12085, %v12081
    %v12362 = vpack.c.b16 %v12090, %v12086
    %v12363 = vpack.c.b16 %v12091, %v12087
    %v12364 = vpack.c.b16 %v12092, %v12088
    %v12365 = vpack.c.b16 %v12093, %v12089
    %v12366 = vpack.c.b16 %v12098, %v12094
    %v12367 = vpack.c.b16 %v12099, %v12095
    %v12368 = vpack.c.b16 %v12100, %v12096
    %v12369 = vpack.c.b16 %v12101, %v12097
    %v12370 = vpack.c.b16 %v12106, %v12102
    %v12371 = vpack.c.b16 %v12107, %v12103
    %v12372 = vpack.c.b16 %v12108, %v12104
    %v12373 = vpack.c.b16 %v12109, %v12105
    %v12374 = vpack.c.b16 %v12114, %v12110
    %v12375 = vpack.c.b16 %v12115, %v12111
    %v12376 = vpack.c.b16 %v12116, %v12112
    %v12377 = vpack.c.b16 %v12117, %v12113
    %v12378 = vpack.c.b16 %v12122, %v12118
    %v12379 = vpack.c.b16 %v12123, %v12119
    %v12380 = vpack.c.b16 %v12124, %v12120
    %v12381 = vpack.c.b16 %v12125, %v12121
    %v12382 = vpack.c.b16 %v12130, %v12126
    %v12383 = vpack.c.b16 %v12131, %v12127
    %v12384 = vpack.c.b16 %v12132, %v12128
    %v12385 = vpack.c.b16 %v12133, %v12129
    %v12386 = vpack.c.b16 %v12138, %v12134
    %v12387 = vpack.c.b16 %v12139, %v12135
    %v12388 = vpack.c.b16 %v12140, %v12136
    %v12389 = vpack.c.b16 %v12141, %v12137
    %v12390 = vpack.c.b16 %v12146, %v12142
    %v12391 = vpack.c.b16 %v12147, %v12143
    %v12392 = vpack.c.b16 %v12148, %v12144
    %v12393 = vpack.c.b16 %v12149, %v12145
    %v12394 = vpack.c.b16 %v12154, %v12150
    %v12395 = vpack.c.b16 %v12155, %v12151
    %v12396 = vpack.c.b16 %v12156, %v12152
    %v12397 = vpack.c.b16 %v12157, %v12153
    %v12398 = vpack.c.b16 %v12162, %v12158
    %v12399 = vpack.c.b16 %v12163, %v12159
    %v12400 = vpack.c.b16 %v12164, %v12160
    %v12401 = vpack.c.b16 %v12165, %v12161
    %v12402 = vpack.c.b16 %v12170, %v12166
    %v12403 = vpack.c.b16 %v12171, %v12167
    %v12404 = vpack.c.b16 %v12172, %v12168
    %v12405 = vpack.c.b16 %v12173, %v12169
    %v12406 = vpack.c.b16 %v12178, %v12174
    %v12407 = vpack.c.b16 %v12179, %v12175
    %v12408 = vpack.c.b16 %v12180, %v12176
    %v12409 = vpack.c.b16 %v12181, %v12177
    %v12410 = vpack.c.b16 %v12186, %v12182
    %v12411 = vpack.c.b16 %v12187, %v12183
    %v12412 = vpack.c.b16 %v12188, %v12184
    %v12413 = vpack.c.b16 %v12189, %v12185
    %v12414 = vpack.c.b16 %v12194, %v12190
    %v12415 = vpack.c.b16 %v12195, %v12191
    %v12416 = vpack.c.b16 %v12196, %v12192
    %v12417 = vpack.c.b16 %v12197, %v12193
    %v12418 = vpack.c.b16 %v12202, %v12198
    %v12419 = vpack.c.b16 %v12203, %v12199
    %v12420 = vpack.c.b16 %v12204, %v12200
    %v12421 = vpack.c.b16 %v12205, %v12201
    %v12422 = vpack.c.b16 %v12210, %v12206
    %v12423 = vpack.c.b16 %v12211, %v12207
    %v12424 = vpack.c.b16 %v12212, %v12208
    %v12425 = vpack.c.b16 %v12213, %v12209
    %v12426 = vpack.c.b16 %v12218, %v12214
    %v12427 = vpack.c.b16 %v12219, %v12215
    %v12428 = vpack.c.b16 %v12220, %v12216
    %v12429 = vpack.c.b16 %v12221, %v12217
    %v12430 = vpack.c.b16 %v12226, %v12222
    %v12431 = vpack.c.b16 %v12227, %v12223
    %v12432 = vpack.c.b16 %v12228, %v12224
    %v12433 = vpack.c.b16 %v12229, %v12225
    %v12434 = vpack.c.b16 %v12234, %v12230
    %v12435 = vpack.c.b16 %v12235, %v12231
    %v12436 = vpack.c.b16 %v12236, %v12232
    %v12437 = vpack.c.b16 %v12237, %v12233
    %v12438 = vpack.c.b16 %v12242, %v12238
    %v12439 = vpack.c.b16 %v12243, %v12239
    %v12440 = vpack.c.b16 %v12244, %v12240
    %v12441 = vpack.c.b16 %v12245, %v12241
    %v12442 = vpack.c.b16 %v12250, %v12246
    %v12443 = vpack.c.b16 %v12251, %v12247
    %v12444 = vpack.c.b16 %v12252, %v12248
    %v12445 = vpack.c.b16 %v12253, %v12249
    %12638 = vmatprep.subr.bf16.mxu0 %v12255
    %12639 = vmatpush1.bf16.msra.mxu0 %v12254
    %12640 = vmatprep.subr.bf16.mxu0 %v12259
    %12641 = vmatpush1.bf16.msra.mxu0 %v12258
    %12642 = vmatprep.subr.bf16.mxu0 %v12263
    %12643 = vmatpush1.bf16.msra.mxu0 %v12262
    %12644 = vmatprep.subr.bf16.mxu0 %v12267
    %12645 = vmatpush1.bf16.msra.mxu0 %v12266
    %12646 = vmatprep.subr.bf16.mxu0 %v12271
    %12647 = vmatpush1.bf16.msra.mxu0 %v12270
    %12648 = vmatprep.subr.bf16.mxu0 %v12275
    %12649 = vmatpush1.bf16.msra.mxu0 %v12274
    %12650 = vmatprep.subr.bf16.mxu0 %v12279
    %12651 = vmatpush1.bf16.msra.mxu0 %v12278
    %12652 = vmatprep.subr.bf16.mxu0 %v12283
    %12653 = vmatpush1.bf16.msra.mxu0 %v12282
    %12654 = vmatprep.subr.bf16.mxu0 %v12287
    %12655 = vmatpush1.bf16.msra.mxu0 %v12286
    %12656 = vmatprep.subr.bf16.mxu0 %v12291
    %12657 = vmatpush1.bf16.msra.mxu0 %v12290
    %12658 = vmatprep.subr.bf16.mxu0 %v12295
    %12659 = vmatpush1.bf16.msra.mxu0 %v12294
    %12660 = vmatprep.subr.bf16.mxu0 %v12299
    %12661 = vmatpush1.bf16.msra.mxu0 %v12298
    %12662 = vmatprep.subr.bf16.mxu0 %v12303
    %12663 = vmatpush1.bf16.msra.mxu0 %v12302
    %12664 = vmatprep.subr.bf16.mxu0 %v12307
    %12665 = vmatpush1.bf16.msra.mxu0 %v12306
    %12666 = vmatprep.subr.bf16.mxu0 %v12311
    %12667 = vmatpush1.bf16.msra.mxu0 %v12310
    %12668 = vmatprep.subr.bf16.mxu0 %v12315
    %12669 = vmatpush1.bf16.msra.mxu0 %v12314
    %12670 = vmatprep.mubr.bf16.mxu0 %v11673
    %12671 = vmatmul.mubr.bf16.gmra.mrb[0].mxu0 %v11672
    %v12672 = vpop.f32.mrb[0].mxu0
    %v12673 = vadd.f32 0.0, %v12672
    %v12674 = vpop.f32.mrb[0].mxu0
    %v12675 = vadd.f32 0.0, %v12674
    %v12676 = vpop.f32.mrb[0].mxu0
    %v12677 = vpop.f32.mrb[0].mxu0
    %12678 = vdwg.mxu0
    %12679 = vmatprep.subr.bf16.mxu0 %v12319
    %12680 = vmatpush1.bf16.msra.mxu0 %v12318
    %12681 = vmatprep.subr.bf16.mxu0 %v12323
    %12682 = vmatpush1.bf16.msra.mxu0 %v12322
    %12683 = vmatprep.subr.bf16.mxu0 %v12327
    %12684 = vmatpush1.bf16.msra.mxu0 %v12326
    %12685 = vmatprep.subr.bf16.mxu0 %v12331
    %12686 = vmatpush1.bf16.msra.mxu0 %v12330
    %12687 = vmatprep.subr.bf16.mxu0 %v12335
    %12688 = vmatpush1.bf16.msra.mxu0 %v12334
    %12689 = vmatprep.subr.bf16.mxu0 %v12339
    %12690 = vmatpush1.bf16.msra.mxu0 %v12338
    %12691 = vmatprep.subr.bf16.mxu0 %v12343
    %12692 = vmatpush1.bf16.msra.mxu0 %v12342
    %12693 = vmatprep.subr.bf16.mxu0 %v12347
    %12694 = vmatpush1.bf16.msra.mxu0 %v12346
    %12695 = vmatprep.subr.bf16.mxu0 %v12351
    %12696 = vmatpush1.bf16.msra.mxu0 %v12350
    %12697 = vmatprep.subr.bf16.mxu0 %v12355
    %12698 = vmatpush1.bf16.msra.mxu0 %v12354
    %12699 = vmatprep.subr.bf16.mxu0 %v12359
    %12700 = vmatpush1.bf16.msra.mxu0 %v12358
    %12701 = vmatprep.subr.bf16.mxu0 %v12363
    %12702 = vmatpush1.bf16.msra.mxu0 %v12362
    %12703 = vmatprep.subr.bf16.mxu0 %v12367
    %12704 = vmatpush1.bf16.msra.mxu0 %v12366
    %12705 = vmatprep.subr.bf16.mxu0 %v12371
    %12706 = vmatpush1.bf16.msra.mxu0 %v12370
    %12707 = vmatprep.subr.bf16.mxu0 %v12375
    %12708 = vmatpush1.bf16.msra.mxu0 %v12374
    %12709 = vmatprep.subr.bf16.mxu0 %v12379
    %12710 = vmatpush1.bf16.msra.mxu0 %v12378
    %12711 = vmatprep.mubr.bf16.mxu0 %v11675
    %12712 = vmatmul.mubr.bf16.gmra.mrb[0].mxu0 %v11674
    %v12713 = vpop.f32.mrb[0].mxu0
    %v12714 = vadd.f32 %v12673, %v12713
    %v12715 = vpop.f32.mrb[0].mxu0
    %v12716 = vadd.f32 %v12675, %v12715
    %v12717 = vpop.f32.mrb[0].mxu0
    %v12718 = vpop.f32.mrb[0].mxu0
    %12719 = vdwg.mxu0
    %12720 = vmatprep.subr.bf16.mxu0 %v12383
    %12721 = vmatpush1.bf16.msra.mxu0 %v12382
    %12722 = vmatprep.subr.bf16.mxu0 %v12387
    %12723 = vmatpush1.bf16.msra.mxu0 %v12386
    %12724 = vmatprep.subr.bf16.mxu0 %v12391
    %12725 = vmatpush1.bf16.msra.mxu0 %v12390
    %12726 = vmatprep.subr.bf16.mxu0 %v12395
    %12727 = vmatpush1.bf16.msra.mxu0 %v12394
    %12728 = vmatprep.subr.bf16.mxu0 %v12399
    %12729 = vmatpush1.bf16.msra.mxu0 %v12398
    %12730 = vmatprep.subr.bf16.mxu0 %v12403
    %12731 = vmatpush1.bf16.msra.mxu0 %v12402
    %12732 = vmatprep.subr.bf16.mxu0 %v12407
    %12733 = vmatpush1.bf16.msra.mxu0 %v12406
    %12734 = vmatprep.subr.bf16.mxu0 %v12411
    %12735 = vmatpush1.bf16.msra.mxu0 %v12410
    %12736 = vmatprep.subr.bf16.mxu0 %v12415
    %12737 = vmatpush1.bf16.msra.mxu0 %v12414
    %12738 = vmatprep.subr.bf16.mxu0 %v12419
    %12739 = vmatpush1.bf16.msra.mxu0 %v12418
    %12740 = vmatprep.subr.bf16.mxu0 %v12423
    %12741 = vmatpush1.bf16.msra.mxu0 %v12422
    %12742 = vmatprep.subr.bf16.mxu0 %v12427
    %12743 = vmatpush1.bf16.msra.mxu0 %v12426
    %12744 = vmatprep.subr.bf16.mxu0 %v12431
    %12745 = vmatpush1.bf16.msra.mxu0 %v12430
    %12746 = vmatprep.subr.bf16.mxu0 %v12435
    %12747 = vmatpush1.bf16.msra.mxu0 %v12434
    %12748 = vmatprep.subr.bf16.mxu0 %v12439
    %12749 = vmatpush1.bf16.msra.mxu0 %v12438
    %12750 = vmatprep.subr.bf16.mxu0 %v12443
    %12751 = vmatpush1.bf16.msra.mxu0 %v12442
    %12752 = vmatprep.mubr.bf16.mxu0 %v11677
    %12753 = vmatmul.mubr.bf16.gmra.mrb[0].mxu0 %v11676
    %v12754 = vpop.f32.mrb[0].mxu0
    %v12755 = vadd.f32 %v12714, %v12754
    %v12756 = vpop.f32.mrb[0].mxu0
    %v12757 = vadd.f32 %v12716, %v12756
    %v12758 = vpop.f32.mrb[0].mxu0
    %v12759 = vpop.f32.mrb[0].mxu0
    %12760 = vdwg.mxu0
    %12761 = vmatprep.subr.bf16.mxu0 %v12257
    %12762 = vmatpush1.bf16.msra.mxu0 %v12256
    %12763 = vmatprep.subr.bf16.mxu0 %v12261
    %12764 = vmatpush1.bf16.msra.mxu0 %v12260
    %12765 = vmatprep.subr.bf16.mxu0 %v12265
    %12766 = vmatpush1.bf16.msra.mxu0 %v12264
    %12767 = vmatprep.subr.bf16.mxu0 %v12269
    %12768 = vmatpush1.bf16.msra.mxu0 %v12268
    %12769 = vmatprep.subr.bf16.mxu0 %v12273
    %12770 = vmatpush1.bf16.msra.mxu0 %v12272
    %12771 = vmatprep.subr.bf16.mxu0 %v12277
    %12772 = vmatpush1.bf16.msra.mxu0 %v12276
    %12773 = vmatprep.subr.bf16.mxu0 %v12281
    %12774 = vmatpush1.bf16.msra.mxu0 %v12280
    %12775 = vmatprep.subr.bf16.mxu0 %v12285
    %12776 = vmatpush1.bf16.msra.mxu0 %v12284
    %12777 = vmatprep.subr.bf16.mxu0 %v12289
    %12778 = vmatpush1.bf16.msra.mxu0 %v12288
    %12779 = vmatprep.subr.bf16.mxu0 %v12293
    %12780 = vmatpush1.bf16.msra.mxu0 %v12292
    %12781 = vmatprep.subr.bf16.mxu0 %v12297
    %12782 = vmatpush1.bf16.msra.mxu0 %v12296
    %12783 = vmatprep.subr.bf16.mxu0 %v12301
    %12784 = vmatpush1.bf16.msra.mxu0 %v12300
    %12785 = vmatprep.subr.bf16.mxu0 %v12305
    %12786 = vmatpush1.bf16.msra.mxu0 %v12304
    %12787 = vmatprep.subr.bf16.mxu0 %v12309
    %12788 = vmatpush1.bf16.msra.mxu0 %v12308
    %12789 = vmatprep.subr.bf16.mxu0 %v12313
    %12790 = vmatpush1.bf16.msra.mxu0 %v12312
    %12791 = vmatprep.subr.bf16.mxu0 %v12317
    %12792 = vmatpush1.bf16.msra.mxu0 %v12316
    %12793 = vmatprep.mubr.bf16.mxu0 %v11673
    %12794 = vmatmul.mubr.bf16.gmra.mrb[0].mxu0 %v11672
    %v12795 = vpop.f32.mrb[0].mxu0
    %v12796 = vadd.f32 0.0, %v12795
    %v12797 = vpop.f32.mrb[0].mxu0
    %v12798 = vadd.f32 0.0, %v12797
    %v12799 = vpop.f32.mrb[0].mxu0
    %v12800 = vpop.f32.mrb[0].mxu0
    %12801 = vdwg.mxu0
    %12802 = vmatprep.subr.bf16.mxu0 %v12321
    %12803 = vmatpush1.bf16.msra.mxu0 %v12320
    %12804 = vmatprep.subr.bf16.mxu0 %v12325
    %12805 = vmatpush1.bf16.msra.mxu0 %v12324
    %12806 = vmatprep.subr.bf16.mxu0 %v12329
    %12807 = vmatpush1.bf16.msra.mxu0 %v12328
    %12808 = vmatprep.subr.bf16.mxu0 %v12333
    %12809 = vmatpush1.bf16.msra.mxu0 %v12332
    %12810 = vmatprep.subr.bf16.mxu0 %v12337
    %12811 = vmatpush1.bf16.msra.mxu0 %v12336
    %12812 = vmatprep.subr.bf16.mxu0 %v12341
    %12813 = vmatpush1.bf16.msra.mxu0 %v12340
    %12814 = vmatprep.subr.bf16.mxu0 %v12345
    %12815 = vmatpush1.bf16.msra.mxu0 %v12344
    %12816 = vmatprep.subr.bf16.mxu0 %v12349
    %12817 = vmatpush1.bf16.msra.mxu0 %v12348
    %12818 = vmatprep.subr.bf16.mxu0 %v12353
    %12819 = vmatpush1.bf16.msra.mxu0 %v12352
    %12820 = vmatprep.subr.bf16.mxu0 %v12357
    %12821 = vmatpush1.bf16.msra.mxu0 %v12356
    %12822 = vmatprep.subr.bf16.mxu0 %v12361
    %12823 = vmatpush1.bf16.msra.mxu0 %v12360
    %12824 = vmatprep.subr.bf16.mxu0 %v12365
    %12825 = vmatpush1.bf16.msra.mxu0 %v12364
    %12826 = vmatprep.subr.bf16.mxu0 %v12369
    %12827 = vmatpush1.bf16.msra.mxu0 %v12368
    %12828 = vmatprep.subr.bf16.mxu0 %v12373
    %12829 = vmatpush1.bf16.msra.mxu0 %v12372
    %12830 = vmatprep.subr.bf16.mxu0 %v12377
    %12831 = vmatpush1.bf16.msra.mxu0 %v12376
    %12832 = vmatprep.subr.bf16.mxu0 %v12381
    %12833 = vmatpush1.bf16.msra.mxu0 %v12380
    %12834 = vmatprep.mubr.bf16.mxu0 %v11675
    %12835 = vmatmul.mubr.bf16.gmra.mrb[0].mxu0 %v11674
    %v12836 = vpop.f32.mrb[0].mxu0
    %v12837 = vadd.f32 %v12796, %v12836
    %v12838 = vpop.f32.mrb[0].mxu0
    %v12839 = vadd.f32 %v12798, %v12838
    %v12840 = vpop.f32.mrb[0].mxu0
    %v12841 = vpop.f32.mrb[0].mxu0
    %12842 = vdwg.mxu0
    %12843 = vmatprep.subr.bf16.mxu0 %v12385
    %12844 = vmatpush1.bf16.msra.mxu0 %v12384
    %12845 = vmatprep.subr.bf16.mxu0 %v12389
    %12846 = vmatpush1.bf16.msra.mxu0 %v12388
    %12847 = vmatprep.subr.bf16.mxu0 %v12393
    %12848 = vmatpush1.bf16.msra.mxu0 %v12392
    %12849 = vmatprep.subr.bf16.mxu0 %v12397
    %12850 = vmatpush1.bf16.msra.mxu0 %v12396
    %12851 = vmatprep.subr.bf16.mxu0 %v12401
    %12852 = vmatpush1.bf16.msra.mxu0 %v12400
    %12853 = vmatprep.subr.bf16.mxu0 %v12405
    %12854 = vmatpush1.bf16.msra.mxu0 %v12404
    %12855 = vmatprep.subr.bf16.mxu0 %v12409
    %12856 = vmatpush1.bf16.msra.mxu0 %v12408
    %12857 = vmatprep.subr.bf16.mxu0 %v12413
    %12858 = vmatpush1.bf16.msra.mxu0 %v12412
    %12859 = vmatprep.subr.bf16.mxu0 %v12417
    %12860 = vmatpush1.bf16.msra.mxu0 %v12416
    %12861 = vmatprep.subr.bf16.mxu0 %v12421
    %12862 = vmatpush1.bf16.msra.mxu0 %v12420
    %12863 = vmatprep.subr.bf16.mxu0 %v12425
    %12864 = vmatpush1.bf16.msra.mxu0 %v12424
    %12865 = vmatprep.subr.bf16.mxu0 %v12429
    %12866 = vmatpush1.bf16.msra.mxu0 %v12428
    %12867 = vmatprep.subr.bf16.mxu0 %v12433
    %12868 = vmatpush1.bf16.msra.mxu0 %v12432
    %12869 = vmatprep.subr.bf16.mxu0 %v12437
    %12870 = vmatpush1.bf16.msra.mxu0 %v12436
    %12871 = vmatprep.subr.bf16.mxu0 %v12441
    %12872 = vmatpush1.bf16.msra.mxu0 %v12440
    %12873 = vmatprep.subr.bf16.mxu0 %v12445
    %12874 = vmatpush1.bf16.msra.mxu0 %v12444
    %12875 = vmatprep.mubr.bf16.mxu0 %v11677
    %12876 = vmatmul.mubr.bf16.gmra.mrb[0].mxu0 %v11676
    %v12877 = vpop.f32.mrb[0].mxu0
    %v12878 = vadd.f32 %v12837, %v12877
    %v12879 = vpop.f32.mrb[0].mxu0
    %v12880 = vadd.f32 %v12839, %v12879
    %v12881 = vpop.f32.mrb[0].mxu0
    %v12882 = vpop.f32.mrb[0].mxu0
    %12883 = vdwg.mxu0
    %v12884 = vmax.f32 %v12755, %v12757
    %v12885 = vmax.f32 %v12878, %v12880
    %v12886 = vmax.f32 %v12884, %v12885
    %v12888 = vlaneseq
    %v12889 = vshrl.u32 %v12888, 7
    %v12890 = vsub.s32 0, %v12889
    %v12891 = vrot.slane %v1857, %v12890
    %v12893 = vadd.f32 %v12886, %v12891
    %v12894 = vmax.f32 %v12893, 0.0
    %v12895 = vpack.c.bf16 %v12894, %v12894
    %v12897 = vlaneseq
    %v12898 = vshrl.u32 %v12897, 7
    %v12899 = vsub.s32 0, %v12898
    %v12900 = vrot.slane %v1890, %v12899
    %v12901 = vlaneseq
    %v12902 = vshrl.u32 %v12901, 7
    %v12903 = vsub.s32 1, %v12902
    %v12904 = vrot.slane %v1890, %v12903
    %v12905 = vlaneseq
    %v12906 = vshrl.u32 %v12905, 7
    %v12907 = vsub.s32 2, %v12906
    %v12908 = vrot.slane %v1890, %v12907
    %v12909 = vlaneseq
    %v12910 = vshrl.u32 %v12909, 7
    %v12911 = vsub.s32 3, %v12910
    %v12912 = vrot.slane %v1890, %v12911
    %v12949 = vunpack.c.l.b16 %v1858
    %v12950 = vunpack.c.h.b16 %v1858
    %v12951 = vunpack.c.l.b16 %v1859
    %v12952 = vunpack.c.h.b16 %v1859
    %v12953 = vunpack.c.l.b16 %v1860
    %v12954 = vunpack.c.h.b16 %v1860
    %v12955 = vunpack.c.l.b16 %v1861
    %v12956 = vunpack.c.h.b16 %v1861
    %v12957 = vunpack.c.l.b16 %v1862
    %v12958 = vunpack.c.h.b16 %v1862
    %v12959 = vunpack.c.l.b16 %v1863
    %v12960 = vunpack.c.h.b16 %v1863
    %v12961 = vunpack.c.l.b16 %v1864
    %v12962 = vunpack.c.h.b16 %v1864
    %v12963 = vunpack.c.l.b16 %v1865
    %v12964 = vunpack.c.h.b16 %v1865
    %v12965 = vunpack.c.l.b16 %v1866
    %v12966 = vunpack.c.h.b16 %v1866
    %v12967 = vunpack.c.l.b16 %v1867
    %v12968 = vunpack.c.h.b16 %v1867
    %v12969 = vunpack.c.l.b16 %v1868
    %v12970 = vunpack.c.h.b16 %v1868
    %v12971 = vunpack.c.l.b16 %v1869
    %v12972 = vunpack.c.h.b16 %v1869
    %v12973 = vunpack.c.l.b16 %v1870
    %v12974 = vunpack.c.h.b16 %v1870
    %v12975 = vunpack.c.l.b16 %v1871
    %v12976 = vunpack.c.h.b16 %v1871
    %v12977 = vunpack.c.l.b16 %v1872
    %v12978 = vunpack.c.h.b16 %v1872
    %v12979 = vunpack.c.l.b16 %v1873
    %v12980 = vunpack.c.h.b16 %v1873
    %v12981 = vunpack.c.l.b16 %v1874
    %v12982 = vunpack.c.h.b16 %v1874
    %v12983 = vunpack.c.l.b16 %v1875
    %v12984 = vunpack.c.h.b16 %v1875
    %v12985 = vunpack.c.l.b16 %v1876
    %v12986 = vunpack.c.h.b16 %v1876
    %v12987 = vunpack.c.l.b16 %v1877
    %v12988 = vunpack.c.h.b16 %v1877
    %v12989 = vunpack.c.l.b16 %v1878
    %v12990 = vunpack.c.h.b16 %v1878
    %v12991 = vunpack.c.l.b16 %v1879
    %v12992 = vunpack.c.h.b16 %v1879
    %v12993 = vunpack.c.l.b16 %v1880
    %v12994 = vunpack.c.h.b16 %v1880
    %v12995 = vunpack.c.l.b16 %v1881
    %v12996 = vunpack.c.h.b16 %v1881
    %v12997 = vunpack.c.l.b16 %v1882
    %v12998 = vunpack.c.h.b16 %v1882
    %v12999 = vunpack.c.l.b16 %v1883
    %v13000 = vunpack.c.h.b16 %v1883
    %v13001 = vunpack.c.l.b16 %v1884
    %v13002 = vunpack.c.h.b16 %v1884
    %v13003 = vunpack.c.l.b16 %v1885
    %v13004 = vunpack.c.h.b16 %v1885
    %v13005 = vunpack.c.l.b16 %v1886
    %v13006 = vunpack.c.h.b16 %v1886
    %v13007 = vunpack.c.l.b16 %v1887
    %v13008 = vunpack.c.h.b16 %v1887
    %v13009 = vunpack.c.l.b16 %v1888
    %v13010 = vunpack.c.h.b16 %v1888
    %v13011 = vunpack.c.l.b16 %v1889
    %v13012 = vunpack.c.h.b16 %v1889
    %v13013 = vpack.c.b16 %v12953, %v12949
    %v13014 = vpack.c.b16 %v12954, %v12950
    %v13015 = vpack.c.b16 %v12955, %v12951
    %v13016 = vpack.c.b16 %v12956, %v12952
    %v13017 = vpack.c.b16 %v12961, %v12957
    %v13018 = vpack.c.b16 %v12962, %v12958
    %v13019 = vpack.c.b16 %v12963, %v12959
    %v13020 = vpack.c.b16 %v12964, %v12960
    %v13021 = vpack.c.b16 %v12969, %v12965
    %v13022 = vpack.c.b16 %v12970, %v12966
    %v13023 = vpack.c.b16 %v12971, %v12967
    %v13024 = vpack.c.b16 %v12972, %v12968
    %v13025 = vpack.c.b16 %v12977, %v12973
    %v13026 = vpack.c.b16 %v12978, %v12974
    %v13027 = vpack.c.b16 %v12979, %v12975
    %v13028 = vpack.c.b16 %v12980, %v12976
    %v13029 = vpack.c.b16 %v12985, %v12981
    %v13030 = vpack.c.b16 %v12986, %v12982
    %v13031 = vpack.c.b16 %v12987, %v12983
    %v13032 = vpack.c.b16 %v12988, %v12984
    %v13033 = vpack.c.b16 %v12993, %v12989
    %v13034 = vpack.c.b16 %v12994, %v12990
    %v13035 = vpack.c.b16 %v12995, %v12991
    %v13036 = vpack.c.b16 %v12996, %v12992
    %v13037 = vpack.c.b16 %v13001, %v12997
    %v13038 = vpack.c.b16 %v13002, %v12998
    %v13039 = vpack.c.b16 %v13003, %v12999
    %v13040 = vpack.c.b16 %v13004, %v13000
    %v13041 = vpack.c.b16 %v13009, %v13005
    %v13042 = vpack.c.b16 %v13010, %v13006
    %v13043 = vpack.c.b16 %v13011, %v13007
    %v13044 = vpack.c.b16 %v13012, %v13008
    %13077 = vmatprep.subr.bf16.mxu0 %v13014
    %13078 = vmatpush1.bf16.msra.mxu0 %v13013
    %13079 = vmatprep.subr.bf16.mxu0 %v13018
    %13080 = vmatpush1.bf16.msra.mxu0 %v13017
    %13081 = vmatprep.subr.bf16.mxu0 %v13022
    %13082 = vmatpush1.bf16.msra.mxu0 %v13021
    %13083 = vmatprep.subr.bf16.mxu0 %v13026
    %13084 = vmatpush1.bf16.msra.mxu0 %v13025
    %13085 = vmatprep.subr.bf16.mxu0 %v13030
    %13086 = vmatpush1.bf16.msra.mxu0 %v13029
    %13087 = vmatprep.subr.bf16.mxu0 %v13034
    %13088 = vmatpush1.bf16.msra.mxu0 %v13033
    %13089 = vmatprep.subr.bf16.mxu0 %v13038
    %13090 = vmatpush1.bf16.msra.mxu0 %v13037
    %13091 = vmatprep.subr.bf16.mxu0 %v13042
    %13092 = vmatpush1.bf16.msra.mxu0 %v13041
    %13093 = vmatprep.subr.bf16.mxu0 0
    %13094 = vmatpush1.bf16.msra.mxu0 0
    %13095 = vmatprep.subr.bf16.mxu0 0
    %13096 = vmatpush1.bf16.msra.mxu0 0
    %13097 = vmatprep.subr.bf16.mxu0 0
    %13098 = vmatpush1.bf16.msra.mxu0 0
    %13099 = vmatprep.subr.bf16.mxu0 0
    %13100 = vmatpush1.bf16.msra.mxu0 0
    %13101 = vmatprep.subr.bf16.mxu0 0
    %13102 = vmatpush1.bf16.msra.mxu0 0
    %13103 = vmatprep.subr.bf16.mxu0 0
    %13104 = vmatpush1.bf16.msra.mxu0 0
    %13105 = vmatprep.subr.bf16.mxu0 0
    %13106 = vmatpush1.bf16.msra.mxu0 0
    %13107 = vmatprep.subr.bf16.mxu0 0
    %13108 = vmatpush1.bf16.msra.mxu0 0
    %13109 = vmatprep.mubr.bf16.mxu0 0
    %13110 = vmatmul.mubr.bf16.gmra.mrb[0].mxu0 %v12895
    %v13111 = vpop.f32.mrb[0].mxu0
    %v13112 = vadd.f32 %v12900, %v13111
    %v13113 = vpop.f32.mrb[0].mxu0
    %v13114 = vadd.f32 %v12904, %v13113
    %v13115 = vpop.f32.mrb[0].mxu0
    %v13116 = vpop.f32.mrb[0].mxu0
    %13117 = vdwg.mxu0
    %13118 = vmatprep.subr.bf16.mxu0 %v13016
    %13119 = vmatpush1.bf16.msra.mxu0 %v13015
    %13120 = vmatprep.subr.bf16.mxu0 %v13020
    %13121 = vmatpush1.bf16.msra.mxu0 %v13019
    %13122 = vmatprep.subr.bf16.mxu0 %v13024
    %13123 = vmatpush1.bf16.msra.mxu0 %v13023
    %13124 = vmatprep.subr.bf16.mxu0 %v13028
    %13125 = vmatpush1.bf16.msra.mxu0 %v13027
    %13126 = vmatprep.subr.bf16.mxu0 %v13032
    %13127 = vmatpush1.bf16.msra.mxu0 %v13031
    %13128 = vmatprep.subr.bf16.mxu0 %v13036
    %13129 = vmatpush1.bf16.msra.mxu0 %v13035
    %13130 = vmatprep.subr.bf16.mxu0 %v13040
    %13131 = vmatpush1.bf16.msra.mxu0 %v13039
    %13132 = vmatprep.subr.bf16.mxu0 %v13044
    %13133 = vmatpush1.bf16.msra.mxu0 %v13043
    %13134 = vmatprep.subr.bf16.mxu0 0
    %13135 = vmatpush1.bf16.msra.mxu0 0
    %13136 = vmatprep.subr.bf16.mxu0 0
    %13137 = vmatpush1.bf16.msra.mxu0 0
    %13138 = vmatprep.subr.bf16.mxu0 0
    %13139 = vmatpush1.bf16.msra.mxu0 0
    %13140 = vmatprep.subr.bf16.mxu0 0
    %13141 = vmatpush1.bf16.msra.mxu0 0
    %13142 = vmatprep.subr.bf16.mxu0 0
    %13143 = vmatpush1.bf16.msra.mxu0 0
    %13144 = vmatprep.subr.bf16.mxu0 0
    %13145 = vmatpush1.bf16.msra.mxu0 0
    %13146 = vmatprep.subr.bf16.mxu0 0
    %13147 = vmatpush1.bf16.msra.mxu0 0
    %13148 = vmatprep.subr.bf16.mxu0 0
    %13149 = vmatpush1.bf16.msra.mxu0 0
    %13150 = vmatprep.mubr.bf16.mxu0 0
    %13151 = vmatmul.mubr.bf16.gmra.mrb[0].mxu0 %v12895
    %v13152 = vpop.f32.mrb[0].mxu0
    %v13153 = vadd.f32 %v12908, %v13152
    %v13154 = vpop.f32.mrb[0].mxu0
    %v13155 = vadd.f32 %v12912, %v13154
    %v13156 = vpop.f32.mrb[0].mxu0
    %v13157 = vpop.f32.mrb[0].mxu0
    %13158 = vdwg.mxu0
    %v13159 = vpack.c.bf16 %v13112, %v13112
    %v13160 = vpack.c.bf16 %v13114, %v13114
    %v13161 = vpack.c.bf16 %v13153, %v13153
    %v13162 = vpack.c.bf16 %v13155, %v13155
    %v13164 = vlaneseq
    %v13165 = vshrl.u32 %v13164, 7
    %v13166 = vsub.s32 0, %v13165
    %v13167 = vrot.slane %v1954, %v13166
    %v13232 = vunpack.c.l.b16 %v1891
    %v13233 = vunpack.c.l.b16 %v1892
    %v13234 = vunpack.c.l.b16 %v1893
    %v13235 = vunpack.c.l.b16 %v1894
    %v13236 = vunpack.c.l.b16 %v1895
    %v13237 = vunpack.c.l.b16 %v1896
    %v13238 = vunpack.c.l.b16 %v1897
    %v13239 = vunpack.c.l.b16 %v1898
    %v13240 = vunpack.c.l.b16 %v1899
    %v13241 = vunpack.c.l.b16 %v1900
    %v13242 = vunpack.c.l.b16 %v1901
    %v13243 = vunpack.c.l.b16 %v1902
    %v13244 = vunpack.c.l.b16 %v1903
    %v13245 = vunpack.c.l.b16 %v1904
    %v13246 = vunpack.c.l.b16 %v1905
    %v13247 = vunpack.c.l.b16 %v1906
    %v13248 = vunpack.c.l.b16 %v1907
    %v13249 = vunpack.c.l.b16 %v1908
    %v13250 = vunpack.c.l.b16 %v1909
    %v13251 = vunpack.c.l.b16 %v1910
    %v13252 = vunpack.c.l.b16 %v1911
    %v13253 = vunpack.c.l.b16 %v1912
    %v13254 = vunpack.c.l.b16 %v1913
    %v13255 = vunpack.c.l.b16 %v1914
    %v13256 = vunpack.c.l.b16 %v1915
    %v13257 = vunpack.c.l.b16 %v1916
    %v13258 = vunpack.c.l.b16 %v1917
    %v13259 = vunpack.c.l.b16 %v1918
    %v13260 = vunpack.c.l.b16 %v1919
    %v13261 = vunpack.c.l.b16 %v1920
    %v13262 = vunpack.c.l.b16 %v1921
    %v13263 = vunpack.c.l.b16 %v1922
    %v13264 = vunpack.c.l.b16 %v1923
    %v13265 = vunpack.c.l.b16 %v1924
    %v13266 = vunpack.c.l.b16 %v1925
    %v13267 = vunpack.c.l.b16 %v1926
    %v13268 = vunpack.c.l.b16 %v1927
    %v13269 = vunpack.c.l.b16 %v1928
    %v13270 = vunpack.c.l.b16 %v1929
    %v13271 = vunpack.c.l.b16 %v1930
    %v13272 = vunpack.c.l.b16 %v1931
    %v13273 = vunpack.c.l.b16 %v1932
    %v13274 = vunpack.c.l.b16 %v1933
    %v13275 = vunpack.c.l.b16 %v1934
    %v13276 = vunpack.c.l.b16 %v1935
    %v13277 = vunpack.c.l.b16 %v1936
    %v13278 = vunpack.c.l.b16 %v1937
    %v13279 = vunpack.c.l.b16 %v1938
    %v13280 = vunpack.c.l.b16 %v1939
    %v13281 = vunpack.c.l.b16 %v1940
    %v13282 = vunpack.c.l.b16 %v1941
    %v13283 = vunpack.c.l.b16 %v1942
    %v13284 = vunpack.c.l.b16 %v1943
    %v13285 = vunpack.c.l.b16 %v1944
    %v13286 = vunpack.c.l.b16 %v1945
    %v13287 = vunpack.c.l.b16 %v1946
    %v13288 = vunpack.c.l.b16 %v1947
    %v13289 = vunpack.c.l.b16 %v1948
    %v13290 = vunpack.c.l.b16 %v1949
    %v13291 = vunpack.c.l.b16 %v1950
    %v13292 = vunpack.c.l.b16 %v1951
    %v13293 = vunpack.c.l.b16 %v1952
    %v13294 = vunpack.c.l.b16 %v1953
    %v13295 = vpack.c.b16 %v13233, %v13232
    %v13296 = vpack.c.b16 %v13235, %v13234
    %v13297 = vpack.c.b16 %v13237, %v13236
    %v13298 = vpack.c.b16 %v13239, %v13238
    %v13299 = vpack.c.b16 %v13241, %v13240
    %v13300 = vpack.c.b16 %v13243, %v13242
    %v13301 = vpack.c.b16 %v13245, %v13244
    %v13302 = vpack.c.b16 %v13247, %v13246
    %v13303 = vpack.c.b16 %v13249, %v13248
    %v13304 = vpack.c.b16 %v13251, %v13250
    %v13305 = vpack.c.b16 %v13253, %v13252
    %v13306 = vpack.c.b16 %v13255, %v13254
    %v13307 = vpack.c.b16 %v13257, %v13256
    %v13308 = vpack.c.b16 %v13259, %v13258
    %v13309 = vpack.c.b16 %v13261, %v13260
    %v13310 = vpack.c.b16 %v13263, %v13262
    %v13311 = vpack.c.b16 %v13265, %v13264
    %v13312 = vpack.c.b16 %v13267, %v13266
    %v13313 = vpack.c.b16 %v13269, %v13268
    %v13314 = vpack.c.b16 %v13271, %v13270
    %v13315 = vpack.c.b16 %v13273, %v13272
    %v13316 = vpack.c.b16 %v13275, %v13274
    %v13317 = vpack.c.b16 %v13277, %v13276
    %v13318 = vpack.c.b16 %v13279, %v13278
    %v13319 = vpack.c.b16 %v13281, %v13280
    %v13320 = vpack.c.b16 %v13283, %v13282
    %v13321 = vpack.c.b16 %v13285, %v13284
    %v13322 = vpack.c.b16 %v13287, %v13286
    %v13323 = vpack.c.b16 %v13289, %v13288
    %v13324 = vpack.c.b16 %v13291, %v13290
    %v13325 = vpack.c.b16 %v13293, %v13292
    %v13326 = vpack.c.b16 %v13294, %v13294
    %vm13358 = vcmask 949248
    %v13360 = vsel %vm13358, %v13162, 0
    %vm13362 = vcmask 1041408
    %v13364 = vsel %vm13362, %v13326, 0
    %13366 = vmatprep.subr.bf16.mxu0 0
    %13367 = vmatpush1.bf16.msra.mxu0 %v13295
    %13368 = vmatprep.subr.bf16.mxu0 0
    %13369 = vmatpush1.bf16.msra.mxu0 %v13296
    %13370 = vmatprep.subr.bf16.mxu0 0
    %13371 = vmatpush1.bf16.msra.mxu0 %v13297
    %13372 = vmatprep.subr.bf16.mxu0 0
    %13373 = vmatpush1.bf16.msra.mxu0 %v13298
    %13374 = vmatprep.subr.bf16.mxu0 0
    %13375 = vmatpush1.bf16.msra.mxu0 %v13299
    %13376 = vmatprep.subr.bf16.mxu0 0
    %13377 = vmatpush1.bf16.msra.mxu0 %v13300
    %13378 = vmatprep.subr.bf16.mxu0 0
    %13379 = vmatpush1.bf16.msra.mxu0 %v13301
    %13380 = vmatprep.subr.bf16.mxu0 0
    %13381 = vmatpush1.bf16.msra.mxu0 %v13302
    %13382 = vmatprep.subr.bf16.mxu0 0
    %13383 = vmatpush1.bf16.msra.mxu0 %v13303
    %13384 = vmatprep.subr.bf16.mxu0 0
    %13385 = vmatpush1.bf16.msra.mxu0 %v13304
    %13386 = vmatprep.subr.bf16.mxu0 0
    %13387 = vmatpush1.bf16.msra.mxu0 %v13305
    %13388 = vmatprep.subr.bf16.mxu0 0
    %13389 = vmatpush1.bf16.msra.mxu0 %v13306
    %13390 = vmatprep.subr.bf16.mxu0 0
    %13391 = vmatpush1.bf16.msra.mxu0 %v13307
    %13392 = vmatprep.subr.bf16.mxu0 0
    %13393 = vmatpush1.bf16.msra.mxu0 %v13308
    %13394 = vmatprep.subr.bf16.mxu0 0
    %13395 = vmatpush1.bf16.msra.mxu0 %v13309
    %13396 = vmatprep.subr.bf16.mxu0 0
    %13397 = vmatpush1.bf16.msra.mxu0 %v13310
    %13398 = vmatprep.mubr.bf16.mxu0 %v13160
    %13399 = vmatmul.mubr.bf16.gmra.mrb[0].mxu0 %v13159
    %v13400 = vpop.f32.mrb[0].mxu0
    %v13401 = vadd.f32 %v13167, %v13400
    %v13402 = vpop.f32.mrb[0].mxu0
    %v13403 = vpop.f32.mrb[0].mxu0
    %v13404 = vpop.f32.mrb[0].mxu0
    %13405 = vdwg.mxu0
    %13406 = vmatprep.subr.bf16.mxu0 0
    %13407 = vmatpush1.bf16.msra.mxu0 %v13311
    %13408 = vmatprep.subr.bf16.mxu0 0
    %13409 = vmatpush1.bf16.msra.mxu0 %v13312
    %13410 = vmatprep.subr.bf16.mxu0 0
    %13411 = vmatpush1.bf16.msra.mxu0 %v13313
    %13412 = vmatprep.subr.bf16.mxu0 0
    %13413 = vmatpush1.bf16.msra.mxu0 %v13314
    %13414 = vmatprep.subr.bf16.mxu0 0
    %13415 = vmatpush1.bf16.msra.mxu0 %v13315
    %13416 = vmatprep.subr.bf16.mxu0 0
    %13417 = vmatpush1.bf16.msra.mxu0 %v13316
    %13418 = vmatprep.subr.bf16.mxu0 0
    %13419 = vmatpush1.bf16.msra.mxu0 %v13317
    %13420 = vmatprep.subr.bf16.mxu0 0
    %13421 = vmatpush1.bf16.msra.mxu0 %v13318
    %13422 = vmatprep.subr.bf16.mxu0 0
    %13423 = vmatpush1.bf16.msra.mxu0 %v13319
    %13424 = vmatprep.subr.bf16.mxu0 0
    %13425 = vmatpush1.bf16.msra.mxu0 %v13320
    %13426 = vmatprep.subr.bf16.mxu0 0
    %13427 = vmatpush1.bf16.msra.mxu0 %v13321
    %13428 = vmatprep.subr.bf16.mxu0 0
    %13429 = vmatpush1.bf16.msra.mxu0 %v13322
    %13430 = vmatprep.subr.bf16.mxu0 0
    %13431 = vmatpush1.bf16.msra.mxu0 %v13323
    %13432 = vmatprep.subr.bf16.mxu0 0
    %13433 = vmatpush1.bf16.msra.mxu0 %v13324
    %13434 = vmatprep.subr.bf16.mxu0 0
    %13435 = vmatpush1.bf16.msra.mxu0 %v13325
    %13436 = vmatprep.subr.bf16.mxu0 0
    %13437 = vmatpush1.bf16.msra.mxu0 %v13364
    %13438 = vmatprep.mubr.bf16.mxu0 %v13360
    %13439 = vmatmul.mubr.bf16.gmra.mrb[0].mxu0 %v13161
    %v13440 = vpop.f32.mrb[0].mxu0
    %v13441 = vadd.f32 %v13401, %v13440
    %v13442 = vpop.f32.mrb[0].mxu0
    %v13443 = vpop.f32.mrb[0].mxu0
    %v13444 = vpop.f32.mrb[0].mxu0
    %13445 = vdwg.mxu0
    %13446 = vst [vmem:[%s9] sm:$0xff] %v13441
    // Predicated region
    $region66: #{lenet_split_forward.1} parent=1 // pred_check
      _
    $region67: #{lenet_split_forward.1} parent=1 // pred_check_branch
      %13448 = sbr.rel (0) target = $region69
    $region68: #{lenet_split_forward.1} parent=1 // pred_region
      _
    $region69: #{lenet_split_forward.1} parent=1 // pred_fallthru
      _
    // Predicated region
    $region70: #{lenet_split_forward.1} parent=1 // pred_check
      _
    $region71: #{lenet_split_forward.1} parent=1 // pred_check_branch
      %13450 = sbr.rel (0) target = $region73
    $region72: #{lenet_split_forward.1} parent=1 // pred_region
      _
    $region73: #{lenet_split_forward.1} parent=1 // pred_fallthru
      _
    %13451 = vsyncpa [#allocation3], 1
    %13452 = vsyncpa [#allocation5], 1
    %13453 = vsyncpa [#allocation8], 1
    %13454 = vsyncpa [#allocation11], 1

</llo_original>
